<compile_context>
chip_gen: v7x
topology: tpu7x:2x2x1
jax: 0.10.0
libtpu: 0.0.40
codegen_flags: <defaults>
</compile_context>

<pallas_src>
import math
from functools import partial

import numpy as np
import jax
import jax.numpy as jnp
from jax.experimental import pallas as pl
from jax.experimental.pallas import tpu as pltpu

# ----------------------------- small config ---------------------------------
IMG = 32            # (384 in the real model)
PATCH = 4
IN_CH = 3
EMBED = 16          # (128 in the real model)
DEPTHS = (2, 2)     # ((2, 2, 18, 2) in the real model)
NUM_HEADS = (2, 4)  # ((4, 8, 16, 32) in the real model)
WINDOW = 4          # (12 in the real model)
MLP_RATIO = 4
NUM_CLASSES = 14
LN_EPS = 1e-5
LANE = 128
MXU_DTYPE = jnp.bfloat16   # MXU operand / stored-weight dtype (accumulation f32)
ACT_DTYPE = jnp.bfloat16   # inter-kernel activation dtype (residual stream stays f32)
VMEM_LIMIT = 48 * 1024 * 1024   # safe on v7x (64 MiB phys) and v5e/v6e (128 MiB)


def _pick_tile(M, cands):
    for c in cands:
        if M % c == 0:
            return c
    return M


# ============================ Pallas kernels =================================
def _linear_kernel(x_ref, w_ref, b_ref, *rest, has_ln, has_res, activation, eps):
    """Fused [LayerNorm] -> matmul(+bias) -> [GELU] -> [+residual].

    With has_ln the normalized block is cached in a bf16 VMEM scratch and only
    recomputed on the first column tile of each row tile.
    """
    rest = list(rest)
    if has_ln:
        g_ref = rest.pop(0)
        bln_ref = rest.pop(0)
    if has_res:
        res_ref = rest.pop(0)
    o_ref = rest.pop(0)
    xn_ref = rest.pop(0) if has_ln else None    # VMEM scratch (bm, K) bf16

    if has_ln:
        @pl.when(pl.program_id(1) == 0)
        def _():
            x = x_ref[...].astype(jnp.float32)
            mu = jnp.mean(x, axis=-1, keepdims=True)
            xc = x - mu
            var = jnp.mean(xc * xc, axis=-1, keepdims=True)
            xn = xc * jax.lax.rsqrt(var + eps)
            xn = xn * g_ref[...].astype(jnp.float32) + bln_ref[...].astype(jnp.float32)
            xn_ref[...] = xn.astype(MXU_DTYPE)
        xm = xn_ref[...]
    else:
        xm = x_ref[...].astype(MXU_DTYPE)

    # w_ref is already bf16 (pre-cast in prepare_params); accumulate in f32.
    y = jnp.dot(xm, w_ref[...], preferred_element_type=jnp.float32)
    y = y + b_ref[...].astype(jnp.float32)
    if activation == "gelu":
        # TODO(synk): PyTorch nn.GELU uses the exact erf form; tanh approx used here.
        y = jax.nn.gelu(y, approximate=True)
    if has_res:
        y = y + res_ref[...].astype(jnp.float32)
    o_ref[...] = y.astype(o_ref.dtype)


def pallas_linear(x, w, b=None, *, ln=None, residual=None, activation=None,
                  out_dtype=None):
    M, K = x.shape
    N = w.shape[1]
    out_dtype = out_dtype if out_dtype is not None else x.dtype
    if b is None:
        b = jnp.zeros((N,), jnp.float32)
    # Drop bm for very large K so x/w tiles stay ~1-2 MiB each (fc2 at real scale).
    bm_cands = (256, 128, 64, 32, 16, 8) if K >= 2048 else (512, 256, 128, 64, 32, 16, 8)
    bm = _pick_tile(M, bm_cands)
    bn = _pick_tile(N, (256, 128))          # lane-dense column tiles at real scale

    args = [x, w, b.reshape(1, N)]
    in_specs = [
        pl.BlockSpec((bm, K), lambda i, j: (i, 0)),
        pl.BlockSpec((K, bn), lambda i, j: (0, j)),
        pl.BlockSpec((1, bn), lambda i, j: (0, j)),
    ]
    if ln is not None:
        g, bb = ln
        args += [g.reshape(1, K), bb.reshape(1, K)]
        in_specs += [pl.BlockSpec((1, K), lambda i, j: (0, 0)),
                     pl.BlockSpec((1, K), lambda i, j: (0, 0))]
    if residual is not None:
        args.append(residual)
        in_specs.append(pl.BlockSpec((bm, bn), lambda i, j: (i, j)))

    scratch = [pltpu.VMEM((bm, K), MXU_DTYPE)] if ln is not None else []
    # Column axis must be "arbitrary" when the LN scratch carries across it.
    dim_sem = ("parallel", "arbitrary") if ln is not None else ("parallel", "parallel")

    return pl.pallas_call(
        partial(_linear_kernel, has_ln=ln is not None, has_res=residual is not None,
                activation=activation, eps=LN_EPS),
        out_shape=jax.ShapeDtypeStruct((M, N), out_dtype),
        grid=(M // bm, N // bn),
        in_specs=in_specs,
        out_specs=pl.BlockSpec((bm, bn), lambda i, j: (i, j)),
        scratch_shapes=scratch,
        compiler_params=pltpu.CompilerParams(
            dimension_semantics=dim_sem,
            vmem_limit_bytes=VMEM_LIMIT),
    )(*args)


def _layernorm_kernel(x_ref, g_ref, b_ref, o_ref, *, eps):
    x = x_ref[...].astype(jnp.float32)
    mu = jnp.mean(x, axis=-1, keepdims=True)
    xc = x - mu
    var = jnp.mean(xc * xc, axis=-1, keepdims=True)
    y = xc * jax.lax.rsqrt(var + eps)
    y = y * g_ref[...].astype(jnp.float32) + b_ref[...].astype(jnp.float32)
    o_ref[...] = y.astype(o_ref.dtype)


def pallas_layernorm(x, g, b, eps=LN_EPS):
    M, C = x.shape
    bm = _pick_tile(M, (512, 256, 128, 64, 32, 16, 8))
    return pl.pallas_call(
        partial(_layernorm_kernel, eps=eps),
        out_shape=jax.ShapeDtypeStruct((M, C), x.dtype),
        grid=(M // bm,),
        in_specs=[
            pl.BlockSpec((bm, C), lambda i: (i, 0)),
            pl.BlockSpec((1, C), lambda i: (0, 0)),
            pl.BlockSpec((1, C), lambda i: (0, 0)),
        ],
        out_specs=pl.BlockSpec((bm, C), lambda i: (i, 0)),
        compiler_params=pltpu.CompilerParams(dimension_semantics=("parallel",)),
    )(x, g.reshape(1, C), b.reshape(1, C))


def _window_attn_kernel(qkv_ref, bias_ref, *rest, scale, num_heads, head_dim, dim,
                        has_mask):
    if has_mask:
        mask_ref, o_ref = rest
    else:
        (o_ref,) = rest

    qkv = qkv_ref[...]                                   # (Wb, T, 3C[+pad]) bf16
    bias = bias_ref[...].astype(jnp.float32)             # (H, T, T)
    if has_mask:
        mask = mask_ref[...].astype(jnp.float32)         # (Wb, T, T)

    # TODO(synk): at real-model head_dim=32, permute qkv_w columns at prepare
    # time so 4 heads form one 128-lane group and batch them per einsum.
    for h in range(num_heads):                            # small, unrolled
        lo = h * head_dim
        q = qkv[:, :, lo:lo + head_dim]
        k = qkv[:, :, dim + lo:dim + lo + head_dim]
        v = qkv[:, :, 2 * dim + lo:2 * dim + lo + head_dim]
        s = jnp.einsum("wtd,wsd->wts", q, k,
                       preferred_element_type=jnp.float32)       # (Wb, T, T)
        s = s * scale + bias[h][None, :, :]
        if has_mask:
            s = s + mask
        s = s - jnp.max(s, axis=-1, keepdims=True)
        p = jnp.exp(s)
        inv_l = pl.reciprocal(jnp.sum(p, axis=-1, keepdims=True), approx=True)
        o_h = jnp.einsum("wts,wsd->wtd", p.astype(MXU_DTYPE), v,
                         preferred_element_type=jnp.float32)     # (Wb, T, Dh)
        # Softmax normalization applied on the (Wb,T,Dh) output (cheaper than on p);
        # direct store bounds liveness to one head.
        o_ref[:, :, lo:lo + head_dim] = (o_h * inv_l).astype(o_ref.dtype)


def pallas_window_attention(qkv, bias, mask, scale, *, num_heads, dim,
                            out_dtype=ACT_DTYPE):
    """qkv: (nW, T, 3C[+pad]) -> out: (nW, T, C).  Heads handled in-kernel."""
    nWtot, T, NQ = qkv.shape
    in_specs = [
        None,  # filled below once Wb is known
        pl.BlockSpec((num_heads, T, T), lambda w: (0, 0, 0)),
    ]
    args = [qkv, bias]
    if mask is not None:
        nW_img = mask.shape[0]                 # windows per image
        Wb = _pick_tile(nW_img, (16, 8, 4, 2, 1))
        n_blk = nW_img // Wb                   # mask blocks per image
        # Windows are image-major, so grid step w covers windows of exactly one
        # image; tile the (nW_img, T, T) mask with a modulo index_map.
        in_specs.append(pl.BlockSpec((Wb, T, T), lambda w: (w % n_blk, 0, 0)))
        args.append(mask)
    else:
        Wb = _pick_tile(nWtot, (16, 8, 4, 2, 1))
    in_specs[0] = pl.BlockSpec((Wb, T, NQ), lambda w: (w, 0, 0))

    return pl.pallas_call(
        partial(_window_attn_kernel, scale=scale, num_heads=num_heads,
                head_dim=dim // num_heads, dim=dim, has_mask=mask is not None),
        out_shape=jax.ShapeDtypeStruct((nWtot, T, dim), out_dtype),
        grid=(nWtot // Wb,),
        in_specs=in_specs,
        out_specs=pl.BlockSpec((Wb, T, dim), lambda w: (w, 0, 0)),
        compiler_params=pltpu.CompilerParams(
            dimension_semantics=("parallel",),
            vmem_limit_bytes=VMEM_LIMIT),
    )(*args)


# ============================ Swin glue (plain JAX) ==========================
def window_partition(x, ws):
    B, H, W, C = x.shape
    x = x.reshape(B, H // ws, ws, W // ws, ws, C)
    return x.transpose(0, 1, 3, 2, 4, 5).reshape(-1, ws * ws, C)


def window_reverse(windows, ws, H, W, B):
    x = windows.reshape(B, H // ws, W // ws, ws, ws, -1)
    return x.transpose(0, 1, 3, 2, 4, 5).reshape(B, H, W, -1)


def get_rel_pos_index(ws):
    coords = np.stack(np.meshgrid(np.arange(ws), np.arange(ws), indexing="ij"))
    flat = coords.reshape(2, -1)
    rel = flat[:, :, None] - flat[:, None, :]
    rel = rel.transpose(1, 2, 0).astype(np.int32)
    rel[:, :, 0] += ws - 1
    rel[:, :, 1] += ws - 1
    rel[:, :, 0] *= 2 * ws - 1
    return rel.sum(-1).reshape(-1)


def build_attn_mask(H, W, ws, shift):
    img_mask = np.zeros((H, W), dtype=np.float32)
    cnt = 0
    for hs in (slice(0, H - ws), slice(H - ws, H - shift), slice(H - shift, H)):
        for wsl in (slice(0, W - ws), slice(W - ws, W - shift), slice(W - shift, W)):
            img_mask[hs, wsl] = cnt
            cnt += 1
    mw = img_mask.reshape(H // ws, ws, W // ws, ws).transpose(0, 2, 1, 3)
    mw = mw.reshape(-1, ws * ws)
    am = mw[:, None, :] - mw[:, :, None]
    am = np.where(am != 0, -100.0, 0.0).astype(np.float32)
    return jnp.asarray(am)  # (nW_per_img, T, T)


def swin_block(x, p, B, H, W, C, num_heads, ws):
    L = H * W
    T = ws * ws
    shift = ws // 2 if p["attn_mask"] is not None else 0
    shortcut = x                                       # f32 residual stream

    # LN is per-token so it commutes with roll/partition -> fuse it into qkv.
    h = x.reshape(B, H, W, C)
    if shift > 0:
        h = jnp.roll(h, shift=(-shift, -shift), axis=(1, 2))
    xw = window_partition(h, ws)                      # (nWtot, T, C)
    nWtot = xw.shape[0]

    qkv = pallas_linear(xw.reshape(nWtot * T, C), p["qkv_w"], p["qkv_b"],
                        ln=(p["norm1_g"], p["norm1_b"]), out_dtype=ACT_DTYPE)
    qkv = qkv.reshape(nWtot, T, qkv.shape[-1])        # padded cols ignored in-kernel

    scale = (C // num_heads) ** -0.5
    attn = pallas_window_attention(qkv, p["bias"], p["attn_mask"], scale,
                                   num_heads=num_heads, dim=C,
                                   out_dtype=ACT_DTYPE)          # (nWtot, T, C) bf16

    attn = pallas_linear(attn.reshape(nWtot * T, C), p["proj_w"], p["proj_b"],
                         out_dtype=ACT_DTYPE)
    h = window_reverse(attn.reshape(nWtot, T, C), ws, H, W, B)
    if shift > 0:
        h = jnp.roll(h, shift=(shift, shift), axis=(1, 2))
    x = shortcut + h.reshape(B, L, C)                 # f32 + bf16 -> f32

    xf = x.reshape(B * L, C)
    y = pallas_linear(xf, p["fc1_w"], p["fc1_b"],
                      ln=(p["norm2_g"], p["norm2_b"]), activation="gelu",
                      out_dtype=ACT_DTYPE)
    out = pallas_linear(y, p["fc2_w"], p["fc2_b"], residual=xf,
                        out_dtype=jnp.float32)        # fused residual, f32 stream
    return out.reshape(B, L, C)


def patch_merging(x, p, B, H, W, C):
    x = x.reshape(B, H, W, C)
    x0 = x[:, 0::2, 0::2, :]
    x1 = x[:, 1::2, 0::2, :]
    x2 = x[:, 0::2, 1::2, :]
    x3 = x[:, 1::2, 1::2, :]
    x = jnp.concatenate([x0, x1, x2, x3], axis=-1)
    x = x.reshape(B * (H // 2) * (W // 2), 4 * C)
    # LayerNorm fused into the reduction linear (Linear(4C -> 2C, no bias)).
    x = pallas_linear(x, p["red_w"], None, ln=(p["norm_g"], p["norm_b"]))
    return x.reshape(B, (H // 2) * (W // 2), 2 * C)


def forward(params, x):
    # x: (B, 3, IMG, IMG) NCHW, float32
    B = x.shape[0]
    Hp = Wp = IMG // PATCH
    # patch embed: stride==kernel conv  ==  patch unfold + linear
    patches = x.reshape(B, IN_CH, Hp, PATCH, Wp, PATCH)
    patches = patches.transpose(0, 2, 4, 1, 3, 5).reshape(B * Hp * Wp,
                                                          IN_CH * PATCH * PATCH)
    tok = pallas_linear(patches, params["patch_w"], params["patch_b"])
    tok = pallas_layernorm(tok, params["patch_norm_g"], params["patch_norm_b"])
    x = tok.reshape(B, Hp * Wp, EMBED)

    H, W, C = Hp, Wp, EMBED
    for si, (depth, nh) in enumerate(zip(DEPTHS, NUM_HEADS)):
        stage = params["stages"][si]
        ws = min(WINDOW, H)
        for bi in range(depth):
            x = swin_block(x, stage["blocks"][bi], B, H, W, C, nh, ws)
        if si < len(DEPTHS) - 1:
            x = patch_merging(x, stage["down"], B, H, W, C)
            H, W, C = H // 2, W // 2, C * 2

    x = pallas_layernorm(x.reshape(-1, C), params["norm_g"], params["norm_b"])
    x = x.reshape(B, -1, C)
    pooled = jnp.mean(x, axis=1)                      # global average pool over tokens
    logits = pallas_linear(pooled, params["head_w"], params["head_b"])
    return logits[:, :NUM_CLASSES]                    # drop lane padding


# ============================ deterministic init =============================
class Rng:
    def __init__(self, key):
        self.key = key

    def next(self):
        self.key, sub = jax.random.split(self.key)
        return sub


def init_params(key):
    rng = Rng(key)

    def w(shape):
        return (jax.random.truncated_normal(rng.next(), -2.0, 2.0, shape)
                * 0.02).astype(jnp.float32)

    zeros = lambda s: jnp.zeros(s, jnp.float32)
    ones = lambda s: jnp.ones(s, jnp.float32)

    params = {
        "patch_w": w((IN_CH * PATCH * PATCH, EMBED)),
        "patch_b": zeros((EMBED,)),
        "patch_norm_g": ones((EMBED,)),
        "patch_norm_b": zeros((EMBED,)),
        "stages": [],
    }
    for si, (depth, nh) in enumerate(zip(DEPTHS, NUM_HEADS)):
        dim = EMBED * (2 ** si)
        blocks = []
        for _ in range(depth):
            blocks.append({
                "norm1_g": ones((dim,)), "norm1_b": zeros((dim,)),
                "qkv_w": w((dim, 3 * dim)), "qkv_b": zeros((3 * dim,)),
                "rpb": w(((2 * WINDOW - 1) ** 2, nh)),
                "proj_w": w((dim, dim)), "proj_b": zeros((dim,)),
                "norm2_g": ones((dim,)), "norm2_b": zeros((dim,)),
                "fc1_w": w((dim, MLP_RATIO * dim)), "fc1_b": zeros((MLP_RATIO * dim,)),
                "fc2_w": w((MLP_RATIO * dim, dim)), "fc2_b": zeros((dim,)),
            })
        stage = {"blocks": blocks}
        if si < len(DEPTHS) - 1:
            stage["down"] = {
                "norm_g": ones((4 * dim,)), "norm_b": zeros((4 * dim,)),
                "red_w": w((4 * dim, 2 * dim)),
            }
        params["stages"].append(stage)

    nf = EMBED * (2 ** (len(DEPTHS) - 1))
    params["norm_g"] = ones((nf,))
    params["norm_b"] = zeros((nf,))
    params["head_w"] = w((nf, NUM_CLASSES))
    params["head_b"] = zeros((NUM_CLASSES,))
    return params


# ----------------------- one-time parameter preparation ----------------------
def _pad_cols(w, b=None):
    """Zero-pad weight columns (and bias) to a multiple of the 128-lane width."""
    K, N = w.shape
    Np = ((N + LANE - 1) // LANE) * LANE
    if Np != N:
        w = jnp.pad(w, ((0, 0), (0, Np - N)))
        if b is not None:
            b = jnp.pad(b, (0, Np - N))
    return w, b


def _pad_rows(w, Kp):
    K, N = w.shape
    if Kp != K:
        w = jnp.pad(w, ((0, Kp - K), (0, 0)))
    return w


def _bf16(w):
    return w.astype(MXU_DTYPE)


def prepare_params(params):
    """Pre-pad weights to lane width, cast MXU operands to bf16, precompute
    rel-pos-bias tables and shifted-window masks."""
    pp = {
        "patch_w": _bf16(params["patch_w"]), "patch_b": params["patch_b"],
        "patch_norm_g": params["patch_norm_g"], "patch_norm_b": params["patch_norm_b"],
        "norm_g": params["norm_g"], "norm_b": params["norm_b"],
        "stages": [],
    }
    Hc = Wc = IMG // PATCH
    for si, (depth, nh) in enumerate(zip(DEPTHS, NUM_HEADS)):
        ws = min(WINDOW, Hc)
        T = ws * ws
        rel_idx = jnp.asarray(get_rel_pos_index(ws))
        blocks = []
        for bi in range(depth):
            bp = params["stages"][si]["blocks"][bi]
            shift = 0 if bi % 2 == 0 else ws // 2
            if min(Hc, Wc) <= WINDOW:
                shift = 0
            qkv_w, qkv_b = _pad_cols(bp["qkv_w"], bp["qkv_b"])
            fc1_w, fc1_b = _pad_cols(bp["fc1_w"], bp["fc1_b"])
            fc2_w = _pad_rows(bp["fc2_w"], fc1_w.shape[1])   # padded fc1 cols are 0
            bias = bp["rpb"][rel_idx].reshape(T, T, nh).transpose(2, 0, 1)  # (H,T,T)
            blocks.append({
                "norm1_g": bp["norm1_g"], "norm1_b": bp["norm1_b"],
                "qkv_w": _bf16(qkv_w), "qkv_b": qkv_b,
                "bias": _bf16(bias),
                "attn_mask": (_bf16(build_attn_mask(Hc, Wc, ws, shift))
                              if shift > 0 else None),
                "proj_w": _bf16(bp["proj_w"]), "proj_b": bp["proj_b"],
                "norm2_g": bp["norm2_g"], "norm2_b": bp["norm2_b"],
                "fc1_w": _bf16(fc1_w), "fc1_b": fc1_b,
                "fc2_w": _bf16(fc2_w), "fc2_b": bp["fc2_b"],
            })
        stage = {"blocks": blocks}
        if si < len(DEPTHS) - 1:
            down = params["stages"][si]["down"]
            stage["down"] = {
                "norm_g": down["norm_g"], "norm_b": down["norm_b"],
                "red_w": _bf16(down["red_w"]),
            }
            Hc, Wc = Hc // 2, Wc // 2
        pp["stages"].append(stage)

    head_w, head_b = _pad_cols(params["head_w"], params["head_b"])
    pp["head_w"], pp["head_b"] = _bf16(head_w), head_b
    return pp


# ================================== main =====================================
if __name__ == "__main__":
    key = jax.random.PRNGKey(0)
    pkey, xkey = jax.random.split(key)
    params = prepare_params(init_params(pkey))
    x = jax.random.normal(xkey, (2, IN_CH, IMG, IMG), dtype=jnp.float32)

    fwd = jax.jit(forward)
    logits = fwd(params, x)
    logits = jax.block_until_ready(logits)

    assert logits.shape == (2, NUM_CLASSES), logits.shape
    assert bool(jnp.all(jnp.isfinite(logits)))
    print("KERNEL_OK")
</pallas_src>

<mosaic_0001>
module attributes {stable_mosaic.version = 11 : i64} {
  func.func @_layernorm_kernel(%arg0: i32, %arg1: memref<128x16xf32, #tpu.memory_space<vmem>>, %arg2: memref<1x16xf32, #tpu.memory_space<vmem>>, %arg3: memref<1x16xf32, #tpu.memory_space<vmem>>, %arg4: memref<128x16xf32, #tpu.memory_space<vmem>>) attributes {dimension_semantics = [#tpu.dimension_semantics<parallel>], iteration_bounds = array<i64: 1>, scalar_prefetch = 0 : i64, scratch_operands = 0 : i64, tpu.core_type = #tpu.core_type<tc>, window_params = [{transform_indices = @transform_0, window_bounds = array<i64: 128, 16>}, {pipeline_mode = #tpu.pipeline_mode<synchronous>, transform_indices = @transform_1, window_bounds = array<i64: 1, 16>}, {pipeline_mode = #tpu.pipeline_mode<synchronous>, transform_indices = @transform_2, window_bounds = array<i64: 1, 16>}, {transform_indices = @transform_3, window_bounds = array<i64: 128, 16>}]} {
    %c0 = arith.constant 0 : index
    %c0_0 = arith.constant 0 : index
    %0 = vector.load %arg1[%c0, %c0_0] : memref<128x16xf32, #tpu.memory_space<vmem>>, vector<128x16xf32>
    %cst = arith.constant dense<0.000000e+00> : vector<128xf32>
    %1 = vector.multi_reduction <add>, %0, %cst [1] : vector<128x16xf32> to vector<128xf32>
    %2 = vector.shape_cast %1 : vector<128xf32> to vector<128x1xf32>
    %cst_1 = arith.constant 1.600000e+01 : f32
    %3 = vector.broadcast %cst_1 : f32 to vector<128x1xf32>
    %4 = arith.divf %2, %3 : vector<128x1xf32>
    %5 = vector.broadcast %4 : vector<128x1xf32> to vector<128x16xf32>
    %6 = arith.subf %0, %5 : vector<128x16xf32>
    %7 = arith.mulf %6, %6 : vector<128x16xf32>
    %cst_2 = arith.constant dense<0.000000e+00> : vector<128xf32>
    %8 = vector.multi_reduction <add>, %7, %cst_2 [1] : vector<128x16xf32> to vector<128xf32>
    %9 = vector.shape_cast %8 : vector<128xf32> to vector<128x1xf32>
    %cst_3 = arith.constant 1.600000e+01 : f32
    %10 = vector.broadcast %cst_3 : f32 to vector<128x1xf32>
    %11 = arith.divf %9, %10 : vector<128x1xf32>
    %cst_4 = arith.constant 9.99999974E-6 : f32
    %12 = vector.broadcast %cst_4 : f32 to vector<128x1xf32>
    %13 = arith.addf %11, %12 : vector<128x1xf32>
    %14 = math.rsqrt %13 : vector<128x1xf32>
    %15 = vector.broadcast %14 : vector<128x1xf32> to vector<128x16xf32>
    %16 = arith.mulf %6, %15 : vector<128x16xf32>
    %c0_5 = arith.constant 0 : index
    %c0_6 = arith.constant 0 : index
    %17 = vector.load %arg2[%c0_5, %c0_6] : memref<1x16xf32, #tpu.memory_space<vmem>>, vector<1x16xf32>
    %18 = vector.broadcast %17 : vector<1x16xf32> to vector<128x16xf32>
    %19 = arith.mulf %16, %18 : vector<128x16xf32>
    %c0_7 = arith.constant 0 : index
    %c0_8 = arith.constant 0 : index
    %20 = vector.load %arg3[%c0_7, %c0_8] : memref<1x16xf32, #tpu.memory_space<vmem>>, vector<1x16xf32>
    %21 = vector.broadcast %20 : vector<1x16xf32> to vector<128x16xf32>
    %22 = arith.addf %19, %21 : vector<128x16xf32>
    %c0_9 = arith.constant 0 : index
    %c0_10 = arith.constant 0 : index
    %23 = vector.load %arg4[%c0_9, %c0_10] : memref<128x16xf32, #tpu.memory_space<vmem>>, vector<128x16xf32>
    tpu.vector_store %arg4[%c0_9, %c0_10], %22 {strides = array<i32>} : memref<128x16xf32, #tpu.memory_space<vmem>>, vector<128x16xf32>,
    return
  }
  func.func @transform_0(%arg0: i32) -> (i32, i32) {
    %c0_i32 = arith.constant 0 : i32
    %c0_i32_0 = arith.constant 0 : i32
    return %arg0, %c0_i32 : i32, i32
  }
  func.func @transform_1(%arg0: i32) -> (i32, i32) {
    %c0_i32 = arith.constant 0 : i32
    %c0_i32_0 = arith.constant 0 : i32
    %c0_i32_1 = arith.constant 0 : i32
    return %c0_i32, %c0_i32_0 : i32, i32
  }
  func.func @transform_2(%arg0: i32) -> (i32, i32) {
    %c0_i32 = arith.constant 0 : i32
    %c0_i32_0 = arith.constant 0 : i32
    %c0_i32_1 = arith.constant 0 : i32
    return %c0_i32, %c0_i32_0 : i32, i32
  }
  func.func @transform_3(%arg0: i32) -> (i32, i32) {
    %c0_i32 = arith.constant 0 : i32
    %c0_i32_0 = arith.constant 0 : i32
    return %arg0, %c0_i32 : i32, i32
  }
}

module attributes {stable_mosaic.version = 11 : i64} {
  func.func @_linear_kernel(%arg0: i32, %arg1: i32, %arg2: memref<128x48xf32, #tpu.memory_space<vmem>>, %arg3: memref<48x16xbf16, #tpu.memory_space<vmem>>, %arg4: memref<1x16xf32, #tpu.memory_space<vmem>>, %arg5: memref<128x16xf32, #tpu.memory_space<vmem>>) attributes {dimension_semantics = [#tpu.dimension_semantics<parallel>, #tpu.dimension_semantics<parallel>], iteration_bounds = array<i64: 1, 1>, scalar_prefetch = 0 : i64, scratch_operands = 0 : i64, tpu.core_type = #tpu.core_type<tc>, window_params = [{transform_indices = @transform_0, window_bounds = array<i64: 128, 48>}, {transform_indices = @transform_1, window_bounds = array<i64: 48, 16>}, {transform_indices = @transform_2, window_bounds = array<i64: 1, 16>}, {transform_indices = @transform_3, window_bounds = array<i64: 128, 16>}]} {
    %c0 = arith.constant 0 : index
    %c0_0 = arith.constant 0 : index
    %0 = vector.load %arg2[%c0, %c0_0] : memref<128x48xf32, #tpu.memory_space<vmem>>, vector<128x48xf32>
    %1 = arith.truncf %0 : vector<128x48xf32> to vector<128x48xbf16>
    %c0_1 = arith.constant 0 : index
    %c0_2 = arith.constant 0 : index
    %2 = vector.load %arg3[%c0_1, %c0_2] : memref<48x16xbf16, #tpu.memory_space<vmem>>, vector<48x16xbf16>
    %cst = arith.constant dense<0.000000e+00> : vector<128x16xf32>
    %3 = tpu.matmul %1, %2, %cst {dimension_numbers = #tpu.dot_dimension_numbers<[1], [0], [0], [1], [0, 0, 1, 1], [], []>} : vector<128x48xbf16>, vector<48x16xbf16>, vector<128x16xf32> -> vector<128x16xf32>
    %c0_3 = arith.constant 0 : index
    %c0_4 = arith.constant 0 : index
    %4 = vector.load %arg4[%c0_3, %c0_4] : memref<1x16xf32, #tpu.memory_space<vmem>>, vector<1x16xf32>
    %5 = vector.broadcast %4 : vector<1x16xf32> to vector<128x16xf32>
    %6 = arith.addf %3, %5 : vector<128x16xf32>
    %c0_5 = arith.constant 0 : index
    %c0_6 = arith.constant 0 : index
    %7 = vector.load %arg5[%c0_5, %c0_6] : memref<128x16xf32, #tpu.memory_space<vmem>>, vector<128x16xf32>
    tpu.vector_store %arg5[%c0_5, %c0_6], %6 {strides = array<i32>} : memref<128x16xf32, #tpu.memory_space<vmem>>, vector<128x16xf32>,
    return
  }
  func.func @transform_0(%arg0: i32, %arg1: i32) -> (i32, i32) {
    %c0_i32 = arith.constant 0 : i32
    %c0_i32_0 = arith.constant 0 : i32
    return %arg0, %c0_i32 : i32, i32
  }
  func.func @transform_1(%arg0: i32, %arg1: i32) -> (i32, i32) {
    %c0_i32 = arith.constant 0 : i32
    %c0_i32_0 = arith.constant 0 : i32
    return %c0_i32, %arg1 : i32, i32
  }
  func.func @transform_2(%arg0: i32, %arg1: i32) -> (i32, i32) {
    %c0_i32 = arith.constant 0 : i32
    %c0_i32_0 = arith.constant 0 : i32
    return %c0_i32, %arg1 : i32, i32
  }
  func.func @transform_3(%arg0: i32, %arg1: i32) -> (i32, i32) {
    %c0_i32 = arith.constant 0 : i32
    return %arg0, %arg1 : i32, i32
  }
}

module attributes {stable_mosaic.version = 11 : i64} {
  func.func @_linear_kernel(%arg0: i32, %arg1: i32, %arg2: memref<128x16xf32, #tpu.memory_space<vmem>>, %arg3: memref<16x128xbf16, #tpu.memory_space<vmem>>, %arg4: memref<1x128xf32, #tpu.memory_space<vmem>>, %arg5: memref<1x16xf32, #tpu.memory_space<vmem>>, %arg6: memref<1x16xf32, #tpu.memory_space<vmem>>, %arg7: memref<128x128xbf16, #tpu.memory_space<vmem>>, %arg8: memref<128x16xbf16, #tpu.memory_space<vmem>>) attributes {dimension_semantics = [#tpu.dimension_semantics<parallel>, #tpu.dimension_semantics<arbitrary>], iteration_bounds = array<i64: 1, 1>, scalar_prefetch = 0 : i64, scratch_operands = 1 : i64, tpu.core_type = #tpu.core_type<tc>, window_params = [{transform_indices = @transform_0, window_bounds = array<i64: 128, 16>}, {transform_indices = @transform_1, window_bounds = array<i64: 16, 128>}, {transform_indices = @transform_2, window_bounds = array<i64: 1, 128>}, {pipeline_mode = #tpu.pipeline_mode<synchronous>, transform_indices = @transform_3, window_bounds = array<i64: 1, 16>}, {pipeline_mode = #tpu.pipeline_mode<synchronous>, transform_indices = @transform_4, window_bounds = array<i64: 1, 16>}, {transform_indices = @transform_5, window_bounds = array<i64: 128, 128>}]} {
    %c0_i32 = arith.constant 0 : i32
    %0 = arith.cmpi eq, %arg1, %c0_i32 : i32
    %1 = arith.extui %0 : i1 to i32
    %c0_i32_0 = arith.constant 0 : i32
    %2 = arith.cmpi ne, %1, %c0_i32_0 : i32
    scf.if %2 {
      %c0_8 = arith.constant 0 : index
      %c0_9 = arith.constant 0 : index
      %11 = vector.load %arg2[%c0_8, %c0_9] : memref<128x16xf32, #tpu.memory_space<vmem>>, vector<128x16xf32>
      %cst_10 = arith.constant dense<0.000000e+00> : vector<128xf32>
      %12 = vector.multi_reduction <add>, %11, %cst_10 [1] : vector<128x16xf32> to vector<128xf32>
      %13 = vector.shape_cast %12 : vector<128xf32> to vector<128x1xf32>
      %cst_11 = arith.constant 1.600000e+01 : f32
      %14 = vector.broadcast %cst_11 : f32 to vector<128x1xf32>
      %15 = arith.divf %13, %14 : vector<128x1xf32>
      %16 = vector.broadcast %15 : vector<128x1xf32> to vector<128x16xf32>
      %17 = arith.subf %11, %16 : vector<128x16xf32>
      %18 = arith.mulf %17, %17 : vector<128x16xf32>
      %cst_12 = arith.constant dense<0.000000e+00> : vector<128xf32>
      %19 = vector.multi_reduction <add>, %18, %cst_12 [1] : vector<128x16xf32> to vector<128xf32>
      %20 = vector.shape_cast %19 : vector<128xf32> to vector<128x1xf32>
      %cst_13 = arith.constant 1.600000e+01 : f32
      %21 = vector.broadcast %cst_13 : f32 to vector<128x1xf32>
      %22 = arith.divf %20, %21 : vector<128x1xf32>
      %cst_14 = arith.constant 9.99999974E-6 : f32
      %23 = vector.broadcast %cst_14 : f32 to vector<128x1xf32>
      %24 = arith.addf %22, %23 : vector<128x1xf32>
      %25 = math.rsqrt %24 : vector<128x1xf32>
      %26 = vector.broadcast %25 : vector<128x1xf32> to vector<128x16xf32>
      %27 = arith.mulf %17, %26 : vector<128x16xf32>
      %c0_15 = arith.constant 0 : index
      %c0_16 = arith.constant 0 : index
      %28 = vector.load %arg5[%c0_15, %c0_16] : memref<1x16xf32, #tpu.memory_space<vmem>>, vector<1x16xf32>
      %29 = vector.broadcast %28 : vector<1x16xf32> to vector<128x16xf32>
      %30 = arith.mulf %27, %29 : vector<128x16xf32>
      %c0_17 = arith.constant 0 : index
      %c0_18 = arith.constant 0 : index
      %31 = vector.load %arg6[%c0_17, %c0_18] : memref<1x16xf32, #tpu.memory_space<vmem>>, vector<1x16xf32>
      %32 = vector.broadcast %31 : vector<1x16xf32> to vector<128x16xf32>
      %33 = arith.addf %30, %32 : vector<128x16xf32>
      %34 = arith.truncf %33 : vector<128x16xf32> to vector<128x16xbf16>
      %c0_19 = arith.constant 0 : index
      %c0_20 = arith.constant 0 : index
      %35 = vector.load %arg8[%c0_19, %c0_20] : memref<128x16xbf16, #tpu.memory_space<vmem>>, vector<128x16xbf16>
      tpu.vector_store %arg8[%c0_19, %c0_20], %34 {strides = array<i32>} : memref<128x16xbf16, #tpu.memory_space<vmem>>, vector<128x16xbf16>,
    } else {
    }
    %c0 = arith.constant 0 : index
    %c0_1 = arith.constant 0 : index
    %3 = vector.load %arg8[%c0, %c0_1] : memref<128x16xbf16, #tpu.memory_space<vmem>>, vector<128x16xbf16>
    %c0_2 = arith.constant 0 : index
    %c0_3 = arith.constant 0 : index
    %4 = vector.load %arg3[%c0_2, %c0_3] : memref<16x128xbf16, #tpu.memory_space<vmem>>, vector<16x128xbf16>
    %cst = arith.constant dense<0.000000e+00> : vector<128x128xf32>
    %5 = tpu.matmul %3, %4, %cst {dimension_numbers = #tpu.dot_dimension_numbers<[1], [0], [0], [1], [0, 0, 1, 1], [], []>} : vector<128x16xbf16>, vector<16x128xbf16>, vector<128x128xf32> -> vector<128x128xf32>
    %c0_4 = arith.constant 0 : index
    %c0_5 = arith.constant 0 : index
    %6 = vector.load %arg4[%c0_4, %c0_5] : memref<1x128xf32, #tpu.memory_space<vmem>>, vector<1x128xf32>
    %7 = vector.broadcast %6 : vector<1x128xf32> to vector<128x128xf32>
    %8 = arith.addf %5, %7 : vector<128x128xf32>
    %9 = arith.truncf %8 : vector<128x128xf32> to vector<128x128xbf16>
    %c0_6 = arith.constant 0 : index
    %c0_7 = arith.constant 0 : index
    %10 = vector.load %arg7[%c0_6, %c0_7] : memref<128x128xbf16, #tpu.memory_space<vmem>>, vector<128x128xbf16>
    tpu.vector_store %arg7[%c0_6, %c0_7], %9 {strides = array<i32>} : memref<128x128xbf16, #tpu.memory_space<vmem>>, vector<128x128xbf16>,
    return
  }
  func.func @transform_0(%arg0: i32, %arg1: i32) -> (i32, i32) {
    %c0_i32 = arith.constant 0 : i32
    %c0_i32_0 = arith.constant 0 : i32
    return %arg0, %c0_i32 : i32, i32
  }
  func.func @transform_1(%arg0: i32, %arg1: i32) -> (i32, i32) {
    %c0_i32 = arith.constant 0 : i32
    %c0_i32_0 = arith.constant 0 : i32
    return %c0_i32, %arg1 : i32, i32
  }
  func.func @transform_2(%arg0: i32, %arg1: i32) -> (i32, i32) {
    %c0_i32 = arith.constant 0 : i32
    %c0_i32_0 = arith.constant 0 : i32
    return %c0_i32, %arg1 : i32, i32
  }
  func.func @transform_3(%arg0: i32, %arg1: i32) -> (i32, i32) {
    %c0_i32 = arith.constant 0 : i32
    %c0_i32_0 = arith.constant 0 : i32
    %c0_i32_1 = arith.constant 0 : i32
    return %c0_i32, %c0_i32_0 : i32, i32
  }
  func.func @transform_4(%arg0: i32, %arg1: i32) -> (i32, i32) {
    %c0_i32 = arith.constant 0 : i32
    %c0_i32_0 = arith.constant 0 : i32
    %c0_i32_1 = arith.constant 0 : i32
    return %c0_i32, %c0_i32_0 : i32, i32
  }
  func.func @transform_5(%arg0: i32, %arg1: i32) -> (i32, i32) {
    %c0_i32 = arith.constant 0 : i32
    return %arg0, %arg1 : i32, i32
  }
}

module attributes {stable_mosaic.version = 11 : i64} {
  func.func @_linear_kernel(%arg0: i32, %arg1: i32, %arg2: memref<128x16xbf16, #tpu.memory_space<vmem>>, %arg3: memref<16x16xbf16, #tpu.memory_space<vmem>>, %arg4: memref<1x16xf32, #tpu.memory_space<vmem>>, %arg5: memref<128x16xbf16, #tpu.memory_space<vmem>>) attributes {dimension_semantics = [#tpu.dimension_semantics<parallel>, #tpu.dimension_semantics<parallel>], iteration_bounds = array<i64: 1, 1>, scalar_prefetch = 0 : i64, scratch_operands = 0 : i64, tpu.core_type = #tpu.core_type<tc>, window_params = [{transform_indices = @transform_0, window_bounds = array<i64: 128, 16>}, {transform_indices = @transform_1, window_bounds = array<i64: 16, 16>}, {transform_indices = @transform_2, window_bounds = array<i64: 1, 16>}, {transform_indices = @transform_3, window_bounds = array<i64: 128, 16>}]} {
    %c0 = arith.constant 0 : index
    %c0_0 = arith.constant 0 : index
    %0 = vector.load %arg2[%c0, %c0_0] : memref<128x16xbf16, #tpu.memory_space<vmem>>, vector<128x16xbf16>
    %c0_1 = arith.constant 0 : index
    %c0_2 = arith.constant 0 : index
    %1 = vector.load %arg3[%c0_1, %c0_2] : memref<16x16xbf16, #tpu.memory_space<vmem>>, vector<16x16xbf16>
    %cst = arith.constant dense<0.000000e+00> : vector<128x16xf32>
    %2 = tpu.matmul %0, %1, %cst {dimension_numbers = #tpu.dot_dimension_numbers<[1], [0], [0], [1], [0, 0, 1, 1], [], []>} : vector<128x16xbf16>, vector<16x16xbf16>, vector<128x16xf32> -> vector<128x16xf32>
    %c0_3 = arith.constant 0 : index
    %c0_4 = arith.constant 0 : index
    %3 = vector.load %arg4[%c0_3, %c0_4] : memref<1x16xf32, #tpu.memory_space<vmem>>, vector<1x16xf32>
    %4 = vector.broadcast %3 : vector<1x16xf32> to vector<128x16xf32>
    %5 = arith.addf %2, %4 : vector<128x16xf32>
    %6 = arith.truncf %5 : vector<128x16xf32> to vector<128x16xbf16>
    %c0_5 = arith.constant 0 : index
    %c0_6 = arith.constant 0 : index
    %7 = vector.load %arg5[%c0_5, %c0_6] : memref<128x16xbf16, #tpu.memory_space<vmem>>, vector<128x16xbf16>
    tpu.vector_store %arg5[%c0_5, %c0_6], %6 {strides = array<i32>} : memref<128x16xbf16, #tpu.memory_space<vmem>>, vector<128x16xbf16>,
    return
  }
  func.func @transform_0(%arg0: i32, %arg1: i32) -> (i32, i32) {
    %c0_i32 = arith.constant 0 : i32
    %c0_i32_0 = arith.constant 0 : i32
    return %arg0, %c0_i32 : i32, i32
  }
  func.func @transform_1(%arg0: i32, %arg1: i32) -> (i32, i32) {
    %c0_i32 = arith.constant 0 : i32
    %c0_i32_0 = arith.constant 0 : i32
    return %c0_i32, %arg1 : i32, i32
  }
  func.func @transform_2(%arg0: i32, %arg1: i32) -> (i32, i32) {
    %c0_i32 = arith.constant 0 : i32
    %c0_i32_0 = arith.constant 0 : i32
    return %c0_i32, %arg1 : i32, i32
  }
  func.func @transform_3(%arg0: i32, %arg1: i32) -> (i32, i32) {
    %c0_i32 = arith.constant 0 : i32
    return %arg0, %arg1 : i32, i32
  }
}

module attributes {stable_mosaic.version = 11 : i64} {
  func.func @_window_attn_kernel(%arg0: i32, %arg1: memref<8x16x128xbf16, #tpu.memory_space<vmem>>, %arg2: memref<2x16x16xbf16, #tpu.memory_space<vmem>>, %arg3: memref<8x16x16xbf16, #tpu.memory_space<vmem>>) attributes {dimension_semantics = [#tpu.dimension_semantics<parallel>], iteration_bounds = array<i64: 1>, scalar_prefetch = 0 : i64, scratch_operands = 0 : i64, tpu.core_type = #tpu.core_type<tc>, window_params = [{transform_indices = @transform_0, window_bounds = array<i64: 8, 16, 128>}, {pipeline_mode = #tpu.pipeline_mode<synchronous>, transform_indices = @transform_1, window_bounds = array<i64: 2, 16, 16>}, {transform_indices = @transform_2, window_bounds = array<i64: 8, 16, 16>}]} {
    %c0 = arith.constant 0 : index
    %c0_0 = arith.constant 0 : index
    %c0_1 = arith.constant 0 : index
    %0 = vector.load %arg1[%c0, %c0_0, %c0_1] : memref<8x16x128xbf16, #tpu.memory_space<vmem>>, vector<8x16x128xbf16>
    %c0_2 = arith.constant 0 : index
    %c0_3 = arith.constant 0 : index
    %c0_4 = arith.constant 0 : index
    %1 = vector.load %arg2[%c0_2, %c0_3, %c0_4] : memref<2x16x16xbf16, #tpu.memory_space<vmem>>, vector<2x16x16xbf16>
    %2 = arith.extf %1 : vector<2x16x16xbf16> to vector<2x16x16xf32>
    %3 = vector.extract_strided_slice %0 {offsets = [0, 0, 0], sizes = [8, 16, 8], strides = [1, 1, 1]} : vector<8x16x128xbf16> to vector<8x16x8xbf16>
    %4 = vector.extract_strided_slice %0 {offsets = [0, 0, 16], sizes = [8, 16, 8], strides = [1, 1, 1]} : vector<8x16x128xbf16> to vector<8x16x8xbf16>
    %5 = vector.extract_strided_slice %0 {offsets = [0, 0, 32], sizes = [8, 16, 8], strides = [1, 1, 1]} : vector<8x16x128xbf16> to vector<8x16x8xbf16>
    "tpu.trace_start"() <{level = 10 : i32, message = "wtd,wsd->wts"}> : () -> ()
    %cst = arith.constant dense<0.000000e+00> : vector<8x16x16xf32>
    %6 = tpu.matmul %3, %4, %cst {dimension_numbers = #tpu.dot_dimension_numbers<[2], [2], [1], [1], [0, 0, 0, 1, 1, 1], [0], [0]>} : vector<8x16x8xbf16>, vector<8x16x8xbf16>, vector<8x16x16xf32> -> vector<8x16x16xf32>
    "tpu.trace_stop"() : () -> ()
    %cst_5 = arith.constant 0.353553385 : f32
    %7 = vector.broadcast %cst_5 : f32 to vector<8x16x16xf32>
    %8 = arith.mulf %6, %7 : vector<8x16x16xf32>
    %9 = vector.extract_strided_slice %2 {offsets = [0, 0, 0], sizes = [1, 16, 16], strides = [1, 1, 1]} : vector<2x16x16xf32> to vector<1x16x16xf32>
    %10 = vector.shape_cast %9 : vector<1x16x16xf32> to vector<16x16xf32>
    %11 = vector.shape_cast %10 : vector<16x16xf32> to vector<1x16x16xf32>
    %12 = vector.broadcast %11 : vector<1x16x16xf32> to vector<8x16x16xf32>
    %13 = arith.addf %8, %12 : vector<8x16x16xf32>
    %cst_6 = arith.constant dense<0xFF800000> : vector<8x16xf32>
    %14 = vector.multi_reduction <maximumf>, %13, %cst_6 [2] : vector<8x16x16xf32> to vector<8x16xf32>
    %15 = vector.shape_cast %14 : vector<8x16xf32> to vector<8x16x1xf32>
    %16 = vector.broadcast %15 : vector<8x16x1xf32> to vector<8x16x16xf32>
    %17 = arith.subf %13, %16 : vector<8x16x16xf32>
    %18 = math.exp %17 : vector<8x16x16xf32>
    %cst_7 = arith.constant dense<0.000000e+00> : vector<8x16xf32>
    %19 = vector.multi_reduction <add>, %18, %cst_7 [2] : vector<8x16x16xf32> to vector<8x16xf32>
    %20 = vector.shape_cast %19 : vector<8x16xf32> to vector<8x16x1xf32>
    %21 = tpu.reciprocal %20 {approx = true} : vector<8x16x1xf32> -> vector<8x16x1xf32>
    %22 = arith.truncf %18 : vector<8x16x16xf32> to vector<8x16x16xbf16>
    "tpu.trace_start"() <{level = 10 : i32, message = "wts,wsd->wtd"}> : () -> ()
    %cst_8 = arith.constant dense<0.000000e+00> : vector<8x16x8xf32>
    %23 = tpu.matmul %22, %5, %cst_8 {dimension_numbers = #tpu.dot_dimension_numbers<[2], [1], [1], [2], [0, 0, 0, 1, 1, 2], [0], [0]>} : vector<8x16x16xbf16>, vector<8x16x8xbf16>, vector<8x16x8xf32> -> vector<8x16x8xf32>
    "tpu.trace_stop"() : () -> ()
    %24 = vector.broadcast %21 : vector<8x16x1xf32> to vector<8x16x8xf32>
    %25 = arith.mulf %23, %24 : vector<8x16x8xf32>
    %26 = arith.truncf %25 : vector<8x16x8xf32> to vector<8x16x8xbf16>
    %c0_9 = arith.constant 0 : index
    %c0_10 = arith.constant 0 : index
    %c0_11 = arith.constant 0 : index
    %27 = vector.load %arg3[%c0_9, %c0_10, %c0_11] : memref<8x16x16xbf16, #tpu.memory_space<vmem>>, vector<8x16x8xbf16>
    tpu.vector_store %arg3[%c0_9, %c0_10, %c0_11], %26 {strides = array<i32>} : memref<8x16x16xbf16, #tpu.memory_space<vmem>>, vector<8x16x8xbf16>,
    %28 = vector.extract_strided_slice %0 {offsets = [0, 0, 8], sizes = [8, 16, 8], strides = [1, 1, 1]} : vector<8x16x128xbf16> to vector<8x16x8xbf16>
    %29 = vector.extract_strided_slice %0 {offsets = [0, 0, 24], sizes = [8, 16, 8], strides = [1, 1, 1]} : vector<8x16x128xbf16> to vector<8x16x8xbf16>
    %30 = vector.extract_strided_slice %0 {offsets = [0, 0, 40], sizes = [8, 16, 8], strides = [1, 1, 1]} : vector<8x16x128xbf16> to vector<8x16x8xbf16>
    "tpu.trace_start"() <{level = 10 : i32, message = "wtd,wsd->wts"}> : () -> ()
    %cst_12 = arith.constant dense<0.000000e+00> : vector<8x16x16xf32>
    %31 = tpu.matmul %28, %29, %cst_12 {dimension_numbers = #tpu.dot_dimension_numbers<[2], [2], [1], [1], [0, 0, 0, 1, 1, 1], [0], [0]>} : vector<8x16x8xbf16>, vector<8x16x8xbf16>, vector<8x16x16xf32> -> vector<8x16x16xf32>
    "tpu.trace_stop"() : () -> ()
    %cst_13 = arith.constant 0.353553385 : f32
    %32 = vector.broadcast %cst_13 : f32 to vector<8x16x16xf32>
    %33 = arith.mulf %31, %32 : vector<8x16x16xf32>
    %34 = vector.extract_strided_slice %2 {offsets = [1, 0, 0], sizes = [1, 16, 16], strides = [1, 1, 1]} : vector<2x16x16xf32> to vector<1x16x16xf32>
    %35 = vector.shape_cast %34 : vector<1x16x16xf32> to vector<16x16xf32>
    %36 = vector.shape_cast %35 : vector<16x16xf32> to vector<1x16x16xf32>
    %37 = vector.broadcast %36 : vector<1x16x16xf32> to vector<8x16x16xf32>
    %38 = arith.addf %33, %37 : vector<8x16x16xf32>
    %cst_14 = arith.constant dense<0xFF800000> : vector<8x16xf32>
    %39 = vector.multi_reduction <maximumf>, %38, %cst_14 [2] : vector<8x16x16xf32> to vector<8x16xf32>
    %40 = vector.shape_cast %39 : vector<8x16xf32> to vector<8x16x1xf32>
    %41 = vector.broadcast %40 : vector<8x16x1xf32> to vector<8x16x16xf32>
    %42 = arith.subf %38, %41 : vector<8x16x16xf32>
    %43 = math.exp %42 : vector<8x16x16xf32>
    %cst_15 = arith.constant dense<0.000000e+00> : vector<8x16xf32>
    %44 = vector.multi_reduction <add>, %43, %cst_15 [2] : vector<8x16x16xf32> to vector<8x16xf32>
    %45 = vector.shape_cast %44 : vector<8x16xf32> to vector<8x16x1xf32>
    %46 = tpu.reciprocal %45 {approx = true} : vector<8x16x1xf32> -> vector<8x16x1xf32>
    %47 = arith.truncf %43 : vector<8x16x16xf32> to vector<8x16x16xbf16>
    "tpu.trace_start"() <{level = 10 : i32, message = "wts,wsd->wtd"}> : () -> ()
    %cst_16 = arith.constant dense<0.000000e+00> : vector<8x16x8xf32>
    %48 = tpu.matmul %47, %30, %cst_16 {dimension_numbers = #tpu.dot_dimension_numbers<[2], [1], [1], [2], [0, 0, 0, 1, 1, 2], [0], [0]>} : vector<8x16x16xbf16>, vector<8x16x8xbf16>, vector<8x16x8xf32> -> vector<8x16x8xf32>
    "tpu.trace_stop"() : () -> ()
    %49 = vector.broadcast %46 : vector<8x16x1xf32> to vector<8x16x8xf32>
    %50 = arith.mulf %48, %49 : vector<8x16x8xf32>
    %51 = arith.truncf %50 : vector<8x16x8xf32> to vector<8x16x8xbf16>
    %c0_17 = arith.constant 0 : index
    %c0_18 = arith.constant 0 : index
    %c8 = arith.constant 8 : index
    %52 = vector.load %arg3[%c0_17, %c0_18, %c8] : memref<8x16x16xbf16, #tpu.memory_space<vmem>>, vector<8x16x8xbf16>
    tpu.vector_store %arg3[%c0_17, %c0_18, %c8], %51 {strides = array<i32>} : memref<8x16x16xbf16, #tpu.memory_space<vmem>>, vector<8x16x8xbf16>,
    return
  }
  func.func @transform_0(%arg0: i32) -> (i32, i32, i32) {
    %c0_i32 = arith.constant 0 : i32
    %c0_i32_0 = arith.constant 0 : i32
    %c0_i32_1 = arith.constant 0 : i32
    return %arg0, %c0_i32, %c0_i32_0 : i32, i32, i32
  }
  func.func @transform_1(%arg0: i32) -> (i32, i32, i32) {
    %c0_i32 = arith.constant 0 : i32
    %c0_i32_0 = arith.constant 0 : i32
    %c0_i32_1 = arith.constant 0 : i32
    %c0_i32_2 = arith.constant 0 : i32
    return %c0_i32, %c0_i32_0, %c0_i32_1 : i32, i32, i32
  }
  func.func @transform_2(%arg0: i32) -> (i32, i32, i32) {
    %c0_i32 = arith.constant 0 : i32
    %c0_i32_0 = arith.constant 0 : i32
    %c0_i32_1 = arith.constant 0 : i32
    return %arg0, %c0_i32, %c0_i32_0 : i32, i32, i32
  }
}

module attributes {stable_mosaic.version = 11 : i64} {
  func.func @_linear_kernel(%arg0: i32, %arg1: i32, %arg2: memref<128x16xf32, #tpu.memory_space<vmem>>, %arg3: memref<16x128xbf16, #tpu.memory_space<vmem>>, %arg4: memref<1x128xf32, #tpu.memory_space<vmem>>, %arg5: memref<1x16xf32, #tpu.memory_space<vmem>>, %arg6: memref<1x16xf32, #tpu.memory_space<vmem>>, %arg7: memref<128x128xbf16, #tpu.memory_space<vmem>>, %arg8: memref<128x16xbf16, #tpu.memory_space<vmem>>) attributes {dimension_semantics = [#tpu.dimension_semantics<parallel>, #tpu.dimension_semantics<arbitrary>], iteration_bounds = array<i64: 1, 1>, scalar_prefetch = 0 : i64, scratch_operands = 1 : i64, tpu.core_type = #tpu.core_type<tc>, window_params = [{transform_indices = @transform_0, window_bounds = array<i64: 128, 16>}, {transform_indices = @transform_1, window_bounds = array<i64: 16, 128>}, {transform_indices = @transform_2, window_bounds = array<i64: 1, 128>}, {pipeline_mode = #tpu.pipeline_mode<synchronous>, transform_indices = @transform_3, window_bounds = array<i64: 1, 16>}, {pipeline_mode = #tpu.pipeline_mode<synchronous>, transform_indices = @transform_4, window_bounds = array<i64: 1, 16>}, {transform_indices = @transform_5, window_bounds = array<i64: 128, 128>}]} {
    %c0_i32 = arith.constant 0 : i32
    %0 = arith.cmpi eq, %arg1, %c0_i32 : i32
    %1 = arith.extui %0 : i1 to i32
    %c0_i32_0 = arith.constant 0 : i32
    %2 = arith.cmpi ne, %1, %c0_i32_0 : i32
    scf.if %2 {
      %c0_12 = arith.constant 0 : index
      %c0_13 = arith.constant 0 : index
      %24 = vector.load %arg2[%c0_12, %c0_13] : memref<128x16xf32, #tpu.memory_space<vmem>>, vector<128x16xf32>
      %cst_14 = arith.constant dense<0.000000e+00> : vector<128xf32>
      %25 = vector.multi_reduction <add>, %24, %cst_14 [1] : vector<128x16xf32> to vector<128xf32>
      %26 = vector.shape_cast %25 : vector<128xf32> to vector<128x1xf32>
      %cst_15 = arith.constant 1.600000e+01 : f32
      %27 = vector.broadcast %cst_15 : f32 to vector<128x1xf32>
      %28 = arith.divf %26, %27 : vector<128x1xf32>
      %29 = vector.broadcast %28 : vector<128x1xf32> to vector<128x16xf32>
      %30 = arith.subf %24, %29 : vector<128x16xf32>
      %31 = arith.mulf %30, %30 : vector<128x16xf32>
      %cst_16 = arith.constant dense<0.000000e+00> : vector<128xf32>
      %32 = vector.multi_reduction <add>, %31, %cst_16 [1] : vector<128x16xf32> to vector<128xf32>
      %33 = vector.shape_cast %32 : vector<128xf32> to vector<128x1xf32>
      %cst_17 = arith.constant 1.600000e+01 : f32
      %34 = vector.broadcast %cst_17 : f32 to vector<128x1xf32>
      %35 = arith.divf %33, %34 : vector<128x1xf32>
      %cst_18 = arith.constant 9.99999974E-6 : f32
      %36 = vector.broadcast %cst_18 : f32 to vector<128x1xf32>
      %37 = arith.addf %35, %36 : vector<128x1xf32>
      %38 = math.rsqrt %37 : vector<128x1xf32>
      %39 = vector.broadcast %38 : vector<128x1xf32> to vector<128x16xf32>
      %40 = arith.mulf %30, %39 : vector<128x16xf32>
      %c0_19 = arith.constant 0 : index
      %c0_20 = arith.constant 0 : index
      %41 = vector.load %arg5[%c0_19, %c0_20] : memref<1x16xf32, #tpu.memory_space<vmem>>, vector<1x16xf32>
      %42 = vector.broadcast %41 : vector<1x16xf32> to vector<128x16xf32>
      %43 = arith.mulf %40, %42 : vector<128x16xf32>
      %c0_21 = arith.constant 0 : index
      %c0_22 = arith.constant 0 : index
      %44 = vector.load %arg6[%c0_21, %c0_22] : memref<1x16xf32, #tpu.memory_space<vmem>>, vector<1x16xf32>
      %45 = vector.broadcast %44 : vector<1x16xf32> to vector<128x16xf32>
      %46 = arith.addf %43, %45 : vector<128x16xf32>
      %47 = arith.truncf %46 : vector<128x16xf32> to vector<128x16xbf16>
      %c0_23 = arith.constant 0 : index
      %c0_24 = arith.constant 0 : index
      %48 = vector.load %arg8[%c0_23, %c0_24] : memref<128x16xbf16, #tpu.memory_space<vmem>>, vector<128x16xbf16>
      tpu.vector_store %arg8[%c0_23, %c0_24], %47 {strides = array<i32>} : memref<128x16xbf16, #tpu.memory_space<vmem>>, vector<128x16xbf16>,
    } else {
    }
    %c0 = arith.constant 0 : index
    %c0_1 = arith.constant 0 : index
    %3 = vector.load %arg8[%c0, %c0_1] : memref<128x16xbf16, #tpu.memory_space<vmem>>, vector<128x16xbf16>
    %c0_2 = arith.constant 0 : index
    %c0_3 = arith.constant 0 : index
    %4 = vector.load %arg3[%c0_2, %c0_3] : memref<16x128xbf16, #tpu.memory_space<vmem>>, vector<16x128xbf16>
    %cst = arith.constant dense<0.000000e+00> : vector<128x128xf32>
    %5 = tpu.matmul %3, %4, %cst {dimension_numbers = #tpu.dot_dimension_numbers<[1], [0], [0], [1], [0, 0, 1, 1], [], []>} : vector<128x16xbf16>, vector<16x128xbf16>, vector<128x128xf32> -> vector<128x128xf32>
    %c0_4 = arith.constant 0 : index
    %c0_5 = arith.constant 0 : index
    %6 = vector.load %arg4[%c0_4, %c0_5] : memref<1x128xf32, #tpu.memory_space<vmem>>, vector<1x128xf32>
    %7 = vector.broadcast %6 : vector<1x128xf32> to vector<128x128xf32>
    %8 = arith.addf %5, %7 : vector<128x128xf32>
    %9 = arith.mulf %8, %8 : vector<128x128xf32>
    %10 = arith.mulf %8, %9 : vector<128x128xf32>
    %cst_6 = arith.constant 4.471500e-02 : f32
    %11 = vector.broadcast %cst_6 : f32 to vector<128x128xf32>
    %12 = arith.mulf %11, %10 : vector<128x128xf32>
    %13 = arith.addf %8, %12 : vector<128x128xf32>
    %cst_7 = arith.constant 0.797884583 : f32
    %14 = vector.broadcast %cst_7 : f32 to vector<128x128xf32>
    %15 = arith.mulf %14, %13 : vector<128x128xf32>
    %16 = math.tanh %15 : vector<128x128xf32>
    %cst_8 = arith.constant 1.000000e+00 : f32
    %17 = vector.broadcast %cst_8 : f32 to vector<128x128xf32>
    %18 = arith.addf %17, %16 : vector<128x128xf32>
    %cst_9 = arith.constant 5.000000e-01 : f32
    %19 = vector.broadcast %cst_9 : f32 to vector<128x128xf32>
    %20 = arith.mulf %19, %18 : vector<128x128xf32>
    %21 = arith.mulf %8, %20 : vector<128x128xf32>
    %22 = arith.truncf %21 : vector<128x128xf32> to vector<128x128xbf16>
    %c0_10 = arith.constant 0 : index
    %c0_11 = arith.constant 0 : index
    %23 = vector.load %arg7[%c0_10, %c0_11] : memref<128x128xbf16, #tpu.memory_space<vmem>>, vector<128x128xbf16>
    tpu.vector_store %arg7[%c0_10, %c0_11], %22 {strides = array<i32>} : memref<128x128xbf16, #tpu.memory_space<vmem>>, vector<128x128xbf16>,
    return
  }
  func.func @transform_0(%arg0: i32, %arg1: i32) -> (i32, i32) {
    %c0_i32 = arith.constant 0 : i32
    %c0_i32_0 = arith.constant 0 : i32
    return %arg0, %c0_i32 : i32, i32
  }
  func.func @transform_1(%arg0: i32, %arg1: i32) -> (i32, i32) {
    %c0_i32 = arith.constant 0 : i32
    %c0_i32_0 = arith.constant 0 : i32
    return %c0_i32, %arg1 : i32, i32
  }
  func.func @transform_2(%arg0: i32, %arg1: i32) -> (i32, i32) {
    %c0_i32 = arith.constant 0 : i32
    %c0_i32_0 = arith.constant 0 : i32
    return %c0_i32, %arg1 : i32, i32
  }
  func.func @transform_3(%arg0: i32, %arg1: i32) -> (i32, i32) {
    %c0_i32 = arith.constant 0 : i32
    %c0_i32_0 = arith.constant 0 : i32
    %c0_i32_1 = arith.constant 0 : i32
    return %c0_i32, %c0_i32_0 : i32, i32
  }
  func.func @transform_4(%arg0: i32, %arg1: i32) -> (i32, i32) {
    %c0_i32 = arith.constant 0 : i32
    %c0_i32_0 = arith.constant 0 : i32
    %c0_i32_1 = arith.constant 0 : i32
    return %c0_i32, %c0_i32_0 : i32, i32
  }
  func.func @transform_5(%arg0: i32, %arg1: i32) -> (i32, i32) {
    %c0_i32 = arith.constant 0 : i32
    return %arg0, %arg1 : i32, i32
  }
}

module attributes {stable_mosaic.version = 11 : i64} {
  func.func @_linear_kernel(%arg0: i32, %arg1: i32, %arg2: memref<128x128xbf16, #tpu.memory_space<vmem>>, %arg3: memref<128x16xbf16, #tpu.memory_space<vmem>>, %arg4: memref<1x16xf32, #tpu.memory_space<vmem>>, %arg5: memref<128x16xf32, #tpu.memory_space<vmem>>, %arg6: memref<128x16xf32, #tpu.memory_space<vmem>>) attributes {dimension_semantics = [#tpu.dimension_semantics<parallel>, #tpu.dimension_semantics<parallel>], iteration_bounds = array<i64: 1, 1>, scalar_prefetch = 0 : i64, scratch_operands = 0 : i64, tpu.core_type = #tpu.core_type<tc>, window_params = [{transform_indices = @transform_0, window_bounds = array<i64: 128, 128>}, {transform_indices = @transform_1, window_bounds = array<i64: 128, 16>}, {transform_indices = @transform_2, window_bounds = array<i64: 1, 16>}, {transform_indices = @transform_3, window_bounds = array<i64: 128, 16>}, {transform_indices = @transform_4, window_bounds = array<i64: 128, 16>}]} {
    %c0 = arith.constant 0 : index
    %c0_0 = arith.constant 0 : index
    %0 = vector.load %arg2[%c0, %c0_0] : memref<128x128xbf16, #tpu.memory_space<vmem>>, vector<128x128xbf16>
    %c0_1 = arith.constant 0 : index
    %c0_2 = arith.constant 0 : index
    %1 = vector.load %arg3[%c0_1, %c0_2] : memref<128x16xbf16, #tpu.memory_space<vmem>>, vector<128x16xbf16>
    %cst = arith.constant dense<0.000000e+00> : vector<128x16xf32>
    %2 = tpu.matmul %0, %1, %cst {dimension_numbers = #tpu.dot_dimension_numbers<[1], [0], [0], [1], [0, 0, 1, 1], [], []>} : vector<128x128xbf16>, vector<128x16xbf16>, vector<128x16xf32> -> vector<128x16xf32>
    %c0_3 = arith.constant 0 : index
    %c0_4 = arith.constant 0 : index
    %3 = vector.load %arg4[%c0_3, %c0_4] : memref<1x16xf32, #tpu.memory_space<vmem>>, vector<1x16xf32>
    %4 = vector.broadcast %3 : vector<1x16xf32> to vector<128x16xf32>
    %5 = arith.addf %2, %4 : vector<128x16xf32>
    %c0_5 = arith.constant 0 : index
    %c0_6 = arith.constant 0 : index
    %6 = vector.load %arg5[%c0_5, %c0_6] : memref<128x16xf32, #tpu.memory_space<vmem>>, vector<128x16xf32>
    %7 = arith.addf %5, %6 : vector<128x16xf32>
    %c0_7 = arith.constant 0 : index
    %c0_8 = arith.constant 0 : index
    %8 = vector.load %arg6[%c0_7, %c0_8] : memref<128x16xf32, #tpu.memory_space<vmem>>, vector<128x16xf32>
    tpu.vector_store %arg6[%c0_7, %c0_8], %7 {strides = array<i32>} : memref<128x16xf32, #tpu.memory_space<vmem>>, vector<128x16xf32>,
    return
  }
  func.func @transform_0(%arg0: i32, %arg1: i32) -> (i32, i32) {
    %c0_i32 = arith.constant 0 : i32
    %c0_i32_0 = arith.constant 0 : i32
    return %arg0, %c0_i32 : i32, i32
  }
  func.func @transform_1(%arg0: i32, %arg1: i32) -> (i32, i32) {
    %c0_i32 = arith.constant 0 : i32
    %c0_i32_0 = arith.constant 0 : i32
    return %c0_i32, %arg1 : i32, i32
  }
  func.func @transform_2(%arg0: i32, %arg1: i32) -> (i32, i32) {
    %c0_i32 = arith.constant 0 : i32
    %c0_i32_0 = arith.constant 0 : i32
    return %c0_i32, %arg1 : i32, i32
  }
  func.func @transform_3(%arg0: i32, %arg1: i32) -> (i32, i32) {
    %c0_i32 = arith.constant 0 : i32
    return %arg0, %arg1 : i32, i32
  }
  func.func @transform_4(%arg0: i32, %arg1: i32) -> (i32, i32) {
    %c0_i32 = arith.constant 0 : i32
    return %arg0, %arg1 : i32, i32
  }
}

module attributes {stable_mosaic.version = 11 : i64} {
  func.func @_window_attn_kernel(%arg0: i32, %arg1: memref<4x16x128xbf16, #tpu.memory_space<vmem>>, %arg2: memref<2x16x16xbf16, #tpu.memory_space<vmem>>, %arg3: memref<4x16x16xbf16, #tpu.memory_space<vmem>>, %arg4: memref<4x16x16xbf16, #tpu.memory_space<vmem>>) attributes {dimension_semantics = [#tpu.dimension_semantics<parallel>], iteration_bounds = array<i64: 2>, scalar_prefetch = 0 : i64, scratch_operands = 0 : i64, tpu.core_type = #tpu.core_type<tc>, window_params = [{transform_indices = @transform_0, window_bounds = array<i64: 4, 16, 128>}, {pipeline_mode = #tpu.pipeline_mode<synchronous>, transform_indices = @transform_1, window_bounds = array<i64: 2, 16, 16>}, {transform_indices = @transform_2, window_bounds = array<i64: 4, 16, 16>}, {transform_indices = @transform_3, window_bounds = array<i64: 4, 16, 16>}]} {
    %c0 = arith.constant 0 : index
    %c0_0 = arith.constant 0 : index
    %c0_1 = arith.constant 0 : index
    %0 = vector.load %arg1[%c0, %c0_0, %c0_1] : memref<4x16x128xbf16, #tpu.memory_space<vmem>>, vector<4x16x128xbf16>
    %c0_2 = arith.constant 0 : index
    %c0_3 = arith.constant 0 : index
    %c0_4 = arith.constant 0 : index
    %1 = vector.load %arg2[%c0_2, %c0_3, %c0_4] : memref<2x16x16xbf16, #tpu.memory_space<vmem>>, vector<2x16x16xbf16>
    %2 = arith.extf %1 : vector<2x16x16xbf16> to vector<2x16x16xf32>
    %c0_5 = arith.constant 0 : index
    %c0_6 = arith.constant 0 : index
    %c0_7 = arith.constant 0 : index
    %3 = vector.load %arg3[%c0_5, %c0_6, %c0_7] : memref<4x16x16xbf16, #tpu.memory_space<vmem>>, vector<4x16x16xbf16>
    %4 = arith.extf %3 : vector<4x16x16xbf16> to vector<4x16x16xf32>
    %5 = vector.extract_strided_slice %0 {offsets = [0, 0, 0], sizes = [4, 16, 8], strides = [1, 1, 1]} : vector<4x16x128xbf16> to vector<4x16x8xbf16>
    %6 = vector.extract_strided_slice %0 {offsets = [0, 0, 16], sizes = [4, 16, 8], strides = [1, 1, 1]} : vector<4x16x128xbf16> to vector<4x16x8xbf16>
    %7 = vector.extract_strided_slice %0 {offsets = [0, 0, 32], sizes = [4, 16, 8], strides = [1, 1, 1]} : vector<4x16x128xbf16> to vector<4x16x8xbf16>
    "tpu.trace_start"() <{level = 10 : i32, message = "wtd,wsd->wts"}> : () -> ()
    %cst = arith.constant dense<0.000000e+00> : vector<4x16x16xf32>
    %8 = tpu.matmul %5, %6, %cst {dimension_numbers = #tpu.dot_dimension_numbers<[2], [2], [1], [1], [0, 0, 0, 1, 1, 1], [0], [0]>} : vector<4x16x8xbf16>, vector<4x16x8xbf16>, vector<4x16x16xf32> -> vector<4x16x16xf32>
    "tpu.trace_stop"() : () -> ()
    %cst_8 = arith.constant 0.353553385 : f32
    %9 = vector.broadcast %cst_8 : f32 to vector<4x16x16xf32>
    %10 = arith.mulf %8, %9 : vector<4x16x16xf32>
    %11 = vector.extract_strided_slice %2 {offsets = [0, 0, 0], sizes = [1, 16, 16], strides = [1, 1, 1]} : vector<2x16x16xf32> to vector<1x16x16xf32>
    %12 = vector.shape_cast %11 : vector<1x16x16xf32> to vector<16x16xf32>
    %13 = vector.shape_cast %12 : vector<16x16xf32> to vector<1x16x16xf32>
    %14 = vector.broadcast %13 : vector<1x16x16xf32> to vector<4x16x16xf32>
    %15 = arith.addf %10, %14 : vector<4x16x16xf32>
    %16 = arith.addf %15, %4 : vector<4x16x16xf32>
    %cst_9 = arith.constant dense<0xFF800000> : vector<4x16xf32>
    %17 = vector.multi_reduction <maximumf>, %16, %cst_9 [2] : vector<4x16x16xf32> to vector<4x16xf32>
    %18 = vector.shape_cast %17 : vector<4x16xf32> to vector<4x16x1xf32>
    %19 = vector.broadcast %18 : vector<4x16x1xf32> to vector<4x16x16xf32>
    %20 = arith.subf %16, %19 : vector<4x16x16xf32>
    %21 = math.exp %20 : vector<4x16x16xf32>
    %cst_10 = arith.constant dense<0.000000e+00> : vector<4x16xf32>
    %22 = vector.multi_reduction <add>, %21, %cst_10 [2] : vector<4x16x16xf32> to vector<4x16xf32>
    %23 = vector.shape_cast %22 : vector<4x16xf32> to vector<4x16x1xf32>
    %24 = tpu.reciprocal %23 {approx = true} : vector<4x16x1xf32> -> vector<4x16x1xf32>
    %25 = arith.truncf %21 : vector<4x16x16xf32> to vector<4x16x16xbf16>
    "tpu.trace_start"() <{level = 10 : i32, message = "wts,wsd->wtd"}> : () -> ()
    %cst_11 = arith.constant dense<0.000000e+00> : vector<4x16x8xf32>
    %26 = tpu.matmul %25, %7, %cst_11 {dimension_numbers = #tpu.dot_dimension_numbers<[2], [1], [1], [2], [0, 0, 0, 1, 1, 2], [0], [0]>} : vector<4x16x16xbf16>, vector<4x16x8xbf16>, vector<4x16x8xf32> -> vector<4x16x8xf32>
    "tpu.trace_stop"() : () -> ()
    %27 = vector.broadcast %24 : vector<4x16x1xf32> to vector<4x16x8xf32>
    %28 = arith.mulf %26, %27 : vector<4x16x8xf32>
    %29 = arith.truncf %28 : vector<4x16x8xf32> to vector<4x16x8xbf16>
    %c0_12 = arith.constant 0 : index
    %c0_13 = arith.constant 0 : index
    %c0_14 = arith.constant 0 : index
    %30 = vector.load %arg4[%c0_12, %c0_13, %c0_14] : memref<4x16x16xbf16, #tpu.memory_space<vmem>>, vector<4x16x8xbf16>
    tpu.vector_store %arg4[%c0_12, %c0_13, %c0_14], %29 {strides = array<i32>} : memref<4x16x16xbf16, #tpu.memory_space<vmem>>, vector<4x16x8xbf16>,
    %31 = vector.extract_strided_slice %0 {offsets = [0, 0, 8], sizes = [4, 16, 8], strides = [1, 1, 1]} : vector<4x16x128xbf16> to vector<4x16x8xbf16>
    %32 = vector.extract_strided_slice %0 {offsets = [0, 0, 24], sizes = [4, 16, 8], strides = [1, 1, 1]} : vector<4x16x128xbf16> to vector<4x16x8xbf16>
    %33 = vector.extract_strided_slice %0 {offsets = [0, 0, 40], sizes = [4, 16, 8], strides = [1, 1, 1]} : vector<4x16x128xbf16> to vector<4x16x8xbf16>
    "tpu.trace_start"() <{level = 10 : i32, message = "wtd,wsd->wts"}> : () -> ()
    %cst_15 = arith.constant dense<0.000000e+00> : vector<4x16x16xf32>
    %34 = tpu.matmul %31, %32, %cst_15 {dimension_numbers = #tpu.dot_dimension_numbers<[2], [2], [1], [1], [0, 0, 0, 1, 1, 1], [0], [0]>} : vector<4x16x8xbf16>, vector<4x16x8xbf16>, vector<4x16x16xf32> -> vector<4x16x16xf32>
    "tpu.trace_stop"() : () -> ()
    %cst_16 = arith.constant 0.353553385 : f32
    %35 = vector.broadcast %cst_16 : f32 to vector<4x16x16xf32>
    %36 = arith.mulf %34, %35 : vector<4x16x16xf32>
    %37 = vector.extract_strided_slice %2 {offsets = [1, 0, 0], sizes = [1, 16, 16], strides = [1, 1, 1]} : vector<2x16x16xf32> to vector<1x16x16xf32>
    %38 = vector.shape_cast %37 : vector<1x16x16xf32> to vector<16x16xf32>
    %39 = vector.shape_cast %38 : vector<16x16xf32> to vector<1x16x16xf32>
    %40 = vector.broadcast %39 : vector<1x16x16xf32> to vector<4x16x16xf32>
    %41 = arith.addf %36, %40 : vector<4x16x16xf32>
    %42 = arith.addf %41, %4 : vector<4x16x16xf32>
    %cst_17 = arith.constant dense<0xFF800000> : vector<4x16xf32>
    %43 = vector.multi_reduction <maximumf>, %42, %cst_17 [2] : vector<4x16x16xf32> to vector<4x16xf32>
    %44 = vector.shape_cast %43 : vector<4x16xf32> to vector<4x16x1xf32>
    %45 = vector.broadcast %44 : vector<4x16x1xf32> to vector<4x16x16xf32>
    %46 = arith.subf %42, %45 : vector<4x16x16xf32>
    %47 = math.exp %46 : vector<4x16x16xf32>
    %cst_18 = arith.constant dense<0.000000e+00> : vector<4x16xf32>
    %48 = vector.multi_reduction <add>, %47, %cst_18 [2] : vector<4x16x16xf32> to vector<4x16xf32>
    %49 = vector.shape_cast %48 : vector<4x16xf32> to vector<4x16x1xf32>
    %50 = tpu.reciprocal %49 {approx = true} : vector<4x16x1xf32> -> vector<4x16x1xf32>
    %51 = arith.truncf %47 : vector<4x16x16xf32> to vector<4x16x16xbf16>
    "tpu.trace_start"() <{level = 10 : i32, message = "wts,wsd->wtd"}> : () -> ()
    %cst_19 = arith.constant dense<0.000000e+00> : vector<4x16x8xf32>
    %52 = tpu.matmul %51, %33, %cst_19 {dimension_numbers = #tpu.dot_dimension_numbers<[2], [1], [1], [2], [0, 0, 0, 1, 1, 2], [0], [0]>} : vector<4x16x16xbf16>, vector<4x16x8xbf16>, vector<4x16x8xf32> -> vector<4x16x8xf32>
    "tpu.trace_stop"() : () -> ()
    %53 = vector.broadcast %50 : vector<4x16x1xf32> to vector<4x16x8xf32>
    %54 = arith.mulf %52, %53 : vector<4x16x8xf32>
    %55 = arith.truncf %54 : vector<4x16x8xf32> to vector<4x16x8xbf16>
    %c0_20 = arith.constant 0 : index
    %c0_21 = arith.constant 0 : index
    %c8 = arith.constant 8 : index
    %56 = vector.load %arg4[%c0_20, %c0_21, %c8] : memref<4x16x16xbf16, #tpu.memory_space<vmem>>, vector<4x16x8xbf16>
    tpu.vector_store %arg4[%c0_20, %c0_21, %c8], %55 {strides = array<i32>} : memref<4x16x16xbf16, #tpu.memory_space<vmem>>, vector<4x16x8xbf16>,
    return
  }
  func.func @transform_0(%arg0: i32) -> (i32, i32, i32) {
    %c0_i32 = arith.constant 0 : i32
    %c0_i32_0 = arith.constant 0 : i32
    %c0_i32_1 = arith.constant 0 : i32
    return %arg0, %c0_i32, %c0_i32_0 : i32, i32, i32
  }
  func.func @transform_1(%arg0: i32) -> (i32, i32, i32) {
    %c0_i32 = arith.constant 0 : i32
    %c0_i32_0 = arith.constant 0 : i32
    %c0_i32_1 = arith.constant 0 : i32
    %c0_i32_2 = arith.constant 0 : i32
    return %c0_i32, %c0_i32_0, %c0_i32_1 : i32, i32, i32
  }
  func.func @transform_2(%arg0: i32) -> (i32, i32, i32) {
    %c1_i32 = arith.constant 1 : i32
    %c0_i32 = arith.constant 0 : i32
    %0 = arith.cmpi eq, %c1_i32, %c0_i32 : i32
    %c1_i32_0 = arith.constant 1 : i32
    %1 = arith.select %0, %c1_i32_0, %c1_i32 : i32
    %2 = arith.remsi %arg0, %1 : i32
    %c0_i32_1 = arith.constant 0 : i32
    %3 = arith.cmpi ne, %2, %c0_i32_1 : i32
    %c0_i32_2 = arith.constant 0 : i32
    %4 = arith.cmpi slt, %2, %c0_i32_2 : i32
    %c0_i32_3 = arith.constant 0 : i32
    %5 = arith.cmpi slt, %1, %c0_i32_3 : i32
    %6 = arith.xori %4, %5 : i1
    %7 = arith.andi %6, %3 : i1
    %8 = arith.addi %2, %1 : i32
    %9 = arith.select %7, %8, %2 : i32
    %c0_i32_4 = arith.constant 0 : i32
    %c0_i32_5 = arith.constant 0 : i32
    %c0_i32_6 = arith.constant 0 : i32
    return %9, %c0_i32_4, %c0_i32_5 : i32, i32, i32
  }
  func.func @transform_3(%arg0: i32) -> (i32, i32, i32) {
    %c0_i32 = arith.constant 0 : i32
    %c0_i32_0 = arith.constant 0 : i32
    %c0_i32_1 = arith.constant 0 : i32
    return %arg0, %c0_i32, %c0_i32_0 : i32, i32, i32
  }
}

module attributes {stable_mosaic.version = 11 : i64} {
  func.func @_linear_kernel(%arg0: i32, %arg1: i32, %arg2: memref<32x64xf32, #tpu.memory_space<vmem>>, %arg3: memref<64x32xbf16, #tpu.memory_space<vmem>>, %arg4: memref<1x32xf32, #tpu.memory_space<vmem>>, %arg5: memref<1x64xf32, #tpu.memory_space<vmem>>, %arg6: memref<1x64xf32, #tpu.memory_space<vmem>>, %arg7: memref<32x32xf32, #tpu.memory_space<vmem>>, %arg8: memref<32x64xbf16, #tpu.memory_space<vmem>>) attributes {dimension_semantics = [#tpu.dimension_semantics<parallel>, #tpu.dimension_semantics<arbitrary>], iteration_bounds = array<i64: 1, 1>, scalar_prefetch = 0 : i64, scratch_operands = 1 : i64, tpu.core_type = #tpu.core_type<tc>, window_params = [{transform_indices = @transform_0, window_bounds = array<i64: 32, 64>}, {transform_indices = @transform_1, window_bounds = array<i64: 64, 32>}, {transform_indices = @transform_2, window_bounds = array<i64: 1, 32>}, {pipeline_mode = #tpu.pipeline_mode<synchronous>, transform_indices = @transform_3, window_bounds = array<i64: 1, 64>}, {pipeline_mode = #tpu.pipeline_mode<synchronous>, transform_indices = @transform_4, window_bounds = array<i64: 1, 64>}, {transform_indices = @transform_5, window_bounds = array<i64: 32, 32>}]} {
    %c0_i32 = arith.constant 0 : i32
    %0 = arith.cmpi eq, %arg1, %c0_i32 : i32
    %1 = arith.extui %0 : i1 to i32
    %c0_i32_0 = arith.constant 0 : i32
    %2 = arith.cmpi ne, %1, %c0_i32_0 : i32
    scf.if %2 {
      %c0_8 = arith.constant 0 : index
      %c0_9 = arith.constant 0 : index
      %10 = vector.load %arg2[%c0_8, %c0_9] : memref<32x64xf32, #tpu.memory_space<vmem>>, vector<32x64xf32>
      %cst_10 = arith.constant dense<0.000000e+00> : vector<32xf32>
      %11 = vector.multi_reduction <add>, %10, %cst_10 [1] : vector<32x64xf32> to vector<32xf32>
      %12 = vector.shape_cast %11 : vector<32xf32> to vector<32x1xf32>
      %cst_11 = arith.constant 6.400000e+01 : f32
      %13 = vector.broadcast %cst_11 : f32 to vector<32x1xf32>
      %14 = arith.divf %12, %13 : vector<32x1xf32>
      %15 = vector.broadcast %14 : vector<32x1xf32> to vector<32x64xf32>
      %16 = arith.subf %10, %15 : vector<32x64xf32>
      %17 = arith.mulf %16, %16 : vector<32x64xf32>
      %cst_12 = arith.constant dense<0.000000e+00> : vector<32xf32>
      %18 = vector.multi_reduction <add>, %17, %cst_12 [1] : vector<32x64xf32> to vector<32xf32>
      %19 = vector.shape_cast %18 : vector<32xf32> to vector<32x1xf32>
      %cst_13 = arith.constant 6.400000e+01 : f32
      %20 = vector.broadcast %cst_13 : f32 to vector<32x1xf32>
      %21 = arith.divf %19, %20 : vector<32x1xf32>
      %cst_14 = arith.constant 9.99999974E-6 : f32
      %22 = vector.broadcast %cst_14 : f32 to vector<32x1xf32>
      %23 = arith.addf %21, %22 : vector<32x1xf32>
      %24 = math.rsqrt %23 : vector<32x1xf32>
      %25 = vector.broadcast %24 : vector<32x1xf32> to vector<32x64xf32>
      %26 = arith.mulf %16, %25 : vector<32x64xf32>
      %c0_15 = arith.constant 0 : index
      %c0_16 = arith.constant 0 : index
      %27 = vector.load %arg5[%c0_15, %c0_16] : memref<1x64xf32, #tpu.memory_space<vmem>>, vector<1x64xf32>
      %28 = vector.broadcast %27 : vector<1x64xf32> to vector<32x64xf32>
      %29 = arith.mulf %26, %28 : vector<32x64xf32>
      %c0_17 = arith.constant 0 : index
      %c0_18 = arith.constant 0 : index
      %30 = vector.load %arg6[%c0_17, %c0_18] : memref<1x64xf32, #tpu.memory_space<vmem>>, vector<1x64xf32>
      %31 = vector.broadcast %30 : vector<1x64xf32> to vector<32x64xf32>
      %32 = arith.addf %29, %31 : vector<32x64xf32>
      %33 = arith.truncf %32 : vector<32x64xf32> to vector<32x64xbf16>
      %c0_19 = arith.constant 0 : index
      %c0_20 = arith.constant 0 : index
      %34 = vector.load %arg8[%c0_19, %c0_20] : memref<32x64xbf16, #tpu.memory_space<vmem>>, vector<32x64xbf16>
      tpu.vector_store %arg8[%c0_19, %c0_20], %33 {strides = array<i32>} : memref<32x64xbf16, #tpu.memory_space<vmem>>, vector<32x64xbf16>,
    } else {
    }
    %c0 = arith.constant 0 : index
    %c0_1 = arith.constant 0 : index
    %3 = vector.load %arg8[%c0, %c0_1] : memref<32x64xbf16, #tpu.memory_space<vmem>>, vector<32x64xbf16>
    %c0_2 = arith.constant 0 : index
    %c0_3 = arith.constant 0 : index
    %4 = vector.load %arg3[%c0_2, %c0_3] : memref<64x32xbf16, #tpu.memory_space<vmem>>, vector<64x32xbf16>
    %cst = arith.constant dense<0.000000e+00> : vector<32x32xf32>
    %5 = tpu.matmul %3, %4, %cst {dimension_numbers = #tpu.dot_dimension_numbers<[1], [0], [0], [1], [0, 0, 1, 1], [], []>} : vector<32x64xbf16>, vector<64x32xbf16>, vector<32x32xf32> -> vector<32x32xf32>
    %c0_4 = arith.constant 0 : index
    %c0_5 = arith.constant 0 : index
    %6 = vector.load %arg4[%c0_4, %c0_5] : memref<1x32xf32, #tpu.memory_space<vmem>>, vector<1x32xf32>
    %7 = vector.broadcast %6 : vector<1x32xf32> to vector<32x32xf32>
    %8 = arith.addf %5, %7 : vector<32x32xf32>
    %c0_6 = arith.constant 0 : index
    %c0_7 = arith.constant 0 : index
    %9 = vector.load %arg7[%c0_6, %c0_7] : memref<32x32xf32, #tpu.memory_space<vmem>>, vector<32x32xf32>
    tpu.vector_store %arg7[%c0_6, %c0_7], %8 {strides = array<i32>} : memref<32x32xf32, #tpu.memory_space<vmem>>, vector<32x32xf32>,
    return
  }
  func.func @transform_0(%arg0: i32, %arg1: i32) -> (i32, i32) {
    %c0_i32 = arith.constant 0 : i32
    %c0_i32_0 = arith.constant 0 : i32
    return %arg0, %c0_i32 : i32, i32
  }
  func.func @transform_1(%arg0: i32, %arg1: i32) -> (i32, i32) {
    %c0_i32 = arith.constant 0 : i32
    %c0_i32_0 = arith.constant 0 : i32
    return %c0_i32, %arg1 : i32, i32
  }
  func.func @transform_2(%arg0: i32, %arg1: i32) -> (i32, i32) {
    %c0_i32 = arith.constant 0 : i32
    %c0_i32_0 = arith.constant 0 : i32
    return %c0_i32, %arg1 : i32, i32
  }
  func.func @transform_3(%arg0: i32, %arg1: i32) -> (i32, i32) {
    %c0_i32 = arith.constant 0 : i32
    %c0_i32_0 = arith.constant 0 : i32
    %c0_i32_1 = arith.constant 0 : i32
    return %c0_i32, %c0_i32_0 : i32, i32
  }
  func.func @transform_4(%arg0: i32, %arg1: i32) -> (i32, i32) {
    %c0_i32 = arith.constant 0 : i32
    %c0_i32_0 = arith.constant 0 : i32
    %c0_i32_1 = arith.constant 0 : i32
    return %c0_i32, %c0_i32_0 : i32, i32
  }
  func.func @transform_5(%arg0: i32, %arg1: i32) -> (i32, i32) {
    %c0_i32 = arith.constant 0 : i32
    return %arg0, %arg1 : i32, i32
  }
}

module attributes {stable_mosaic.version = 11 : i64} {
  func.func @_linear_kernel(%arg0: i32, %arg1: i32, %arg2: memref<32x32xf32, #tpu.memory_space<vmem>>, %arg3: memref<32x128xbf16, #tpu.memory_space<vmem>>, %arg4: memref<1x128xf32, #tpu.memory_space<vmem>>, %arg5: memref<1x32xf32, #tpu.memory_space<vmem>>, %arg6: memref<1x32xf32, #tpu.memory_space<vmem>>, %arg7: memref<32x128xbf16, #tpu.memory_space<vmem>>, %arg8: memref<32x32xbf16, #tpu.memory_space<vmem>>) attributes {dimension_semantics = [#tpu.dimension_semantics<parallel>, #tpu.dimension_semantics<arbitrary>], iteration_bounds = array<i64: 1, 1>, scalar_prefetch = 0 : i64, scratch_operands = 1 : i64, tpu.core_type = #tpu.core_type<tc>, window_params = [{transform_indices = @transform_0, window_bounds = array<i64: 32, 32>}, {transform_indices = @transform_1, window_bounds = array<i64: 32, 128>}, {transform_indices = @transform_2, window_bounds = array<i64: 1, 128>}, {pipeline_mode = #tpu.pipeline_mode<synchronous>, transform_indices = @transform_3, window_bounds = array<i64: 1, 32>}, {pipeline_mode = #tpu.pipeline_mode<synchronous>, transform_indices = @transform_4, window_bounds = array<i64: 1, 32>}, {transform_indices = @transform_5, window_bounds = array<i64: 32, 128>}]} {
    %c0_i32 = arith.constant 0 : i32
    %0 = arith.cmpi eq, %arg1, %c0_i32 : i32
    %1 = arith.extui %0 : i1 to i32
    %c0_i32_0 = arith.constant 0 : i32
    %2 = arith.cmpi ne, %1, %c0_i32_0 : i32
    scf.if %2 {
      %c0_8 = arith.constant 0 : index
      %c0_9 = arith.constant 0 : index
      %11 = vector.load %arg2[%c0_8, %c0_9] : memref<32x32xf32, #tpu.memory_space<vmem>>, vector<32x32xf32>
      %cst_10 = arith.constant dense<0.000000e+00> : vector<32xf32>
      %12 = vector.multi_reduction <add>, %11, %cst_10 [1] : vector<32x32xf32> to vector<32xf32>
      %13 = vector.shape_cast %12 : vector<32xf32> to vector<32x1xf32>
      %cst_11 = arith.constant 3.200000e+01 : f32
      %14 = vector.broadcast %cst_11 : f32 to vector<32x1xf32>
      %15 = arith.divf %13, %14 : vector<32x1xf32>
      %16 = vector.broadcast %15 : vector<32x1xf32> to vector<32x32xf32>
      %17 = arith.subf %11, %16 : vector<32x32xf32>
      %18 = arith.mulf %17, %17 : vector<32x32xf32>
      %cst_12 = arith.constant dense<0.000000e+00> : vector<32xf32>
      %19 = vector.multi_reduction <add>, %18, %cst_12 [1] : vector<32x32xf32> to vector<32xf32>
      %20 = vector.shape_cast %19 : vector<32xf32> to vector<32x1xf32>
      %cst_13 = arith.constant 3.200000e+01 : f32
      %21 = vector.broadcast %cst_13 : f32 to vector<32x1xf32>
      %22 = arith.divf %20, %21 : vector<32x1xf32>
      %cst_14 = arith.constant 9.99999974E-6 : f32
      %23 = vector.broadcast %cst_14 : f32 to vector<32x1xf32>
      %24 = arith.addf %22, %23 : vector<32x1xf32>
      %25 = math.rsqrt %24 : vector<32x1xf32>
      %26 = vector.broadcast %25 : vector<32x1xf32> to vector<32x32xf32>
      %27 = arith.mulf %17, %26 : vector<32x32xf32>
      %c0_15 = arith.constant 0 : index
      %c0_16 = arith.constant 0 : index
      %28 = vector.load %arg5[%c0_15, %c0_16] : memref<1x32xf32, #tpu.memory_space<vmem>>, vector<1x32xf32>
      %29 = vector.broadcast %28 : vector<1x32xf32> to vector<32x32xf32>
      %30 = arith.mulf %27, %29 : vector<32x32xf32>
      %c0_17 = arith.constant 0 : index
      %c0_18 = arith.constant 0 : index
      %31 = vector.load %arg6[%c0_17, %c0_18] : memref<1x32xf32, #tpu.memory_space<vmem>>, vector<1x32xf32>
      %32 = vector.broadcast %31 : vector<1x32xf32> to vector<32x32xf32>
      %33 = arith.addf %30, %32 : vector<32x32xf32>
      %34 = arith.truncf %33 : vector<32x32xf32> to vector<32x32xbf16>
      %c0_19 = arith.constant 0 : index
      %c0_20 = arith.constant 0 : index
      %35 = vector.load %arg8[%c0_19, %c0_20] : memref<32x32xbf16, #tpu.memory_space<vmem>>, vector<32x32xbf16>
      tpu.vector_store %arg8[%c0_19, %c0_20], %34 {strides = array<i32>} : memref<32x32xbf16, #tpu.memory_space<vmem>>, vector<32x32xbf16>,
    } else {
    }
    %c0 = arith.constant 0 : index
    %c0_1 = arith.constant 0 : index
    %3 = vector.load %arg8[%c0, %c0_1] : memref<32x32xbf16, #tpu.memory_space<vmem>>, vector<32x32xbf16>
    %c0_2 = arith.constant 0 : index
    %c0_3 = arith.constant 0 : index
    %4 = vector.load %arg3[%c0_2, %c0_3] : memref<32x128xbf16, #tpu.memory_space<vmem>>, vector<32x128xbf16>
    %cst = arith.constant dense<0.000000e+00> : vector<32x128xf32>
    %5 = tpu.matmul %3, %4, %cst {dimension_numbers = #tpu.dot_dimension_numbers<[1], [0], [0], [1], [0, 0, 1, 1], [], []>} : vector<32x32xbf16>, vector<32x128xbf16>, vector<32x128xf32> -> vector<32x128xf32>
    %c0_4 = arith.constant 0 : index
    %c0_5 = arith.constant 0 : index
    %6 = vector.load %arg4[%c0_4, %c0_5] : memref<1x128xf32, #tpu.memory_space<vmem>>, vector<1x128xf32>
    %7 = vector.broadcast %6 : vector<1x128xf32> to vector<32x128xf32>
    %8 = arith.addf %5, %7 : vector<32x128xf32>
    %9 = arith.truncf %8 : vector<32x128xf32> to vector<32x128xbf16>
    %c0_6 = arith.constant 0 : index
    %c0_7 = arith.constant 0 : index
    %10 = vector.load %arg7[%c0_6, %c0_7] : memref<32x128xbf16, #tpu.memory_space<vmem>>, vector<32x128xbf16>
    tpu.vector_store %arg7[%c0_6, %c0_7], %9 {strides = array<i32>} : memref<32x128xbf16, #tpu.memory_space<vmem>>, vector<32x128xbf16>,
    return
  }
  func.func @transform_0(%arg0: i32, %arg1: i32) -> (i32, i32) {
    %c0_i32 = arith.constant 0 : i32
    %c0_i32_0 = arith.constant 0 : i32
    return %arg0, %c0_i32 : i32, i32
  }
  func.func @transform_1(%arg0: i32, %arg1: i32) -> (i32, i32) {
    %c0_i32 = arith.constant 0 : i32
    %c0_i32_0 = arith.constant 0 : i32
    return %c0_i32, %arg1 : i32, i32
  }
  func.func @transform_2(%arg0: i32, %arg1: i32) -> (i32, i32) {
    %c0_i32 = arith.constant 0 : i32
    %c0_i32_0 = arith.constant 0 : i32
    return %c0_i32, %arg1 : i32, i32
  }
  func.func @transform_3(%arg0: i32, %arg1: i32) -> (i32, i32) {
    %c0_i32 = arith.constant 0 : i32
    %c0_i32_0 = arith.constant 0 : i32
    %c0_i32_1 = arith.constant 0 : i32
    return %c0_i32, %c0_i32_0 : i32, i32
  }
  func.func @transform_4(%arg0: i32, %arg1: i32) -> (i32, i32) {
    %c0_i32 = arith.constant 0 : i32
    %c0_i32_0 = arith.constant 0 : i32
    %c0_i32_1 = arith.constant 0 : i32
    return %c0_i32, %c0_i32_0 : i32, i32
  }
  func.func @transform_5(%arg0: i32, %arg1: i32) -> (i32, i32) {
    %c0_i32 = arith.constant 0 : i32
    return %arg0, %arg1 : i32, i32
  }
}

module attributes {stable_mosaic.version = 11 : i64} {
  func.func @_window_attn_kernel(%arg0: i32, %arg1: memref<2x16x128xbf16, #tpu.memory_space<vmem>>, %arg2: memref<4x16x16xbf16, #tpu.memory_space<vmem>>, %arg3: memref<2x16x32xbf16, #tpu.memory_space<vmem>>) attributes {dimension_semantics = [#tpu.dimension_semantics<parallel>], iteration_bounds = array<i64: 1>, scalar_prefetch = 0 : i64, scratch_operands = 0 : i64, tpu.core_type = #tpu.core_type<tc>, window_params = [{transform_indices = @transform_0, window_bounds = array<i64: 2, 16, 128>}, {pipeline_mode = #tpu.pipeline_mode<synchronous>, transform_indices = @transform_1, window_bounds = array<i64: 4, 16, 16>}, {transform_indices = @transform_2, window_bounds = array<i64: 2, 16, 32>}]} {
    %c0 = arith.constant 0 : index
    %c0_0 = arith.constant 0 : index
    %c0_1 = arith.constant 0 : index
    %0 = vector.load %arg1[%c0, %c0_0, %c0_1] : memref<2x16x128xbf16, #tpu.memory_space<vmem>>, vector<2x16x128xbf16>
    %c0_2 = arith.constant 0 : index
    %c0_3 = arith.constant 0 : index
    %c0_4 = arith.constant 0 : index
    %1 = vector.load %arg2[%c0_2, %c0_3, %c0_4] : memref<4x16x16xbf16, #tpu.memory_space<vmem>>, vector<4x16x16xbf16>
    %2 = arith.extf %1 : vector<4x16x16xbf16> to vector<4x16x16xf32>
    %3 = vector.extract_strided_slice %0 {offsets = [0, 0, 0], sizes = [2, 16, 8], strides = [1, 1, 1]} : vector<2x16x128xbf16> to vector<2x16x8xbf16>
    %4 = vector.extract_strided_slice %0 {offsets = [0, 0, 32], sizes = [2, 16, 8], strides = [1, 1, 1]} : vector<2x16x128xbf16> to vector<2x16x8xbf16>
    %5 = vector.extract_strided_slice %0 {offsets = [0, 0, 64], sizes = [2, 16, 8], strides = [1, 1, 1]} : vector<2x16x128xbf16> to vector<2x16x8xbf16>
    "tpu.trace_start"() <{level = 10 : i32, message = "wtd,wsd->wts"}> : () -> ()
    %cst = arith.constant dense<0.000000e+00> : vector<2x16x16xf32>
    %6 = tpu.matmul %3, %4, %cst {dimension_numbers = #tpu.dot_dimension_numbers<[2], [2], [1], [1], [0, 0, 0, 1, 1, 1], [0], [0]>} : vector<2x16x8xbf16>, vector<2x16x8xbf16>, vector<2x16x16xf32> -> vector<2x16x16xf32>
    "tpu.trace_stop"() : () -> ()
    %cst_5 = arith.constant 0.353553385 : f32
    %7 = vector.broadcast %cst_5 : f32 to vector<2x16x16xf32>
    %8 = arith.mulf %6, %7 : vector<2x16x16xf32>
    %9 = vector.extract_strided_slice %2 {offsets = [0, 0, 0], sizes = [1, 16, 16], strides = [1, 1, 1]} : vector<4x16x16xf32> to vector<1x16x16xf32>
    %10 = vector.shape_cast %9 : vector<1x16x16xf32> to vector<16x16xf32>
    %11 = vector.shape_cast %10 : vector<16x16xf32> to vector<1x16x16xf32>
    %12 = vector.broadcast %11 : vector<1x16x16xf32> to vector<2x16x16xf32>
    %13 = arith.addf %8, %12 : vector<2x16x16xf32>
    %cst_6 = arith.constant dense<0xFF800000> : vector<2x16xf32>
    %14 = vector.multi_reduction <maximumf>, %13, %cst_6 [2] : vector<2x16x16xf32> to vector<2x16xf32>
    %15 = vector.shape_cast %14 : vector<2x16xf32> to vector<2x16x1xf32>
    %16 = vector.broadcast %15 : vector<2x16x1xf32> to vector<2x16x16xf32>
    %17 = arith.subf %13, %16 : vector<2x16x16xf32>
    %18 = math.exp %17 : vector<2x16x16xf32>
    %cst_7 = arith.constant dense<0.000000e+00> : vector<2x16xf32>
    %19 = vector.multi_reduction <add>, %18, %cst_7 [2] : vector<2x16x16xf32> to vector<2x16xf32>
    %20 = vector.shape_cast %19 : vector<2x16xf32> to vector<2x16x1xf32>
    %21 = tpu.reciprocal %20 {approx = true} : vector<2x16x1xf32> -> vector<2x16x1xf32>
    %22 = arith.truncf %18 : vector<2x16x16xf32> to vector<2x16x16xbf16>
    "tpu.trace_start"() <{level = 10 : i32, message = "wts,wsd->wtd"}> : () -> ()
    %cst_8 = arith.constant dense<0.000000e+00> : vector<2x16x8xf32>
    %23 = tpu.matmul %22, %5, %cst_8 {dimension_numbers = #tpu.dot_dimension_numbers<[2], [1], [1], [2], [0, 0, 0, 1, 1, 2], [0], [0]>} : vector<2x16x16xbf16>, vector<2x16x8xbf16>, vector<2x16x8xf32> -> vector<2x16x8xf32>
    "tpu.trace_stop"() : () -> ()
    %24 = vector.broadcast %21 : vector<2x16x1xf32> to vector<2x16x8xf32>
    %25 = arith.mulf %23, %24 : vector<2x16x8xf32>
    %26 = arith.truncf %25 : vector<2x16x8xf32> to vector<2x16x8xbf16>
    %c0_9 = arith.constant 0 : index
    %c0_10 = arith.constant 0 : index
    %c0_11 = arith.constant 0 : index
    %27 = vector.load %arg3[%c0_9, %c0_10, %c0_11] : memref<2x16x32xbf16, #tpu.memory_space<vmem>>, vector<2x16x8xbf16>
    tpu.vector_store %arg3[%c0_9, %c0_10, %c0_11], %26 {strides = array<i32>} : memref<2x16x32xbf16, #tpu.memory_space<vmem>>, vector<2x16x8xbf16>,
    %28 = vector.extract_strided_slice %0 {offsets = [0, 0, 8], sizes = [2, 16, 8], strides = [1, 1, 1]} : vector<2x16x128xbf16> to vector<2x16x8xbf16>
    %29 = vector.extract_strided_slice %0 {offsets = [0, 0, 40], sizes = [2, 16, 8], strides = [1, 1, 1]} : vector<2x16x128xbf16> to vector<2x16x8xbf16>
    %30 = vector.extract_strided_slice %0 {offsets = [0, 0, 72], sizes = [2, 16, 8], strides = [1, 1, 1]} : vector<2x16x128xbf16> to vector<2x16x8xbf16>
    "tpu.trace_start"() <{level = 10 : i32, message = "wtd,wsd->wts"}> : () -> ()
    %cst_12 = arith.constant dense<0.000000e+00> : vector<2x16x16xf32>
    %31 = tpu.matmul %28, %29, %cst_12 {dimension_numbers = #tpu.dot_dimension_numbers<[2], [2], [1], [1], [0, 0, 0, 1, 1, 1], [0], [0]>} : vector<2x16x8xbf16>, vector<2x16x8xbf16>, vector<2x16x16xf32> -> vector<2x16x16xf32>
    "tpu.trace_stop"() : () -> ()
    %cst_13 = arith.constant 0.353553385 : f32
    %32 = vector.broadcast %cst_13 : f32 to vector<2x16x16xf32>
    %33 = arith.mulf %31, %32 : vector<2x16x16xf32>
    %34 = vector.extract_strided_slice %2 {offsets = [1, 0, 0], sizes = [1, 16, 16], strides = [1, 1, 1]} : vector<4x16x16xf32> to vector<1x16x16xf32>
    %35 = vector.shape_cast %34 : vector<1x16x16xf32> to vector<16x16xf32>
    %36 = vector.shape_cast %35 : vector<16x16xf32> to vector<1x16x16xf32>
    %37 = vector.broadcast %36 : vector<1x16x16xf32> to vector<2x16x16xf32>
    %38 = arith.addf %33, %37 : vector<2x16x16xf32>
    %cst_14 = arith.constant dense<0xFF800000> : vector<2x16xf32>
    %39 = vector.multi_reduction <maximumf>, %38, %cst_14 [2] : vector<2x16x16xf32> to vector<2x16xf32>
    %40 = vector.shape_cast %39 : vector<2x16xf32> to vector<2x16x1xf32>
    %41 = vector.broadcast %40 : vector<2x16x1xf32> to vector<2x16x16xf32>
    %42 = arith.subf %38, %41 : vector<2x16x16xf32>
    %43 = math.exp %42 : vector<2x16x16xf32>
    %cst_15 = arith.constant dense<0.000000e+00> : vector<2x16xf32>
    %44 = vector.multi_reduction <add>, %43, %cst_15 [2] : vector<2x16x16xf32> to vector<2x16xf32>
    %45 = vector.shape_cast %44 : vector<2x16xf32> to vector<2x16x1xf32>
    %46 = tpu.reciprocal %45 {approx = true} : vector<2x16x1xf32> -> vector<2x16x1xf32>
    %47 = arith.truncf %43 : vector<2x16x16xf32> to vector<2x16x16xbf16>
    "tpu.trace_start"() <{level = 10 : i32, message = "wts,wsd->wtd"}> : () -> ()
    %cst_16 = arith.constant dense<0.000000e+00> : vector<2x16x8xf32>
    %48 = tpu.matmul %47, %30, %cst_16 {dimension_numbers = #tpu.dot_dimension_numbers<[2], [1], [1], [2], [0, 0, 0, 1, 1, 2], [0], [0]>} : vector<2x16x16xbf16>, vector<2x16x8xbf16>, vector<2x16x8xf32> -> vector<2x16x8xf32>
    "tpu.trace_stop"() : () -> ()
    %49 = vector.broadcast %46 : vector<2x16x1xf32> to vector<2x16x8xf32>
    %50 = arith.mulf %48, %49 : vector<2x16x8xf32>
    %51 = arith.truncf %50 : vector<2x16x8xf32> to vector<2x16x8xbf16>
    %c0_17 = arith.constant 0 : index
    %c0_18 = arith.constant 0 : index
    %c8 = arith.constant 8 : index
    %52 = vector.load %arg3[%c0_17, %c0_18, %c8] : memref<2x16x32xbf16, #tpu.memory_space<vmem>>, vector<2x16x8xbf16>
    tpu.vector_store %arg3[%c0_17, %c0_18, %c8], %51 {strides = array<i32>} : memref<2x16x32xbf16, #tpu.memory_space<vmem>>, vector<2x16x8xbf16>,
    %53 = vector.extract_strided_slice %0 {offsets = [0, 0, 16], sizes = [2, 16, 8], strides = [1, 1, 1]} : vector<2x16x128xbf16> to vector<2x16x8xbf16>
    %54 = vector.extract_strided_slice %0 {offsets = [0, 0, 48], sizes = [2, 16, 8], strides = [1, 1, 1]} : vector<2x16x128xbf16> to vector<2x16x8xbf16>
    %55 = vector.extract_strided_slice %0 {offsets = [0, 0, 80], sizes = [2, 16, 8], strides = [1, 1, 1]} : vector<2x16x128xbf16> to vector<2x16x8xbf16>
    "tpu.trace_start"() <{level = 10 : i32, message = "wtd,wsd->wts"}> : () -> ()
    %cst_19 = arith.constant dense<0.000000e+00> : vector<2x16x16xf32>
    %56 = tpu.matmul %53, %54, %cst_19 {dimension_numbers = #tpu.dot_dimension_numbers<[2], [2], [1], [1], [0, 0, 0, 1, 1, 1], [0], [0]>} : vector<2x16x8xbf16>, vector<2x16x8xbf16>, vector<2x16x16xf32> -> vector<2x16x16xf32>
    "tpu.trace_stop"() : () -> ()
    %cst_20 = arith.constant 0.353553385 : f32
    %57 = vector.broadcast %cst_20 : f32 to vector<2x16x16xf32>
    %58 = arith.mulf %56, %57 : vector<2x16x16xf32>
    %59 = vector.extract_strided_slice %2 {offsets = [2, 0, 0], sizes = [1, 16, 16], strides = [1, 1, 1]} : vector<4x16x16xf32> to vector<1x16x16xf32>
    %60 = vector.shape_cast %59 : vector<1x16x16xf32> to vector<16x16xf32>
    %61 = vector.shape_cast %60 : vector<16x16xf32> to vector<1x16x16xf32>
    %62 = vector.broadcast %61 : vector<1x16x16xf32> to vector<2x16x16xf32>
    %63 = arith.addf %58, %62 : vector<2x16x16xf32>
    %cst_21 = arith.constant dense<0xFF800000> : vector<2x16xf32>
    %64 = vector.multi_reduction <maximumf>, %63, %cst_21 [2] : vector<2x16x16xf32> to vector<2x16xf32>
    %65 = vector.shape_cast %64 : vector<2x16xf32> to vector<2x16x1xf32>
    %66 = vector.broadcast %65 : vector<2x16x1xf32> to vector<2x16x16xf32>
    %67 = arith.subf %63, %66 : vector<2x16x16xf32>
    %68 = math.exp %67 : vector<2x16x16xf32>
    %cst_22 = arith.constant dense<0.000000e+00> : vector<2x16xf32>
    %69 = vector.multi_reduction <add>, %68, %cst_22 [2] : vector<2x16x16xf32> to vector<2x16xf32>
    %70 = vector.shape_cast %69 : vector<2x16xf32> to vector<2x16x1xf32>
    %71 = tpu.reciprocal %70 {approx = true} : vector<2x16x1xf32> -> vector<2x16x1xf32>
    %72 = arith.truncf %68 : vector<2x16x16xf32> to vector<2x16x16xbf16>
    "tpu.trace_start"() <{level = 10 : i32, message = "wts,wsd->wtd"}> : () -> ()
    %cst_23 = arith.constant dense<0.000000e+00> : vector<2x16x8xf32>
    %73 = tpu.matmul %72, %55, %cst_23 {dimension_numbers = #tpu.dot_dimension_numbers<[2], [1], [1], [2], [0, 0, 0, 1, 1, 2], [0], [0]>} : vector<2x16x16xbf16>, vector<2x16x8xbf16>, vector<2x16x8xf32> -> vector<2x16x8xf32>
    "tpu.trace_stop"() : () -> ()
    %74 = vector.broadcast %71 : vector<2x16x1xf32> to vector<2x16x8xf32>
    %75 = arith.mulf %73, %74 : vector<2x16x8xf32>
    %76 = arith.truncf %75 : vector<2x16x8xf32> to vector<2x16x8xbf16>
    %c0_24 = arith.constant 0 : index
    %c0_25 = arith.constant 0 : index
    %c16 = arith.constant 16 : index
    %77 = vector.load %arg3[%c0_24, %c0_25, %c16] : memref<2x16x32xbf16, #tpu.memory_space<vmem>>, vector<2x16x8xbf16>
    tpu.vector_store %arg3[%c0_24, %c0_25, %c16], %76 {strides = array<i32>} : memref<2x16x32xbf16, #tpu.memory_space<vmem>>, vector<2x16x8xbf16>,
    %78 = vector.extract_strided_slice %0 {offsets = [0, 0, 24], sizes = [2, 16, 8], strides = [1, 1, 1]} : vector<2x16x128xbf16> to vector<2x16x8xbf16>
    %79 = vector.extract_strided_slice %0 {offsets = [0, 0, 56], sizes = [2, 16, 8], strides = [1, 1, 1]} : vector<2x16x128xbf16> to vector<2x16x8xbf16>
    %80 = vector.extract_strided_slice %0 {offsets = [0, 0, 88], sizes = [2, 16, 8], strides = [1, 1, 1]} : vector<2x16x128xbf16> to vector<2x16x8xbf16>
    "tpu.trace_start"() <{level = 10 : i32, message = "wtd,wsd->wts"}> : () -> ()
    %cst_26 = arith.constant dense<0.000000e+00> : vector<2x16x16xf32>
    %81 = tpu.matmul %78, %79, %cst_26 {dimension_numbers = #tpu.dot_dimension_numbers<[2], [2], [1], [1], [0, 0, 0, 1, 1, 1], [0], [0]>} : vector<2x16x8xbf16>, vector<2x16x8xbf16>, vector<2x16x16xf32> -> vector<2x16x16xf32>
    "tpu.trace_stop"() : () -> ()
    %cst_27 = arith.constant 0.353553385 : f32
    %82 = vector.broadcast %cst_27 : f32 to vector<2x16x16xf32>
    %83 = arith.mulf %81, %82 : vector<2x16x16xf32>
    %84 = vector.extract_strided_slice %2 {offsets = [3, 0, 0], sizes = [1, 16, 16], strides = [1, 1, 1]} : vector<4x16x16xf32> to vector<1x16x16xf32>
    %85 = vector.shape_cast %84 : vector<1x16x16xf32> to vector<16x16xf32>
    %86 = vector.shape_cast %85 : vector<16x16xf32> to vector<1x16x16xf32>
    %87 = vector.broadcast %86 : vector<1x16x16xf32> to vector<2x16x16xf32>
    %88 = arith.addf %83, %87 : vector<2x16x16xf32>
    %cst_28 = arith.constant dense<0xFF800000> : vector<2x16xf32>
    %89 = vector.multi_reduction <maximumf>, %88, %cst_28 [2] : vector<2x16x16xf32> to vector<2x16xf32>
    %90 = vector.shape_cast %89 : vector<2x16xf32> to vector<2x16x1xf32>
    %91 = vector.broadcast %90 : vector<2x16x1xf32> to vector<2x16x16xf32>
    %92 = arith.subf %88, %91 : vector<2x16x16xf32>
    %93 = math.exp %92 : vector<2x16x16xf32>
    %cst_29 = arith.constant dense<0.000000e+00> : vector<2x16xf32>
    %94 = vector.multi_reduction <add>, %93, %cst_29 [2] : vector<2x16x16xf32> to vector<2x16xf32>
    %95 = vector.shape_cast %94 : vector<2x16xf32> to vector<2x16x1xf32>
    %96 = tpu.reciprocal %95 {approx = true} : vector<2x16x1xf32> -> vector<2x16x1xf32>
    %97 = arith.truncf %93 : vector<2x16x16xf32> to vector<2x16x16xbf16>
    "tpu.trace_start"() <{level = 10 : i32, message = "wts,wsd->wtd"}> : () -> ()
    %cst_30 = arith.constant dense<0.000000e+00> : vector<2x16x8xf32>
    %98 = tpu.matmul %97, %80, %cst_30 {dimension_numbers = #tpu.dot_dimension_numbers<[2], [1], [1], [2], [0, 0, 0, 1, 1, 2], [0], [0]>} : vector<2x16x16xbf16>, vector<2x16x8xbf16>, vector<2x16x8xf32> -> vector<2x16x8xf32>
    "tpu.trace_stop"() : () -> ()
    %99 = vector.broadcast %96 : vector<2x16x1xf32> to vector<2x16x8xf32>
    %100 = arith.mulf %98, %99 : vector<2x16x8xf32>
    %101 = arith.truncf %100 : vector<2x16x8xf32> to vector<2x16x8xbf16>
    %c0_31 = arith.constant 0 : index
    %c0_32 = arith.constant 0 : index
    %c24 = arith.constant 24 : index
    %102 = vector.load %arg3[%c0_31, %c0_32, %c24] : memref<2x16x32xbf16, #tpu.memory_space<vmem>>, vector<2x16x8xbf16>
    tpu.vector_store %arg3[%c0_31, %c0_32, %c24], %101 {strides = array<i32>} : memref<2x16x32xbf16, #tpu.memory_space<vmem>>, vector<2x16x8xbf16>,
    return
  }
  func.func @transform_0(%arg0: i32) -> (i32, i32, i32) {
    %c0_i32 = arith.constant 0 : i32
    %c0_i32_0 = arith.constant 0 : i32
    %c0_i32_1 = arith.constant 0 : i32
    return %arg0, %c0_i32, %c0_i32_0 : i32, i32, i32
  }
  func.func @transform_1(%arg0: i32) -> (i32, i32, i32) {
    %c0_i32 = arith.constant 0 : i32
    %c0_i32_0 = arith.constant 0 : i32
    %c0_i32_1 = arith.constant 0 : i32
    %c0_i32_2 = arith.constant 0 : i32
    return %c0_i32, %c0_i32_0, %c0_i32_1 : i32, i32, i32
  }
  func.func @transform_2(%arg0: i32) -> (i32, i32, i32) {
    %c0_i32 = arith.constant 0 : i32
    %c0_i32_0 = arith.constant 0 : i32
    %c0_i32_1 = arith.constant 0 : i32
    return %arg0, %c0_i32, %c0_i32_0 : i32, i32, i32
  }
}

module attributes {stable_mosaic.version = 11 : i64} {
  func.func @_linear_kernel(%arg0: i32, %arg1: i32, %arg2: memref<32x32xbf16, #tpu.memory_space<vmem>>, %arg3: memref<32x32xbf16, #tpu.memory_space<vmem>>, %arg4: memref<1x32xf32, #tpu.memory_space<vmem>>, %arg5: memref<32x32xbf16, #tpu.memory_space<vmem>>) attributes {dimension_semantics = [#tpu.dimension_semantics<parallel>, #tpu.dimension_semantics<parallel>], iteration_bounds = array<i64: 1, 1>, scalar_prefetch = 0 : i64, scratch_operands = 0 : i64, tpu.core_type = #tpu.core_type<tc>, window_params = [{transform_indices = @transform_0, window_bounds = array<i64: 32, 32>}, {transform_indices = @transform_1, window_bounds = array<i64: 32, 32>}, {transform_indices = @transform_2, window_bounds = array<i64: 1, 32>}, {transform_indices = @transform_3, window_bounds = array<i64: 32, 32>}]} {
    %c0 = arith.constant 0 : index
    %c0_0 = arith.constant 0 : index
    %0 = vector.load %arg2[%c0, %c0_0] : memref<32x32xbf16, #tpu.memory_space<vmem>>, vector<32x32xbf16>
    %c0_1 = arith.constant 0 : index
    %c0_2 = arith.constant 0 : index
    %1 = vector.load %arg3[%c0_1, %c0_2] : memref<32x32xbf16, #tpu.memory_space<vmem>>, vector<32x32xbf16>
    %cst = arith.constant dense<0.000000e+00> : vector<32x32xf32>
    %2 = tpu.matmul %0, %1, %cst {dimension_numbers = #tpu.dot_dimension_numbers<[1], [0], [0], [1], [0, 0, 1, 1], [], []>} : vector<32x32xbf16>, vector<32x32xbf16>, vector<32x32xf32> -> vector<32x32xf32>
    %c0_3 = arith.constant 0 : index
    %c0_4 = arith.constant 0 : index
    %3 = vector.load %arg4[%c0_3, %c0_4] : memref<1x32xf32, #tpu.memory_space<vmem>>, vector<1x32xf32>
    %4 = vector.broadcast %3 : vector<1x32xf32> to vector<32x32xf32>
    %5 = arith.addf %2, %4 : vector<32x32xf32>
    %6 = arith.truncf %5 : vector<32x32xf32> to vector<32x32xbf16>
    %c0_5 = arith.constant 0 : index
    %c0_6 = arith.constant 0 : index
    %7 = vector.load %arg5[%c0_5, %c0_6] : memref<32x32xbf16, #tpu.memory_space<vmem>>, vector<32x32xbf16>
    tpu.vector_store %arg5[%c0_5, %c0_6], %6 {strides = array<i32>} : memref<32x32xbf16, #tpu.memory_space<vmem>>, vector<32x32xbf16>,
    return
  }
  func.func @transform_0(%arg0: i32, %arg1: i32) -> (i32, i32) {
    %c0_i32 = arith.constant 0 : i32
    %c0_i32_0 = arith.constant 0 : i32
    return %arg0, %c0_i32 : i32, i32
  }
  func.func @transform_1(%arg0: i32, %arg1: i32) -> (i32, i32) {
    %c0_i32 = arith.constant 0 : i32
    %c0_i32_0 = arith.constant 0 : i32
    return %c0_i32, %arg1 : i32, i32
  }
  func.func @transform_2(%arg0: i32, %arg1: i32) -> (i32, i32) {
    %c0_i32 = arith.constant 0 : i32
    %c0_i32_0 = arith.constant 0 : i32
    return %c0_i32, %arg1 : i32, i32
  }
  func.func @transform_3(%arg0: i32, %arg1: i32) -> (i32, i32) {
    %c0_i32 = arith.constant 0 : i32
    return %arg0, %arg1 : i32, i32
  }
}

module attributes {stable_mosaic.version = 11 : i64} {
  func.func @_linear_kernel(%arg0: i32, %arg1: i32, %arg2: memref<32x32xf32, #tpu.memory_space<vmem>>, %arg3: memref<32x128xbf16, #tpu.memory_space<vmem>>, %arg4: memref<1x128xf32, #tpu.memory_space<vmem>>, %arg5: memref<1x32xf32, #tpu.memory_space<vmem>>, %arg6: memref<1x32xf32, #tpu.memory_space<vmem>>, %arg7: memref<32x128xbf16, #tpu.memory_space<vmem>>, %arg8: memref<32x32xbf16, #tpu.memory_space<vmem>>) attributes {dimension_semantics = [#tpu.dimension_semantics<parallel>, #tpu.dimension_semantics<arbitrary>], iteration_bounds = array<i64: 1, 1>, scalar_prefetch = 0 : i64, scratch_operands = 1 : i64, tpu.core_type = #tpu.core_type<tc>, window_params = [{transform_indices = @transform_0, window_bounds = array<i64: 32, 32>}, {transform_indices = @transform_1, window_bounds = array<i64: 32, 128>}, {transform_indices = @transform_2, window_bounds = array<i64: 1, 128>}, {pipeline_mode = #tpu.pipeline_mode<synchronous>, transform_indices = @transform_3, window_bounds = array<i64: 1, 32>}, {pipeline_mode = #tpu.pipeline_mode<synchronous>, transform_indices = @transform_4, window_bounds = array<i64: 1, 32>}, {transform_indices = @transform_5, window_bounds = array<i64: 32, 128>}]} {
    %c0_i32 = arith.constant 0 : i32
    %0 = arith.cmpi eq, %arg1, %c0_i32 : i32
    %1 = arith.extui %0 : i1 to i32
    %c0_i32_0 = arith.constant 0 : i32
    %2 = arith.cmpi ne, %1, %c0_i32_0 : i32
    scf.if %2 {
      %c0_12 = arith.constant 0 : index
      %c0_13 = arith.constant 0 : index
      %24 = vector.load %arg2[%c0_12, %c0_13] : memref<32x32xf32, #tpu.memory_space<vmem>>, vector<32x32xf32>
      %cst_14 = arith.constant dense<0.000000e+00> : vector<32xf32>
      %25 = vector.multi_reduction <add>, %24, %cst_14 [1] : vector<32x32xf32> to vector<32xf32>
      %26 = vector.shape_cast %25 : vector<32xf32> to vector<32x1xf32>
      %cst_15 = arith.constant 3.200000e+01 : f32
      %27 = vector.broadcast %cst_15 : f32 to vector<32x1xf32>
      %28 = arith.divf %26, %27 : vector<32x1xf32>
      %29 = vector.broadcast %28 : vector<32x1xf32> to vector<32x32xf32>
      %30 = arith.subf %24, %29 : vector<32x32xf32>
      %31 = arith.mulf %30, %30 : vector<32x32xf32>
      %cst_16 = arith.constant dense<0.000000e+00> : vector<32xf32>
      %32 = vector.multi_reduction <add>, %31, %cst_16 [1] : vector<32x32xf32> to vector<32xf32>
      %33 = vector.shape_cast %32 : vector<32xf32> to vector<32x1xf32>
      %cst_17 = arith.constant 3.200000e+01 : f32
      %34 = vector.broadcast %cst_17 : f32 to vector<32x1xf32>
      %35 = arith.divf %33, %34 : vector<32x1xf32>
      %cst_18 = arith.constant 9.99999974E-6 : f32
      %36 = vector.broadcast %cst_18 : f32 to vector<32x1xf32>
      %37 = arith.addf %35, %36 : vector<32x1xf32>
      %38 = math.rsqrt %37 : vector<32x1xf32>
      %39 = vector.broadcast %38 : vector<32x1xf32> to vector<32x32xf32>
      %40 = arith.mulf %30, %39 : vector<32x32xf32>
      %c0_19 = arith.constant 0 : index
      %c0_20 = arith.constant 0 : index
      %41 = vector.load %arg5[%c0_19, %c0_20] : memref<1x32xf32, #tpu.memory_space<vmem>>, vector<1x32xf32>
      %42 = vector.broadcast %41 : vector<1x32xf32> to vector<32x32xf32>
      %43 = arith.mulf %40, %42 : vector<32x32xf32>
      %c0_21 = arith.constant 0 : index
      %c0_22 = arith.constant 0 : index
      %44 = vector.load %arg6[%c0_21, %c0_22] : memref<1x32xf32, #tpu.memory_space<vmem>>, vector<1x32xf32>
      %45 = vector.broadcast %44 : vector<1x32xf32> to vector<32x32xf32>
      %46 = arith.addf %43, %45 : vector<32x32xf32>
      %47 = arith.truncf %46 : vector<32x32xf32> to vector<32x32xbf16>
      %c0_23 = arith.constant 0 : index
      %c0_24 = arith.constant 0 : index
      %48 = vector.load %arg8[%c0_23, %c0_24] : memref<32x32xbf16, #tpu.memory_space<vmem>>, vector<32x32xbf16>
      tpu.vector_store %arg8[%c0_23, %c0_24], %47 {strides = array<i32>} : memref<32x32xbf16, #tpu.memory_space<vmem>>, vector<32x32xbf16>,
    } else {
    }
    %c0 = arith.constant 0 : index
    %c0_1 = arith.constant 0 : index
    %3 = vector.load %arg8[%c0, %c0_1] : memref<32x32xbf16, #tpu.memory_space<vmem>>, vector<32x32xbf16>
    %c0_2 = arith.constant 0 : index
    %c0_3 = arith.constant 0 : index
    %4 = vector.load %arg3[%c0_2, %c0_3] : memref<32x128xbf16, #tpu.memory_space<vmem>>, vector<32x128xbf16>
    %cst = arith.constant dense<0.000000e+00> : vector<32x128xf32>
    %5 = tpu.matmul %3, %4, %cst {dimension_numbers = #tpu.dot_dimension_numbers<[1], [0], [0], [1], [0, 0, 1, 1], [], []>} : vector<32x32xbf16>, vector<32x128xbf16>, vector<32x128xf32> -> vector<32x128xf32>
    %c0_4 = arith.constant 0 : index
    %c0_5 = arith.constant 0 : index
    %6 = vector.load %arg4[%c0_4, %c0_5] : memref<1x128xf32, #tpu.memory_space<vmem>>, vector<1x128xf32>
    %7 = vector.broadcast %6 : vector<1x128xf32> to vector<32x128xf32>
    %8 = arith.addf %5, %7 : vector<32x128xf32>
    %9 = arith.mulf %8, %8 : vector<32x128xf32>
    %10 = arith.mulf %8, %9 : vector<32x128xf32>
    %cst_6 = arith.constant 4.471500e-02 : f32
    %11 = vector.broadcast %cst_6 : f32 to vector<32x128xf32>
    %12 = arith.mulf %11, %10 : vector<32x128xf32>
    %13 = arith.addf %8, %12 : vector<32x128xf32>
    %cst_7 = arith.constant 0.797884583 : f32
    %14 = vector.broadcast %cst_7 : f32 to vector<32x128xf32>
    %15 = arith.mulf %14, %13 : vector<32x128xf32>
    %16 = math.tanh %15 : vector<32x128xf32>
    %cst_8 = arith.constant 1.000000e+00 : f32
    %17 = vector.broadcast %cst_8 : f32 to vector<32x128xf32>
    %18 = arith.addf %17, %16 : vector<32x128xf32>
    %cst_9 = arith.constant 5.000000e-01 : f32
    %19 = vector.broadcast %cst_9 : f32 to vector<32x128xf32>
    %20 = arith.mulf %19, %18 : vector<32x128xf32>
    %21 = arith.mulf %8, %20 : vector<32x128xf32>
    %22 = arith.truncf %21 : vector<32x128xf32> to vector<32x128xbf16>
    %c0_10 = arith.constant 0 : index
    %c0_11 = arith.constant 0 : index
    %23 = vector.load %arg7[%c0_10, %c0_11] : memref<32x128xbf16, #tpu.memory_space<vmem>>, vector<32x128xbf16>
    tpu.vector_store %arg7[%c0_10, %c0_11], %22 {strides = array<i32>} : memref<32x128xbf16, #tpu.memory_space<vmem>>, vector<32x128xbf16>,
    return
  }
  func.func @transform_0(%arg0: i32, %arg1: i32) -> (i32, i32) {
    %c0_i32 = arith.constant 0 : i32
    %c0_i32_0 = arith.constant 0 : i32
    return %arg0, %c0_i32 : i32, i32
  }
  func.func @transform_1(%arg0: i32, %arg1: i32) -> (i32, i32) {
    %c0_i32 = arith.constant 0 : i32
    %c0_i32_0 = arith.constant 0 : i32
    return %c0_i32, %arg1 : i32, i32
  }
  func.func @transform_2(%arg0: i32, %arg1: i32) -> (i32, i32) {
    %c0_i32 = arith.constant 0 : i32
    %c0_i32_0 = arith.constant 0 : i32
    return %c0_i32, %arg1 : i32, i32
  }
  func.func @transform_3(%arg0: i32, %arg1: i32) -> (i32, i32) {
    %c0_i32 = arith.constant 0 : i32
    %c0_i32_0 = arith.constant 0 : i32
    %c0_i32_1 = arith.constant 0 : i32
    return %c0_i32, %c0_i32_0 : i32, i32
  }
  func.func @transform_4(%arg0: i32, %arg1: i32) -> (i32, i32) {
    %c0_i32 = arith.constant 0 : i32
    %c0_i32_0 = arith.constant 0 : i32
    %c0_i32_1 = arith.constant 0 : i32
    return %c0_i32, %c0_i32_0 : i32, i32
  }
  func.func @transform_5(%arg0: i32, %arg1: i32) -> (i32, i32) {
    %c0_i32 = arith.constant 0 : i32
    return %arg0, %arg1 : i32, i32
  }
}

module attributes {stable_mosaic.version = 11 : i64} {
  func.func @_linear_kernel(%arg0: i32, %arg1: i32, %arg2: memref<32x128xbf16, #tpu.memory_space<vmem>>, %arg3: memref<128x32xbf16, #tpu.memory_space<vmem>>, %arg4: memref<1x32xf32, #tpu.memory_space<vmem>>, %arg5: memref<32x32xf32, #tpu.memory_space<vmem>>, %arg6: memref<32x32xf32, #tpu.memory_space<vmem>>) attributes {dimension_semantics = [#tpu.dimension_semantics<parallel>, #tpu.dimension_semantics<parallel>], iteration_bounds = array<i64: 1, 1>, scalar_prefetch = 0 : i64, scratch_operands = 0 : i64, tpu.core_type = #tpu.core_type<tc>, window_params = [{transform_indices = @transform_0, window_bounds = array<i64: 32, 128>}, {transform_indices = @transform_1, window_bounds = array<i64: 128, 32>}, {transform_indices = @transform_2, window_bounds = array<i64: 1, 32>}, {transform_indices = @transform_3, window_bounds = array<i64: 32, 32>}, {transform_indices = @transform_4, window_bounds = array<i64: 32, 32>}]} {
    %c0 = arith.constant 0 : index
    %c0_0 = arith.constant 0 : index
    %0 = vector.load %arg2[%c0, %c0_0] : memref<32x128xbf16, #tpu.memory_space<vmem>>, vector<32x128xbf16>
    %c0_1 = arith.constant 0 : index
    %c0_2 = arith.constant 0 : index
    %1 = vector.load %arg3[%c0_1, %c0_2] : memref<128x32xbf16, #tpu.memory_space<vmem>>, vector<128x32xbf16>
    %cst = arith.constant dense<0.000000e+00> : vector<32x32xf32>
    %2 = tpu.matmul %0, %1, %cst {dimension_numbers = #tpu.dot_dimension_numbers<[1], [0], [0], [1], [0, 0, 1, 1], [], []>} : vector<32x128xbf16>, vector<128x32xbf16>, vector<32x32xf32> -> vector<32x32xf32>
    %c0_3 = arith.constant 0 : index
    %c0_4 = arith.constant 0 : index
    %3 = vector.load %arg4[%c0_3, %c0_4] : memref<1x32xf32, #tpu.memory_space<vmem>>, vector<1x32xf32>
    %4 = vector.broadcast %3 : vector<1x32xf32> to vector<32x32xf32>
    %5 = arith.addf %2, %4 : vector<32x32xf32>
    %c0_5 = arith.constant 0 : index
    %c0_6 = arith.constant 0 : index
    %6 = vector.load %arg5[%c0_5, %c0_6] : memref<32x32xf32, #tpu.memory_space<vmem>>, vector<32x32xf32>
    %7 = arith.addf %5, %6 : vector<32x32xf32>
    %c0_7 = arith.constant 0 : index
    %c0_8 = arith.constant 0 : index
    %8 = vector.load %arg6[%c0_7, %c0_8] : memref<32x32xf32, #tpu.memory_space<vmem>>, vector<32x32xf32>
    tpu.vector_store %arg6[%c0_7, %c0_8], %7 {strides = array<i32>} : memref<32x32xf32, #tpu.memory_space<vmem>>, vector<32x32xf32>,
    return
  }
  func.func @transform_0(%arg0: i32, %arg1: i32) -> (i32, i32) {
    %c0_i32 = arith.constant 0 : i32
    %c0_i32_0 = arith.constant 0 : i32
    return %arg0, %c0_i32 : i32, i32
  }
  func.func @transform_1(%arg0: i32, %arg1: i32) -> (i32, i32) {
    %c0_i32 = arith.constant 0 : i32
    %c0_i32_0 = arith.constant 0 : i32
    return %c0_i32, %arg1 : i32, i32
  }
  func.func @transform_2(%arg0: i32, %arg1: i32) -> (i32, i32) {
    %c0_i32 = arith.constant 0 : i32
    %c0_i32_0 = arith.constant 0 : i32
    return %c0_i32, %arg1 : i32, i32
  }
  func.func @transform_3(%arg0: i32, %arg1: i32) -> (i32, i32) {
    %c0_i32 = arith.constant 0 : i32
    return %arg0, %arg1 : i32, i32
  }
  func.func @transform_4(%arg0: i32, %arg1: i32) -> (i32, i32) {
    %c0_i32 = arith.constant 0 : i32
    return %arg0, %arg1 : i32, i32
  }
}

module attributes {stable_mosaic.version = 11 : i64} {
  func.func @_layernorm_kernel(%arg0: i32, %arg1: memref<32x32xf32, #tpu.memory_space<vmem>>, %arg2: memref<1x32xf32, #tpu.memory_space<vmem>>, %arg3: memref<1x32xf32, #tpu.memory_space<vmem>>, %arg4: memref<32x32xf32, #tpu.memory_space<vmem>>) attributes {dimension_semantics = [#tpu.dimension_semantics<parallel>], iteration_bounds = array<i64: 1>, scalar_prefetch = 0 : i64, scratch_operands = 0 : i64, tpu.core_type = #tpu.core_type<tc>, window_params = [{transform_indices = @transform_0, window_bounds = array<i64: 32, 32>}, {pipeline_mode = #tpu.pipeline_mode<synchronous>, transform_indices = @transform_1, window_bounds = array<i64: 1, 32>}, {pipeline_mode = #tpu.pipeline_mode<synchronous>, transform_indices = @transform_2, window_bounds = array<i64: 1, 32>}, {transform_indices = @transform_3, window_bounds = array<i64: 32, 32>}]} {
    %c0 = arith.constant 0 : index
    %c0_0 = arith.constant 0 : index
    %0 = vector.load %arg1[%c0, %c0_0] : memref<32x32xf32, #tpu.memory_space<vmem>>, vector<32x32xf32>
    %cst = arith.constant dense<0.000000e+00> : vector<32xf32>
    %1 = vector.multi_reduction <add>, %0, %cst [1] : vector<32x32xf32> to vector<32xf32>
    %2 = vector.shape_cast %1 : vector<32xf32> to vector<32x1xf32>
    %cst_1 = arith.constant 3.200000e+01 : f32
    %3 = vector.broadcast %cst_1 : f32 to vector<32x1xf32>
    %4 = arith.divf %2, %3 : vector<32x1xf32>
    %5 = vector.broadcast %4 : vector<32x1xf32> to vector<32x32xf32>
    %6 = arith.subf %0, %5 : vector<32x32xf32>
    %7 = arith.mulf %6, %6 : vector<32x32xf32>
    %cst_2 = arith.constant dense<0.000000e+00> : vector<32xf32>
    %8 = vector.multi_reduction <add>, %7, %cst_2 [1] : vector<32x32xf32> to vector<32xf32>
    %9 = vector.shape_cast %8 : vector<32xf32> to vector<32x1xf32>
    %cst_3 = arith.constant 3.200000e+01 : f32
    %10 = vector.broadcast %cst_3 : f32 to vector<32x1xf32>
    %11 = arith.divf %9, %10 : vector<32x1xf32>
    %cst_4 = arith.constant 9.99999974E-6 : f32
    %12 = vector.broadcast %cst_4 : f32 to vector<32x1xf32>
    %13 = arith.addf %11, %12 : vector<32x1xf32>
    %14 = math.rsqrt %13 : vector<32x1xf32>
    %15 = vector.broadcast %14 : vector<32x1xf32> to vector<32x32xf32>
    %16 = arith.mulf %6, %15 : vector<32x32xf32>
    %c0_5 = arith.constant 0 : index
    %c0_6 = arith.constant 0 : index
    %17 = vector.load %arg2[%c0_5, %c0_6] : memref<1x32xf32, #tpu.memory_space<vmem>>, vector<1x32xf32>
    %18 = vector.broadcast %17 : vector<1x32xf32> to vector<32x32xf32>
    %19 = arith.mulf %16, %18 : vector<32x32xf32>
    %c0_7 = arith.constant 0 : index
    %c0_8 = arith.constant 0 : index
    %20 = vector.load %arg3[%c0_7, %c0_8] : memref<1x32xf32, #tpu.memory_space<vmem>>, vector<1x32xf32>
    %21 = vector.broadcast %20 : vector<1x32xf32> to vector<32x32xf32>
    %22 = arith.addf %19, %21 : vector<32x32xf32>
    %c0_9 = arith.constant 0 : index
    %c0_10 = arith.constant 0 : index
    %23 = vector.load %arg4[%c0_9, %c0_10] : memref<32x32xf32, #tpu.memory_space<vmem>>, vector<32x32xf32>
    tpu.vector_store %arg4[%c0_9, %c0_10], %22 {strides = array<i32>} : memref<32x32xf32, #tpu.memory_space<vmem>>, vector<32x32xf32>,
    return
  }
  func.func @transform_0(%arg0: i32) -> (i32, i32) {
    %c0_i32 = arith.constant 0 : i32
    %c0_i32_0 = arith.constant 0 : i32
    return %arg0, %c0_i32 : i32, i32
  }
  func.func @transform_1(%arg0: i32) -> (i32, i32) {
    %c0_i32 = arith.constant 0 : i32
    %c0_i32_0 = arith.constant 0 : i32
    %c0_i32_1 = arith.constant 0 : i32
    return %c0_i32, %c0_i32_0 : i32, i32
  }
  func.func @transform_2(%arg0: i32) -> (i32, i32) {
    %c0_i32 = arith.constant 0 : i32
    %c0_i32_0 = arith.constant 0 : i32
    %c0_i32_1 = arith.constant 0 : i32
    return %c0_i32, %c0_i32_0 : i32, i32
  }
  func.func @transform_3(%arg0: i32) -> (i32, i32) {
    %c0_i32 = arith.constant 0 : i32
    %c0_i32_0 = arith.constant 0 : i32
    return %arg0, %c0_i32 : i32, i32
  }
}

module attributes {stable_mosaic.version = 11 : i64} {
  func.func @_linear_kernel(%arg0: i32, %arg1: i32, %arg2: memref<2x32xf32, #tpu.memory_space<vmem>>, %arg3: memref<32x128xbf16, #tpu.memory_space<vmem>>, %arg4: memref<1x128xf32, #tpu.memory_space<vmem>>, %arg5: memref<2x128xf32, #tpu.memory_space<vmem>>) attributes {dimension_semantics = [#tpu.dimension_semantics<parallel>, #tpu.dimension_semantics<parallel>], iteration_bounds = array<i64: 1, 1>, scalar_prefetch = 0 : i64, scratch_operands = 0 : i64, tpu.core_type = #tpu.core_type<tc>, window_params = [{transform_indices = @transform_0, window_bounds = array<i64: 2, 32>}, {transform_indices = @transform_1, window_bounds = array<i64: 32, 128>}, {transform_indices = @transform_2, window_bounds = array<i64: 1, 128>}, {transform_indices = @transform_3, window_bounds = array<i64: 2, 128>}]} {
    %c0 = arith.constant 0 : index
    %c0_0 = arith.constant 0 : index
    %0 = vector.load %arg2[%c0, %c0_0] : memref<2x32xf32, #tpu.memory_space<vmem>>, vector<2x32xf32>
    %1 = arith.truncf %0 : vector<2x32xf32> to vector<2x32xbf16>
    %c0_1 = arith.constant 0 : index
    %c0_2 = arith.constant 0 : index
    %2 = vector.load %arg3[%c0_1, %c0_2] : memref<32x128xbf16, #tpu.memory_space<vmem>>, vector<32x128xbf16>
    %cst = arith.constant dense<0.000000e+00> : vector<2x128xf32>
    %3 = tpu.matmul %1, %2, %cst {dimension_numbers = #tpu.dot_dimension_numbers<[1], [0], [0], [1], [0, 0, 1, 1], [], []>} : vector<2x32xbf16>, vector<32x128xbf16>, vector<2x128xf32> -> vector<2x128xf32>
    %c0_3 = arith.constant 0 : index
    %c0_4 = arith.constant 0 : index
    %4 = vector.load %arg4[%c0_3, %c0_4] : memref<1x128xf32, #tpu.memory_space<vmem>>, vector<1x128xf32>
    %5 = vector.broadcast %4 : vector<1x128xf32> to vector<2x128xf32>
    %6 = arith.addf %3, %5 : vector<2x128xf32>
    %c0_5 = arith.constant 0 : index
    %c0_6 = arith.constant 0 : index
    %7 = vector.load %arg5[%c0_5, %c0_6] : memref<2x128xf32, #tpu.memory_space<vmem>>, vector<2x128xf32>
    tpu.vector_store %arg5[%c0_5, %c0_6], %6 {strides = array<i32>} : memref<2x128xf32, #tpu.memory_space<vmem>>, vector<2x128xf32>,
    return
  }
  func.func @transform_0(%arg0: i32, %arg1: i32) -> (i32, i32) {
    %c0_i32 = arith.constant 0 : i32
    %c0_i32_0 = arith.constant 0 : i32
    return %arg0, %c0_i32 : i32, i32
  }
  func.func @transform_1(%arg0: i32, %arg1: i32) -> (i32, i32) {
    %c0_i32 = arith.constant 0 : i32
    %c0_i32_0 = arith.constant 0 : i32
    return %c0_i32, %arg1 : i32, i32
  }
  func.func @transform_2(%arg0: i32, %arg1: i32) -> (i32, i32) {
    %c0_i32 = arith.constant 0 : i32
    %c0_i32_0 = arith.constant 0 : i32
    return %c0_i32, %arg1 : i32, i32
  }
  func.func @transform_3(%arg0: i32, %arg1: i32) -> (i32, i32) {
    %c0_i32 = arith.constant 0 : i32
    return %arg0, %arg1 : i32, i32
  }
}

</mosaic_0001>

<llo_original>
// kernel: forward.25
$region0: #{forward.25}
  #allocation0 [shape = 'u32[]', space=smem, size = 0x4, offset = 0x4, fixed_abs, tag = 'smem constant byte address 0x4 - core index']
  #allocation1 [shape = 'u32[144,128]{1,0:T(1,128)}', space=vmem, size = 0x12000, scoped, tag = 'internal scratch']
  %s0 = inlined_call_operand.vmem [shape: f32[128,48], index: 0, kind: input, shape index: {}]
  %s1 = inlined_call_operand.vmem [shape: bf16[48,16], index: 1, kind: input, shape index: {}]
  %s2 = inlined_call_operand.vmem [shape: f32[1,16], index: 2, kind: input, shape index: {}]
  %s3 = inlined_call_operand.vmem [shape: f32[128,16], index: 3, kind: output, shape index: {}]
  %s4 = sld [smem:[#allocation0]]
  $region22: #{forward.25} parent=0
    _
  %s6 = ssub.s32 1, %s4
  %s7 = scalar_select 0, %s6, %s4
  // Predicated region
  $region2: #{forward.25} parent=0 // pred_check
    _
  $region3: #{forward.25} parent=0 // pred_check_branch
    %9 = sbr.rel (0) target = $region5
  $region4: #{forward.25} parent=0 // pred_region
    _
  $region5: #{forward.25} parent=0 // pred_fallthru
    _
  // Predicated region
  $region6: #{forward.25} parent=0 // pred_check
    _
  $region7: #{forward.25} parent=0 // pred_check_branch
    %11 = sbr.rel (0) target = $region9
  $region8: #{forward.25} parent=0 // pred_region
    _
  $region9: #{forward.25} parent=0 // pred_fallthru
    _
  // Predicated region
  $region10: #{forward.25} parent=0 // pred_check
    _
  $region11: #{forward.25} parent=0 // pred_check_branch
    %13 = sbr.rel (0) target = $region13
  $region12: #{forward.25} parent=0 // pred_region
    _
  $region13: #{forward.25} parent=0 // pred_fallthru
    _
  %v15 = vld [vmem:[%s0] sm:$0xff]
  %v16 = vld [vmem:[%s0 + $0x8] sm:$0xff]
  %v17 = vld [vmem:[%s0 + $0x10] sm:$0xff]
  %v18 = vld [vmem:[%s0 + $0x18] sm:$0xff]
  %v19 = vld [vmem:[%s0 + $0x20] sm:$0xff]
  %v20 = vld [vmem:[%s0 + $0x28] sm:$0xff]
  %v21 = vld [vmem:[%s0 + $0x30] sm:$0xff]
  %v22 = vld [vmem:[%s0 + $0x38] sm:$0xff]
  %v23 = vld [vmem:[%s0 + $0x40] sm:$0xff]
  %v24 = vld [vmem:[%s0 + $0x48] sm:$0xff]
  %v25 = vld [vmem:[%s0 + $0x50] sm:$0xff]
  %v26 = vld [vmem:[%s0 + $0x58] sm:$0xff]
  %v27 = vld [vmem:[%s0 + $0x60] sm:$0xff]
  %v28 = vld [vmem:[%s0 + $0x68] sm:$0xff]
  %v29 = vld [vmem:[%s0 + $0x70] sm:$0xff]
  %v30 = vld [vmem:[%s0 + $0x78] sm:$0xff]
  %v31 = vpack.c.bf16 %v16, %v15
  %v32 = vpack.c.bf16 %v18, %v17
  %v33 = vpack.c.bf16 %v20, %v19
  %v34 = vpack.c.bf16 %v22, %v21
  %v35 = vpack.c.bf16 %v24, %v23
  %v36 = vpack.c.bf16 %v26, %v25
  %v37 = vpack.c.bf16 %v28, %v27
  %v38 = vpack.c.bf16 %v30, %v29
  %v39 = vld [vmem:[%s1] sm:$0xf]
  %v40 = vld [vmem:[%s1 + $0x4] sm:$0xf]
  %v41 = vld [vmem:[%s1 + $0x8] sm:$0xf]
  %v42 = vld [vmem:[%s1 + $0xc] sm:$0xf]
  %v43 = vld [vmem:[%s1 + $0x10] sm:$0xf]
  %v44 = vld [vmem:[%s1 + $0x14] sm:$0xf]
  %v45 = vld [vmem:[%s2] sm:$0x1]
  %v47 = vlaneseq
  %v48 = vshrl.u32 %v47, 7
  %v49 = vsub.s32 0, %v48
  %v50 = vrot.slane %v45, %v49
  %v58 = vunpack.c.l.b16 %v39
  %v59 = vunpack.c.l.b16 %v40
  %v60 = vunpack.c.l.b16 %v41
  %v61 = vunpack.c.l.b16 %v42
  %v62 = vunpack.c.l.b16 %v43
  %v63 = vunpack.c.l.b16 %v44
  %v64 = vpack.c.b16 %v59, %v58
  %v65 = vpack.c.b16 %v61, %v60
  %v66 = vpack.c.b16 %v63, %v62
  %vm70 = vcmask 392192
  %v72 = vsel %vm70, %v31, 0
  %v75 = vsel %vm70, %v32, 0
  %v78 = vsel %vm70, %v33, 0
  %v81 = vsel %vm70, %v34, 0
  %v84 = vsel %vm70, %v35, 0
  %v87 = vsel %vm70, %v36, 0
  %v90 = vsel %vm70, %v37, 0
  %v93 = vsel %vm70, %v38, 0
  %95 = vmatprep.subr.bf16.mxu0 0
  %96 = vmatpush1.bf16.msra.mxu0 %v64
  %97 = vmatprep.subr.bf16.mxu0 0
  %98 = vmatpush1.bf16.msra.mxu0 %v65
  %99 = vmatprep.subr.bf16.mxu0 0
  %100 = vmatpush1.bf16.msra.mxu0 %v66
  %101 = vmatprep.subr.bf16.mxu0 0
  %102 = vmatpush1.bf16.msra.mxu0 0
  %103 = vmatprep.subr.bf16.mxu0 0
  %104 = vmatpush1.bf16.msra.mxu0 0
  %105 = vmatprep.subr.bf16.mxu0 0
  %106 = vmatpush1.bf16.msra.mxu0 0
  %107 = vmatprep.subr.bf16.mxu0 0
  %108 = vmatpush1.bf16.msra.mxu0 0
  %109 = vmatprep.subr.bf16.mxu0 0
  %110 = vmatpush1.bf16.msra.mxu0 0
  %111 = vmatprep.subr.bf16.mxu0 0
  %112 = vmatpush1.bf16.msra.mxu0 0
  %113 = vmatprep.subr.bf16.mxu0 0
  %114 = vmatpush1.bf16.msra.mxu0 0
  %115 = vmatprep.subr.bf16.mxu0 0
  %116 = vmatpush1.bf16.msra.mxu0 0
  %117 = vmatprep.subr.bf16.mxu0 0
  %118 = vmatpush1.bf16.msra.mxu0 0
  %119 = vmatprep.subr.bf16.mxu0 0
  %120 = vmatpush1.bf16.msra.mxu0 0
  %121 = vmatprep.subr.bf16.mxu0 0
  %122 = vmatpush1.bf16.msra.mxu0 0
  %123 = vmatprep.subr.bf16.mxu0 0
  %124 = vmatpush1.bf16.msra.mxu0 0
  %125 = vmatprep.subr.bf16.mxu0 0
  %126 = vmatpush1.bf16.msra.mxu0 0
  %127 = vmatprep.mubr.bf16.mxu0 0
  %128 = vmatmul.mubr.bf16.gmra.mrb[0].mxu0 %v72
  %v129 = vpop.f32.mrb[0].mxu0
  %v130 = vadd.f32 %v50, %v129
  %v131 = vpop.f32.mrb[0].mxu0
  %v132 = vpop.f32.mrb[0].mxu0
  %v133 = vadd.f32 %v50, %v132
  %v134 = vpop.f32.mrb[0].mxu0
  %135 = vmatprep.mubr.bf16.mxu0 0
  %136 = vmatmul.mubr.bf16.gmra.mrb[0].mxu0 %v75
  %v137 = vpop.f32.mrb[0].mxu0
  %v138 = vadd.f32 %v50, %v137
  %v139 = vpop.f32.mrb[0].mxu0
  %v140 = vpop.f32.mrb[0].mxu0
  %v141 = vadd.f32 %v50, %v140
  %v142 = vpop.f32.mrb[0].mxu0
  %143 = vmatprep.mubr.bf16.mxu0 0
  %144 = vmatmul.mubr.bf16.gmra.mrb[0].mxu0 %v78
  %v145 = vpop.f32.mrb[0].mxu0
  %v146 = vadd.f32 %v50, %v145
  %v147 = vpop.f32.mrb[0].mxu0
  %v148 = vpop.f32.mrb[0].mxu0
  %v149 = vadd.f32 %v50, %v148
  %v150 = vpop.f32.mrb[0].mxu0
  %151 = vmatprep.mubr.bf16.mxu0 0
  %152 = vmatmul.mubr.bf16.gmra.mrb[0].mxu0 %v81
  %v153 = vpop.f32.mrb[0].mxu0
  %v154 = vadd.f32 %v50, %v153
  %v155 = vpop.f32.mrb[0].mxu0
  %v156 = vpop.f32.mrb[0].mxu0
  %v157 = vadd.f32 %v50, %v156
  %v158 = vpop.f32.mrb[0].mxu0
  %159 = vmatprep.mubr.bf16.mxu0 0
  %160 = vmatmul.mubr.bf16.gmra.mrb[0].mxu0 %v84
  %v161 = vpop.f32.mrb[0].mxu0
  %v162 = vadd.f32 %v50, %v161
  %v163 = vpop.f32.mrb[0].mxu0
  %v164 = vpop.f32.mrb[0].mxu0
  %v165 = vadd.f32 %v50, %v164
  %v166 = vpop.f32.mrb[0].mxu0
  %167 = vmatprep.mubr.bf16.mxu0 0
  %168 = vmatmul.mubr.bf16.gmra.mrb[0].mxu0 %v87
  %v169 = vpop.f32.mrb[0].mxu0
  %v170 = vadd.f32 %v50, %v169
  %v171 = vpop.f32.mrb[0].mxu0
  %v172 = vpop.f32.mrb[0].mxu0
  %v173 = vadd.f32 %v50, %v172
  %v174 = vpop.f32.mrb[0].mxu0
  %175 = vmatprep.mubr.bf16.mxu0 0
  %176 = vmatmul.mubr.bf16.gmra.mrb[0].mxu0 %v90
  %v177 = vpop.f32.mrb[0].mxu0
  %v178 = vadd.f32 %v50, %v177
  %v179 = vpop.f32.mrb[0].mxu0
  %v180 = vpop.f32.mrb[0].mxu0
  %v181 = vadd.f32 %v50, %v180
  %v182 = vpop.f32.mrb[0].mxu0
  %183 = vmatprep.mubr.bf16.mxu0 0
  %184 = vmatmul.mubr.bf16.gmra.mrb[0].mxu0 %v93
  %v185 = vpop.f32.mrb[0].mxu0
  %v186 = vadd.f32 %v50, %v185
  %v187 = vpop.f32.mrb[0].mxu0
  %v188 = vpop.f32.mrb[0].mxu0
  %v189 = vadd.f32 %v50, %v188
  %v190 = vpop.f32.mrb[0].mxu0
  %191 = vdwg.mxu0
  %vm192 = vcmask 130048
  %193 = vst.msk [vmem:[%s3] sm:$0xff] %vm192, %v130
  %194 = vst.msk [vmem:[%s3 + $0x8] sm:$0xff] %vm192, %v133
  %195 = vst.msk [vmem:[%s3 + $0x10] sm:$0xff] %vm192, %v138
  %196 = vst.msk [vmem:[%s3 + $0x18] sm:$0xff] %vm192, %v141
  %197 = vst.msk [vmem:[%s3 + $0x20] sm:$0xff] %vm192, %v146
  %198 = vst.msk [vmem:[%s3 + $0x28] sm:$0xff] %vm192, %v149
  %199 = vst.msk [vmem:[%s3 + $0x30] sm:$0xff] %vm192, %v154
  %200 = vst.msk [vmem:[%s3 + $0x38] sm:$0xff] %vm192, %v157
  %201 = vst.msk [vmem:[%s3 + $0x40] sm:$0xff] %vm192, %v162
  %202 = vst.msk [vmem:[%s3 + $0x48] sm:$0xff] %vm192, %v165
  %203 = vst.msk [vmem:[%s3 + $0x50] sm:$0xff] %vm192, %v170
  %204 = vst.msk [vmem:[%s3 + $0x58] sm:$0xff] %vm192, %v173
  %205 = vst.msk [vmem:[%s3 + $0x60] sm:$0xff] %vm192, %v178
  %206 = vst.msk [vmem:[%s3 + $0x68] sm:$0xff] %vm192, %v181
  %207 = vst.msk [vmem:[%s3 + $0x70] sm:$0xff] %vm192, %v186
  %208 = vst.msk [vmem:[%s3 + $0x78] sm:$0xff] %vm192, %v189
  // Predicated region
  $region14: #{forward.25} parent=0 // pred_check
    _
  $region15: #{forward.25} parent=0 // pred_check_branch
    %210 = sbr.rel (0) target = $region17
  $region16: #{forward.25} parent=0 // pred_region
    _
  $region17: #{forward.25} parent=0 // pred_fallthru
    _
  // Predicated region
  $region18: #{forward.25} parent=0 // pred_check
    _
  $region19: #{forward.25} parent=0 // pred_check_branch
    %212 = sbr.rel (0) target = $region21
  $region20: #{forward.25} parent=0 // pred_region
    _
  $region21: #{forward.25} parent=0 // pred_fallthru
    _

// kernel: forward.26
$region0: #{forward.26}
  #allocation0 [shape = 'u32[]', space=smem, size = 0x4, offset = 0x4, fixed_abs, tag = 'smem constant byte address 0x4 - core index']
  #allocation1 [shape = 'u32[144,128]{1,0:T(1,128)}', space=vmem, size = 0x12000, scoped, tag = 'internal scratch']
  %s0 = inlined_call_operand.vmem [shape: f32[128,16], index: 0, kind: input, shape index: {}]
  %s1 = inlined_call_operand.vmem [shape: f32[1,16], index: 1, kind: input, shape index: {}]
  %s2 = inlined_call_operand.vmem [shape: f32[1,16], index: 2, kind: input, shape index: {}]
  %s3 = inlined_call_operand.vmem [shape: f32[128,16], index: 3, kind: output, shape index: {}]
  %s4 = sld [smem:[#allocation0]]
  $region22: #{forward.26} parent=0
    _
  %s6 = ssub.s32 1, %s4
  %s7 = scalar_select 0, %s6, %s4
  // Predicated region
  $region2: #{forward.26} parent=0 // pred_check
    _
  $region3: #{forward.26} parent=0 // pred_check_branch
    %9 = sbr.rel (0) target = $region5
  $region4: #{forward.26} parent=0 // pred_region
    _
  $region5: #{forward.26} parent=0 // pred_fallthru
    _
  // Predicated region
  $region6: #{forward.26} parent=0 // pred_check
    _
  $region7: #{forward.26} parent=0 // pred_check_branch
    %11 = sbr.rel (0) target = $region9
  $region8: #{forward.26} parent=0 // pred_region
    _
  $region9: #{forward.26} parent=0 // pred_fallthru
    _
  // Predicated region
  $region10: #{forward.26} parent=0 // pred_check
    _
  $region11: #{forward.26} parent=0 // pred_check_branch
    %13 = sbr.rel (0) target = $region13
  $region12: #{forward.26} parent=0 // pred_region
    _
  $region13: #{forward.26} parent=0 // pred_fallthru
    _
  %v14 = vld [vmem:[%s0] sm:$0xff]
  %v15 = vld [vmem:[%s0 + $0x8] sm:$0xff]
  %v16 = vld [vmem:[%s0 + $0x10] sm:$0xff]
  %v17 = vld [vmem:[%s0 + $0x18] sm:$0xff]
  %v18 = vld [vmem:[%s0 + $0x20] sm:$0xff]
  %v19 = vld [vmem:[%s0 + $0x28] sm:$0xff]
  %v20 = vld [vmem:[%s0 + $0x30] sm:$0xff]
  %v21 = vld [vmem:[%s0 + $0x38] sm:$0xff]
  %v22 = vld [vmem:[%s0 + $0x40] sm:$0xff]
  %v23 = vld [vmem:[%s0 + $0x48] sm:$0xff]
  %v24 = vld [vmem:[%s0 + $0x50] sm:$0xff]
  %v25 = vld [vmem:[%s0 + $0x58] sm:$0xff]
  %v26 = vld [vmem:[%s0 + $0x60] sm:$0xff]
  %v27 = vld [vmem:[%s0 + $0x68] sm:$0xff]
  %v28 = vld [vmem:[%s0 + $0x70] sm:$0xff]
  %v29 = vld [vmem:[%s0 + $0x78] sm:$0xff]
  %vm30 = vcmask 130048
  %v31 = vsel %vm30, %v14, 0.0
  %32 = vadd.xlane.f32.xlu0 %v31
  %v33 = vpop.xlane.xlu0 %32
  %v34 = vsel %vm30, %v15, 0.0
  %35 = vadd.xlane.f32.xlu0 %v34
  %v36 = vpop.xlane.xlu0 %35
  %v37 = vsel %vm30, %v16, 0.0
  %38 = vadd.xlane.f32.xlu0 %v37
  %v39 = vpop.xlane.xlu0 %38
  %v40 = vsel %vm30, %v17, 0.0
  %41 = vadd.xlane.f32.xlu0 %v40
  %v42 = vpop.xlane.xlu0 %41
  %v43 = vsel %vm30, %v18, 0.0
  %44 = vadd.xlane.f32.xlu0 %v43
  %v45 = vpop.xlane.xlu0 %44
  %v46 = vsel %vm30, %v19, 0.0
  %47 = vadd.xlane.f32.xlu0 %v46
  %v48 = vpop.xlane.xlu0 %47
  %v49 = vsel %vm30, %v20, 0.0
  %50 = vadd.xlane.f32.xlu0 %v49
  %v51 = vpop.xlane.xlu0 %50
  %v52 = vsel %vm30, %v21, 0.0
  %53 = vadd.xlane.f32.xlu0 %v52
  %v54 = vpop.xlane.xlu0 %53
  %v55 = vsel %vm30, %v22, 0.0
  %56 = vadd.xlane.f32.xlu0 %v55
  %v57 = vpop.xlane.xlu0 %56
  %v58 = vsel %vm30, %v23, 0.0
  %59 = vadd.xlane.f32.xlu0 %v58
  %v60 = vpop.xlane.xlu0 %59
  %v61 = vsel %vm30, %v24, 0.0
  %62 = vadd.xlane.f32.xlu0 %v61
  %v63 = vpop.xlane.xlu0 %62
  %v64 = vsel %vm30, %v25, 0.0
  %65 = vadd.xlane.f32.xlu0 %v64
  %v66 = vpop.xlane.xlu0 %65
  %v67 = vsel %vm30, %v26, 0.0
  %68 = vadd.xlane.f32.xlu0 %v67
  %v69 = vpop.xlane.xlu0 %68
  %v70 = vsel %vm30, %v27, 0.0
  %71 = vadd.xlane.f32.xlu0 %v70
  %v72 = vpop.xlane.xlu0 %71
  %v73 = vsel %vm30, %v28, 0.0
  %74 = vadd.xlane.f32.xlu0 %v73
  %v75 = vpop.xlane.xlu0 %74
  %v76 = vsel %vm30, %v29, 0.0
  %77 = vadd.xlane.f32.xlu0 %v76
  %v78 = vpop.xlane.xlu0 %77
  %v79 = vrcp.pop 16.0
  %v80 = vmul.f32 %v33, %v79
  %v81 = vmul.f32 %v36, %v79
  %v82 = vmul.f32 %v39, %v79
  %v83 = vmul.f32 %v42, %v79
  %v84 = vmul.f32 %v45, %v79
  %v85 = vmul.f32 %v48, %v79
  %v86 = vmul.f32 %v51, %v79
  %v87 = vmul.f32 %v54, %v79
  %v88 = vmul.f32 %v57, %v79
  %v89 = vmul.f32 %v60, %v79
  %v90 = vmul.f32 %v63, %v79
  %v91 = vmul.f32 %v66, %v79
  %v92 = vmul.f32 %v69, %v79
  %v93 = vmul.f32 %v72, %v79
  %v94 = vmul.f32 %v75, %v79
  %v95 = vmul.f32 %v78, %v79
  %v96 = vsub.f32 %v14, %v80
  %v97 = vsub.f32 %v15, %v81
  %v98 = vsub.f32 %v16, %v82
  %v99 = vsub.f32 %v17, %v83
  %v100 = vsub.f32 %v18, %v84
  %v101 = vsub.f32 %v19, %v85
  %v102 = vsub.f32 %v20, %v86
  %v103 = vsub.f32 %v21, %v87
  %v104 = vsub.f32 %v22, %v88
  %v105 = vsub.f32 %v23, %v89
  %v106 = vsub.f32 %v24, %v90
  %v107 = vsub.f32 %v25, %v91
  %v108 = vsub.f32 %v26, %v92
  %v109 = vsub.f32 %v27, %v93
  %v110 = vsub.f32 %v28, %v94
  %v111 = vsub.f32 %v29, %v95
  %v112 = vmul.f32 %v96, %v96
  %v113 = vmul.f32 %v97, %v97
  %v114 = vmul.f32 %v98, %v98
  %v115 = vmul.f32 %v99, %v99
  %v116 = vmul.f32 %v100, %v100
  %v117 = vmul.f32 %v101, %v101
  %v118 = vmul.f32 %v102, %v102
  %v119 = vmul.f32 %v103, %v103
  %v120 = vmul.f32 %v104, %v104
  %v121 = vmul.f32 %v105, %v105
  %v122 = vmul.f32 %v106, %v106
  %v123 = vmul.f32 %v107, %v107
  %v124 = vmul.f32 %v108, %v108
  %v125 = vmul.f32 %v109, %v109
  %v126 = vmul.f32 %v110, %v110
  %v127 = vmul.f32 %v111, %v111
  %v128 = vsel %vm30, %v112, 0.0
  %129 = vadd.xlane.f32.xlu0 %v128
  %v130 = vpop.xlane.xlu0 %129
  %v131 = vsel %vm30, %v113, 0.0
  %132 = vadd.xlane.f32.xlu0 %v131
  %v133 = vpop.xlane.xlu0 %132
  %v134 = vsel %vm30, %v114, 0.0
  %135 = vadd.xlane.f32.xlu0 %v134
  %v136 = vpop.xlane.xlu0 %135
  %v137 = vsel %vm30, %v115, 0.0
  %138 = vadd.xlane.f32.xlu0 %v137
  %v139 = vpop.xlane.xlu0 %138
  %v140 = vsel %vm30, %v116, 0.0
  %141 = vadd.xlane.f32.xlu0 %v140
  %v142 = vpop.xlane.xlu0 %141
  %v143 = vsel %vm30, %v117, 0.0
  %144 = vadd.xlane.f32.xlu0 %v143
  %v145 = vpop.xlane.xlu0 %144
  %v146 = vsel %vm30, %v118, 0.0
  %147 = vadd.xlane.f32.xlu0 %v146
  %v148 = vpop.xlane.xlu0 %147
  %v149 = vsel %vm30, %v119, 0.0
  %150 = vadd.xlane.f32.xlu0 %v149
  %v151 = vpop.xlane.xlu0 %150
  %v152 = vsel %vm30, %v120, 0.0
  %153 = vadd.xlane.f32.xlu0 %v152
  %v154 = vpop.xlane.xlu0 %153
  %v155 = vsel %vm30, %v121, 0.0
  %156 = vadd.xlane.f32.xlu0 %v155
  %v157 = vpop.xlane.xlu0 %156
  %v158 = vsel %vm30, %v122, 0.0
  %159 = vadd.xlane.f32.xlu0 %v158
  %v160 = vpop.xlane.xlu0 %159
  %v161 = vsel %vm30, %v123, 0.0
  %162 = vadd.xlane.f32.xlu0 %v161
  %v163 = vpop.xlane.xlu0 %162
  %v164 = vsel %vm30, %v124, 0.0
  %165 = vadd.xlane.f32.xlu0 %v164
  %v166 = vpop.xlane.xlu0 %165
  %v167 = vsel %vm30, %v125, 0.0
  %168 = vadd.xlane.f32.xlu0 %v167
  %v169 = vpop.xlane.xlu0 %168
  %v170 = vsel %vm30, %v126, 0.0
  %171 = vadd.xlane.f32.xlu0 %v170
  %v172 = vpop.xlane.xlu0 %171
  %v173 = vsel %vm30, %v127, 0.0
  %174 = vadd.xlane.f32.xlu0 %v173
  %v175 = vpop.xlane.xlu0 %174
  %v176 = vmul.f32 %v130, %v79
  %v177 = vmul.f32 %v133, %v79
  %v178 = vmul.f32 %v136, %v79
  %v179 = vmul.f32 %v139, %v79
  %v180 = vmul.f32 %v142, %v79
  %v181 = vmul.f32 %v145, %v79
  %v182 = vmul.f32 %v148, %v79
  %v183 = vmul.f32 %v151, %v79
  %v184 = vmul.f32 %v154, %v79
  %v185 = vmul.f32 %v157, %v79
  %v186 = vmul.f32 %v160, %v79
  %v187 = vmul.f32 %v163, %v79
  %v188 = vmul.f32 %v166, %v79
  %v189 = vmul.f32 %v169, %v79
  %v190 = vmul.f32 %v172, %v79
  %v191 = vmul.f32 %v175, %v79
  %v192 = vadd.f32 %v176, 1e-05
  %v193 = vadd.f32 %v177, 1e-05
  %v194 = vadd.f32 %v178, 1e-05
  %v195 = vadd.f32 %v179, 1e-05
  %v196 = vadd.f32 %v180, 1e-05
  %v197 = vadd.f32 %v181, 1e-05
  %v198 = vadd.f32 %v182, 1e-05
  %v199 = vadd.f32 %v183, 1e-05
  %v200 = vadd.f32 %v184, 1e-05
  %v201 = vadd.f32 %v185, 1e-05
  %v202 = vadd.f32 %v186, 1e-05
  %v203 = vadd.f32 %v187, 1e-05
  %v204 = vadd.f32 %v188, 1e-05
  %v205 = vadd.f32 %v189, 1e-05
  %v206 = vadd.f32 %v190, 1e-05
  %v207 = vadd.f32 %v191, 1e-05
  %v208 = vrsqrt.pop %v192
  %v209 = vrsqrt.pop %v193
  %v210 = vrsqrt.pop %v194
  %v211 = vrsqrt.pop %v195
  %v212 = vrsqrt.pop %v196
  %v213 = vrsqrt.pop %v197
  %v214 = vrsqrt.pop %v198
  %v215 = vrsqrt.pop %v199
  %v216 = vrsqrt.pop %v200
  %v217 = vrsqrt.pop %v201
  %v218 = vrsqrt.pop %v202
  %v219 = vrsqrt.pop %v203
  %v220 = vrsqrt.pop %v204
  %v221 = vrsqrt.pop %v205
  %v222 = vrsqrt.pop %v206
  %v223 = vrsqrt.pop %v207
  %v224 = vmul.f32 %v96, %v208
  %v225 = vmul.f32 %v97, %v209
  %v226 = vmul.f32 %v98, %v210
  %v227 = vmul.f32 %v99, %v211
  %v228 = vmul.f32 %v100, %v212
  %v229 = vmul.f32 %v101, %v213
  %v230 = vmul.f32 %v102, %v214
  %v231 = vmul.f32 %v103, %v215
  %v232 = vmul.f32 %v104, %v216
  %v233 = vmul.f32 %v105, %v217
  %v234 = vmul.f32 %v106, %v218
  %v235 = vmul.f32 %v107, %v219
  %v236 = vmul.f32 %v108, %v220
  %v237 = vmul.f32 %v109, %v221
  %v238 = vmul.f32 %v110, %v222
  %v239 = vmul.f32 %v111, %v223
  %v240 = vld [vmem:[%s1] sm:$0x1]
  %v242 = vlaneseq
  %v243 = vshrl.u32 %v242, 7
  %v244 = vsub.s32 0, %v243
  %v245 = vrot.slane %v240, %v244
  %v247 = vmul.f32 %v224, %v245
  %v248 = vmul.f32 %v225, %v245
  %v249 = vmul.f32 %v226, %v245
  %v250 = vmul.f32 %v227, %v245
  %v251 = vmul.f32 %v228, %v245
  %v252 = vmul.f32 %v229, %v245
  %v253 = vmul.f32 %v230, %v245
  %v254 = vmul.f32 %v231, %v245
  %v255 = vmul.f32 %v232, %v245
  %v256 = vmul.f32 %v233, %v245
  %v257 = vmul.f32 %v234, %v245
  %v258 = vmul.f32 %v235, %v245
  %v259 = vmul.f32 %v236, %v245
  %v260 = vmul.f32 %v237, %v245
  %v261 = vmul.f32 %v238, %v245
  %v262 = vmul.f32 %v239, %v245
  %v263 = vld [vmem:[%s2] sm:$0x1]
  %v265 = vlaneseq
  %v266 = vshrl.u32 %v265, 7
  %v267 = vsub.s32 0, %v266
  %v268 = vrot.slane %v263, %v267
  %v270 = vadd.f32 %v247, %v268
  %v271 = vadd.f32 %v248, %v268
  %v272 = vadd.f32 %v249, %v268
  %v273 = vadd.f32 %v250, %v268
  %v274 = vadd.f32 %v251, %v268
  %v275 = vadd.f32 %v252, %v268
  %v276 = vadd.f32 %v253, %v268
  %v277 = vadd.f32 %v254, %v268
  %v278 = vadd.f32 %v255, %v268
  %v279 = vadd.f32 %v256, %v268
  %v280 = vadd.f32 %v257, %v268
  %v281 = vadd.f32 %v258, %v268
  %v282 = vadd.f32 %v259, %v268
  %v283 = vadd.f32 %v260, %v268
  %v284 = vadd.f32 %v261, %v268
  %v285 = vadd.f32 %v262, %v268
  %286 = vst.msk [vmem:[%s3] sm:$0xff] %vm30, %v270
  %287 = vst.msk [vmem:[%s3 + $0x8] sm:$0xff] %vm30, %v271
  %288 = vst.msk [vmem:[%s3 + $0x10] sm:$0xff] %vm30, %v272
  %289 = vst.msk [vmem:[%s3 + $0x18] sm:$0xff] %vm30, %v273
  %290 = vst.msk [vmem:[%s3 + $0x20] sm:$0xff] %vm30, %v274
  %291 = vst.msk [vmem:[%s3 + $0x28] sm:$0xff] %vm30, %v275
  %292 = vst.msk [vmem:[%s3 + $0x30] sm:$0xff] %vm30, %v276
  %293 = vst.msk [vmem:[%s3 + $0x38] sm:$0xff] %vm30, %v277
  %294 = vst.msk [vmem:[%s3 + $0x40] sm:$0xff] %vm30, %v278
  %295 = vst.msk [vmem:[%s3 + $0x48] sm:$0xff] %vm30, %v279
  %296 = vst.msk [vmem:[%s3 + $0x50] sm:$0xff] %vm30, %v280
  %297 = vst.msk [vmem:[%s3 + $0x58] sm:$0xff] %vm30, %v281
  %298 = vst.msk [vmem:[%s3 + $0x60] sm:$0xff] %vm30, %v282
  %299 = vst.msk [vmem:[%s3 + $0x68] sm:$0xff] %vm30, %v283
  %300 = vst.msk [vmem:[%s3 + $0x70] sm:$0xff] %vm30, %v284
  %301 = vst.msk [vmem:[%s3 + $0x78] sm:$0xff] %vm30, %v285
  // Predicated region
  $region14: #{forward.26} parent=0 // pred_check
    _
  $region15: #{forward.26} parent=0 // pred_check_branch
    %303 = sbr.rel (0) target = $region17
  $region16: #{forward.26} parent=0 // pred_region
    _
  $region17: #{forward.26} parent=0 // pred_fallthru
    _
  // Predicated region
  $region18: #{forward.26} parent=0 // pred_check
    _
  $region19: #{forward.26} parent=0 // pred_check_branch
    %305 = sbr.rel (0) target = $region21
  $region20: #{forward.26} parent=0 // pred_region
    _
  $region21: #{forward.26} parent=0 // pred_fallthru
    _

// kernel: forward.27
$region0: #{forward.27}
  #allocation0 [shape = 'u32[]', space=smem, size = 0x4, offset = 0x4, fixed_abs, tag = 'smem constant byte address 0x4 - core index']
  #allocation1 [shape = 'u32[144,128]{1,0:T(1,128)}', space=vmem, size = 0x12000, scoped, tag = 'internal scratch']
  #allocation2 [shape = 'bf16[128,16]{1,0:T(16,128)(2,1)}', space=vmem, size = 0x8000, scoped, tag = 'scratch operand']
  %s0 = inlined_call_operand.vmem [shape: f32[128,16], index: 0, kind: input, shape index: {}]
  %s1 = inlined_call_operand.vmem [shape: bf16[16,128], index: 1, kind: input, shape index: {}]
  %s2 = inlined_call_operand.vmem [shape: f32[1,128], index: 2, kind: input, shape index: {}]
  %s3 = inlined_call_operand.vmem [shape: f32[1,16], index: 3, kind: input, shape index: {}]
  %s4 = inlined_call_operand.vmem [shape: f32[1,16], index: 4, kind: input, shape index: {}]
  %s5 = inlined_call_operand.vmem [shape: bf16[128,128], index: 5, kind: output, shape index: {}]
  %s6 = sld [smem:[#allocation0]]
  $region34: #{forward.27} parent=0
    _
  %s8 = ssub.s32 1, %s6
  %s9 = scalar_select 0, %s8, %s6
  // Predicated region
  $region2: #{forward.27} parent=0 // pred_check
    _
  $region3: #{forward.27} parent=0 // pred_check_branch
    %11 = sbr.rel (0) target = $region5
  $region4: #{forward.27} parent=0 // pred_region
    _
  $region5: #{forward.27} parent=0 // pred_fallthru
    _
  // Predicated region
  $region6: #{forward.27} parent=0 // pred_check
    _
  $region7: #{forward.27} parent=0 // pred_check_branch
    %13 = sbr.rel (0) target = $region9
  $region8: #{forward.27} parent=0 // pred_region
    _
  $region9: #{forward.27} parent=0 // pred_fallthru
    _
  // Predicated region
  $region10: #{forward.27} parent=0 // pred_check
    _
  $region11: #{forward.27} parent=0 // pred_check_branch
    %15 = sbr.rel (0) target = $region13
  $region12: #{forward.27} parent=0 // pred_region
    _
  $region13: #{forward.27} parent=0 // pred_fallthru
    _
  // Predicated region
  $region14: #{forward.27} parent=0 // pred_check
    _
  $region15: #{forward.27} parent=0 // pred_check_branch
    %17 = sbr.rel (0) target = $region17
  $region16: #{forward.27} parent=0 // pred_region
    _
  $region17: #{forward.27} parent=0 // pred_fallthru
    _
  // Predicated region
  $region18: #{forward.27} parent=0 // pred_check
    _
  $region19: #{forward.27} parent=0 // pred_check_branch
    %19 = sbr.rel (0) target = $region21
  $region20: #{forward.27} parent=0 // pred_region
    _
  $region21: #{forward.27} parent=0 // pred_fallthru
    _
  %p21 = scmp.eq.s32.totalorder 0, 0
  // Predicated region
  $region22: #{forward.27} parent=0 // pred_check
    %p22 = pneg %p21
  $region23: #{forward.27} parent=0 // pred_check_branch
    %24 = sbr.rel (%p22) target = $region25
  $region24: #{forward.27} parent=0 // pred_region
    %v25 = vld [vmem:[%s0] sm:$0xff]
    %v26 = vld [vmem:[%s0 + $0x8] sm:$0xff]
    %v27 = vld [vmem:[%s0 + $0x10] sm:$0xff]
    %v28 = vld [vmem:[%s0 + $0x18] sm:$0xff]
    %v29 = vld [vmem:[%s0 + $0x20] sm:$0xff]
    %v30 = vld [vmem:[%s0 + $0x28] sm:$0xff]
    %v31 = vld [vmem:[%s0 + $0x30] sm:$0xff]
    %v32 = vld [vmem:[%s0 + $0x38] sm:$0xff]
    %v33 = vld [vmem:[%s0 + $0x40] sm:$0xff]
    %v34 = vld [vmem:[%s0 + $0x48] sm:$0xff]
    %v35 = vld [vmem:[%s0 + $0x50] sm:$0xff]
    %v36 = vld [vmem:[%s0 + $0x58] sm:$0xff]
    %v37 = vld [vmem:[%s0 + $0x60] sm:$0xff]
    %v38 = vld [vmem:[%s0 + $0x68] sm:$0xff]
    %v39 = vld [vmem:[%s0 + $0x70] sm:$0xff]
    %v40 = vld [vmem:[%s0 + $0x78] sm:$0xff]
    %vm41 = vcmask 130048
    %v42 = vsel %vm41, %v25, 0.0
    %43 = vadd.xlane.f32.xlu0 %v42
    %v44 = vpop.xlane.xlu0 %43
    %v45 = vsel %vm41, %v26, 0.0
    %46 = vadd.xlane.f32.xlu0 %v45
    %v47 = vpop.xlane.xlu0 %46
    %v48 = vsel %vm41, %v27, 0.0
    %49 = vadd.xlane.f32.xlu0 %v48
    %v50 = vpop.xlane.xlu0 %49
    %v51 = vsel %vm41, %v28, 0.0
    %52 = vadd.xlane.f32.xlu0 %v51
    %v53 = vpop.xlane.xlu0 %52
    %v54 = vsel %vm41, %v29, 0.0
    %55 = vadd.xlane.f32.xlu0 %v54
    %v56 = vpop.xlane.xlu0 %55
    %v57 = vsel %vm41, %v30, 0.0
    %58 = vadd.xlane.f32.xlu0 %v57
    %v59 = vpop.xlane.xlu0 %58
    %v60 = vsel %vm41, %v31, 0.0
    %61 = vadd.xlane.f32.xlu0 %v60
    %v62 = vpop.xlane.xlu0 %61
    %v63 = vsel %vm41, %v32, 0.0
    %64 = vadd.xlane.f32.xlu0 %v63
    %v65 = vpop.xlane.xlu0 %64
    %v66 = vsel %vm41, %v33, 0.0
    %67 = vadd.xlane.f32.xlu0 %v66
    %v68 = vpop.xlane.xlu0 %67
    %v69 = vsel %vm41, %v34, 0.0
    %70 = vadd.xlane.f32.xlu0 %v69
    %v71 = vpop.xlane.xlu0 %70
    %v72 = vsel %vm41, %v35, 0.0
    %73 = vadd.xlane.f32.xlu0 %v72
    %v74 = vpop.xlane.xlu0 %73
    %v75 = vsel %vm41, %v36, 0.0
    %76 = vadd.xlane.f32.xlu0 %v75
    %v77 = vpop.xlane.xlu0 %76
    %v78 = vsel %vm41, %v37, 0.0
    %79 = vadd.xlane.f32.xlu0 %v78
    %v80 = vpop.xlane.xlu0 %79
    %v81 = vsel %vm41, %v38, 0.0
    %82 = vadd.xlane.f32.xlu0 %v81
    %v83 = vpop.xlane.xlu0 %82
    %v84 = vsel %vm41, %v39, 0.0
    %85 = vadd.xlane.f32.xlu0 %v84
    %v86 = vpop.xlane.xlu0 %85
    %v87 = vsel %vm41, %v40, 0.0
    %88 = vadd.xlane.f32.xlu0 %v87
    %v89 = vpop.xlane.xlu0 %88
    %v90 = vrcp.pop 16.0
    %v91 = vmul.f32 %v44, %v90
    %v92 = vmul.f32 %v47, %v90
    %v93 = vmul.f32 %v50, %v90
    %v94 = vmul.f32 %v53, %v90
    %v95 = vmul.f32 %v56, %v90
    %v96 = vmul.f32 %v59, %v90
    %v97 = vmul.f32 %v62, %v90
    %v98 = vmul.f32 %v65, %v90
    %v99 = vmul.f32 %v68, %v90
    %v100 = vmul.f32 %v71, %v90
    %v101 = vmul.f32 %v74, %v90
    %v102 = vmul.f32 %v77, %v90
    %v103 = vmul.f32 %v80, %v90
    %v104 = vmul.f32 %v83, %v90
    %v105 = vmul.f32 %v86, %v90
    %v106 = vmul.f32 %v89, %v90
    %v107 = vsub.f32 %v25, %v91
    %v108 = vsub.f32 %v26, %v92
    %v109 = vsub.f32 %v27, %v93
    %v110 = vsub.f32 %v28, %v94
    %v111 = vsub.f32 %v29, %v95
    %v112 = vsub.f32 %v30, %v96
    %v113 = vsub.f32 %v31, %v97
    %v114 = vsub.f32 %v32, %v98
    %v115 = vsub.f32 %v33, %v99
    %v116 = vsub.f32 %v34, %v100
    %v117 = vsub.f32 %v35, %v101
    %v118 = vsub.f32 %v36, %v102
    %v119 = vsub.f32 %v37, %v103
    %v120 = vsub.f32 %v38, %v104
    %v121 = vsub.f32 %v39, %v105
    %v122 = vsub.f32 %v40, %v106
    %v123 = vmul.f32 %v107, %v107
    %v124 = vmul.f32 %v108, %v108
    %v125 = vmul.f32 %v109, %v109
    %v126 = vmul.f32 %v110, %v110
    %v127 = vmul.f32 %v111, %v111
    %v128 = vmul.f32 %v112, %v112
    %v129 = vmul.f32 %v113, %v113
    %v130 = vmul.f32 %v114, %v114
    %v131 = vmul.f32 %v115, %v115
    %v132 = vmul.f32 %v116, %v116
    %v133 = vmul.f32 %v117, %v117
    %v134 = vmul.f32 %v118, %v118
    %v135 = vmul.f32 %v119, %v119
    %v136 = vmul.f32 %v120, %v120
    %v137 = vmul.f32 %v121, %v121
    %v138 = vmul.f32 %v122, %v122
    %v139 = vsel %vm41, %v123, 0.0
    %140 = vadd.xlane.f32.xlu0 %v139
    %v141 = vpop.xlane.xlu0 %140
    %v142 = vsel %vm41, %v124, 0.0
    %143 = vadd.xlane.f32.xlu0 %v142
    %v144 = vpop.xlane.xlu0 %143
    %v145 = vsel %vm41, %v125, 0.0
    %146 = vadd.xlane.f32.xlu0 %v145
    %v147 = vpop.xlane.xlu0 %146
    %v148 = vsel %vm41, %v126, 0.0
    %149 = vadd.xlane.f32.xlu0 %v148
    %v150 = vpop.xlane.xlu0 %149
    %v151 = vsel %vm41, %v127, 0.0
    %152 = vadd.xlane.f32.xlu0 %v151
    %v153 = vpop.xlane.xlu0 %152
    %v154 = vsel %vm41, %v128, 0.0
    %155 = vadd.xlane.f32.xlu0 %v154
    %v156 = vpop.xlane.xlu0 %155
    %v157 = vsel %vm41, %v129, 0.0
    %158 = vadd.xlane.f32.xlu0 %v157
    %v159 = vpop.xlane.xlu0 %158
    %v160 = vsel %vm41, %v130, 0.0
    %161 = vadd.xlane.f32.xlu0 %v160
    %v162 = vpop.xlane.xlu0 %161
    %v163 = vsel %vm41, %v131, 0.0
    %164 = vadd.xlane.f32.xlu0 %v163
    %v165 = vpop.xlane.xlu0 %164
    %v166 = vsel %vm41, %v132, 0.0
    %167 = vadd.xlane.f32.xlu0 %v166
    %v168 = vpop.xlane.xlu0 %167
    %v169 = vsel %vm41, %v133, 0.0
    %170 = vadd.xlane.f32.xlu0 %v169
    %v171 = vpop.xlane.xlu0 %170
    %v172 = vsel %vm41, %v134, 0.0
    %173 = vadd.xlane.f32.xlu0 %v172
    %v174 = vpop.xlane.xlu0 %173
    %v175 = vsel %vm41, %v135, 0.0
    %176 = vadd.xlane.f32.xlu0 %v175
    %v177 = vpop.xlane.xlu0 %176
    %v178 = vsel %vm41, %v136, 0.0
    %179 = vadd.xlane.f32.xlu0 %v178
    %v180 = vpop.xlane.xlu0 %179
    %v181 = vsel %vm41, %v137, 0.0
    %182 = vadd.xlane.f32.xlu0 %v181
    %v183 = vpop.xlane.xlu0 %182
    %v184 = vsel %vm41, %v138, 0.0
    %185 = vadd.xlane.f32.xlu0 %v184
    %v186 = vpop.xlane.xlu0 %185
    %v187 = vmul.f32 %v141, %v90
    %v188 = vmul.f32 %v144, %v90
    %v189 = vmul.f32 %v147, %v90
    %v190 = vmul.f32 %v150, %v90
    %v191 = vmul.f32 %v153, %v90
    %v192 = vmul.f32 %v156, %v90
    %v193 = vmul.f32 %v159, %v90
    %v194 = vmul.f32 %v162, %v90
    %v195 = vmul.f32 %v165, %v90
    %v196 = vmul.f32 %v168, %v90
    %v197 = vmul.f32 %v171, %v90
    %v198 = vmul.f32 %v174, %v90
    %v199 = vmul.f32 %v177, %v90
    %v200 = vmul.f32 %v180, %v90
    %v201 = vmul.f32 %v183, %v90
    %v202 = vmul.f32 %v186, %v90
    %v203 = vadd.f32 %v187, 1e-05
    %v204 = vadd.f32 %v188, 1e-05
    %v205 = vadd.f32 %v189, 1e-05
    %v206 = vadd.f32 %v190, 1e-05
    %v207 = vadd.f32 %v191, 1e-05
    %v208 = vadd.f32 %v192, 1e-05
    %v209 = vadd.f32 %v193, 1e-05
    %v210 = vadd.f32 %v194, 1e-05
    %v211 = vadd.f32 %v195, 1e-05
    %v212 = vadd.f32 %v196, 1e-05
    %v213 = vadd.f32 %v197, 1e-05
    %v214 = vadd.f32 %v198, 1e-05
    %v215 = vadd.f32 %v199, 1e-05
    %v216 = vadd.f32 %v200, 1e-05
    %v217 = vadd.f32 %v201, 1e-05
    %v218 = vadd.f32 %v202, 1e-05
    %v219 = vrsqrt.pop %v203
    %v220 = vrsqrt.pop %v204
    %v221 = vrsqrt.pop %v205
    %v222 = vrsqrt.pop %v206
    %v223 = vrsqrt.pop %v207
    %v224 = vrsqrt.pop %v208
    %v225 = vrsqrt.pop %v209
    %v226 = vrsqrt.pop %v210
    %v227 = vrsqrt.pop %v211
    %v228 = vrsqrt.pop %v212
    %v229 = vrsqrt.pop %v213
    %v230 = vrsqrt.pop %v214
    %v231 = vrsqrt.pop %v215
    %v232 = vrsqrt.pop %v216
    %v233 = vrsqrt.pop %v217
    %v234 = vrsqrt.pop %v218
    %v235 = vmul.f32 %v107, %v219
    %v236 = vmul.f32 %v108, %v220
    %v237 = vmul.f32 %v109, %v221
    %v238 = vmul.f32 %v110, %v222
    %v239 = vmul.f32 %v111, %v223
    %v240 = vmul.f32 %v112, %v224
    %v241 = vmul.f32 %v113, %v225
    %v242 = vmul.f32 %v114, %v226
    %v243 = vmul.f32 %v115, %v227
    %v244 = vmul.f32 %v116, %v228
    %v245 = vmul.f32 %v117, %v229
    %v246 = vmul.f32 %v118, %v230
    %v247 = vmul.f32 %v119, %v231
    %v248 = vmul.f32 %v120, %v232
    %v249 = vmul.f32 %v121, %v233
    %v250 = vmul.f32 %v122, %v234
    %v251 = vld [vmem:[%s3] sm:$0x1]
    %v253 = vlaneseq
    %v254 = vshrl.u32 %v253, 7
    %v255 = vsub.s32 0, %v254
    %v256 = vrot.slane %v251, %v255
    %v258 = vmul.f32 %v235, %v256
    %v259 = vmul.f32 %v236, %v256
    %v260 = vmul.f32 %v237, %v256
    %v261 = vmul.f32 %v238, %v256
    %v262 = vmul.f32 %v239, %v256
    %v263 = vmul.f32 %v240, %v256
    %v264 = vmul.f32 %v241, %v256
    %v265 = vmul.f32 %v242, %v256
    %v266 = vmul.f32 %v243, %v256
    %v267 = vmul.f32 %v244, %v256
    %v268 = vmul.f32 %v245, %v256
    %v269 = vmul.f32 %v246, %v256
    %v270 = vmul.f32 %v247, %v256
    %v271 = vmul.f32 %v248, %v256
    %v272 = vmul.f32 %v249, %v256
    %v273 = vmul.f32 %v250, %v256
    %v274 = vld [vmem:[%s4] sm:$0x1]
    %v276 = vlaneseq
    %v277 = vshrl.u32 %v276, 7
    %v278 = vsub.s32 0, %v277
    %v279 = vrot.slane %v274, %v278
    %v281 = vadd.f32 %v258, %v279
    %v282 = vadd.f32 %v259, %v279
    %v283 = vadd.f32 %v260, %v279
    %v284 = vadd.f32 %v261, %v279
    %v285 = vadd.f32 %v262, %v279
    %v286 = vadd.f32 %v263, %v279
    %v287 = vadd.f32 %v264, %v279
    %v288 = vadd.f32 %v265, %v279
    %v289 = vadd.f32 %v266, %v279
    %v290 = vadd.f32 %v267, %v279
    %v291 = vadd.f32 %v268, %v279
    %v292 = vadd.f32 %v269, %v279
    %v293 = vadd.f32 %v270, %v279
    %v294 = vadd.f32 %v271, %v279
    %v295 = vadd.f32 %v272, %v279
    %v296 = vadd.f32 %v273, %v279
    %v297 = vpack.c.bf16 %v282, %v281
    %v298 = vpack.c.bf16 %v284, %v283
    %v299 = vpack.c.bf16 %v286, %v285
    %v300 = vpack.c.bf16 %v288, %v287
    %v301 = vpack.c.bf16 %v290, %v289
    %v302 = vpack.c.bf16 %v292, %v291
    %v303 = vpack.c.bf16 %v294, %v293
    %v304 = vpack.c.bf16 %v296, %v295
    %305 = vst.msk [vmem:[#allocation2] sm:$0xff] %vm41, %v297
    %306 = vst.msk [vmem:[#allocation2 + $0x8] sm:$0xff] %vm41, %v298
    %307 = vst.msk [vmem:[#allocation2 + $0x10] sm:$0xff] %vm41, %v299
    %308 = vst.msk [vmem:[#allocation2 + $0x18] sm:$0xff] %vm41, %v300
    %309 = vst.msk [vmem:[#allocation2 + $0x20] sm:$0xff] %vm41, %v301
    %310 = vst.msk [vmem:[#allocation2 + $0x28] sm:$0xff] %vm41, %v302
    %311 = vst.msk [vmem:[#allocation2 + $0x30] sm:$0xff] %vm41, %v303
    %312 = vst.msk [vmem:[#allocation2 + $0x38] sm:$0xff] %vm41, %v304
  $region25: #{forward.27} parent=0 // pred_fallthru
    _
  %v313 = vld [vmem:[#allocation2] sm:$0xff]
  %v314 = vld [vmem:[#allocation2 + $0x8] sm:$0xff]
  %v315 = vld [vmem:[#allocation2 + $0x10] sm:$0xff]
  %v316 = vld [vmem:[#allocation2 + $0x18] sm:$0xff]
  %v317 = vld [vmem:[#allocation2 + $0x20] sm:$0xff]
  %v318 = vld [vmem:[#allocation2 + $0x28] sm:$0xff]
  %v319 = vld [vmem:[#allocation2 + $0x30] sm:$0xff]
  %v320 = vld [vmem:[#allocation2 + $0x38] sm:$0xff]
  %v321 = vld [vmem:[%s1] sm:$0xf]
  %v322 = vld [vmem:[%s1 + $0x4] sm:$0xf]
  %v323 = vld [vmem:[%s2] sm:$0x1]
  %v325 = vlaneseq
  %v326 = vshrl.u32 %v325, 7
  %v327 = vsub.s32 0, %v326
  %v328 = vrot.slane %v323, %v327
  %v332 = vunpack.c.l.b16 %v321
  %v333 = vunpack.c.l.b16 %v322
  %v334 = vpack.c.b16 %v333, %v332
  %vm336 = vcmask 130048
  %v338 = vsel %vm336, %v313, 0
  %v341 = vsel %vm336, %v314, 0
  %v344 = vsel %vm336, %v315, 0
  %v347 = vsel %vm336, %v316, 0
  %v350 = vsel %vm336, %v317, 0
  %v353 = vsel %vm336, %v318, 0
  %v356 = vsel %vm336, %v319, 0
  %v359 = vsel %vm336, %v320, 0
  %361 = vmatprep.subr.bf16.mxu0 0
  %362 = vmatpush1.bf16.msra.mxu0 %v334
  %363 = vmatprep.subr.bf16.mxu0 0
  %364 = vmatpush1.bf16.msra.mxu0 0
  %365 = vmatprep.subr.bf16.mxu0 0
  %366 = vmatpush1.bf16.msra.mxu0 0
  %367 = vmatprep.subr.bf16.mxu0 0
  %368 = vmatpush1.bf16.msra.mxu0 0
  %369 = vmatprep.subr.bf16.mxu0 0
  %370 = vmatpush1.bf16.msra.mxu0 0
  %371 = vmatprep.subr.bf16.mxu0 0
  %372 = vmatpush1.bf16.msra.mxu0 0
  %373 = vmatprep.subr.bf16.mxu0 0
  %374 = vmatpush1.bf16.msra.mxu0 0
  %375 = vmatprep.subr.bf16.mxu0 0
  %376 = vmatpush1.bf16.msra.mxu0 0
  %377 = vmatprep.subr.bf16.mxu0 0
  %378 = vmatpush1.bf16.msra.mxu0 0
  %379 = vmatprep.subr.bf16.mxu0 0
  %380 = vmatpush1.bf16.msra.mxu0 0
  %381 = vmatprep.subr.bf16.mxu0 0
  %382 = vmatpush1.bf16.msra.mxu0 0
  %383 = vmatprep.subr.bf16.mxu0 0
  %384 = vmatpush1.bf16.msra.mxu0 0
  %385 = vmatprep.subr.bf16.mxu0 0
  %386 = vmatpush1.bf16.msra.mxu0 0
  %387 = vmatprep.subr.bf16.mxu0 0
  %388 = vmatpush1.bf16.msra.mxu0 0
  %389 = vmatprep.subr.bf16.mxu0 0
  %390 = vmatpush1.bf16.msra.mxu0 0
  %391 = vmatprep.subr.bf16.mxu0 0
  %392 = vmatpush1.bf16.msra.mxu0 0
  %393 = vmatprep.mubr.bf16.mxu0 0
  %394 = vmatmul.mubr.bf16.gmra.mrb[0].mxu0 %v338
  %v395 = vpop.f32.mrb[0].mxu0
  %v396 = vadd.f32 %v328, %v395
  %v397 = vpop.f32.mrb[0].mxu0
  %v398 = vpop.f32.mrb[0].mxu0
  %v399 = vadd.f32 %v328, %v398
  %v400 = vpop.f32.mrb[0].mxu0
  %401 = vmatprep.mubr.bf16.mxu0 0
  %402 = vmatmul.mubr.bf16.gmra.mrb[0].mxu0 %v341
  %v403 = vpop.f32.mrb[0].mxu0
  %v404 = vadd.f32 %v328, %v403
  %v405 = vpop.f32.mrb[0].mxu0
  %v406 = vpop.f32.mrb[0].mxu0
  %v407 = vadd.f32 %v328, %v406
  %v408 = vpop.f32.mrb[0].mxu0
  %409 = vmatprep.mubr.bf16.mxu0 0
  %410 = vmatmul.mubr.bf16.gmra.mrb[0].mxu0 %v344
  %v411 = vpop.f32.mrb[0].mxu0
  %v412 = vadd.f32 %v328, %v411
  %v413 = vpop.f32.mrb[0].mxu0
  %v414 = vpop.f32.mrb[0].mxu0
  %v415 = vadd.f32 %v328, %v414
  %v416 = vpop.f32.mrb[0].mxu0
  %417 = vmatprep.mubr.bf16.mxu0 0
  %418 = vmatmul.mubr.bf16.gmra.mrb[0].mxu0 %v347
  %v419 = vpop.f32.mrb[0].mxu0
  %v420 = vadd.f32 %v328, %v419
  %v421 = vpop.f32.mrb[0].mxu0
  %v422 = vpop.f32.mrb[0].mxu0
  %v423 = vadd.f32 %v328, %v422
  %v424 = vpop.f32.mrb[0].mxu0
  %425 = vmatprep.mubr.bf16.mxu0 0
  %426 = vmatmul.mubr.bf16.gmra.mrb[0].mxu0 %v350
  %v427 = vpop.f32.mrb[0].mxu0
  %v428 = vadd.f32 %v328, %v427
  %v429 = vpop.f32.mrb[0].mxu0
  %v430 = vpop.f32.mrb[0].mxu0
  %v431 = vadd.f32 %v328, %v430
  %v432 = vpop.f32.mrb[0].mxu0
  %433 = vmatprep.mubr.bf16.mxu0 0
  %434 = vmatmul.mubr.bf16.gmra.mrb[0].mxu0 %v353
  %v435 = vpop.f32.mrb[0].mxu0
  %v436 = vadd.f32 %v328, %v435
  %v437 = vpop.f32.mrb[0].mxu0
  %v438 = vpop.f32.mrb[0].mxu0
  %v439 = vadd.f32 %v328, %v438
  %v440 = vpop.f32.mrb[0].mxu0
  %441 = vmatprep.mubr.bf16.mxu0 0
  %442 = vmatmul.mubr.bf16.gmra.mrb[0].mxu0 %v356
  %v443 = vpop.f32.mrb[0].mxu0
  %v444 = vadd.f32 %v328, %v443
  %v445 = vpop.f32.mrb[0].mxu0
  %v446 = vpop.f32.mrb[0].mxu0
  %v447 = vadd.f32 %v328, %v446
  %v448 = vpop.f32.mrb[0].mxu0
  %449 = vmatprep.mubr.bf16.mxu0 0
  %450 = vmatmul.mubr.bf16.gmra.mrb[0].mxu0 %v359
  %v451 = vpop.f32.mrb[0].mxu0
  %v452 = vadd.f32 %v328, %v451
  %v453 = vpop.f32.mrb[0].mxu0
  %v454 = vpop.f32.mrb[0].mxu0
  %v455 = vadd.f32 %v328, %v454
  %v456 = vpop.f32.mrb[0].mxu0
  %457 = vdwg.mxu0
  %v458 = vpack.c.bf16 %v399, %v396
  %v459 = vpack.c.bf16 %v407, %v404
  %v460 = vpack.c.bf16 %v415, %v412
  %v461 = vpack.c.bf16 %v423, %v420
  %v462 = vpack.c.bf16 %v431, %v428
  %v463 = vpack.c.bf16 %v439, %v436
  %v464 = vpack.c.bf16 %v447, %v444
  %v465 = vpack.c.bf16 %v455, %v452
  %v474 = vunpack.c.l.b16 %v458
  %v475 = vunpack.c.h.b16 %v458
  %v476 = vunpack.c.l.b16 %v459
  %v477 = vunpack.c.h.b16 %v459
  %v478 = vunpack.c.l.b16 %v460
  %v479 = vunpack.c.h.b16 %v460
  %v480 = vunpack.c.l.b16 %v461
  %v481 = vunpack.c.h.b16 %v461
  %v482 = vunpack.c.l.b16 %v462
  %v483 = vunpack.c.h.b16 %v462
  %v484 = vunpack.c.l.b16 %v463
  %v485 = vunpack.c.h.b16 %v463
  %v486 = vunpack.c.l.b16 %v464
  %v487 = vunpack.c.h.b16 %v464
  %v488 = vunpack.c.l.b16 %v465
  %v489 = vunpack.c.h.b16 %v465
  %v490 = vpack.c.b16 %v474, %v474
  %v491 = vpack.c.b16 %v475, %v475
  %v492 = vpack.c.b16 %v476, %v476
  %v493 = vpack.c.b16 %v477, %v477
  %v494 = vpack.c.b16 %v478, %v478
  %v495 = vpack.c.b16 %v479, %v479
  %v496 = vpack.c.b16 %v480, %v480
  %v497 = vpack.c.b16 %v481, %v481
  %v498 = vpack.c.b16 %v482, %v482
  %v499 = vpack.c.b16 %v483, %v483
  %v500 = vpack.c.b16 %v484, %v484
  %v501 = vpack.c.b16 %v485, %v485
  %v502 = vpack.c.b16 %v486, %v486
  %v503 = vpack.c.b16 %v487, %v487
  %v504 = vpack.c.b16 %v488, %v488
  %v505 = vpack.c.b16 %v489, %v489
  %522 = vst [vmem:[%s5] sm:$0xf] %v490
  %523 = vst [vmem:[%s5 + $0x4] sm:$0xf] %v491
  %524 = vst [vmem:[%s5 + $0x8] sm:$0xf] %v492
  %525 = vst [vmem:[%s5 + $0xc] sm:$0xf] %v493
  %526 = vst [vmem:[%s5 + $0x10] sm:$0xf] %v494
  %527 = vst [vmem:[%s5 + $0x14] sm:$0xf] %v495
  %528 = vst [vmem:[%s5 + $0x18] sm:$0xf] %v496
  %529 = vst [vmem:[%s5 + $0x1c] sm:$0xf] %v497
  %530 = vst [vmem:[%s5 + $0x20] sm:$0xf] %v498
  %531 = vst [vmem:[%s5 + $0x24] sm:$0xf] %v499
  %532 = vst [vmem:[%s5 + $0x28] sm:$0xf] %v500
  %533 = vst [vmem:[%s5 + $0x2c] sm:$0xf] %v501
  %534 = vst [vmem:[%s5 + $0x30] sm:$0xf] %v502
  %535 = vst [vmem:[%s5 + $0x34] sm:$0xf] %v503
  %536 = vst [vmem:[%s5 + $0x38] sm:$0xf] %v504
  %537 = vst [vmem:[%s5 + $0x3c] sm:$0xf] %v505
  // Predicated region
  $region26: #{forward.27} parent=0 // pred_check
    _
  $region27: #{forward.27} parent=0 // pred_check_branch
    %539 = sbr.rel (0) target = $region29
  $region28: #{forward.27} parent=0 // pred_region
    _
  $region29: #{forward.27} parent=0 // pred_fallthru
    _
  // Predicated region
  $region30: #{forward.27} parent=0 // pred_check
    _
  $region31: #{forward.27} parent=0 // pred_check_branch
    %541 = sbr.rel (0) target = $region33
  $region32: #{forward.27} parent=0 // pred_region
    _
  $region33: #{forward.27} parent=0 // pred_fallthru
    _

// kernel: forward.29
$region0: #{forward.29}
  #allocation0 [shape = 'u32[]', space=smem, size = 0x4, offset = 0x4, fixed_abs, tag = 'smem constant byte address 0x4 - core index']
  #allocation1 [shape = 'u32[144,128]{1,0:T(1,128)}', space=vmem, size = 0x12000, scoped, tag = 'internal scratch']
  %s0 = inlined_call_operand.vmem [shape: bf16[128,16], index: 0, kind: input, shape index: {}]
  %s1 = inlined_call_operand.vmem [shape: bf16[16,16], index: 1, kind: input, shape index: {}]
  %s2 = inlined_call_operand.vmem [shape: f32[1,16], index: 2, kind: input, shape index: {}]
  %s3 = inlined_call_operand.vmem [shape: bf16[128,16], index: 3, kind: output, shape index: {}]
  %s4 = sld [smem:[#allocation0]]
  $region22: #{forward.29} parent=0
    _
  %s6 = ssub.s32 1, %s4
  %s7 = scalar_select 0, %s6, %s4
  // Predicated region
  $region2: #{forward.29} parent=0 // pred_check
    _
  $region3: #{forward.29} parent=0 // pred_check_branch
    %9 = sbr.rel (0) target = $region5
  $region4: #{forward.29} parent=0 // pred_region
    _
  $region5: #{forward.29} parent=0 // pred_fallthru
    _
  // Predicated region
  $region6: #{forward.29} parent=0 // pred_check
    _
  $region7: #{forward.29} parent=0 // pred_check_branch
    %11 = sbr.rel (0) target = $region9
  $region8: #{forward.29} parent=0 // pred_region
    _
  $region9: #{forward.29} parent=0 // pred_fallthru
    _
  // Predicated region
  $region10: #{forward.29} parent=0 // pred_check
    _
  $region11: #{forward.29} parent=0 // pred_check_branch
    %13 = sbr.rel (0) target = $region13
  $region12: #{forward.29} parent=0 // pred_region
    _
  $region13: #{forward.29} parent=0 // pred_fallthru
    _
  %v15 = vld [vmem:[%s0] sm:$0xf]
  %v16 = vld [vmem:[%s0 + $0x4] sm:$0xf]
  %v17 = vld [vmem:[%s0 + $0x8] sm:$0xf]
  %v18 = vld [vmem:[%s0 + $0xc] sm:$0xf]
  %v19 = vld [vmem:[%s0 + $0x10] sm:$0xf]
  %v20 = vld [vmem:[%s0 + $0x14] sm:$0xf]
  %v21 = vld [vmem:[%s0 + $0x18] sm:$0xf]
  %v22 = vld [vmem:[%s0 + $0x1c] sm:$0xf]
  %v23 = vld [vmem:[%s0 + $0x20] sm:$0xf]
  %v24 = vld [vmem:[%s0 + $0x24] sm:$0xf]
  %v25 = vld [vmem:[%s0 + $0x28] sm:$0xf]
  %v26 = vld [vmem:[%s0 + $0x2c] sm:$0xf]
  %v27 = vld [vmem:[%s0 + $0x30] sm:$0xf]
  %v28 = vld [vmem:[%s0 + $0x34] sm:$0xf]
  %v29 = vld [vmem:[%s0 + $0x38] sm:$0xf]
  %v30 = vld [vmem:[%s0 + $0x3c] sm:$0xf]
  %v31 = vld [vmem:[%s1] sm:$0xf]
  %v32 = vld [vmem:[%s1 + $0x4] sm:$0xf]
  %v33 = vld [vmem:[%s2] sm:$0x1]
  %v35 = vlaneseq
  %v36 = vshrl.u32 %v35, 7
  %v37 = vsub.s32 0, %v36
  %v38 = vrot.slane %v33, %v37
  %v56 = vunpack.c.l.b16 %v15
  %v57 = vunpack.c.l.b16 %v16
  %v58 = vunpack.c.l.b16 %v17
  %v59 = vunpack.c.l.b16 %v18
  %v60 = vunpack.c.l.b16 %v19
  %v61 = vunpack.c.l.b16 %v20
  %v62 = vunpack.c.l.b16 %v21
  %v63 = vunpack.c.l.b16 %v22
  %v64 = vunpack.c.l.b16 %v23
  %v65 = vunpack.c.l.b16 %v24
  %v66 = vunpack.c.l.b16 %v25
  %v67 = vunpack.c.l.b16 %v26
  %v68 = vunpack.c.l.b16 %v27
  %v69 = vunpack.c.l.b16 %v28
  %v70 = vunpack.c.l.b16 %v29
  %v71 = vunpack.c.l.b16 %v30
  %v72 = vpack.c.b16 %v57, %v56
  %v73 = vpack.c.b16 %v59, %v58
  %v74 = vpack.c.b16 %v61, %v60
  %v75 = vpack.c.b16 %v63, %v62
  %v76 = vpack.c.b16 %v65, %v64
  %v77 = vpack.c.b16 %v67, %v66
  %v78 = vpack.c.b16 %v69, %v68
  %v79 = vpack.c.b16 %v71, %v70
  %v82 = vunpack.c.l.b16 %v31
  %v83 = vunpack.c.l.b16 %v32
  %v84 = vpack.c.b16 %v83, %v82
  %vm86 = vcmask 130048
  %v88 = vsel %vm86, %v72, 0
  %v91 = vsel %vm86, %v73, 0
  %v94 = vsel %vm86, %v74, 0
  %v97 = vsel %vm86, %v75, 0
  %v100 = vsel %vm86, %v76, 0
  %v103 = vsel %vm86, %v77, 0
  %v106 = vsel %vm86, %v78, 0
  %v109 = vsel %vm86, %v79, 0
  %111 = vmatprep.subr.bf16.mxu0 0
  %112 = vmatpush1.bf16.msra.mxu0 %v84
  %113 = vmatprep.subr.bf16.mxu0 0
  %114 = vmatpush1.bf16.msra.mxu0 0
  %115 = vmatprep.subr.bf16.mxu0 0
  %116 = vmatpush1.bf16.msra.mxu0 0
  %117 = vmatprep.subr.bf16.mxu0 0
  %118 = vmatpush1.bf16.msra.mxu0 0
  %119 = vmatprep.subr.bf16.mxu0 0
  %120 = vmatpush1.bf16.msra.mxu0 0
  %121 = vmatprep.subr.bf16.mxu0 0
  %122 = vmatpush1.bf16.msra.mxu0 0
  %123 = vmatprep.subr.bf16.mxu0 0
  %124 = vmatpush1.bf16.msra.mxu0 0
  %125 = vmatprep.subr.bf16.mxu0 0
  %126 = vmatpush1.bf16.msra.mxu0 0
  %127 = vmatprep.subr.bf16.mxu0 0
  %128 = vmatpush1.bf16.msra.mxu0 0
  %129 = vmatprep.subr.bf16.mxu0 0
  %130 = vmatpush1.bf16.msra.mxu0 0
  %131 = vmatprep.subr.bf16.mxu0 0
  %132 = vmatpush1.bf16.msra.mxu0 0
  %133 = vmatprep.subr.bf16.mxu0 0
  %134 = vmatpush1.bf16.msra.mxu0 0
  %135 = vmatprep.subr.bf16.mxu0 0
  %136 = vmatpush1.bf16.msra.mxu0 0
  %137 = vmatprep.subr.bf16.mxu0 0
  %138 = vmatpush1.bf16.msra.mxu0 0
  %139 = vmatprep.subr.bf16.mxu0 0
  %140 = vmatpush1.bf16.msra.mxu0 0
  %141 = vmatprep.subr.bf16.mxu0 0
  %142 = vmatpush1.bf16.msra.mxu0 0
  %143 = vmatprep.mubr.bf16.mxu0 0
  %144 = vmatmul.mubr.bf16.gmra.mrb[0].mxu0 %v88
  %v145 = vpop.f32.mrb[0].mxu0
  %v146 = vadd.f32 %v38, %v145
  %v147 = vpop.f32.mrb[0].mxu0
  %v148 = vpop.f32.mrb[0].mxu0
  %v149 = vadd.f32 %v38, %v148
  %v150 = vpop.f32.mrb[0].mxu0
  %151 = vmatprep.mubr.bf16.mxu0 0
  %152 = vmatmul.mubr.bf16.gmra.mrb[0].mxu0 %v91
  %v153 = vpop.f32.mrb[0].mxu0
  %v154 = vadd.f32 %v38, %v153
  %v155 = vpop.f32.mrb[0].mxu0
  %v156 = vpop.f32.mrb[0].mxu0
  %v157 = vadd.f32 %v38, %v156
  %v158 = vpop.f32.mrb[0].mxu0
  %159 = vmatprep.mubr.bf16.mxu0 0
  %160 = vmatmul.mubr.bf16.gmra.mrb[0].mxu0 %v94
  %v161 = vpop.f32.mrb[0].mxu0
  %v162 = vadd.f32 %v38, %v161
  %v163 = vpop.f32.mrb[0].mxu0
  %v164 = vpop.f32.mrb[0].mxu0
  %v165 = vadd.f32 %v38, %v164
  %v166 = vpop.f32.mrb[0].mxu0
  %167 = vmatprep.mubr.bf16.mxu0 0
  %168 = vmatmul.mubr.bf16.gmra.mrb[0].mxu0 %v97
  %v169 = vpop.f32.mrb[0].mxu0
  %v170 = vadd.f32 %v38, %v169
  %v171 = vpop.f32.mrb[0].mxu0
  %v172 = vpop.f32.mrb[0].mxu0
  %v173 = vadd.f32 %v38, %v172
  %v174 = vpop.f32.mrb[0].mxu0
  %175 = vmatprep.mubr.bf16.mxu0 0
  %176 = vmatmul.mubr.bf16.gmra.mrb[0].mxu0 %v100
  %v177 = vpop.f32.mrb[0].mxu0
  %v178 = vadd.f32 %v38, %v177
  %v179 = vpop.f32.mrb[0].mxu0
  %v180 = vpop.f32.mrb[0].mxu0
  %v181 = vadd.f32 %v38, %v180
  %v182 = vpop.f32.mrb[0].mxu0
  %183 = vmatprep.mubr.bf16.mxu0 0
  %184 = vmatmul.mubr.bf16.gmra.mrb[0].mxu0 %v103
  %v185 = vpop.f32.mrb[0].mxu0
  %v186 = vadd.f32 %v38, %v185
  %v187 = vpop.f32.mrb[0].mxu0
  %v188 = vpop.f32.mrb[0].mxu0
  %v189 = vadd.f32 %v38, %v188
  %v190 = vpop.f32.mrb[0].mxu0
  %191 = vmatprep.mubr.bf16.mxu0 0
  %192 = vmatmul.mubr.bf16.gmra.mrb[0].mxu0 %v106
  %v193 = vpop.f32.mrb[0].mxu0
  %v194 = vadd.f32 %v38, %v193
  %v195 = vpop.f32.mrb[0].mxu0
  %v196 = vpop.f32.mrb[0].mxu0
  %v197 = vadd.f32 %v38, %v196
  %v198 = vpop.f32.mrb[0].mxu0
  %199 = vmatprep.mubr.bf16.mxu0 0
  %200 = vmatmul.mubr.bf16.gmra.mrb[0].mxu0 %v109
  %v201 = vpop.f32.mrb[0].mxu0
  %v202 = vadd.f32 %v38, %v201
  %v203 = vpop.f32.mrb[0].mxu0
  %v204 = vpop.f32.mrb[0].mxu0
  %v205 = vadd.f32 %v38, %v204
  %v206 = vpop.f32.mrb[0].mxu0
  %207 = vdwg.mxu0
  %v208 = vpack.c.bf16 %v149, %v146
  %v209 = vpack.c.bf16 %v157, %v154
  %v210 = vpack.c.bf16 %v165, %v162
  %v211 = vpack.c.bf16 %v173, %v170
  %v212 = vpack.c.bf16 %v181, %v178
  %v213 = vpack.c.bf16 %v189, %v186
  %v214 = vpack.c.bf16 %v197, %v194
  %v215 = vpack.c.bf16 %v205, %v202
  %v224 = vunpack.c.l.b16 %v208
  %v225 = vunpack.c.h.b16 %v208
  %v226 = vunpack.c.l.b16 %v209
  %v227 = vunpack.c.h.b16 %v209
  %v228 = vunpack.c.l.b16 %v210
  %v229 = vunpack.c.h.b16 %v210
  %v230 = vunpack.c.l.b16 %v211
  %v231 = vunpack.c.h.b16 %v211
  %v232 = vunpack.c.l.b16 %v212
  %v233 = vunpack.c.h.b16 %v212
  %v234 = vunpack.c.l.b16 %v213
  %v235 = vunpack.c.h.b16 %v213
  %v236 = vunpack.c.l.b16 %v214
  %v237 = vunpack.c.h.b16 %v214
  %v238 = vunpack.c.l.b16 %v215
  %v239 = vunpack.c.h.b16 %v215
  %v240 = vpack.c.b16 %v224, %v224
  %v241 = vpack.c.b16 %v225, %v225
  %v242 = vpack.c.b16 %v226, %v226
  %v243 = vpack.c.b16 %v227, %v227
  %v244 = vpack.c.b16 %v228, %v228
  %v245 = vpack.c.b16 %v229, %v229
  %v246 = vpack.c.b16 %v230, %v230
  %v247 = vpack.c.b16 %v231, %v231
  %v248 = vpack.c.b16 %v232, %v232
  %v249 = vpack.c.b16 %v233, %v233
  %v250 = vpack.c.b16 %v234, %v234
  %v251 = vpack.c.b16 %v235, %v235
  %v252 = vpack.c.b16 %v236, %v236
  %v253 = vpack.c.b16 %v237, %v237
  %v254 = vpack.c.b16 %v238, %v238
  %v255 = vpack.c.b16 %v239, %v239
  %vm272 = vcmask 125952
  %273 = vst.msk [vmem:[%s3] sm:$0xf] %vm272, %v240
  %274 = vst.msk [vmem:[%s3 + $0x4] sm:$0xf] %vm272, %v241
  %275 = vst.msk [vmem:[%s3 + $0x8] sm:$0xf] %vm272, %v242
  %276 = vst.msk [vmem:[%s3 + $0xc] sm:$0xf] %vm272, %v243
  %277 = vst.msk [vmem:[%s3 + $0x10] sm:$0xf] %vm272, %v244
  %278 = vst.msk [vmem:[%s3 + $0x14] sm:$0xf] %vm272, %v245
  %279 = vst.msk [vmem:[%s3 + $0x18] sm:$0xf] %vm272, %v246
  %280 = vst.msk [vmem:[%s3 + $0x1c] sm:$0xf] %vm272, %v247
  %281 = vst.msk [vmem:[%s3 + $0x20] sm:$0xf] %vm272, %v248
  %282 = vst.msk [vmem:[%s3 + $0x24] sm:$0xf] %vm272, %v249
  %283 = vst.msk [vmem:[%s3 + $0x28] sm:$0xf] %vm272, %v250
  %284 = vst.msk [vmem:[%s3 + $0x2c] sm:$0xf] %vm272, %v251
  %285 = vst.msk [vmem:[%s3 + $0x30] sm:$0xf] %vm272, %v252
  %286 = vst.msk [vmem:[%s3 + $0x34] sm:$0xf] %vm272, %v253
  %287 = vst.msk [vmem:[%s3 + $0x38] sm:$0xf] %vm272, %v254
  %288 = vst.msk [vmem:[%s3 + $0x3c] sm:$0xf] %vm272, %v255
  // Predicated region
  $region14: #{forward.29} parent=0 // pred_check
    _
  $region15: #{forward.29} parent=0 // pred_check_branch
    %290 = sbr.rel (0) target = $region17
  $region16: #{forward.29} parent=0 // pred_region
    _
  $region17: #{forward.29} parent=0 // pred_fallthru
    _
  // Predicated region
  $region18: #{forward.29} parent=0 // pred_check
    _
  $region19: #{forward.29} parent=0 // pred_check_branch
    %292 = sbr.rel (0) target = $region21
  $region20: #{forward.29} parent=0 // pred_region
    _
  $region21: #{forward.29} parent=0 // pred_fallthru
    _

// kernel: forward.31
$region0: #{forward.31}
  #allocation0 [shape = 'u32[]', space=smem, size = 0x4, offset = 0x4, fixed_abs, tag = 'smem constant byte address 0x4 - core index']
  #allocation1 [shape = 'u32[144,128]{1,0:T(1,128)}', space=vmem, size = 0x12000, scoped, tag = 'internal scratch']
  %s0 = inlined_call_operand.vmem [shape: bf16[128,128], index: 0, kind: input, shape index: {}]
  %s1 = inlined_call_operand.vmem [shape: bf16[128,16], index: 1, kind: input, shape index: {}]
  %s2 = inlined_call_operand.vmem [shape: f32[1,16], index: 2, kind: input, shape index: {}]
  %s3 = inlined_call_operand.vmem [shape: f32[128,16], index: 3, kind: input, shape index: {}]
  %s4 = inlined_call_operand.vmem [shape: f32[128,16], index: 4, kind: output, shape index: {}]
  %s5 = sld [smem:[#allocation0]]
  $region26: #{forward.31} parent=0
    _
  %s7 = ssub.s32 1, %s5
  %s8 = scalar_select 0, %s7, %s5
  // Predicated region
  $region2: #{forward.31} parent=0 // pred_check
    _
  $region3: #{forward.31} parent=0 // pred_check_branch
    %10 = sbr.rel (0) target = $region5
  $region4: #{forward.31} parent=0 // pred_region
    _
  $region5: #{forward.31} parent=0 // pred_fallthru
    _
  // Predicated region
  $region6: #{forward.31} parent=0 // pred_check
    _
  $region7: #{forward.31} parent=0 // pred_check_branch
    %12 = sbr.rel (0) target = $region9
  $region8: #{forward.31} parent=0 // pred_region
    _
  $region9: #{forward.31} parent=0 // pred_fallthru
    _
  // Predicated region
  $region10: #{forward.31} parent=0 // pred_check
    _
  $region11: #{forward.31} parent=0 // pred_check_branch
    %14 = sbr.rel (0) target = $region13
  $region12: #{forward.31} parent=0 // pred_region
    _
  $region13: #{forward.31} parent=0 // pred_fallthru
    _
  // Predicated region
  $region14: #{forward.31} parent=0 // pred_check
    _
  $region15: #{forward.31} parent=0 // pred_check_branch
    %16 = sbr.rel (0) target = $region17
  $region16: #{forward.31} parent=0 // pred_region
    _
  $region17: #{forward.31} parent=0 // pred_fallthru
    _
  %v18 = vld [vmem:[%s0] sm:$0xf]
  %v19 = vld [vmem:[%s0 + $0x4] sm:$0xf]
  %v20 = vld [vmem:[%s0 + $0x8] sm:$0xf]
  %v21 = vld [vmem:[%s0 + $0xc] sm:$0xf]
  %v22 = vld [vmem:[%s0 + $0x10] sm:$0xf]
  %v23 = vld [vmem:[%s0 + $0x14] sm:$0xf]
  %v24 = vld [vmem:[%s0 + $0x18] sm:$0xf]
  %v25 = vld [vmem:[%s0 + $0x1c] sm:$0xf]
  %v26 = vld [vmem:[%s0 + $0x20] sm:$0xf]
  %v27 = vld [vmem:[%s0 + $0x24] sm:$0xf]
  %v28 = vld [vmem:[%s0 + $0x28] sm:$0xf]
  %v29 = vld [vmem:[%s0 + $0x2c] sm:$0xf]
  %v30 = vld [vmem:[%s0 + $0x30] sm:$0xf]
  %v31 = vld [vmem:[%s0 + $0x34] sm:$0xf]
  %v32 = vld [vmem:[%s0 + $0x38] sm:$0xf]
  %v33 = vld [vmem:[%s0 + $0x3c] sm:$0xf]
  %v34 = vld [vmem:[%s1] sm:$0xf]
  %v35 = vld [vmem:[%s1 + $0x4] sm:$0xf]
  %v36 = vld [vmem:[%s1 + $0x8] sm:$0xf]
  %v37 = vld [vmem:[%s1 + $0xc] sm:$0xf]
  %v38 = vld [vmem:[%s1 + $0x10] sm:$0xf]
  %v39 = vld [vmem:[%s1 + $0x14] sm:$0xf]
  %v40 = vld [vmem:[%s1 + $0x18] sm:$0xf]
  %v41 = vld [vmem:[%s1 + $0x1c] sm:$0xf]
  %v42 = vld [vmem:[%s1 + $0x20] sm:$0xf]
  %v43 = vld [vmem:[%s1 + $0x24] sm:$0xf]
  %v44 = vld [vmem:[%s1 + $0x28] sm:$0xf]
  %v45 = vld [vmem:[%s1 + $0x2c] sm:$0xf]
  %v46 = vld [vmem:[%s1 + $0x30] sm:$0xf]
  %v47 = vld [vmem:[%s1 + $0x34] sm:$0xf]
  %v48 = vld [vmem:[%s1 + $0x38] sm:$0xf]
  %v49 = vld [vmem:[%s1 + $0x3c] sm:$0xf]
  %v50 = vld [vmem:[%s2] sm:$0x1]
  %v52 = vlaneseq
  %v53 = vshrl.u32 %v52, 7
  %v54 = vsub.s32 0, %v53
  %v55 = vrot.slane %v50, %v54
  %v73 = vunpack.c.l.b16 %v18
  %v74 = vunpack.c.l.b16 %v19
  %v75 = vunpack.c.l.b16 %v20
  %v76 = vunpack.c.l.b16 %v21
  %v77 = vunpack.c.l.b16 %v22
  %v78 = vunpack.c.l.b16 %v23
  %v79 = vunpack.c.l.b16 %v24
  %v80 = vunpack.c.l.b16 %v25
  %v81 = vunpack.c.l.b16 %v26
  %v82 = vunpack.c.l.b16 %v27
  %v83 = vunpack.c.l.b16 %v28
  %v84 = vunpack.c.l.b16 %v29
  %v85 = vunpack.c.l.b16 %v30
  %v86 = vunpack.c.l.b16 %v31
  %v87 = vunpack.c.l.b16 %v32
  %v88 = vunpack.c.l.b16 %v33
  %v89 = vpack.c.b16 %v74, %v73
  %v90 = vpack.c.b16 %v76, %v75
  %v91 = vpack.c.b16 %v78, %v77
  %v92 = vpack.c.b16 %v80, %v79
  %v93 = vpack.c.b16 %v82, %v81
  %v94 = vpack.c.b16 %v84, %v83
  %v95 = vpack.c.b16 %v86, %v85
  %v96 = vpack.c.b16 %v88, %v87
  %v121 = vunpack.c.l.b16 %v34
  %v122 = vunpack.c.l.b16 %v35
  %v123 = vunpack.c.l.b16 %v36
  %v124 = vunpack.c.l.b16 %v37
  %v125 = vunpack.c.l.b16 %v38
  %v126 = vunpack.c.l.b16 %v39
  %v127 = vunpack.c.l.b16 %v40
  %v128 = vunpack.c.l.b16 %v41
  %v129 = vunpack.c.l.b16 %v42
  %v130 = vunpack.c.l.b16 %v43
  %v131 = vunpack.c.l.b16 %v44
  %v132 = vunpack.c.l.b16 %v45
  %v133 = vunpack.c.l.b16 %v46
  %v134 = vunpack.c.l.b16 %v47
  %v135 = vunpack.c.l.b16 %v48
  %v136 = vunpack.c.l.b16 %v49
  %v137 = vpack.c.b16 %v122, %v121
  %v138 = vpack.c.b16 %v124, %v123
  %v139 = vpack.c.b16 %v126, %v125
  %v140 = vpack.c.b16 %v128, %v127
  %v141 = vpack.c.b16 %v130, %v129
  %v142 = vpack.c.b16 %v132, %v131
  %v143 = vpack.c.b16 %v134, %v133
  %v144 = vpack.c.b16 %v136, %v135
  %153 = vmatprep.subr.bf16.mxu0 0
  %154 = vmatpush1.bf16.msra.mxu0 %v137
  %155 = vmatprep.subr.bf16.mxu0 0
  %156 = vmatpush1.bf16.msra.mxu0 %v138
  %157 = vmatprep.subr.bf16.mxu0 0
  %158 = vmatpush1.bf16.msra.mxu0 %v139
  %159 = vmatprep.subr.bf16.mxu0 0
  %160 = vmatpush1.bf16.msra.mxu0 %v140
  %161 = vmatprep.subr.bf16.mxu0 0
  %162 = vmatpush1.bf16.msra.mxu0 %v141
  %163 = vmatprep.subr.bf16.mxu0 0
  %164 = vmatpush1.bf16.msra.mxu0 %v142
  %165 = vmatprep.subr.bf16.mxu0 0
  %166 = vmatpush1.bf16.msra.mxu0 %v143
  %167 = vmatprep.subr.bf16.mxu0 0
  %168 = vmatpush1.bf16.msra.mxu0 %v144
  %169 = vmatprep.subr.bf16.mxu0 0
  %170 = vmatpush1.bf16.msra.mxu0 0
  %171 = vmatprep.subr.bf16.mxu0 0
  %172 = vmatpush1.bf16.msra.mxu0 0
  %173 = vmatprep.subr.bf16.mxu0 0
  %174 = vmatpush1.bf16.msra.mxu0 0
  %175 = vmatprep.subr.bf16.mxu0 0
  %176 = vmatpush1.bf16.msra.mxu0 0
  %177 = vmatprep.subr.bf16.mxu0 0
  %178 = vmatpush1.bf16.msra.mxu0 0
  %179 = vmatprep.subr.bf16.mxu0 0
  %180 = vmatpush1.bf16.msra.mxu0 0
  %181 = vmatprep.subr.bf16.mxu0 0
  %182 = vmatpush1.bf16.msra.mxu0 0
  %183 = vmatprep.subr.bf16.mxu0 0
  %184 = vmatpush1.bf16.msra.mxu0 0
  %185 = vmatprep.mubr.bf16.mxu0 0
  %186 = vmatmul.mubr.bf16.gmra.mrb[0].mxu0 %v89
  %v187 = vpop.f32.mrb[0].mxu0
  %v188 = vadd.f32 %v55, %v187
  %v189 = vpop.f32.mrb[0].mxu0
  %v190 = vpop.f32.mrb[0].mxu0
  %v191 = vadd.f32 %v55, %v190
  %v192 = vpop.f32.mrb[0].mxu0
  %193 = vmatprep.mubr.bf16.mxu0 0
  %194 = vmatmul.mubr.bf16.gmra.mrb[0].mxu0 %v90
  %v195 = vpop.f32.mrb[0].mxu0
  %v196 = vadd.f32 %v55, %v195
  %v197 = vpop.f32.mrb[0].mxu0
  %v198 = vpop.f32.mrb[0].mxu0
  %v199 = vadd.f32 %v55, %v198
  %v200 = vpop.f32.mrb[0].mxu0
  %201 = vmatprep.mubr.bf16.mxu0 0
  %202 = vmatmul.mubr.bf16.gmra.mrb[0].mxu0 %v91
  %v203 = vpop.f32.mrb[0].mxu0
  %v204 = vadd.f32 %v55, %v203
  %v205 = vpop.f32.mrb[0].mxu0
  %v206 = vpop.f32.mrb[0].mxu0
  %v207 = vadd.f32 %v55, %v206
  %v208 = vpop.f32.mrb[0].mxu0
  %209 = vmatprep.mubr.bf16.mxu0 0
  %210 = vmatmul.mubr.bf16.gmra.mrb[0].mxu0 %v92
  %v211 = vpop.f32.mrb[0].mxu0
  %v212 = vadd.f32 %v55, %v211
  %v213 = vpop.f32.mrb[0].mxu0
  %v214 = vpop.f32.mrb[0].mxu0
  %v215 = vadd.f32 %v55, %v214
  %v216 = vpop.f32.mrb[0].mxu0
  %217 = vmatprep.mubr.bf16.mxu0 0
  %218 = vmatmul.mubr.bf16.gmra.mrb[0].mxu0 %v93
  %v219 = vpop.f32.mrb[0].mxu0
  %v220 = vadd.f32 %v55, %v219
  %v221 = vpop.f32.mrb[0].mxu0
  %v222 = vpop.f32.mrb[0].mxu0
  %v223 = vadd.f32 %v55, %v222
  %v224 = vpop.f32.mrb[0].mxu0
  %225 = vmatprep.mubr.bf16.mxu0 0
  %226 = vmatmul.mubr.bf16.gmra.mrb[0].mxu0 %v94
  %v227 = vpop.f32.mrb[0].mxu0
  %v228 = vadd.f32 %v55, %v227
  %v229 = vpop.f32.mrb[0].mxu0
  %v230 = vpop.f32.mrb[0].mxu0
  %v231 = vadd.f32 %v55, %v230
  %v232 = vpop.f32.mrb[0].mxu0
  %233 = vmatprep.mubr.bf16.mxu0 0
  %234 = vmatmul.mubr.bf16.gmra.mrb[0].mxu0 %v95
  %v235 = vpop.f32.mrb[0].mxu0
  %v236 = vadd.f32 %v55, %v235
  %v237 = vpop.f32.mrb[0].mxu0
  %v238 = vpop.f32.mrb[0].mxu0
  %v239 = vadd.f32 %v55, %v238
  %v240 = vpop.f32.mrb[0].mxu0
  %241 = vmatprep.mubr.bf16.mxu0 0
  %242 = vmatmul.mubr.bf16.gmra.mrb[0].mxu0 %v96
  %v243 = vpop.f32.mrb[0].mxu0
  %v244 = vadd.f32 %v55, %v243
  %v245 = vpop.f32.mrb[0].mxu0
  %v246 = vpop.f32.mrb[0].mxu0
  %v247 = vadd.f32 %v55, %v246
  %v248 = vpop.f32.mrb[0].mxu0
  %249 = vdwg.mxu0
  %v250 = vld [vmem:[%s3] sm:$0xff]
  %v251 = vld [vmem:[%s3 + $0x8] sm:$0xff]
  %v252 = vld [vmem:[%s3 + $0x10] sm:$0xff]
  %v253 = vld [vmem:[%s3 + $0x18] sm:$0xff]
  %v254 = vld [vmem:[%s3 + $0x20] sm:$0xff]
  %v255 = vld [vmem:[%s3 + $0x28] sm:$0xff]
  %v256 = vld [vmem:[%s3 + $0x30] sm:$0xff]
  %v257 = vld [vmem:[%s3 + $0x38] sm:$0xff]
  %v258 = vld [vmem:[%s3 + $0x40] sm:$0xff]
  %v259 = vld [vmem:[%s3 + $0x48] sm:$0xff]
  %v260 = vld [vmem:[%s3 + $0x50] sm:$0xff]
  %v261 = vld [vmem:[%s3 + $0x58] sm:$0xff]
  %v262 = vld [vmem:[%s3 + $0x60] sm:$0xff]
  %v263 = vld [vmem:[%s3 + $0x68] sm:$0xff]
  %v264 = vld [vmem:[%s3 + $0x70] sm:$0xff]
  %v265 = vld [vmem:[%s3 + $0x78] sm:$0xff]
  %v266 = vadd.f32 %v188, %v250
  %v267 = vadd.f32 %v191, %v251
  %v268 = vadd.f32 %v196, %v252
  %v269 = vadd.f32 %v199, %v253
  %v270 = vadd.f32 %v204, %v254
  %v271 = vadd.f32 %v207, %v255
  %v272 = vadd.f32 %v212, %v256
  %v273 = vadd.f32 %v215, %v257
  %v274 = vadd.f32 %v220, %v258
  %v275 = vadd.f32 %v223, %v259
  %v276 = vadd.f32 %v228, %v260
  %v277 = vadd.f32 %v231, %v261
  %v278 = vadd.f32 %v236, %v262
  %v279 = vadd.f32 %v239, %v263
  %v280 = vadd.f32 %v244, %v264
  %v281 = vadd.f32 %v247, %v265
  %vm282 = vcmask 130048
  %283 = vst.msk [vmem:[%s4] sm:$0xff] %vm282, %v266
  %284 = vst.msk [vmem:[%s4 + $0x8] sm:$0xff] %vm282, %v267
  %285 = vst.msk [vmem:[%s4 + $0x10] sm:$0xff] %vm282, %v268
  %286 = vst.msk [vmem:[%s4 + $0x18] sm:$0xff] %vm282, %v269
  %287 = vst.msk [vmem:[%s4 + $0x20] sm:$0xff] %vm282, %v270
  %288 = vst.msk [vmem:[%s4 + $0x28] sm:$0xff] %vm282, %v271
  %289 = vst.msk [vmem:[%s4 + $0x30] sm:$0xff] %vm282, %v272
  %290 = vst.msk [vmem:[%s4 + $0x38] sm:$0xff] %vm282, %v273
  %291 = vst.msk [vmem:[%s4 + $0x40] sm:$0xff] %vm282, %v274
  %292 = vst.msk [vmem:[%s4 + $0x48] sm:$0xff] %vm282, %v275
  %293 = vst.msk [vmem:[%s4 + $0x50] sm:$0xff] %vm282, %v276
  %294 = vst.msk [vmem:[%s4 + $0x58] sm:$0xff] %vm282, %v277
  %295 = vst.msk [vmem:[%s4 + $0x60] sm:$0xff] %vm282, %v278
  %296 = vst.msk [vmem:[%s4 + $0x68] sm:$0xff] %vm282, %v279
  %297 = vst.msk [vmem:[%s4 + $0x70] sm:$0xff] %vm282, %v280
  %298 = vst.msk [vmem:[%s4 + $0x78] sm:$0xff] %vm282, %v281
  // Predicated region
  $region18: #{forward.31} parent=0 // pred_check
    _
  $region19: #{forward.31} parent=0 // pred_check_branch
    %300 = sbr.rel (0) target = $region21
  $region20: #{forward.31} parent=0 // pred_region
    _
  $region21: #{forward.31} parent=0 // pred_fallthru
    _
  // Predicated region
  $region22: #{forward.31} parent=0 // pred_check
    _
  $region23: #{forward.31} parent=0 // pred_check_branch
    %302 = sbr.rel (0) target = $region25
  $region24: #{forward.31} parent=0 // pred_region
    _
  $region25: #{forward.31} parent=0 // pred_fallthru
    _

// kernel: forward.30
$region0: #{forward.30}
  #allocation0 [shape = 'u32[]', space=smem, size = 0x4, offset = 0x4, fixed_abs, tag = 'smem constant byte address 0x4 - core index']
  #allocation1 [shape = 'u32[144,128]{1,0:T(1,128)}', space=vmem, size = 0x12000, scoped, tag = 'internal scratch']
  #allocation2 [shape = 'bf16[128,16]{1,0:T(16,128)(2,1)}', space=vmem, size = 0x8000, scoped, tag = 'scratch operand']
  %s0 = inlined_call_operand.vmem [shape: f32[128,16], index: 0, kind: input, shape index: {}]
  %s1 = inlined_call_operand.vmem [shape: bf16[16,128], index: 1, kind: input, shape index: {}]
  %s2 = inlined_call_operand.vmem [shape: f32[1,128], index: 2, kind: input, shape index: {}]
  %s3 = inlined_call_operand.vmem [shape: f32[1,16], index: 3, kind: input, shape index: {}]
  %s4 = inlined_call_operand.vmem [shape: f32[1,16], index: 4, kind: input, shape index: {}]
  %s5 = inlined_call_operand.vmem [shape: bf16[128,128], index: 5, kind: output, shape index: {}]
  %s6 = sld [smem:[#allocation0]]
  $region34: #{forward.30} parent=0
    _
  %s8 = ssub.s32 1, %s6
  %s9 = scalar_select 0, %s8, %s6
  // Predicated region
  $region2: #{forward.30} parent=0 // pred_check
    _
  $region3: #{forward.30} parent=0 // pred_check_branch
    %11 = sbr.rel (0) target = $region5
  $region4: #{forward.30} parent=0 // pred_region
    _
  $region5: #{forward.30} parent=0 // pred_fallthru
    _
  // Predicated region
  $region6: #{forward.30} parent=0 // pred_check
    _
  $region7: #{forward.30} parent=0 // pred_check_branch
    %13 = sbr.rel (0) target = $region9
  $region8: #{forward.30} parent=0 // pred_region
    _
  $region9: #{forward.30} parent=0 // pred_fallthru
    _
  // Predicated region
  $region10: #{forward.30} parent=0 // pred_check
    _
  $region11: #{forward.30} parent=0 // pred_check_branch
    %15 = sbr.rel (0) target = $region13
  $region12: #{forward.30} parent=0 // pred_region
    _
  $region13: #{forward.30} parent=0 // pred_fallthru
    _
  // Predicated region
  $region14: #{forward.30} parent=0 // pred_check
    _
  $region15: #{forward.30} parent=0 // pred_check_branch
    %17 = sbr.rel (0) target = $region17
  $region16: #{forward.30} parent=0 // pred_region
    _
  $region17: #{forward.30} parent=0 // pred_fallthru
    _
  // Predicated region
  $region18: #{forward.30} parent=0 // pred_check
    _
  $region19: #{forward.30} parent=0 // pred_check_branch
    %19 = sbr.rel (0) target = $region21
  $region20: #{forward.30} parent=0 // pred_region
    _
  $region21: #{forward.30} parent=0 // pred_fallthru
    _
  %p21 = scmp.eq.s32.totalorder 0, 0
  // Predicated region
  $region22: #{forward.30} parent=0 // pred_check
    %p22 = pneg %p21
  $region23: #{forward.30} parent=0 // pred_check_branch
    %24 = sbr.rel (%p22) target = $region25
  $region24: #{forward.30} parent=0 // pred_region
    %v25 = vld [vmem:[%s0] sm:$0xff]
    %v26 = vld [vmem:[%s0 + $0x8] sm:$0xff]
    %v27 = vld [vmem:[%s0 + $0x10] sm:$0xff]
    %v28 = vld [vmem:[%s0 + $0x18] sm:$0xff]
    %v29 = vld [vmem:[%s0 + $0x20] sm:$0xff]
    %v30 = vld [vmem:[%s0 + $0x28] sm:$0xff]
    %v31 = vld [vmem:[%s0 + $0x30] sm:$0xff]
    %v32 = vld [vmem:[%s0 + $0x38] sm:$0xff]
    %v33 = vld [vmem:[%s0 + $0x40] sm:$0xff]
    %v34 = vld [vmem:[%s0 + $0x48] sm:$0xff]
    %v35 = vld [vmem:[%s0 + $0x50] sm:$0xff]
    %v36 = vld [vmem:[%s0 + $0x58] sm:$0xff]
    %v37 = vld [vmem:[%s0 + $0x60] sm:$0xff]
    %v38 = vld [vmem:[%s0 + $0x68] sm:$0xff]
    %v39 = vld [vmem:[%s0 + $0x70] sm:$0xff]
    %v40 = vld [vmem:[%s0 + $0x78] sm:$0xff]
    %vm41 = vcmask 130048
    %v42 = vsel %vm41, %v25, 0.0
    %43 = vadd.xlane.f32.xlu0 %v42
    %v44 = vpop.xlane.xlu0 %43
    %v45 = vsel %vm41, %v26, 0.0
    %46 = vadd.xlane.f32.xlu0 %v45
    %v47 = vpop.xlane.xlu0 %46
    %v48 = vsel %vm41, %v27, 0.0
    %49 = vadd.xlane.f32.xlu0 %v48
    %v50 = vpop.xlane.xlu0 %49
    %v51 = vsel %vm41, %v28, 0.0
    %52 = vadd.xlane.f32.xlu0 %v51
    %v53 = vpop.xlane.xlu0 %52
    %v54 = vsel %vm41, %v29, 0.0
    %55 = vadd.xlane.f32.xlu0 %v54
    %v56 = vpop.xlane.xlu0 %55
    %v57 = vsel %vm41, %v30, 0.0
    %58 = vadd.xlane.f32.xlu0 %v57
    %v59 = vpop.xlane.xlu0 %58
    %v60 = vsel %vm41, %v31, 0.0
    %61 = vadd.xlane.f32.xlu0 %v60
    %v62 = vpop.xlane.xlu0 %61
    %v63 = vsel %vm41, %v32, 0.0
    %64 = vadd.xlane.f32.xlu0 %v63
    %v65 = vpop.xlane.xlu0 %64
    %v66 = vsel %vm41, %v33, 0.0
    %67 = vadd.xlane.f32.xlu0 %v66
    %v68 = vpop.xlane.xlu0 %67
    %v69 = vsel %vm41, %v34, 0.0
    %70 = vadd.xlane.f32.xlu0 %v69
    %v71 = vpop.xlane.xlu0 %70
    %v72 = vsel %vm41, %v35, 0.0
    %73 = vadd.xlane.f32.xlu0 %v72
    %v74 = vpop.xlane.xlu0 %73
    %v75 = vsel %vm41, %v36, 0.0
    %76 = vadd.xlane.f32.xlu0 %v75
    %v77 = vpop.xlane.xlu0 %76
    %v78 = vsel %vm41, %v37, 0.0
    %79 = vadd.xlane.f32.xlu0 %v78
    %v80 = vpop.xlane.xlu0 %79
    %v81 = vsel %vm41, %v38, 0.0
    %82 = vadd.xlane.f32.xlu0 %v81
    %v83 = vpop.xlane.xlu0 %82
    %v84 = vsel %vm41, %v39, 0.0
    %85 = vadd.xlane.f32.xlu0 %v84
    %v86 = vpop.xlane.xlu0 %85
    %v87 = vsel %vm41, %v40, 0.0
    %88 = vadd.xlane.f32.xlu0 %v87
    %v89 = vpop.xlane.xlu0 %88
    %v90 = vrcp.pop 16.0
    %v91 = vmul.f32 %v44, %v90
    %v92 = vmul.f32 %v47, %v90
    %v93 = vmul.f32 %v50, %v90
    %v94 = vmul.f32 %v53, %v90
    %v95 = vmul.f32 %v56, %v90
    %v96 = vmul.f32 %v59, %v90
    %v97 = vmul.f32 %v62, %v90
    %v98 = vmul.f32 %v65, %v90
    %v99 = vmul.f32 %v68, %v90
    %v100 = vmul.f32 %v71, %v90
    %v101 = vmul.f32 %v74, %v90
    %v102 = vmul.f32 %v77, %v90
    %v103 = vmul.f32 %v80, %v90
    %v104 = vmul.f32 %v83, %v90
    %v105 = vmul.f32 %v86, %v90
    %v106 = vmul.f32 %v89, %v90
    %v107 = vsub.f32 %v25, %v91
    %v108 = vsub.f32 %v26, %v92
    %v109 = vsub.f32 %v27, %v93
    %v110 = vsub.f32 %v28, %v94
    %v111 = vsub.f32 %v29, %v95
    %v112 = vsub.f32 %v30, %v96
    %v113 = vsub.f32 %v31, %v97
    %v114 = vsub.f32 %v32, %v98
    %v115 = vsub.f32 %v33, %v99
    %v116 = vsub.f32 %v34, %v100
    %v117 = vsub.f32 %v35, %v101
    %v118 = vsub.f32 %v36, %v102
    %v119 = vsub.f32 %v37, %v103
    %v120 = vsub.f32 %v38, %v104
    %v121 = vsub.f32 %v39, %v105
    %v122 = vsub.f32 %v40, %v106
    %v123 = vmul.f32 %v107, %v107
    %v124 = vmul.f32 %v108, %v108
    %v125 = vmul.f32 %v109, %v109
    %v126 = vmul.f32 %v110, %v110
    %v127 = vmul.f32 %v111, %v111
    %v128 = vmul.f32 %v112, %v112
    %v129 = vmul.f32 %v113, %v113
    %v130 = vmul.f32 %v114, %v114
    %v131 = vmul.f32 %v115, %v115
    %v132 = vmul.f32 %v116, %v116
    %v133 = vmul.f32 %v117, %v117
    %v134 = vmul.f32 %v118, %v118
    %v135 = vmul.f32 %v119, %v119
    %v136 = vmul.f32 %v120, %v120
    %v137 = vmul.f32 %v121, %v121
    %v138 = vmul.f32 %v122, %v122
    %v139 = vsel %vm41, %v123, 0.0
    %140 = vadd.xlane.f32.xlu0 %v139
    %v141 = vpop.xlane.xlu0 %140
    %v142 = vsel %vm41, %v124, 0.0
    %143 = vadd.xlane.f32.xlu0 %v142
    %v144 = vpop.xlane.xlu0 %143
    %v145 = vsel %vm41, %v125, 0.0
    %146 = vadd.xlane.f32.xlu0 %v145
    %v147 = vpop.xlane.xlu0 %146
    %v148 = vsel %vm41, %v126, 0.0
    %149 = vadd.xlane.f32.xlu0 %v148
    %v150 = vpop.xlane.xlu0 %149
    %v151 = vsel %vm41, %v127, 0.0
    %152 = vadd.xlane.f32.xlu0 %v151
    %v153 = vpop.xlane.xlu0 %152
    %v154 = vsel %vm41, %v128, 0.0
    %155 = vadd.xlane.f32.xlu0 %v154
    %v156 = vpop.xlane.xlu0 %155
    %v157 = vsel %vm41, %v129, 0.0
    %158 = vadd.xlane.f32.xlu0 %v157
    %v159 = vpop.xlane.xlu0 %158
    %v160 = vsel %vm41, %v130, 0.0
    %161 = vadd.xlane.f32.xlu0 %v160
    %v162 = vpop.xlane.xlu0 %161
    %v163 = vsel %vm41, %v131, 0.0
    %164 = vadd.xlane.f32.xlu0 %v163
    %v165 = vpop.xlane.xlu0 %164
    %v166 = vsel %vm41, %v132, 0.0
    %167 = vadd.xlane.f32.xlu0 %v166
    %v168 = vpop.xlane.xlu0 %167
    %v169 = vsel %vm41, %v133, 0.0
    %170 = vadd.xlane.f32.xlu0 %v169
    %v171 = vpop.xlane.xlu0 %170
    %v172 = vsel %vm41, %v134, 0.0
    %173 = vadd.xlane.f32.xlu0 %v172
    %v174 = vpop.xlane.xlu0 %173
    %v175 = vsel %vm41, %v135, 0.0
    %176 = vadd.xlane.f32.xlu0 %v175
    %v177 = vpop.xlane.xlu0 %176
    %v178 = vsel %vm41, %v136, 0.0
    %179 = vadd.xlane.f32.xlu0 %v178
    %v180 = vpop.xlane.xlu0 %179
    %v181 = vsel %vm41, %v137, 0.0
    %182 = vadd.xlane.f32.xlu0 %v181
    %v183 = vpop.xlane.xlu0 %182
    %v184 = vsel %vm41, %v138, 0.0
    %185 = vadd.xlane.f32.xlu0 %v184
    %v186 = vpop.xlane.xlu0 %185
    %v187 = vmul.f32 %v141, %v90
    %v188 = vmul.f32 %v144, %v90
    %v189 = vmul.f32 %v147, %v90
    %v190 = vmul.f32 %v150, %v90
    %v191 = vmul.f32 %v153, %v90
    %v192 = vmul.f32 %v156, %v90
    %v193 = vmul.f32 %v159, %v90
    %v194 = vmul.f32 %v162, %v90
    %v195 = vmul.f32 %v165, %v90
    %v196 = vmul.f32 %v168, %v90
    %v197 = vmul.f32 %v171, %v90
    %v198 = vmul.f32 %v174, %v90
    %v199 = vmul.f32 %v177, %v90
    %v200 = vmul.f32 %v180, %v90
    %v201 = vmul.f32 %v183, %v90
    %v202 = vmul.f32 %v186, %v90
    %v203 = vadd.f32 %v187, 1e-05
    %v204 = vadd.f32 %v188, 1e-05
    %v205 = vadd.f32 %v189, 1e-05
    %v206 = vadd.f32 %v190, 1e-05
    %v207 = vadd.f32 %v191, 1e-05
    %v208 = vadd.f32 %v192, 1e-05
    %v209 = vadd.f32 %v193, 1e-05
    %v210 = vadd.f32 %v194, 1e-05
    %v211 = vadd.f32 %v195, 1e-05
    %v212 = vadd.f32 %v196, 1e-05
    %v213 = vadd.f32 %v197, 1e-05
    %v214 = vadd.f32 %v198, 1e-05
    %v215 = vadd.f32 %v199, 1e-05
    %v216 = vadd.f32 %v200, 1e-05
    %v217 = vadd.f32 %v201, 1e-05
    %v218 = vadd.f32 %v202, 1e-05
    %v219 = vrsqrt.pop %v203
    %v220 = vrsqrt.pop %v204
    %v221 = vrsqrt.pop %v205
    %v222 = vrsqrt.pop %v206
    %v223 = vrsqrt.pop %v207
    %v224 = vrsqrt.pop %v208
    %v225 = vrsqrt.pop %v209
    %v226 = vrsqrt.pop %v210
    %v227 = vrsqrt.pop %v211
    %v228 = vrsqrt.pop %v212
    %v229 = vrsqrt.pop %v213
    %v230 = vrsqrt.pop %v214
    %v231 = vrsqrt.pop %v215
    %v232 = vrsqrt.pop %v216
    %v233 = vrsqrt.pop %v217
    %v234 = vrsqrt.pop %v218
    %v235 = vmul.f32 %v107, %v219
    %v236 = vmul.f32 %v108, %v220
    %v237 = vmul.f32 %v109, %v221
    %v238 = vmul.f32 %v110, %v222
    %v239 = vmul.f32 %v111, %v223
    %v240 = vmul.f32 %v112, %v224
    %v241 = vmul.f32 %v113, %v225
    %v242 = vmul.f32 %v114, %v226
    %v243 = vmul.f32 %v115, %v227
    %v244 = vmul.f32 %v116, %v228
    %v245 = vmul.f32 %v117, %v229
    %v246 = vmul.f32 %v118, %v230
    %v247 = vmul.f32 %v119, %v231
    %v248 = vmul.f32 %v120, %v232
    %v249 = vmul.f32 %v121, %v233
    %v250 = vmul.f32 %v122, %v234
    %v251 = vld [vmem:[%s3] sm:$0x1]
    %v253 = vlaneseq
    %v254 = vshrl.u32 %v253, 7
    %v255 = vsub.s32 0, %v254
    %v256 = vrot.slane %v251, %v255
    %v258 = vmul.f32 %v235, %v256
    %v259 = vmul.f32 %v236, %v256
    %v260 = vmul.f32 %v237, %v256
    %v261 = vmul.f32 %v238, %v256
    %v262 = vmul.f32 %v239, %v256
    %v263 = vmul.f32 %v240, %v256
    %v264 = vmul.f32 %v241, %v256
    %v265 = vmul.f32 %v242, %v256
    %v266 = vmul.f32 %v243, %v256
    %v267 = vmul.f32 %v244, %v256
    %v268 = vmul.f32 %v245, %v256
    %v269 = vmul.f32 %v246, %v256
    %v270 = vmul.f32 %v247, %v256
    %v271 = vmul.f32 %v248, %v256
    %v272 = vmul.f32 %v249, %v256
    %v273 = vmul.f32 %v250, %v256
    %v274 = vld [vmem:[%s4] sm:$0x1]
    %v276 = vlaneseq
    %v277 = vshrl.u32 %v276, 7
    %v278 = vsub.s32 0, %v277
    %v279 = vrot.slane %v274, %v278
    %v281 = vadd.f32 %v258, %v279
    %v282 = vadd.f32 %v259, %v279
    %v283 = vadd.f32 %v260, %v279
    %v284 = vadd.f32 %v261, %v279
    %v285 = vadd.f32 %v262, %v279
    %v286 = vadd.f32 %v263, %v279
    %v287 = vadd.f32 %v264, %v279
    %v288 = vadd.f32 %v265, %v279
    %v289 = vadd.f32 %v266, %v279
    %v290 = vadd.f32 %v267, %v279
    %v291 = vadd.f32 %v268, %v279
    %v292 = vadd.f32 %v269, %v279
    %v293 = vadd.f32 %v270, %v279
    %v294 = vadd.f32 %v271, %v279
    %v295 = vadd.f32 %v272, %v279
    %v296 = vadd.f32 %v273, %v279
    %v297 = vpack.c.bf16 %v282, %v281
    %v298 = vpack.c.bf16 %v284, %v283
    %v299 = vpack.c.bf16 %v286, %v285
    %v300 = vpack.c.bf16 %v288, %v287
    %v301 = vpack.c.bf16 %v290, %v289
    %v302 = vpack.c.bf16 %v292, %v291
    %v303 = vpack.c.bf16 %v294, %v293
    %v304 = vpack.c.bf16 %v296, %v295
    %305 = vst.msk [vmem:[#allocation2] sm:$0xff] %vm41, %v297
    %306 = vst.msk [vmem:[#allocation2 + $0x8] sm:$0xff] %vm41, %v298
    %307 = vst.msk [vmem:[#allocation2 + $0x10] sm:$0xff] %vm41, %v299
    %308 = vst.msk [vmem:[#allocation2 + $0x18] sm:$0xff] %vm41, %v300
    %309 = vst.msk [vmem:[#allocation2 + $0x20] sm:$0xff] %vm41, %v301
    %310 = vst.msk [vmem:[#allocation2 + $0x28] sm:$0xff] %vm41, %v302
    %311 = vst.msk [vmem:[#allocation2 + $0x30] sm:$0xff] %vm41, %v303
    %312 = vst.msk [vmem:[#allocation2 + $0x38] sm:$0xff] %vm41, %v304
  $region25: #{forward.30} parent=0 // pred_fallthru
    _
  %v313 = vld [vmem:[#allocation2] sm:$0xff]
  %v314 = vld [vmem:[#allocation2 + $0x8] sm:$0xff]
  %v315 = vld [vmem:[#allocation2 + $0x10] sm:$0xff]
  %v316 = vld [vmem:[#allocation2 + $0x18] sm:$0xff]
  %v317 = vld [vmem:[#allocation2 + $0x20] sm:$0xff]
  %v318 = vld [vmem:[#allocation2 + $0x28] sm:$0xff]
  %v319 = vld [vmem:[#allocation2 + $0x30] sm:$0xff]
  %v320 = vld [vmem:[#allocation2 + $0x38] sm:$0xff]
  %v321 = vld [vmem:[%s1] sm:$0xf]
  %v322 = vld [vmem:[%s1 + $0x4] sm:$0xf]
  %v323 = vld [vmem:[%s2] sm:$0x1]
  %v325 = vlaneseq
  %v326 = vshrl.u32 %v325, 7
  %v327 = vsub.s32 0, %v326
  %v328 = vrot.slane %v323, %v327
  %v332 = vunpack.c.l.b16 %v321
  %v333 = vunpack.c.l.b16 %v322
  %v334 = vpack.c.b16 %v333, %v332
  %vm336 = vcmask 130048
  %v338 = vsel %vm336, %v313, 0
  %v341 = vsel %vm336, %v314, 0
  %v344 = vsel %vm336, %v315, 0
  %v347 = vsel %vm336, %v316, 0
  %v350 = vsel %vm336, %v317, 0
  %v353 = vsel %vm336, %v318, 0
  %v356 = vsel %vm336, %v319, 0
  %v359 = vsel %vm336, %v320, 0
  %361 = vmatprep.subr.bf16.mxu0 0
  %362 = vmatpush1.bf16.msra.mxu0 %v334
  %363 = vmatprep.subr.bf16.mxu0 0
  %364 = vmatpush1.bf16.msra.mxu0 0
  %365 = vmatprep.subr.bf16.mxu0 0
  %366 = vmatpush1.bf16.msra.mxu0 0
  %367 = vmatprep.subr.bf16.mxu0 0
  %368 = vmatpush1.bf16.msra.mxu0 0
  %369 = vmatprep.subr.bf16.mxu0 0
  %370 = vmatpush1.bf16.msra.mxu0 0
  %371 = vmatprep.subr.bf16.mxu0 0
  %372 = vmatpush1.bf16.msra.mxu0 0
  %373 = vmatprep.subr.bf16.mxu0 0
  %374 = vmatpush1.bf16.msra.mxu0 0
  %375 = vmatprep.subr.bf16.mxu0 0
  %376 = vmatpush1.bf16.msra.mxu0 0
  %377 = vmatprep.subr.bf16.mxu0 0
  %378 = vmatpush1.bf16.msra.mxu0 0
  %379 = vmatprep.subr.bf16.mxu0 0
  %380 = vmatpush1.bf16.msra.mxu0 0
  %381 = vmatprep.subr.bf16.mxu0 0
  %382 = vmatpush1.bf16.msra.mxu0 0
  %383 = vmatprep.subr.bf16.mxu0 0
  %384 = vmatpush1.bf16.msra.mxu0 0
  %385 = vmatprep.subr.bf16.mxu0 0
  %386 = vmatpush1.bf16.msra.mxu0 0
  %387 = vmatprep.subr.bf16.mxu0 0
  %388 = vmatpush1.bf16.msra.mxu0 0
  %389 = vmatprep.subr.bf16.mxu0 0
  %390 = vmatpush1.bf16.msra.mxu0 0
  %391 = vmatprep.subr.bf16.mxu0 0
  %392 = vmatpush1.bf16.msra.mxu0 0
  %393 = vmatprep.mubr.bf16.mxu0 0
  %394 = vmatmul.mubr.bf16.gmra.mrb[0].mxu0 %v338
  %v395 = vpop.f32.mrb[0].mxu0
  %v396 = vadd.f32 %v328, %v395
  %v397 = vpop.f32.mrb[0].mxu0
  %v398 = vpop.f32.mrb[0].mxu0
  %v399 = vadd.f32 %v328, %v398
  %v400 = vpop.f32.mrb[0].mxu0
  %401 = vmatprep.mubr.bf16.mxu0 0
  %402 = vmatmul.mubr.bf16.gmra.mrb[0].mxu0 %v341
  %v403 = vpop.f32.mrb[0].mxu0
  %v404 = vadd.f32 %v328, %v403
  %v405 = vpop.f32.mrb[0].mxu0
  %v406 = vpop.f32.mrb[0].mxu0
  %v407 = vadd.f32 %v328, %v406
  %v408 = vpop.f32.mrb[0].mxu0
  %409 = vmatprep.mubr.bf16.mxu0 0
  %410 = vmatmul.mubr.bf16.gmra.mrb[0].mxu0 %v344
  %v411 = vpop.f32.mrb[0].mxu0
  %v412 = vadd.f32 %v328, %v411
  %v413 = vpop.f32.mrb[0].mxu0
  %v414 = vpop.f32.mrb[0].mxu0
  %v415 = vadd.f32 %v328, %v414
  %v416 = vpop.f32.mrb[0].mxu0
  %417 = vmatprep.mubr.bf16.mxu0 0
  %418 = vmatmul.mubr.bf16.gmra.mrb[0].mxu0 %v347
  %v419 = vpop.f32.mrb[0].mxu0
  %v420 = vadd.f32 %v328, %v419
  %v421 = vpop.f32.mrb[0].mxu0
  %v422 = vpop.f32.mrb[0].mxu0
  %v423 = vadd.f32 %v328, %v422
  %v424 = vpop.f32.mrb[0].mxu0
  %425 = vmatprep.mubr.bf16.mxu0 0
  %426 = vmatmul.mubr.bf16.gmra.mrb[0].mxu0 %v350
  %v427 = vpop.f32.mrb[0].mxu0
  %v428 = vadd.f32 %v328, %v427
  %v429 = vpop.f32.mrb[0].mxu0
  %v430 = vpop.f32.mrb[0].mxu0
  %v431 = vadd.f32 %v328, %v430
  %v432 = vpop.f32.mrb[0].mxu0
  %433 = vmatprep.mubr.bf16.mxu0 0
  %434 = vmatmul.mubr.bf16.gmra.mrb[0].mxu0 %v353
  %v435 = vpop.f32.mrb[0].mxu0
  %v436 = vadd.f32 %v328, %v435
  %v437 = vpop.f32.mrb[0].mxu0
  %v438 = vpop.f32.mrb[0].mxu0
  %v439 = vadd.f32 %v328, %v438
  %v440 = vpop.f32.mrb[0].mxu0
  %441 = vmatprep.mubr.bf16.mxu0 0
  %442 = vmatmul.mubr.bf16.gmra.mrb[0].mxu0 %v356
  %v443 = vpop.f32.mrb[0].mxu0
  %v444 = vadd.f32 %v328, %v443
  %v445 = vpop.f32.mrb[0].mxu0
  %v446 = vpop.f32.mrb[0].mxu0
  %v447 = vadd.f32 %v328, %v446
  %v448 = vpop.f32.mrb[0].mxu0
  %449 = vmatprep.mubr.bf16.mxu0 0
  %450 = vmatmul.mubr.bf16.gmra.mrb[0].mxu0 %v359
  %v451 = vpop.f32.mrb[0].mxu0
  %v452 = vadd.f32 %v328, %v451
  %v453 = vpop.f32.mrb[0].mxu0
  %v454 = vpop.f32.mrb[0].mxu0
  %v455 = vadd.f32 %v328, %v454
  %v456 = vpop.f32.mrb[0].mxu0
  %457 = vdwg.mxu0
  %v458 = vmul.f32 %v396, %v396
  %v459 = vmul.f32 %v399, %v399
  %v460 = vmul.f32 %v404, %v404
  %v461 = vmul.f32 %v407, %v407
  %v462 = vmul.f32 %v412, %v412
  %v463 = vmul.f32 %v415, %v415
  %v464 = vmul.f32 %v420, %v420
  %v465 = vmul.f32 %v423, %v423
  %v466 = vmul.f32 %v428, %v428
  %v467 = vmul.f32 %v431, %v431
  %v468 = vmul.f32 %v436, %v436
  %v469 = vmul.f32 %v439, %v439
  %v470 = vmul.f32 %v444, %v444
  %v471 = vmul.f32 %v447, %v447
  %v472 = vmul.f32 %v452, %v452
  %v473 = vmul.f32 %v455, %v455
  %v474 = vmul.f32 %v396, %v458
  %v475 = vmul.f32 %v399, %v459
  %v476 = vmul.f32 %v404, %v460
  %v477 = vmul.f32 %v407, %v461
  %v478 = vmul.f32 %v412, %v462
  %v479 = vmul.f32 %v415, %v463
  %v480 = vmul.f32 %v420, %v464
  %v481 = vmul.f32 %v423, %v465
  %v482 = vmul.f32 %v428, %v466
  %v483 = vmul.f32 %v431, %v467
  %v484 = vmul.f32 %v436, %v468
  %v485 = vmul.f32 %v439, %v469
  %v486 = vmul.f32 %v444, %v470
  %v487 = vmul.f32 %v447, %v471
  %v488 = vmul.f32 %v452, %v472
  %v489 = vmul.f32 %v455, %v473
  %v490 = vmul.f32 %v474, 0.044715
  %v491 = vmul.f32 %v475, 0.044715
  %v492 = vmul.f32 %v476, 0.044715
  %v493 = vmul.f32 %v477, 0.044715
  %v494 = vmul.f32 %v478, 0.044715
  %v495 = vmul.f32 %v479, 0.044715
  %v496 = vmul.f32 %v480, 0.044715
  %v497 = vmul.f32 %v481, 0.044715
  %v498 = vmul.f32 %v482, 0.044715
  %v499 = vmul.f32 %v483, 0.044715
  %v500 = vmul.f32 %v484, 0.044715
  %v501 = vmul.f32 %v485, 0.044715
  %v502 = vmul.f32 %v486, 0.044715
  %v503 = vmul.f32 %v487, 0.044715
  %v504 = vmul.f32 %v488, 0.044715
  %v505 = vmul.f32 %v489, 0.044715
  %v506 = vadd.f32 %v396, %v490
  %v507 = vadd.f32 %v399, %v491
  %v508 = vadd.f32 %v404, %v492
  %v509 = vadd.f32 %v407, %v493
  %v510 = vadd.f32 %v412, %v494
  %v511 = vadd.f32 %v415, %v495
  %v512 = vadd.f32 %v420, %v496
  %v513 = vadd.f32 %v423, %v497
  %v514 = vadd.f32 %v428, %v498
  %v515 = vadd.f32 %v431, %v499
  %v516 = vadd.f32 %v436, %v500
  %v517 = vadd.f32 %v439, %v501
  %v518 = vadd.f32 %v444, %v502
  %v519 = vadd.f32 %v447, %v503
  %v520 = vadd.f32 %v452, %v504
  %v521 = vadd.f32 %v455, %v505
  %v522 = vmul.f32 %v506, 0.7978846
  %v523 = vmul.f32 %v507, 0.7978846
  %v524 = vmul.f32 %v508, 0.7978846
  %v525 = vmul.f32 %v509, 0.7978846
  %v526 = vmul.f32 %v510, 0.7978846
  %v527 = vmul.f32 %v511, 0.7978846
  %v528 = vmul.f32 %v512, 0.7978846
  %v529 = vmul.f32 %v513, 0.7978846
  %v530 = vmul.f32 %v514, 0.7978846
  %v531 = vmul.f32 %v515, 0.7978846
  %v532 = vmul.f32 %v516, 0.7978846
  %v533 = vmul.f32 %v517, 0.7978846
  %v534 = vmul.f32 %v518, 0.7978846
  %v535 = vmul.f32 %v519, 0.7978846
  %v536 = vmul.f32 %v520, 0.7978846
  %v537 = vmul.f32 %v521, 0.7978846
  %v538 = vtanh.pop %v522
  %v539 = vtanh.pop %v523
  %v540 = vtanh.pop %v524
  %v541 = vtanh.pop %v525
  %v542 = vtanh.pop %v526
  %v543 = vtanh.pop %v527
  %v544 = vtanh.pop %v528
  %v545 = vtanh.pop %v529
  %v546 = vtanh.pop %v530
  %v547 = vtanh.pop %v531
  %v548 = vtanh.pop %v532
  %v549 = vtanh.pop %v533
  %v550 = vtanh.pop %v534
  %v551 = vtanh.pop %v535
  %v552 = vtanh.pop %v536
  %v553 = vtanh.pop %v537
  %v554 = vadd.f32 %v538, 1.0
  %v555 = vadd.f32 %v539, 1.0
  %v556 = vadd.f32 %v540, 1.0
  %v557 = vadd.f32 %v541, 1.0
  %v558 = vadd.f32 %v542, 1.0
  %v559 = vadd.f32 %v543, 1.0
  %v560 = vadd.f32 %v544, 1.0
  %v561 = vadd.f32 %v545, 1.0
  %v562 = vadd.f32 %v546, 1.0
  %v563 = vadd.f32 %v547, 1.0
  %v564 = vadd.f32 %v548, 1.0
  %v565 = vadd.f32 %v549, 1.0
  %v566 = vadd.f32 %v550, 1.0
  %v567 = vadd.f32 %v551, 1.0
  %v568 = vadd.f32 %v552, 1.0
  %v569 = vadd.f32 %v553, 1.0
  %v570 = vmul.f32 %v554, 0.5
  %v571 = vmul.f32 %v555, 0.5
  %v572 = vmul.f32 %v556, 0.5
  %v573 = vmul.f32 %v557, 0.5
  %v574 = vmul.f32 %v558, 0.5
  %v575 = vmul.f32 %v559, 0.5
  %v576 = vmul.f32 %v560, 0.5
  %v577 = vmul.f32 %v561, 0.5
  %v578 = vmul.f32 %v562, 0.5
  %v579 = vmul.f32 %v563, 0.5
  %v580 = vmul.f32 %v564, 0.5
  %v581 = vmul.f32 %v565, 0.5
  %v582 = vmul.f32 %v566, 0.5
  %v583 = vmul.f32 %v567, 0.5
  %v584 = vmul.f32 %v568, 0.5
  %v585 = vmul.f32 %v569, 0.5
  %v586 = vmul.f32 %v396, %v570
  %v587 = vmul.f32 %v399, %v571
  %v588 = vmul.f32 %v404, %v572
  %v589 = vmul.f32 %v407, %v573
  %v590 = vmul.f32 %v412, %v574
  %v591 = vmul.f32 %v415, %v575
  %v592 = vmul.f32 %v420, %v576
  %v593 = vmul.f32 %v423, %v577
  %v594 = vmul.f32 %v428, %v578
  %v595 = vmul.f32 %v431, %v579
  %v596 = vmul.f32 %v436, %v580
  %v597 = vmul.f32 %v439, %v581
  %v598 = vmul.f32 %v444, %v582
  %v599 = vmul.f32 %v447, %v583
  %v600 = vmul.f32 %v452, %v584
  %v601 = vmul.f32 %v455, %v585
  %v602 = vpack.c.bf16 %v587, %v586
  %v603 = vpack.c.bf16 %v589, %v588
  %v604 = vpack.c.bf16 %v591, %v590
  %v605 = vpack.c.bf16 %v593, %v592
  %v606 = vpack.c.bf16 %v595, %v594
  %v607 = vpack.c.bf16 %v597, %v596
  %v608 = vpack.c.bf16 %v599, %v598
  %v609 = vpack.c.bf16 %v601, %v600
  %v618 = vunpack.c.l.b16 %v602
  %v619 = vunpack.c.h.b16 %v602
  %v620 = vunpack.c.l.b16 %v603
  %v621 = vunpack.c.h.b16 %v603
  %v622 = vunpack.c.l.b16 %v604
  %v623 = vunpack.c.h.b16 %v604
  %v624 = vunpack.c.l.b16 %v605
  %v625 = vunpack.c.h.b16 %v605
  %v626 = vunpack.c.l.b16 %v606
  %v627 = vunpack.c.h.b16 %v606
  %v628 = vunpack.c.l.b16 %v607
  %v629 = vunpack.c.h.b16 %v607
  %v630 = vunpack.c.l.b16 %v608
  %v631 = vunpack.c.h.b16 %v608
  %v632 = vunpack.c.l.b16 %v609
  %v633 = vunpack.c.h.b16 %v609
  %v634 = vpack.c.b16 %v618, %v618
  %v635 = vpack.c.b16 %v619, %v619
  %v636 = vpack.c.b16 %v620, %v620
  %v637 = vpack.c.b16 %v621, %v621
  %v638 = vpack.c.b16 %v622, %v622
  %v639 = vpack.c.b16 %v623, %v623
  %v640 = vpack.c.b16 %v624, %v624
  %v641 = vpack.c.b16 %v625, %v625
  %v642 = vpack.c.b16 %v626, %v626
  %v643 = vpack.c.b16 %v627, %v627
  %v644 = vpack.c.b16 %v628, %v628
  %v645 = vpack.c.b16 %v629, %v629
  %v646 = vpack.c.b16 %v630, %v630
  %v647 = vpack.c.b16 %v631, %v631
  %v648 = vpack.c.b16 %v632, %v632
  %v649 = vpack.c.b16 %v633, %v633
  %666 = vst [vmem:[%s5] sm:$0xf] %v634
  %667 = vst [vmem:[%s5 + $0x4] sm:$0xf] %v635
  %668 = vst [vmem:[%s5 + $0x8] sm:$0xf] %v636
  %669 = vst [vmem:[%s5 + $0xc] sm:$0xf] %v637
  %670 = vst [vmem:[%s5 + $0x10] sm:$0xf] %v638
  %671 = vst [vmem:[%s5 + $0x14] sm:$0xf] %v639
  %672 = vst [vmem:[%s5 + $0x18] sm:$0xf] %v640
  %673 = vst [vmem:[%s5 + $0x1c] sm:$0xf] %v641
  %674 = vst [vmem:[%s5 + $0x20] sm:$0xf] %v642
  %675 = vst [vmem:[%s5 + $0x24] sm:$0xf] %v643
  %676 = vst [vmem:[%s5 + $0x28] sm:$0xf] %v644
  %677 = vst [vmem:[%s5 + $0x2c] sm:$0xf] %v645
  %678 = vst [vmem:[%s5 + $0x30] sm:$0xf] %v646
  %679 = vst [vmem:[%s5 + $0x34] sm:$0xf] %v647
  %680 = vst [vmem:[%s5 + $0x38] sm:$0xf] %v648
  %681 = vst [vmem:[%s5 + $0x3c] sm:$0xf] %v649
  // Predicated region
  $region26: #{forward.30} parent=0 // pred_check
    _
  $region27: #{forward.30} parent=0 // pred_check_branch
    %683 = sbr.rel (0) target = $region29
  $region28: #{forward.30} parent=0 // pred_region
    _
  $region29: #{forward.30} parent=0 // pred_fallthru
    _
  // Predicated region
  $region30: #{forward.30} parent=0 // pred_check
    _
  $region31: #{forward.30} parent=0 // pred_check_branch
    %685 = sbr.rel (0) target = $region33
  $region32: #{forward.30} parent=0 // pred_region
    _
  $region33: #{forward.30} parent=0 // pred_fallthru
    _

// kernel: forward.28
$region0: #{forward.28}
  #allocation0 [shape = 'u32[]', space=smem, size = 0x4, offset = 0x4, fixed_abs, tag = 'smem constant byte address 0x4 - core index']
  #allocation1 [shape = 'u32[144,128]{1,0:T(1,128)}', space=vmem, size = 0x12000, scoped, tag = 'internal scratch']
  %s0 = inlined_call_operand.vmem [shape: bf16[8,16,128], index: 0, kind: input, shape index: {}]
  %s1 = inlined_call_operand.vmem [shape: bf16[2,16,16], index: 1, kind: input, shape index: {}]
  %s2 = inlined_call_operand.vmem [shape: bf16[8,16,16], index: 2, kind: output, shape index: {}]
  %s3 = sld [smem:[#allocation0]]
  $region18: #{forward.28} parent=0
    _
  %s5 = ssub.s32 1, %s3
  %s6 = scalar_select 0, %s5, %s3
  // Predicated region
  $region2: #{forward.28} parent=0 // pred_check
    _
  $region3: #{forward.28} parent=0 // pred_check_branch
    %8 = sbr.rel (0) target = $region5
  $region4: #{forward.28} parent=0 // pred_region
    _
  $region5: #{forward.28} parent=0 // pred_fallthru
    _
  // Predicated region
  $region6: #{forward.28} parent=0 // pred_check
    _
  $region7: #{forward.28} parent=0 // pred_check_branch
    %10 = sbr.rel (0) target = $region9
  $region8: #{forward.28} parent=0 // pred_region
    _
  $region9: #{forward.28} parent=0 // pred_fallthru
    _
  %v12 = vld [vmem:[%s0] sm:$0xf]
  %v13 = vld [vmem:[%s0 + $0x4] sm:$0xf]
  %v14 = vld [vmem:[%s0 + $0x8] sm:$0xf]
  %v15 = vld [vmem:[%s0 + $0xc] sm:$0xf]
  %v16 = vld [vmem:[%s0 + $0x10] sm:$0xf]
  %v17 = vld [vmem:[%s0 + $0x14] sm:$0xf]
  %v18 = vld [vmem:[%s0 + $0x18] sm:$0xf]
  %v19 = vld [vmem:[%s0 + $0x1c] sm:$0xf]
  %v20 = vld [vmem:[%s0 + $0x20] sm:$0xf]
  %v21 = vld [vmem:[%s0 + $0x24] sm:$0xf]
  %v22 = vld [vmem:[%s0 + $0x28] sm:$0xf]
  %v23 = vld [vmem:[%s0 + $0x2c] sm:$0xf]
  %v24 = vld [vmem:[%s0 + $0x30] sm:$0xf]
  %v25 = vld [vmem:[%s0 + $0x34] sm:$0xf]
  %v26 = vld [vmem:[%s0 + $0x38] sm:$0xf]
  %v27 = vld [vmem:[%s0 + $0x3c] sm:$0xf]
  %v28 = vld [vmem:[%s1] sm:$0xf]
  %v29 = vld [vmem:[%s1 + $0x4] sm:$0xf]
  %v30 = vld [vmem:[%s1 + $0x8] sm:$0xf]
  %v31 = vld [vmem:[%s1 + $0xc] sm:$0xf]
  %v32 = vunpack.c.l.bf16 %v28
  %v33 = vunpack.c.l.bf16 %v29
  %v34 = vunpack.c.l.bf16 %v30
  %v35 = vunpack.c.l.bf16 %v31
  %v38 = vunpack.c.l.b16 %v12
  %v39 = vunpack.c.l.b16 %v13
  %v40 = vpack.c.b16 %v39, %v38
  %41 = vrot.lane.b32.xlu0 %v40, 112
  %v42 = vpop.permute.xlu0 %41
  %vm43 = vcmask 64512
  %v45 = vsel %vm43, %v40, 0
  %v48 = vsel %vm43, %v42, 0
  %50 = vmatprep.subr.bf16.mxu0 0
  %51 = vmatpush1.bf16.xpose.msra.mxu0 %v48
  %52 = vmatprep.subr.bf16.mxu0 0
  %53 = vmatpush1.bf16.xpose.msra.mxu0 0
  %54 = vmatprep.subr.bf16.mxu0 0
  %55 = vmatpush1.bf16.xpose.msra.mxu0 0
  %56 = vmatprep.subr.bf16.mxu0 0
  %57 = vmatpush1.bf16.xpose.msra.mxu0 0
  %58 = vmatprep.subr.bf16.mxu0 0
  %59 = vmatpush1.bf16.xpose.msra.mxu0 0
  %60 = vmatprep.subr.bf16.mxu0 0
  %61 = vmatpush1.bf16.xpose.msra.mxu0 0
  %62 = vmatprep.subr.bf16.mxu0 0
  %63 = vmatpush1.bf16.xpose.msra.mxu0 0
  %64 = vmatprep.subr.bf16.mxu0 0
  %65 = vmatpush1.bf16.xpose.msra.mxu0 0
  %66 = vmatprep.subr.bf16.mxu0 0
  %67 = vmatpush1.bf16.xpose.msra.mxu0 0
  %68 = vmatprep.subr.bf16.mxu0 0
  %69 = vmatpush1.bf16.xpose.msra.mxu0 0
  %70 = vmatprep.subr.bf16.mxu0 0
  %71 = vmatpush1.bf16.xpose.msra.mxu0 0
  %72 = vmatprep.subr.bf16.mxu0 0
  %73 = vmatpush1.bf16.xpose.msra.mxu0 0
  %74 = vmatprep.subr.bf16.mxu0 0
  %75 = vmatpush1.bf16.xpose.msra.mxu0 0
  %76 = vmatprep.subr.bf16.mxu0 0
  %77 = vmatpush1.bf16.xpose.msra.mxu0 0
  %78 = vmatprep.subr.bf16.mxu0 0
  %79 = vmatpush1.bf16.xpose.msra.mxu0 0
  %80 = vmatprep.subr.bf16.mxu0 0
  %81 = vmatpush1.bf16.xpose.msra.mxu0 0
  %82 = vmatprep.mubr.bf16.mxu0 0
  %83 = vmatmul.mubr.bf16.gmra.mrb[0].mxu0 %v45
  %v84 = vpop.f32.mrb[0].mxu0
  %v85 = vadd.f32 0.0, %v84
  %v86 = vpop.f32.mrb[0].mxu0
  %v87 = vpop.f32.mrb[0].mxu0
  %v88 = vadd.f32 0.0, %v87
  %v89 = vpop.f32.mrb[0].mxu0
  %90 = vdwg.mxu0
  %v93 = vunpack.c.l.b16 %v14
  %v94 = vunpack.c.l.b16 %v15
  %v95 = vpack.c.b16 %v94, %v93
  %96 = vrot.lane.b32.xlu0 %v95, 112
  %v97 = vpop.permute.xlu0 %96
  %v99 = vsel %vm43, %v95, 0
  %v102 = vsel %vm43, %v97, 0
  %104 = vmatprep.subr.bf16.mxu0 0
  %105 = vmatpush1.bf16.xpose.msra.mxu0 %v102
  %106 = vmatprep.subr.bf16.mxu0 0
  %107 = vmatpush1.bf16.xpose.msra.mxu0 0
  %108 = vmatprep.subr.bf16.mxu0 0
  %109 = vmatpush1.bf16.xpose.msra.mxu0 0
  %110 = vmatprep.subr.bf16.mxu0 0
  %111 = vmatpush1.bf16.xpose.msra.mxu0 0
  %112 = vmatprep.subr.bf16.mxu0 0
  %113 = vmatpush1.bf16.xpose.msra.mxu0 0
  %114 = vmatprep.subr.bf16.mxu0 0
  %115 = vmatpush1.bf16.xpose.msra.mxu0 0
  %116 = vmatprep.subr.bf16.mxu0 0
  %117 = vmatpush1.bf16.xpose.msra.mxu0 0
  %118 = vmatprep.subr.bf16.mxu0 0
  %119 = vmatpush1.bf16.xpose.msra.mxu0 0
  %120 = vmatprep.subr.bf16.mxu0 0
  %121 = vmatpush1.bf16.xpose.msra.mxu0 0
  %122 = vmatprep.subr.bf16.mxu0 0
  %123 = vmatpush1.bf16.xpose.msra.mxu0 0
  %124 = vmatprep.subr.bf16.mxu0 0
  %125 = vmatpush1.bf16.xpose.msra.mxu0 0
  %126 = vmatprep.subr.bf16.mxu0 0
  %127 = vmatpush1.bf16.xpose.msra.mxu0 0
  %128 = vmatprep.subr.bf16.mxu0 0
  %129 = vmatpush1.bf16.xpose.msra.mxu0 0
  %130 = vmatprep.subr.bf16.mxu0 0
  %131 = vmatpush1.bf16.xpose.msra.mxu0 0
  %132 = vmatprep.subr.bf16.mxu0 0
  %133 = vmatpush1.bf16.xpose.msra.mxu0 0
  %134 = vmatprep.subr.bf16.mxu0 0
  %135 = vmatpush1.bf16.xpose.msra.mxu0 0
  %136 = vmatprep.mubr.bf16.mxu0 0
  %137 = vmatmul.mubr.bf16.gmra.mrb[0].mxu0 %v99
  %v138 = vpop.f32.mrb[0].mxu0
  %v139 = vadd.f32 0.0, %v138
  %v140 = vpop.f32.mrb[0].mxu0
  %v141 = vpop.f32.mrb[0].mxu0
  %v142 = vadd.f32 0.0, %v141
  %v143 = vpop.f32.mrb[0].mxu0
  %144 = vdwg.mxu0
  %v147 = vunpack.c.l.b16 %v16
  %v148 = vunpack.c.l.b16 %v17
  %v149 = vpack.c.b16 %v148, %v147
  %150 = vrot.lane.b32.xlu0 %v149, 112
  %v151 = vpop.permute.xlu0 %150
  %v153 = vsel %vm43, %v149, 0
  %v156 = vsel %vm43, %v151, 0
  %158 = vmatprep.subr.bf16.mxu0 0
  %159 = vmatpush1.bf16.xpose.msra.mxu0 %v156
  %160 = vmatprep.subr.bf16.mxu0 0
  %161 = vmatpush1.bf16.xpose.msra.mxu0 0
  %162 = vmatprep.subr.bf16.mxu0 0
  %163 = vmatpush1.bf16.xpose.msra.mxu0 0
  %164 = vmatprep.subr.bf16.mxu0 0
  %165 = vmatpush1.bf16.xpose.msra.mxu0 0
  %166 = vmatprep.subr.bf16.mxu0 0
  %167 = vmatpush1.bf16.xpose.msra.mxu0 0
  %168 = vmatprep.subr.bf16.mxu0 0
  %169 = vmatpush1.bf16.xpose.msra.mxu0 0
  %170 = vmatprep.subr.bf16.mxu0 0
  %171 = vmatpush1.bf16.xpose.msra.mxu0 0
  %172 = vmatprep.subr.bf16.mxu0 0
  %173 = vmatpush1.bf16.xpose.msra.mxu0 0
  %174 = vmatprep.subr.bf16.mxu0 0
  %175 = vmatpush1.bf16.xpose.msra.mxu0 0
  %176 = vmatprep.subr.bf16.mxu0 0
  %177 = vmatpush1.bf16.xpose.msra.mxu0 0
  %178 = vmatprep.subr.bf16.mxu0 0
  %179 = vmatpush1.bf16.xpose.msra.mxu0 0
  %180 = vmatprep.subr.bf16.mxu0 0
  %181 = vmatpush1.bf16.xpose.msra.mxu0 0
  %182 = vmatprep.subr.bf16.mxu0 0
  %183 = vmatpush1.bf16.xpose.msra.mxu0 0
  %184 = vmatprep.subr.bf16.mxu0 0
  %185 = vmatpush1.bf16.xpose.msra.mxu0 0
  %186 = vmatprep.subr.bf16.mxu0 0
  %187 = vmatpush1.bf16.xpose.msra.mxu0 0
  %188 = vmatprep.subr.bf16.mxu0 0
  %189 = vmatpush1.bf16.xpose.msra.mxu0 0
  %190 = vmatprep.mubr.bf16.mxu0 0
  %191 = vmatmul.mubr.bf16.gmra.mrb[0].mxu0 %v153
  %v192 = vpop.f32.mrb[0].mxu0
  %v193 = vadd.f32 0.0, %v192
  %v194 = vpop.f32.mrb[0].mxu0
  %v195 = vpop.f32.mrb[0].mxu0
  %v196 = vadd.f32 0.0, %v195
  %v197 = vpop.f32.mrb[0].mxu0
  %198 = vdwg.mxu0
  %v201 = vunpack.c.l.b16 %v18
  %v202 = vunpack.c.l.b16 %v19
  %v203 = vpack.c.b16 %v202, %v201
  %204 = vrot.lane.b32.xlu0 %v203, 112
  %v205 = vpop.permute.xlu0 %204
  %v207 = vsel %vm43, %v203, 0
  %v210 = vsel %vm43, %v205, 0
  %212 = vmatprep.subr.bf16.mxu0 0
  %213 = vmatpush1.bf16.xpose.msra.mxu0 %v210
  %214 = vmatprep.subr.bf16.mxu0 0
  %215 = vmatpush1.bf16.xpose.msra.mxu0 0
  %216 = vmatprep.subr.bf16.mxu0 0
  %217 = vmatpush1.bf16.xpose.msra.mxu0 0
  %218 = vmatprep.subr.bf16.mxu0 0
  %219 = vmatpush1.bf16.xpose.msra.mxu0 0
  %220 = vmatprep.subr.bf16.mxu0 0
  %221 = vmatpush1.bf16.xpose.msra.mxu0 0
  %222 = vmatprep.subr.bf16.mxu0 0
  %223 = vmatpush1.bf16.xpose.msra.mxu0 0
  %224 = vmatprep.subr.bf16.mxu0 0
  %225 = vmatpush1.bf16.xpose.msra.mxu0 0
  %226 = vmatprep.subr.bf16.mxu0 0
  %227 = vmatpush1.bf16.xpose.msra.mxu0 0
  %228 = vmatprep.subr.bf16.mxu0 0
  %229 = vmatpush1.bf16.xpose.msra.mxu0 0
  %230 = vmatprep.subr.bf16.mxu0 0
  %231 = vmatpush1.bf16.xpose.msra.mxu0 0
  %232 = vmatprep.subr.bf16.mxu0 0
  %233 = vmatpush1.bf16.xpose.msra.mxu0 0
  %234 = vmatprep.subr.bf16.mxu0 0
  %235 = vmatpush1.bf16.xpose.msra.mxu0 0
  %236 = vmatprep.subr.bf16.mxu0 0
  %237 = vmatpush1.bf16.xpose.msra.mxu0 0
  %238 = vmatprep.subr.bf16.mxu0 0
  %239 = vmatpush1.bf16.xpose.msra.mxu0 0
  %240 = vmatprep.subr.bf16.mxu0 0
  %241 = vmatpush1.bf16.xpose.msra.mxu0 0
  %242 = vmatprep.subr.bf16.mxu0 0
  %243 = vmatpush1.bf16.xpose.msra.mxu0 0
  %244 = vmatprep.mubr.bf16.mxu0 0
  %245 = vmatmul.mubr.bf16.gmra.mrb[0].mxu0 %v207
  %v246 = vpop.f32.mrb[0].mxu0
  %v247 = vadd.f32 0.0, %v246
  %v248 = vpop.f32.mrb[0].mxu0
  %v249 = vpop.f32.mrb[0].mxu0
  %v250 = vadd.f32 0.0, %v249
  %v251 = vpop.f32.mrb[0].mxu0
  %252 = vdwg.mxu0
  %v255 = vunpack.c.l.b16 %v20
  %v256 = vunpack.c.l.b16 %v21
  %v257 = vpack.c.b16 %v256, %v255
  %258 = vrot.lane.b32.xlu0 %v257, 112
  %v259 = vpop.permute.xlu0 %258
  %v261 = vsel %vm43, %v257, 0
  %v264 = vsel %vm43, %v259, 0
  %266 = vmatprep.subr.bf16.mxu0 0
  %267 = vmatpush1.bf16.xpose.msra.mxu0 %v264
  %268 = vmatprep.subr.bf16.mxu0 0
  %269 = vmatpush1.bf16.xpose.msra.mxu0 0
  %270 = vmatprep.subr.bf16.mxu0 0
  %271 = vmatpush1.bf16.xpose.msra.mxu0 0
  %272 = vmatprep.subr.bf16.mxu0 0
  %273 = vmatpush1.bf16.xpose.msra.mxu0 0
  %274 = vmatprep.subr.bf16.mxu0 0
  %275 = vmatpush1.bf16.xpose.msra.mxu0 0
  %276 = vmatprep.subr.bf16.mxu0 0
  %277 = vmatpush1.bf16.xpose.msra.mxu0 0
  %278 = vmatprep.subr.bf16.mxu0 0
  %279 = vmatpush1.bf16.xpose.msra.mxu0 0
  %280 = vmatprep.subr.bf16.mxu0 0
  %281 = vmatpush1.bf16.xpose.msra.mxu0 0
  %282 = vmatprep.subr.bf16.mxu0 0
  %283 = vmatpush1.bf16.xpose.msra.mxu0 0
  %284 = vmatprep.subr.bf16.mxu0 0
  %285 = vmatpush1.bf16.xpose.msra.mxu0 0
  %286 = vmatprep.subr.bf16.mxu0 0
  %287 = vmatpush1.bf16.xpose.msra.mxu0 0
  %288 = vmatprep.subr.bf16.mxu0 0
  %289 = vmatpush1.bf16.xpose.msra.mxu0 0
  %290 = vmatprep.subr.bf16.mxu0 0
  %291 = vmatpush1.bf16.xpose.msra.mxu0 0
  %292 = vmatprep.subr.bf16.mxu0 0
  %293 = vmatpush1.bf16.xpose.msra.mxu0 0
  %294 = vmatprep.subr.bf16.mxu0 0
  %295 = vmatpush1.bf16.xpose.msra.mxu0 0
  %296 = vmatprep.subr.bf16.mxu0 0
  %297 = vmatpush1.bf16.xpose.msra.mxu0 0
  %298 = vmatprep.mubr.bf16.mxu0 0
  %299 = vmatmul.mubr.bf16.gmra.mrb[0].mxu0 %v261
  %v300 = vpop.f32.mrb[0].mxu0
  %v301 = vadd.f32 0.0, %v300
  %v302 = vpop.f32.mrb[0].mxu0
  %v303 = vpop.f32.mrb[0].mxu0
  %v304 = vadd.f32 0.0, %v303
  %v305 = vpop.f32.mrb[0].mxu0
  %306 = vdwg.mxu0
  %v309 = vunpack.c.l.b16 %v22
  %v310 = vunpack.c.l.b16 %v23
  %v311 = vpack.c.b16 %v310, %v309
  %312 = vrot.lane.b32.xlu0 %v311, 112
  %v313 = vpop.permute.xlu0 %312
  %v315 = vsel %vm43, %v311, 0
  %v318 = vsel %vm43, %v313, 0
  %320 = vmatprep.subr.bf16.mxu0 0
  %321 = vmatpush1.bf16.xpose.msra.mxu0 %v318
  %322 = vmatprep.subr.bf16.mxu0 0
  %323 = vmatpush1.bf16.xpose.msra.mxu0 0
  %324 = vmatprep.subr.bf16.mxu0 0
  %325 = vmatpush1.bf16.xpose.msra.mxu0 0
  %326 = vmatprep.subr.bf16.mxu0 0
  %327 = vmatpush1.bf16.xpose.msra.mxu0 0
  %328 = vmatprep.subr.bf16.mxu0 0
  %329 = vmatpush1.bf16.xpose.msra.mxu0 0
  %330 = vmatprep.subr.bf16.mxu0 0
  %331 = vmatpush1.bf16.xpose.msra.mxu0 0
  %332 = vmatprep.subr.bf16.mxu0 0
  %333 = vmatpush1.bf16.xpose.msra.mxu0 0
  %334 = vmatprep.subr.bf16.mxu0 0
  %335 = vmatpush1.bf16.xpose.msra.mxu0 0
  %336 = vmatprep.subr.bf16.mxu0 0
  %337 = vmatpush1.bf16.xpose.msra.mxu0 0
  %338 = vmatprep.subr.bf16.mxu0 0
  %339 = vmatpush1.bf16.xpose.msra.mxu0 0
  %340 = vmatprep.subr.bf16.mxu0 0
  %341 = vmatpush1.bf16.xpose.msra.mxu0 0
  %342 = vmatprep.subr.bf16.mxu0 0
  %343 = vmatpush1.bf16.xpose.msra.mxu0 0
  %344 = vmatprep.subr.bf16.mxu0 0
  %345 = vmatpush1.bf16.xpose.msra.mxu0 0
  %346 = vmatprep.subr.bf16.mxu0 0
  %347 = vmatpush1.bf16.xpose.msra.mxu0 0
  %348 = vmatprep.subr.bf16.mxu0 0
  %349 = vmatpush1.bf16.xpose.msra.mxu0 0
  %350 = vmatprep.subr.bf16.mxu0 0
  %351 = vmatpush1.bf16.xpose.msra.mxu0 0
  %352 = vmatprep.mubr.bf16.mxu0 0
  %353 = vmatmul.mubr.bf16.gmra.mrb[0].mxu0 %v315
  %v354 = vpop.f32.mrb[0].mxu0
  %v355 = vadd.f32 0.0, %v354
  %v356 = vpop.f32.mrb[0].mxu0
  %v357 = vpop.f32.mrb[0].mxu0
  %v358 = vadd.f32 0.0, %v357
  %v359 = vpop.f32.mrb[0].mxu0
  %360 = vdwg.mxu0
  %v363 = vunpack.c.l.b16 %v24
  %v364 = vunpack.c.l.b16 %v25
  %v365 = vpack.c.b16 %v364, %v363
  %366 = vrot.lane.b32.xlu0 %v365, 112
  %v367 = vpop.permute.xlu0 %366
  %v369 = vsel %vm43, %v365, 0
  %v372 = vsel %vm43, %v367, 0
  %374 = vmatprep.subr.bf16.mxu0 0
  %375 = vmatpush1.bf16.xpose.msra.mxu0 %v372
  %376 = vmatprep.subr.bf16.mxu0 0
  %377 = vmatpush1.bf16.xpose.msra.mxu0 0
  %378 = vmatprep.subr.bf16.mxu0 0
  %379 = vmatpush1.bf16.xpose.msra.mxu0 0
  %380 = vmatprep.subr.bf16.mxu0 0
  %381 = vmatpush1.bf16.xpose.msra.mxu0 0
  %382 = vmatprep.subr.bf16.mxu0 0
  %383 = vmatpush1.bf16.xpose.msra.mxu0 0
  %384 = vmatprep.subr.bf16.mxu0 0
  %385 = vmatpush1.bf16.xpose.msra.mxu0 0
  %386 = vmatprep.subr.bf16.mxu0 0
  %387 = vmatpush1.bf16.xpose.msra.mxu0 0
  %388 = vmatprep.subr.bf16.mxu0 0
  %389 = vmatpush1.bf16.xpose.msra.mxu0 0
  %390 = vmatprep.subr.bf16.mxu0 0
  %391 = vmatpush1.bf16.xpose.msra.mxu0 0
  %392 = vmatprep.subr.bf16.mxu0 0
  %393 = vmatpush1.bf16.xpose.msra.mxu0 0
  %394 = vmatprep.subr.bf16.mxu0 0
  %395 = vmatpush1.bf16.xpose.msra.mxu0 0
  %396 = vmatprep.subr.bf16.mxu0 0
  %397 = vmatpush1.bf16.xpose.msra.mxu0 0
  %398 = vmatprep.subr.bf16.mxu0 0
  %399 = vmatpush1.bf16.xpose.msra.mxu0 0
  %400 = vmatprep.subr.bf16.mxu0 0
  %401 = vmatpush1.bf16.xpose.msra.mxu0 0
  %402 = vmatprep.subr.bf16.mxu0 0
  %403 = vmatpush1.bf16.xpose.msra.mxu0 0
  %404 = vmatprep.subr.bf16.mxu0 0
  %405 = vmatpush1.bf16.xpose.msra.mxu0 0
  %406 = vmatprep.mubr.bf16.mxu0 0
  %407 = vmatmul.mubr.bf16.gmra.mrb[0].mxu0 %v369
  %v408 = vpop.f32.mrb[0].mxu0
  %v409 = vadd.f32 0.0, %v408
  %v410 = vpop.f32.mrb[0].mxu0
  %v411 = vpop.f32.mrb[0].mxu0
  %v412 = vadd.f32 0.0, %v411
  %v413 = vpop.f32.mrb[0].mxu0
  %414 = vdwg.mxu0
  %v417 = vunpack.c.l.b16 %v26
  %v418 = vunpack.c.l.b16 %v27
  %v419 = vpack.c.b16 %v418, %v417
  %420 = vrot.lane.b32.xlu0 %v419, 112
  %v421 = vpop.permute.xlu0 %420
  %v423 = vsel %vm43, %v419, 0
  %v426 = vsel %vm43, %v421, 0
  %428 = vmatprep.subr.bf16.mxu0 0
  %429 = vmatpush1.bf16.xpose.msra.mxu0 %v426
  %430 = vmatprep.subr.bf16.mxu0 0
  %431 = vmatpush1.bf16.xpose.msra.mxu0 0
  %432 = vmatprep.subr.bf16.mxu0 0
  %433 = vmatpush1.bf16.xpose.msra.mxu0 0
  %434 = vmatprep.subr.bf16.mxu0 0
  %435 = vmatpush1.bf16.xpose.msra.mxu0 0
  %436 = vmatprep.subr.bf16.mxu0 0
  %437 = vmatpush1.bf16.xpose.msra.mxu0 0
  %438 = vmatprep.subr.bf16.mxu0 0
  %439 = vmatpush1.bf16.xpose.msra.mxu0 0
  %440 = vmatprep.subr.bf16.mxu0 0
  %441 = vmatpush1.bf16.xpose.msra.mxu0 0
  %442 = vmatprep.subr.bf16.mxu0 0
  %443 = vmatpush1.bf16.xpose.msra.mxu0 0
  %444 = vmatprep.subr.bf16.mxu0 0
  %445 = vmatpush1.bf16.xpose.msra.mxu0 0
  %446 = vmatprep.subr.bf16.mxu0 0
  %447 = vmatpush1.bf16.xpose.msra.mxu0 0
  %448 = vmatprep.subr.bf16.mxu0 0
  %449 = vmatpush1.bf16.xpose.msra.mxu0 0
  %450 = vmatprep.subr.bf16.mxu0 0
  %451 = vmatpush1.bf16.xpose.msra.mxu0 0
  %452 = vmatprep.subr.bf16.mxu0 0
  %453 = vmatpush1.bf16.xpose.msra.mxu0 0
  %454 = vmatprep.subr.bf16.mxu0 0
  %455 = vmatpush1.bf16.xpose.msra.mxu0 0
  %456 = vmatprep.subr.bf16.mxu0 0
  %457 = vmatpush1.bf16.xpose.msra.mxu0 0
  %458 = vmatprep.subr.bf16.mxu0 0
  %459 = vmatpush1.bf16.xpose.msra.mxu0 0
  %460 = vmatprep.mubr.bf16.mxu0 0
  %461 = vmatmul.mubr.bf16.gmra.mrb[0].mxu0 %v423
  %v462 = vpop.f32.mrb[0].mxu0
  %v463 = vadd.f32 0.0, %v462
  %v464 = vpop.f32.mrb[0].mxu0
  %v465 = vpop.f32.mrb[0].mxu0
  %v466 = vadd.f32 0.0, %v465
  %v467 = vpop.f32.mrb[0].mxu0
  %468 = vdwg.mxu0
  %v469 = vmul.f32 %v85, 0.35355338
  %v470 = vmul.f32 %v88, 0.35355338
  %v471 = vmul.f32 %v139, 0.35355338
  %v472 = vmul.f32 %v142, 0.35355338
  %v473 = vmul.f32 %v193, 0.35355338
  %v474 = vmul.f32 %v196, 0.35355338
  %v475 = vmul.f32 %v247, 0.35355338
  %v476 = vmul.f32 %v250, 0.35355338
  %v477 = vmul.f32 %v301, 0.35355338
  %v478 = vmul.f32 %v304, 0.35355338
  %v479 = vmul.f32 %v355, 0.35355338
  %v480 = vmul.f32 %v358, 0.35355338
  %v481 = vmul.f32 %v409, 0.35355338
  %v482 = vmul.f32 %v412, 0.35355338
  %v483 = vmul.f32 %v463, 0.35355338
  %v484 = vmul.f32 %v466, 0.35355338
  %v485 = vadd.f32 %v469, %v32
  %v486 = vadd.f32 %v470, %v33
  %v487 = vadd.f32 %v471, %v32
  %v488 = vadd.f32 %v472, %v33
  %v489 = vadd.f32 %v473, %v32
  %v490 = vadd.f32 %v474, %v33
  %v491 = vadd.f32 %v475, %v32
  %v492 = vadd.f32 %v476, %v33
  %v493 = vadd.f32 %v477, %v32
  %v494 = vadd.f32 %v478, %v33
  %v495 = vadd.f32 %v479, %v32
  %v496 = vadd.f32 %v480, %v33
  %v497 = vadd.f32 %v481, %v32
  %v498 = vadd.f32 %v482, %v33
  %v499 = vadd.f32 %v483, %v32
  %v500 = vadd.f32 %v484, %v33
  %vm501 = vcmask 130048
  %v502 = vsel %vm501, %v485, -inf
  %503 = vmax.xlane.f32.xlu0 %v502
  %v504 = vpop.xlane.xlu0 %503
  %v505 = vsel %vm501, %v486, -inf
  %506 = vmax.xlane.f32.xlu0 %v505
  %v507 = vpop.xlane.xlu0 %506
  %v508 = vsel %vm501, %v487, -inf
  %509 = vmax.xlane.f32.xlu0 %v508
  %v510 = vpop.xlane.xlu0 %509
  %v511 = vsel %vm501, %v488, -inf
  %512 = vmax.xlane.f32.xlu0 %v511
  %v513 = vpop.xlane.xlu0 %512
  %v514 = vsel %vm501, %v489, -inf
  %515 = vmax.xlane.f32.xlu0 %v514
  %v516 = vpop.xlane.xlu0 %515
  %v517 = vsel %vm501, %v490, -inf
  %518 = vmax.xlane.f32.xlu0 %v517
  %v519 = vpop.xlane.xlu0 %518
  %v520 = vsel %vm501, %v491, -inf
  %521 = vmax.xlane.f32.xlu0 %v520
  %v522 = vpop.xlane.xlu0 %521
  %v523 = vsel %vm501, %v492, -inf
  %524 = vmax.xlane.f32.xlu0 %v523
  %v525 = vpop.xlane.xlu0 %524
  %v526 = vsel %vm501, %v493, -inf
  %527 = vmax.xlane.f32.xlu0 %v526
  %v528 = vpop.xlane.xlu0 %527
  %v529 = vsel %vm501, %v494, -inf
  %530 = vmax.xlane.f32.xlu0 %v529
  %v531 = vpop.xlane.xlu0 %530
  %v532 = vsel %vm501, %v495, -inf
  %533 = vmax.xlane.f32.xlu0 %v532
  %v534 = vpop.xlane.xlu0 %533
  %v535 = vsel %vm501, %v496, -inf
  %536 = vmax.xlane.f32.xlu0 %v535
  %v537 = vpop.xlane.xlu0 %536
  %v538 = vsel %vm501, %v497, -inf
  %539 = vmax.xlane.f32.xlu0 %v538
  %v540 = vpop.xlane.xlu0 %539
  %v541 = vsel %vm501, %v498, -inf
  %542 = vmax.xlane.f32.xlu0 %v541
  %v543 = vpop.xlane.xlu0 %542
  %v544 = vsel %vm501, %v499, -inf
  %545 = vmax.xlane.f32.xlu0 %v544
  %v546 = vpop.xlane.xlu0 %545
  %v547 = vsel %vm501, %v500, -inf
  %548 = vmax.xlane.f32.xlu0 %v547
  %v549 = vpop.xlane.xlu0 %548
  %v550 = vsub.f32 %v485, %v504
  %v551 = vsub.f32 %v486, %v507
  %v552 = vsub.f32 %v487, %v510
  %v553 = vsub.f32 %v488, %v513
  %v554 = vsub.f32 %v489, %v516
  %v555 = vsub.f32 %v490, %v519
  %v556 = vsub.f32 %v491, %v522
  %v557 = vsub.f32 %v492, %v525
  %v558 = vsub.f32 %v493, %v528
  %v559 = vsub.f32 %v494, %v531
  %v560 = vsub.f32 %v495, %v534
  %v561 = vsub.f32 %v496, %v537
  %v562 = vsub.f32 %v497, %v540
  %v563 = vsub.f32 %v498, %v543
  %v564 = vsub.f32 %v499, %v546
  %v565 = vsub.f32 %v500, %v549
  %v566 = vmul.f32 %v550, 1.442695
  %v567 = vpow.pop %v566
  %v568 = vmul.f32 %v551, 1.442695
  %v569 = vpow.pop %v568
  %v570 = vmul.f32 %v552, 1.442695
  %v571 = vpow.pop %v570
  %v572 = vmul.f32 %v553, 1.442695
  %v573 = vpow.pop %v572
  %v574 = vmul.f32 %v554, 1.442695
  %v575 = vpow.pop %v574
  %v576 = vmul.f32 %v555, 1.442695
  %v577 = vpow.pop %v576
  %v578 = vmul.f32 %v556, 1.442695
  %v579 = vpow.pop %v578
  %v580 = vmul.f32 %v557, 1.442695
  %v581 = vpow.pop %v580
  %v582 = vmul.f32 %v558, 1.442695
  %v583 = vpow.pop %v582
  %v584 = vmul.f32 %v559, 1.442695
  %v585 = vpow.pop %v584
  %v586 = vmul.f32 %v560, 1.442695
  %v587 = vpow.pop %v586
  %v588 = vmul.f32 %v561, 1.442695
  %v589 = vpow.pop %v588
  %v590 = vmul.f32 %v562, 1.442695
  %v591 = vpow.pop %v590
  %v592 = vmul.f32 %v563, 1.442695
  %v593 = vpow.pop %v592
  %v594 = vmul.f32 %v564, 1.442695
  %v595 = vpow.pop %v594
  %v596 = vmul.f32 %v565, 1.442695
  %v597 = vpow.pop %v596
  %v598 = vsel %vm501, %v567, 0.0
  %599 = vadd.xlane.f32.xlu0 %v598
  %v600 = vpop.xlane.xlu0 %599
  %v601 = vsel %vm501, %v569, 0.0
  %602 = vadd.xlane.f32.xlu0 %v601
  %v603 = vpop.xlane.xlu0 %602
  %v604 = vsel %vm501, %v571, 0.0
  %605 = vadd.xlane.f32.xlu0 %v604
  %v606 = vpop.xlane.xlu0 %605
  %v607 = vsel %vm501, %v573, 0.0
  %608 = vadd.xlane.f32.xlu0 %v607
  %v609 = vpop.xlane.xlu0 %608
  %v610 = vsel %vm501, %v575, 0.0
  %611 = vadd.xlane.f32.xlu0 %v610
  %v612 = vpop.xlane.xlu0 %611
  %v613 = vsel %vm501, %v577, 0.0
  %614 = vadd.xlane.f32.xlu0 %v613
  %v615 = vpop.xlane.xlu0 %614
  %v616 = vsel %vm501, %v579, 0.0
  %617 = vadd.xlane.f32.xlu0 %v616
  %v618 = vpop.xlane.xlu0 %617
  %v619 = vsel %vm501, %v581, 0.0
  %620 = vadd.xlane.f32.xlu0 %v619
  %v621 = vpop.xlane.xlu0 %620
  %v622 = vsel %vm501, %v583, 0.0
  %623 = vadd.xlane.f32.xlu0 %v622
  %v624 = vpop.xlane.xlu0 %623
  %v625 = vsel %vm501, %v585, 0.0
  %626 = vadd.xlane.f32.xlu0 %v625
  %v627 = vpop.xlane.xlu0 %626
  %v628 = vsel %vm501, %v587, 0.0
  %629 = vadd.xlane.f32.xlu0 %v628
  %v630 = vpop.xlane.xlu0 %629
  %v631 = vsel %vm501, %v589, 0.0
  %632 = vadd.xlane.f32.xlu0 %v631
  %v633 = vpop.xlane.xlu0 %632
  %v634 = vsel %vm501, %v591, 0.0
  %635 = vadd.xlane.f32.xlu0 %v634
  %v636 = vpop.xlane.xlu0 %635
  %v637 = vsel %vm501, %v593, 0.0
  %638 = vadd.xlane.f32.xlu0 %v637
  %v639 = vpop.xlane.xlu0 %638
  %v640 = vsel %vm501, %v595, 0.0
  %641 = vadd.xlane.f32.xlu0 %v640
  %v642 = vpop.xlane.xlu0 %641
  %v643 = vsel %vm501, %v597, 0.0
  %644 = vadd.xlane.f32.xlu0 %v643
  %v645 = vpop.xlane.xlu0 %644
  %v646 = vrcp.pop %v600
  %v647 = vrcp.pop %v603
  %v648 = vrcp.pop %v606
  %v649 = vrcp.pop %v609
  %v650 = vrcp.pop %v612
  %v651 = vrcp.pop %v615
  %v652 = vrcp.pop %v618
  %v653 = vrcp.pop %v621
  %v654 = vrcp.pop %v624
  %v655 = vrcp.pop %v627
  %v656 = vrcp.pop %v630
  %v657 = vrcp.pop %v633
  %v658 = vrcp.pop %v636
  %v659 = vrcp.pop %v639
  %v660 = vrcp.pop %v642
  %v661 = vrcp.pop %v645
  %v662 = vpack.c.bf16 %v569, %v567
  %v663 = vpack.c.bf16 %v573, %v571
  %v664 = vpack.c.bf16 %v577, %v575
  %v665 = vpack.c.bf16 %v581, %v579
  %v666 = vpack.c.bf16 %v585, %v583
  %v667 = vpack.c.bf16 %v589, %v587
  %v668 = vpack.c.bf16 %v593, %v591
  %v669 = vpack.c.bf16 %v597, %v595
  %670 = vrot.lane.b32.xlu0 %v40, 96
  %v671 = vpop.permute.xlu0 %670
  %v674 = vsel %vm501, %v662, 0
  %676 = vmatprep.subr.bf16.mxu0 0
  %677 = vmatpush1.bf16.msra.mxu0 %v671
  %678 = vmatprep.subr.bf16.mxu0 0
  %679 = vmatpush1.bf16.msra.mxu0 0
  %680 = vmatprep.subr.bf16.mxu0 0
  %681 = vmatpush1.bf16.msra.mxu0 0
  %682 = vmatprep.subr.bf16.mxu0 0
  %683 = vmatpush1.bf16.msra.mxu0 0
  %684 = vmatprep.subr.bf16.mxu0 0
  %685 = vmatpush1.bf16.msra.mxu0 0
  %686 = vmatprep.subr.bf16.mxu0 0
  %687 = vmatpush1.bf16.msra.mxu0 0
  %688 = vmatprep.subr.bf16.mxu0 0
  %689 = vmatpush1.bf16.msra.mxu0 0
  %690 = vmatprep.subr.bf16.mxu0 0
  %691 = vmatpush1.bf16.msra.mxu0 0
  %692 = vmatprep.subr.bf16.mxu0 0
  %693 = vmatpush1.bf16.msra.mxu0 0
  %694 = vmatprep.subr.bf16.mxu0 0
  %695 = vmatpush1.bf16.msra.mxu0 0
  %696 = vmatprep.subr.bf16.mxu0 0
  %697 = vmatpush1.bf16.msra.mxu0 0
  %698 = vmatprep.subr.bf16.mxu0 0
  %699 = vmatpush1.bf16.msra.mxu0 0
  %700 = vmatprep.subr.bf16.mxu0 0
  %701 = vmatpush1.bf16.msra.mxu0 0
  %702 = vmatprep.subr.bf16.mxu0 0
  %703 = vmatpush1.bf16.msra.mxu0 0
  %704 = vmatprep.subr.bf16.mxu0 0
  %705 = vmatpush1.bf16.msra.mxu0 0
  %706 = vmatprep.subr.bf16.mxu0 0
  %707 = vmatpush1.bf16.msra.mxu0 0
  %708 = vmatprep.mubr.bf16.mxu0 0
  %709 = vmatmul.mubr.bf16.gmra.mrb[0].mxu0 %v674
  %v710 = vpop.f32.mrb[0].mxu0
  %v711 = vadd.f32 0.0, %v710
  %v712 = vpop.f32.mrb[0].mxu0
  %v713 = vpop.f32.mrb[0].mxu0
  %v714 = vadd.f32 0.0, %v713
  %v715 = vpop.f32.mrb[0].mxu0
  %716 = vdwg.mxu0
  %717 = vrot.lane.b32.xlu0 %v95, 96
  %v718 = vpop.permute.xlu0 %717
  %v721 = vsel %vm501, %v663, 0
  %723 = vmatprep.subr.bf16.mxu0 0
  %724 = vmatpush1.bf16.msra.mxu0 %v718
  %725 = vmatprep.subr.bf16.mxu0 0
  %726 = vmatpush1.bf16.msra.mxu0 0
  %727 = vmatprep.subr.bf16.mxu0 0
  %728 = vmatpush1.bf16.msra.mxu0 0
  %729 = vmatprep.subr.bf16.mxu0 0
  %730 = vmatpush1.bf16.msra.mxu0 0
  %731 = vmatprep.subr.bf16.mxu0 0
  %732 = vmatpush1.bf16.msra.mxu0 0
  %733 = vmatprep.subr.bf16.mxu0 0
  %734 = vmatpush1.bf16.msra.mxu0 0
  %735 = vmatprep.subr.bf16.mxu0 0
  %736 = vmatpush1.bf16.msra.mxu0 0
  %737 = vmatprep.subr.bf16.mxu0 0
  %738 = vmatpush1.bf16.msra.mxu0 0
  %739 = vmatprep.subr.bf16.mxu0 0
  %740 = vmatpush1.bf16.msra.mxu0 0
  %741 = vmatprep.subr.bf16.mxu0 0
  %742 = vmatpush1.bf16.msra.mxu0 0
  %743 = vmatprep.subr.bf16.mxu0 0
  %744 = vmatpush1.bf16.msra.mxu0 0
  %745 = vmatprep.subr.bf16.mxu0 0
  %746 = vmatpush1.bf16.msra.mxu0 0
  %747 = vmatprep.subr.bf16.mxu0 0
  %748 = vmatpush1.bf16.msra.mxu0 0
  %749 = vmatprep.subr.bf16.mxu0 0
  %750 = vmatpush1.bf16.msra.mxu0 0
  %751 = vmatprep.subr.bf16.mxu0 0
  %752 = vmatpush1.bf16.msra.mxu0 0
  %753 = vmatprep.subr.bf16.mxu0 0
  %754 = vmatpush1.bf16.msra.mxu0 0
  %755 = vmatprep.mubr.bf16.mxu0 0
  %756 = vmatmul.mubr.bf16.gmra.mrb[0].mxu0 %v721
  %v757 = vpop.f32.mrb[0].mxu0
  %v758 = vadd.f32 0.0, %v757
  %v759 = vpop.f32.mrb[0].mxu0
  %v760 = vpop.f32.mrb[0].mxu0
  %v761 = vadd.f32 0.0, %v760
  %v762 = vpop.f32.mrb[0].mxu0
  %763 = vdwg.mxu0
  %764 = vrot.lane.b32.xlu0 %v149, 96
  %v765 = vpop.permute.xlu0 %764
  %v768 = vsel %vm501, %v664, 0
  %770 = vmatprep.subr.bf16.mxu0 0
  %771 = vmatpush1.bf16.msra.mxu0 %v765
  %772 = vmatprep.subr.bf16.mxu0 0
  %773 = vmatpush1.bf16.msra.mxu0 0
  %774 = vmatprep.subr.bf16.mxu0 0
  %775 = vmatpush1.bf16.msra.mxu0 0
  %776 = vmatprep.subr.bf16.mxu0 0
  %777 = vmatpush1.bf16.msra.mxu0 0
  %778 = vmatprep.subr.bf16.mxu0 0
  %779 = vmatpush1.bf16.msra.mxu0 0
  %780 = vmatprep.subr.bf16.mxu0 0
  %781 = vmatpush1.bf16.msra.mxu0 0
  %782 = vmatprep.subr.bf16.mxu0 0
  %783 = vmatpush1.bf16.msra.mxu0 0
  %784 = vmatprep.subr.bf16.mxu0 0
  %785 = vmatpush1.bf16.msra.mxu0 0
  %786 = vmatprep.subr.bf16.mxu0 0
  %787 = vmatpush1.bf16.msra.mxu0 0
  %788 = vmatprep.subr.bf16.mxu0 0
  %789 = vmatpush1.bf16.msra.mxu0 0
  %790 = vmatprep.subr.bf16.mxu0 0
  %791 = vmatpush1.bf16.msra.mxu0 0
  %792 = vmatprep.subr.bf16.mxu0 0
  %793 = vmatpush1.bf16.msra.mxu0 0
  %794 = vmatprep.subr.bf16.mxu0 0
  %795 = vmatpush1.bf16.msra.mxu0 0
  %796 = vmatprep.subr.bf16.mxu0 0
  %797 = vmatpush1.bf16.msra.mxu0 0
  %798 = vmatprep.subr.bf16.mxu0 0
  %799 = vmatpush1.bf16.msra.mxu0 0
  %800 = vmatprep.subr.bf16.mxu0 0
  %801 = vmatpush1.bf16.msra.mxu0 0
  %802 = vmatprep.mubr.bf16.mxu0 0
  %803 = vmatmul.mubr.bf16.gmra.mrb[0].mxu0 %v768
  %v804 = vpop.f32.mrb[0].mxu0
  %v805 = vadd.f32 0.0, %v804
  %v806 = vpop.f32.mrb[0].mxu0
  %v807 = vpop.f32.mrb[0].mxu0
  %v808 = vadd.f32 0.0, %v807
  %v809 = vpop.f32.mrb[0].mxu0
  %810 = vdwg.mxu0
  %811 = vrot.lane.b32.xlu0 %v203, 96
  %v812 = vpop.permute.xlu0 %811
  %v815 = vsel %vm501, %v665, 0
  %817 = vmatprep.subr.bf16.mxu0 0
  %818 = vmatpush1.bf16.msra.mxu0 %v812
  %819 = vmatprep.subr.bf16.mxu0 0
  %820 = vmatpush1.bf16.msra.mxu0 0
  %821 = vmatprep.subr.bf16.mxu0 0
  %822 = vmatpush1.bf16.msra.mxu0 0
  %823 = vmatprep.subr.bf16.mxu0 0
  %824 = vmatpush1.bf16.msra.mxu0 0
  %825 = vmatprep.subr.bf16.mxu0 0
  %826 = vmatpush1.bf16.msra.mxu0 0
  %827 = vmatprep.subr.bf16.mxu0 0
  %828 = vmatpush1.bf16.msra.mxu0 0
  %829 = vmatprep.subr.bf16.mxu0 0
  %830 = vmatpush1.bf16.msra.mxu0 0
  %831 = vmatprep.subr.bf16.mxu0 0
  %832 = vmatpush1.bf16.msra.mxu0 0
  %833 = vmatprep.subr.bf16.mxu0 0
  %834 = vmatpush1.bf16.msra.mxu0 0
  %835 = vmatprep.subr.bf16.mxu0 0
  %836 = vmatpush1.bf16.msra.mxu0 0
  %837 = vmatprep.subr.bf16.mxu0 0
  %838 = vmatpush1.bf16.msra.mxu0 0
  %839 = vmatprep.subr.bf16.mxu0 0
  %840 = vmatpush1.bf16.msra.mxu0 0
  %841 = vmatprep.subr.bf16.mxu0 0
  %842 = vmatpush1.bf16.msra.mxu0 0
  %843 = vmatprep.subr.bf16.mxu0 0
  %844 = vmatpush1.bf16.msra.mxu0 0
  %845 = vmatprep.subr.bf16.mxu0 0
  %846 = vmatpush1.bf16.msra.mxu0 0
  %847 = vmatprep.subr.bf16.mxu0 0
  %848 = vmatpush1.bf16.msra.mxu0 0
  %849 = vmatprep.mubr.bf16.mxu0 0
  %850 = vmatmul.mubr.bf16.gmra.mrb[0].mxu0 %v815
  %v851 = vpop.f32.mrb[0].mxu0
  %v852 = vadd.f32 0.0, %v851
  %v853 = vpop.f32.mrb[0].mxu0
  %v854 = vpop.f32.mrb[0].mxu0
  %v855 = vadd.f32 0.0, %v854
  %v856 = vpop.f32.mrb[0].mxu0
  %857 = vdwg.mxu0
  %858 = vrot.lane.b32.xlu0 %v257, 96
  %v859 = vpop.permute.xlu0 %858
  %v862 = vsel %vm501, %v666, 0
  %864 = vmatprep.subr.bf16.mxu0 0
  %865 = vmatpush1.bf16.msra.mxu0 %v859
  %866 = vmatprep.subr.bf16.mxu0 0
  %867 = vmatpush1.bf16.msra.mxu0 0
  %868 = vmatprep.subr.bf16.mxu0 0
  %869 = vmatpush1.bf16.msra.mxu0 0
  %870 = vmatprep.subr.bf16.mxu0 0
  %871 = vmatpush1.bf16.msra.mxu0 0
  %872 = vmatprep.subr.bf16.mxu0 0
  %873 = vmatpush1.bf16.msra.mxu0 0
  %874 = vmatprep.subr.bf16.mxu0 0
  %875 = vmatpush1.bf16.msra.mxu0 0
  %876 = vmatprep.subr.bf16.mxu0 0
  %877 = vmatpush1.bf16.msra.mxu0 0
  %878 = vmatprep.subr.bf16.mxu0 0
  %879 = vmatpush1.bf16.msra.mxu0 0
  %880 = vmatprep.subr.bf16.mxu0 0
  %881 = vmatpush1.bf16.msra.mxu0 0
  %882 = vmatprep.subr.bf16.mxu0 0
  %883 = vmatpush1.bf16.msra.mxu0 0
  %884 = vmatprep.subr.bf16.mxu0 0
  %885 = vmatpush1.bf16.msra.mxu0 0
  %886 = vmatprep.subr.bf16.mxu0 0
  %887 = vmatpush1.bf16.msra.mxu0 0
  %888 = vmatprep.subr.bf16.mxu0 0
  %889 = vmatpush1.bf16.msra.mxu0 0
  %890 = vmatprep.subr.bf16.mxu0 0
  %891 = vmatpush1.bf16.msra.mxu0 0
  %892 = vmatprep.subr.bf16.mxu0 0
  %893 = vmatpush1.bf16.msra.mxu0 0
  %894 = vmatprep.subr.bf16.mxu0 0
  %895 = vmatpush1.bf16.msra.mxu0 0
  %896 = vmatprep.mubr.bf16.mxu0 0
  %897 = vmatmul.mubr.bf16.gmra.mrb[0].mxu0 %v862
  %v898 = vpop.f32.mrb[0].mxu0
  %v899 = vadd.f32 0.0, %v898
  %v900 = vpop.f32.mrb[0].mxu0
  %v901 = vpop.f32.mrb[0].mxu0
  %v902 = vadd.f32 0.0, %v901
  %v903 = vpop.f32.mrb[0].mxu0
  %904 = vdwg.mxu0
  %905 = vrot.lane.b32.xlu0 %v311, 96
  %v906 = vpop.permute.xlu0 %905
  %v909 = vsel %vm501, %v667, 0
  %911 = vmatprep.subr.bf16.mxu0 0
  %912 = vmatpush1.bf16.msra.mxu0 %v906
  %913 = vmatprep.subr.bf16.mxu0 0
  %914 = vmatpush1.bf16.msra.mxu0 0
  %915 = vmatprep.subr.bf16.mxu0 0
  %916 = vmatpush1.bf16.msra.mxu0 0
  %917 = vmatprep.subr.bf16.mxu0 0
  %918 = vmatpush1.bf16.msra.mxu0 0
  %919 = vmatprep.subr.bf16.mxu0 0
  %920 = vmatpush1.bf16.msra.mxu0 0
  %921 = vmatprep.subr.bf16.mxu0 0
  %922 = vmatpush1.bf16.msra.mxu0 0
  %923 = vmatprep.subr.bf16.mxu0 0
  %924 = vmatpush1.bf16.msra.mxu0 0
  %925 = vmatprep.subr.bf16.mxu0 0
  %926 = vmatpush1.bf16.msra.mxu0 0
  %927 = vmatprep.subr.bf16.mxu0 0
  %928 = vmatpush1.bf16.msra.mxu0 0
  %929 = vmatprep.subr.bf16.mxu0 0
  %930 = vmatpush1.bf16.msra.mxu0 0
  %931 = vmatprep.subr.bf16.mxu0 0
  %932 = vmatpush1.bf16.msra.mxu0 0
  %933 = vmatprep.subr.bf16.mxu0 0
  %934 = vmatpush1.bf16.msra.mxu0 0
  %935 = vmatprep.subr.bf16.mxu0 0
  %936 = vmatpush1.bf16.msra.mxu0 0
  %937 = vmatprep.subr.bf16.mxu0 0
  %938 = vmatpush1.bf16.msra.mxu0 0
  %939 = vmatprep.subr.bf16.mxu0 0
  %940 = vmatpush1.bf16.msra.mxu0 0
  %941 = vmatprep.subr.bf16.mxu0 0
  %942 = vmatpush1.bf16.msra.mxu0 0
  %943 = vmatprep.mubr.bf16.mxu0 0
  %944 = vmatmul.mubr.bf16.gmra.mrb[0].mxu0 %v909
  %v945 = vpop.f32.mrb[0].mxu0
  %v946 = vadd.f32 0.0, %v945
  %v947 = vpop.f32.mrb[0].mxu0
  %v948 = vpop.f32.mrb[0].mxu0
  %v949 = vadd.f32 0.0, %v948
  %v950 = vpop.f32.mrb[0].mxu0
  %951 = vdwg.mxu0
  %952 = vrot.lane.b32.xlu0 %v365, 96
  %v953 = vpop.permute.xlu0 %952
  %v956 = vsel %vm501, %v668, 0
  %958 = vmatprep.subr.bf16.mxu0 0
  %959 = vmatpush1.bf16.msra.mxu0 %v953
  %960 = vmatprep.subr.bf16.mxu0 0
  %961 = vmatpush1.bf16.msra.mxu0 0
  %962 = vmatprep.subr.bf16.mxu0 0
  %963 = vmatpush1.bf16.msra.mxu0 0
  %964 = vmatprep.subr.bf16.mxu0 0
  %965 = vmatpush1.bf16.msra.mxu0 0
  %966 = vmatprep.subr.bf16.mxu0 0
  %967 = vmatpush1.bf16.msra.mxu0 0
  %968 = vmatprep.subr.bf16.mxu0 0
  %969 = vmatpush1.bf16.msra.mxu0 0
  %970 = vmatprep.subr.bf16.mxu0 0
  %971 = vmatpush1.bf16.msra.mxu0 0
  %972 = vmatprep.subr.bf16.mxu0 0
  %973 = vmatpush1.bf16.msra.mxu0 0
  %974 = vmatprep.subr.bf16.mxu0 0
  %975 = vmatpush1.bf16.msra.mxu0 0
  %976 = vmatprep.subr.bf16.mxu0 0
  %977 = vmatpush1.bf16.msra.mxu0 0
  %978 = vmatprep.subr.bf16.mxu0 0
  %979 = vmatpush1.bf16.msra.mxu0 0
  %980 = vmatprep.subr.bf16.mxu0 0
  %981 = vmatpush1.bf16.msra.mxu0 0
  %982 = vmatprep.subr.bf16.mxu0 0
  %983 = vmatpush1.bf16.msra.mxu0 0
  %984 = vmatprep.subr.bf16.mxu0 0
  %985 = vmatpush1.bf16.msra.mxu0 0
  %986 = vmatprep.subr.bf16.mxu0 0
  %987 = vmatpush1.bf16.msra.mxu0 0
  %988 = vmatprep.subr.bf16.mxu0 0
  %989 = vmatpush1.bf16.msra.mxu0 0
  %990 = vmatprep.mubr.bf16.mxu0 0
  %991 = vmatmul.mubr.bf16.gmra.mrb[0].mxu0 %v956
  %v992 = vpop.f32.mrb[0].mxu0
  %v993 = vadd.f32 0.0, %v992
  %v994 = vpop.f32.mrb[0].mxu0
  %v995 = vpop.f32.mrb[0].mxu0
  %v996 = vadd.f32 0.0, %v995
  %v997 = vpop.f32.mrb[0].mxu0
  %998 = vdwg.mxu0
  %999 = vrot.lane.b32.xlu0 %v419, 96
  %v1000 = vpop.permute.xlu0 %999
  %v1003 = vsel %vm501, %v669, 0
  %1005 = vmatprep.subr.bf16.mxu0 0
  %1006 = vmatpush1.bf16.msra.mxu0 %v1000
  %1007 = vmatprep.subr.bf16.mxu0 0
  %1008 = vmatpush1.bf16.msra.mxu0 0
  %1009 = vmatprep.subr.bf16.mxu0 0
  %1010 = vmatpush1.bf16.msra.mxu0 0
  %1011 = vmatprep.subr.bf16.mxu0 0
  %1012 = vmatpush1.bf16.msra.mxu0 0
  %1013 = vmatprep.subr.bf16.mxu0 0
  %1014 = vmatpush1.bf16.msra.mxu0 0
  %1015 = vmatprep.subr.bf16.mxu0 0
  %1016 = vmatpush1.bf16.msra.mxu0 0
  %1017 = vmatprep.subr.bf16.mxu0 0
  %1018 = vmatpush1.bf16.msra.mxu0 0
  %1019 = vmatprep.subr.bf16.mxu0 0
  %1020 = vmatpush1.bf16.msra.mxu0 0
  %1021 = vmatprep.subr.bf16.mxu0 0
  %1022 = vmatpush1.bf16.msra.mxu0 0
  %1023 = vmatprep.subr.bf16.mxu0 0
  %1024 = vmatpush1.bf16.msra.mxu0 0
  %1025 = vmatprep.subr.bf16.mxu0 0
  %1026 = vmatpush1.bf16.msra.mxu0 0
  %1027 = vmatprep.subr.bf16.mxu0 0
  %1028 = vmatpush1.bf16.msra.mxu0 0
  %1029 = vmatprep.subr.bf16.mxu0 0
  %1030 = vmatpush1.bf16.msra.mxu0 0
  %1031 = vmatprep.subr.bf16.mxu0 0
  %1032 = vmatpush1.bf16.msra.mxu0 0
  %1033 = vmatprep.subr.bf16.mxu0 0
  %1034 = vmatpush1.bf16.msra.mxu0 0
  %1035 = vmatprep.subr.bf16.mxu0 0
  %1036 = vmatpush1.bf16.msra.mxu0 0
  %1037 = vmatprep.mubr.bf16.mxu0 0
  %1038 = vmatmul.mubr.bf16.gmra.mrb[0].mxu0 %v1003
  %v1039 = vpop.f32.mrb[0].mxu0
  %v1040 = vadd.f32 0.0, %v1039
  %v1041 = vpop.f32.mrb[0].mxu0
  %v1042 = vpop.f32.mrb[0].mxu0
  %v1043 = vadd.f32 0.0, %v1042
  %v1044 = vpop.f32.mrb[0].mxu0
  %1045 = vdwg.mxu0
  %v1046 = vmul.f32 %v711, %v646
  %v1047 = vmul.f32 %v714, %v647
  %v1048 = vmul.f32 %v758, %v648
  %v1049 = vmul.f32 %v761, %v649
  %v1050 = vmul.f32 %v805, %v650
  %v1051 = vmul.f32 %v808, %v651
  %v1052 = vmul.f32 %v852, %v652
  %v1053 = vmul.f32 %v855, %v653
  %v1054 = vmul.f32 %v899, %v654
  %v1055 = vmul.f32 %v902, %v655
  %v1056 = vmul.f32 %v946, %v656
  %v1057 = vmul.f32 %v949, %v657
  %v1058 = vmul.f32 %v993, %v658
  %v1059 = vmul.f32 %v996, %v659
  %v1060 = vmul.f32 %v1040, %v660
  %v1061 = vmul.f32 %v1043, %v661
  %v1062 = vpack.c.bf16 %v1047, %v1046
  %v1063 = vpack.c.bf16 %v1049, %v1048
  %v1064 = vpack.c.bf16 %v1051, %v1050
  %v1065 = vpack.c.bf16 %v1053, %v1052
  %v1066 = vpack.c.bf16 %v1055, %v1054
  %v1067 = vpack.c.bf16 %v1057, %v1056
  %v1068 = vpack.c.bf16 %v1059, %v1058
  %v1069 = vpack.c.bf16 %v1061, %v1060
  %v1078 = vunpack.c.l.b16 %v1062
  %v1079 = vunpack.c.h.b16 %v1062
  %v1080 = vunpack.c.l.b16 %v1063
  %v1081 = vunpack.c.h.b16 %v1063
  %v1082 = vunpack.c.l.b16 %v1064
  %v1083 = vunpack.c.h.b16 %v1064
  %v1084 = vunpack.c.l.b16 %v1065
  %v1085 = vunpack.c.h.b16 %v1065
  %v1086 = vunpack.c.l.b16 %v1066
  %v1087 = vunpack.c.h.b16 %v1066
  %v1088 = vunpack.c.l.b16 %v1067
  %v1089 = vunpack.c.h.b16 %v1067
  %v1090 = vunpack.c.l.b16 %v1068
  %v1091 = vunpack.c.h.b16 %v1068
  %v1092 = vunpack.c.l.b16 %v1069
  %v1093 = vunpack.c.h.b16 %v1069
  %v1094 = vpack.c.b16 %v1078, %v1078
  %v1095 = vpack.c.b16 %v1079, %v1079
  %v1096 = vpack.c.b16 %v1080, %v1080
  %v1097 = vpack.c.b16 %v1081, %v1081
  %v1098 = vpack.c.b16 %v1082, %v1082
  %v1099 = vpack.c.b16 %v1083, %v1083
  %v1100 = vpack.c.b16 %v1084, %v1084
  %v1101 = vpack.c.b16 %v1085, %v1085
  %v1102 = vpack.c.b16 %v1086, %v1086
  %v1103 = vpack.c.b16 %v1087, %v1087
  %v1104 = vpack.c.b16 %v1088, %v1088
  %v1105 = vpack.c.b16 %v1089, %v1089
  %v1106 = vpack.c.b16 %v1090, %v1090
  %v1107 = vpack.c.b16 %v1091, %v1091
  %v1108 = vpack.c.b16 %v1092, %v1092
  %v1109 = vpack.c.b16 %v1093, %v1093
  %vm1126 = vcmask 60416
  %1127 = vst.msk [vmem:[%s2] sm:$0xf] %vm1126, %v1094
  %1128 = vst.msk [vmem:[%s2 + $0x4] sm:$0xf] %vm1126, %v1095
  %1129 = vst.msk [vmem:[%s2 + $0x8] sm:$0xf] %vm1126, %v1096
  %1130 = vst.msk [vmem:[%s2 + $0xc] sm:$0xf] %vm1126, %v1097
  %1131 = vst.msk [vmem:[%s2 + $0x10] sm:$0xf] %vm1126, %v1098
  %1132 = vst.msk [vmem:[%s2 + $0x14] sm:$0xf] %vm1126, %v1099
  %1133 = vst.msk [vmem:[%s2 + $0x18] sm:$0xf] %vm1126, %v1100
  %1134 = vst.msk [vmem:[%s2 + $0x1c] sm:$0xf] %vm1126, %v1101
  %1135 = vst.msk [vmem:[%s2 + $0x20] sm:$0xf] %vm1126, %v1102
  %1136 = vst.msk [vmem:[%s2 + $0x24] sm:$0xf] %vm1126, %v1103
  %1137 = vst.msk [vmem:[%s2 + $0x28] sm:$0xf] %vm1126, %v1104
  %1138 = vst.msk [vmem:[%s2 + $0x2c] sm:$0xf] %vm1126, %v1105
  %1139 = vst.msk [vmem:[%s2 + $0x30] sm:$0xf] %vm1126, %v1106
  %1140 = vst.msk [vmem:[%s2 + $0x34] sm:$0xf] %vm1126, %v1107
  %1141 = vst.msk [vmem:[%s2 + $0x38] sm:$0xf] %vm1126, %v1108
  %1142 = vst.msk [vmem:[%s2 + $0x3c] sm:$0xf] %vm1126, %v1109
  %1143 = vrot.lane.b32.xlu0 %v40, 120
  %v1144 = vpop.permute.xlu0 %1143
  %1145 = vrot.lane.b32.xlu0 %v40, 104
  %v1146 = vpop.permute.xlu0 %1145
  %v1148 = vsel %vm43, %v1144, 0
  %v1151 = vsel %vm43, %v1146, 0
  %1153 = vmatprep.subr.bf16.mxu0 0
  %1154 = vmatpush1.bf16.xpose.msra.mxu0 %v1151
  %1155 = vmatprep.subr.bf16.mxu0 0
  %1156 = vmatpush1.bf16.xpose.msra.mxu0 0
  %1157 = vmatprep.subr.bf16.mxu0 0
  %1158 = vmatpush1.bf16.xpose.msra.mxu0 0
  %1159 = vmatprep.subr.bf16.mxu0 0
  %1160 = vmatpush1.bf16.xpose.msra.mxu0 0
  %1161 = vmatprep.subr.bf16.mxu0 0
  %1162 = vmatpush1.bf16.xpose.msra.mxu0 0
  %1163 = vmatprep.subr.bf16.mxu0 0
  %1164 = vmatpush1.bf16.xpose.msra.mxu0 0
  %1165 = vmatprep.subr.bf16.mxu0 0
  %1166 = vmatpush1.bf16.xpose.msra.mxu0 0
  %1167 = vmatprep.subr.bf16.mxu0 0
  %1168 = vmatpush1.bf16.xpose.msra.mxu0 0
  %1169 = vmatprep.subr.bf16.mxu0 0
  %1170 = vmatpush1.bf16.xpose.msra.mxu0 0
  %1171 = vmatprep.subr.bf16.mxu0 0
  %1172 = vmatpush1.bf16.xpose.msra.mxu0 0
  %1173 = vmatprep.subr.bf16.mxu0 0
  %1174 = vmatpush1.bf16.xpose.msra.mxu0 0
  %1175 = vmatprep.subr.bf16.mxu0 0
  %1176 = vmatpush1.bf16.xpose.msra.mxu0 0
  %1177 = vmatprep.subr.bf16.mxu0 0
  %1178 = vmatpush1.bf16.xpose.msra.mxu0 0
  %1179 = vmatprep.subr.bf16.mxu0 0
  %1180 = vmatpush1.bf16.xpose.msra.mxu0 0
  %1181 = vmatprep.subr.bf16.mxu0 0
  %1182 = vmatpush1.bf16.xpose.msra.mxu0 0
  %1183 = vmatprep.subr.bf16.mxu0 0
  %1184 = vmatpush1.bf16.xpose.msra.mxu0 0
  %1185 = vmatprep.mubr.bf16.mxu0 0
  %1186 = vmatmul.mubr.bf16.gmra.mrb[0].mxu0 %v1148
  %v1187 = vpop.f32.mrb[0].mxu0
  %v1188 = vadd.f32 0.0, %v1187
  %v1189 = vpop.f32.mrb[0].mxu0
  %v1190 = vpop.f32.mrb[0].mxu0
  %v1191 = vadd.f32 0.0, %v1190
  %v1192 = vpop.f32.mrb[0].mxu0
  %1193 = vdwg.mxu0
  %1194 = vrot.lane.b32.xlu0 %v95, 120
  %v1195 = vpop.permute.xlu0 %1194
  %1196 = vrot.lane.b32.xlu0 %v95, 104
  %v1197 = vpop.permute.xlu0 %1196
  %v1199 = vsel %vm43, %v1195, 0
  %v1202 = vsel %vm43, %v1197, 0
  %1204 = vmatprep.subr.bf16.mxu0 0
  %1205 = vmatpush1.bf16.xpose.msra.mxu0 %v1202
  %1206 = vmatprep.subr.bf16.mxu0 0
  %1207 = vmatpush1.bf16.xpose.msra.mxu0 0
  %1208 = vmatprep.subr.bf16.mxu0 0
  %1209 = vmatpush1.bf16.xpose.msra.mxu0 0
  %1210 = vmatprep.subr.bf16.mxu0 0
  %1211 = vmatpush1.bf16.xpose.msra.mxu0 0
  %1212 = vmatprep.subr.bf16.mxu0 0
  %1213 = vmatpush1.bf16.xpose.msra.mxu0 0
  %1214 = vmatprep.subr.bf16.mxu0 0
  %1215 = vmatpush1.bf16.xpose.msra.mxu0 0
  %1216 = vmatprep.subr.bf16.mxu0 0
  %1217 = vmatpush1.bf16.xpose.msra.mxu0 0
  %1218 = vmatprep.subr.bf16.mxu0 0
  %1219 = vmatpush1.bf16.xpose.msra.mxu0 0
  %1220 = vmatprep.subr.bf16.mxu0 0
  %1221 = vmatpush1.bf16.xpose.msra.mxu0 0
  %1222 = vmatprep.subr.bf16.mxu0 0
  %1223 = vmatpush1.bf16.xpose.msra.mxu0 0
  %1224 = vmatprep.subr.bf16.mxu0 0
  %1225 = vmatpush1.bf16.xpose.msra.mxu0 0
  %1226 = vmatprep.subr.bf16.mxu0 0
  %1227 = vmatpush1.bf16.xpose.msra.mxu0 0
  %1228 = vmatprep.subr.bf16.mxu0 0
  %1229 = vmatpush1.bf16.xpose.msra.mxu0 0
  %1230 = vmatprep.subr.bf16.mxu0 0
  %1231 = vmatpush1.bf16.xpose.msra.mxu0 0
  %1232 = vmatprep.subr.bf16.mxu0 0
  %1233 = vmatpush1.bf16.xpose.msra.mxu0 0
  %1234 = vmatprep.subr.bf16.mxu0 0
  %1235 = vmatpush1.bf16.xpose.msra.mxu0 0
  %1236 = vmatprep.mubr.bf16.mxu0 0
  %1237 = vmatmul.mubr.bf16.gmra.mrb[0].mxu0 %v1199
  %v1238 = vpop.f32.mrb[0].mxu0
  %v1239 = vadd.f32 0.0, %v1238
  %v1240 = vpop.f32.mrb[0].mxu0
  %v1241 = vpop.f32.mrb[0].mxu0
  %v1242 = vadd.f32 0.0, %v1241
  %v1243 = vpop.f32.mrb[0].mxu0
  %1244 = vdwg.mxu0
  %1245 = vrot.lane.b32.xlu0 %v149, 120
  %v1246 = vpop.permute.xlu0 %1245
  %1247 = vrot.lane.b32.xlu0 %v149, 104
  %v1248 = vpop.permute.xlu0 %1247
  %v1250 = vsel %vm43, %v1246, 0
  %v1253 = vsel %vm43, %v1248, 0
  %1255 = vmatprep.subr.bf16.mxu0 0
  %1256 = vmatpush1.bf16.xpose.msra.mxu0 %v1253
  %1257 = vmatprep.subr.bf16.mxu0 0
  %1258 = vmatpush1.bf16.xpose.msra.mxu0 0
  %1259 = vmatprep.subr.bf16.mxu0 0
  %1260 = vmatpush1.bf16.xpose.msra.mxu0 0
  %1261 = vmatprep.subr.bf16.mxu0 0
  %1262 = vmatpush1.bf16.xpose.msra.mxu0 0
  %1263 = vmatprep.subr.bf16.mxu0 0
  %1264 = vmatpush1.bf16.xpose.msra.mxu0 0
  %1265 = vmatprep.subr.bf16.mxu0 0
  %1266 = vmatpush1.bf16.xpose.msra.mxu0 0
  %1267 = vmatprep.subr.bf16.mxu0 0
  %1268 = vmatpush1.bf16.xpose.msra.mxu0 0
  %1269 = vmatprep.subr.bf16.mxu0 0
  %1270 = vmatpush1.bf16.xpose.msra.mxu0 0
  %1271 = vmatprep.subr.bf16.mxu0 0
  %1272 = vmatpush1.bf16.xpose.msra.mxu0 0
  %1273 = vmatprep.subr.bf16.mxu0 0
  %1274 = vmatpush1.bf16.xpose.msra.mxu0 0
  %1275 = vmatprep.subr.bf16.mxu0 0
  %1276 = vmatpush1.bf16.xpose.msra.mxu0 0
  %1277 = vmatprep.subr.bf16.mxu0 0
  %1278 = vmatpush1.bf16.xpose.msra.mxu0 0
  %1279 = vmatprep.subr.bf16.mxu0 0
  %1280 = vmatpush1.bf16.xpose.msra.mxu0 0
  %1281 = vmatprep.subr.bf16.mxu0 0
  %1282 = vmatpush1.bf16.xpose.msra.mxu0 0
  %1283 = vmatprep.subr.bf16.mxu0 0
  %1284 = vmatpush1.bf16.xpose.msra.mxu0 0
  %1285 = vmatprep.subr.bf16.mxu0 0
  %1286 = vmatpush1.bf16.xpose.msra.mxu0 0
  %1287 = vmatprep.mubr.bf16.mxu0 0
  %1288 = vmatmul.mubr.bf16.gmra.mrb[0].mxu0 %v1250
  %v1289 = vpop.f32.mrb[0].mxu0
  %v1290 = vadd.f32 0.0, %v1289
  %v1291 = vpop.f32.mrb[0].mxu0
  %v1292 = vpop.f32.mrb[0].mxu0
  %v1293 = vadd.f32 0.0, %v1292
  %v1294 = vpop.f32.mrb[0].mxu0
  %1295 = vdwg.mxu0
  %1296 = vrot.lane.b32.xlu0 %v203, 120
  %v1297 = vpop.permute.xlu0 %1296
  %1298 = vrot.lane.b32.xlu0 %v203, 104
  %v1299 = vpop.permute.xlu0 %1298
  %v1301 = vsel %vm43, %v1297, 0
  %v1304 = vsel %vm43, %v1299, 0
  %1306 = vmatprep.subr.bf16.mxu0 0
  %1307 = vmatpush1.bf16.xpose.msra.mxu0 %v1304
  %1308 = vmatprep.subr.bf16.mxu0 0
  %1309 = vmatpush1.bf16.xpose.msra.mxu0 0
  %1310 = vmatprep.subr.bf16.mxu0 0
  %1311 = vmatpush1.bf16.xpose.msra.mxu0 0
  %1312 = vmatprep.subr.bf16.mxu0 0
  %1313 = vmatpush1.bf16.xpose.msra.mxu0 0
  %1314 = vmatprep.subr.bf16.mxu0 0
  %1315 = vmatpush1.bf16.xpose.msra.mxu0 0
  %1316 = vmatprep.subr.bf16.mxu0 0
  %1317 = vmatpush1.bf16.xpose.msra.mxu0 0
  %1318 = vmatprep.subr.bf16.mxu0 0
  %1319 = vmatpush1.bf16.xpose.msra.mxu0 0
  %1320 = vmatprep.subr.bf16.mxu0 0
  %1321 = vmatpush1.bf16.xpose.msra.mxu0 0
  %1322 = vmatprep.subr.bf16.mxu0 0
  %1323 = vmatpush1.bf16.xpose.msra.mxu0 0
  %1324 = vmatprep.subr.bf16.mxu0 0
  %1325 = vmatpush1.bf16.xpose.msra.mxu0 0
  %1326 = vmatprep.subr.bf16.mxu0 0
  %1327 = vmatpush1.bf16.xpose.msra.mxu0 0
  %1328 = vmatprep.subr.bf16.mxu0 0
  %1329 = vmatpush1.bf16.xpose.msra.mxu0 0
  %1330 = vmatprep.subr.bf16.mxu0 0
  %1331 = vmatpush1.bf16.xpose.msra.mxu0 0
  %1332 = vmatprep.subr.bf16.mxu0 0
  %1333 = vmatpush1.bf16.xpose.msra.mxu0 0
  %1334 = vmatprep.subr.bf16.mxu0 0
  %1335 = vmatpush1.bf16.xpose.msra.mxu0 0
  %1336 = vmatprep.subr.bf16.mxu0 0
  %1337 = vmatpush1.bf16.xpose.msra.mxu0 0
  %1338 = vmatprep.mubr.bf16.mxu0 0
  %1339 = vmatmul.mubr.bf16.gmra.mrb[0].mxu0 %v1301
  %v1340 = vpop.f32.mrb[0].mxu0
  %v1341 = vadd.f32 0.0, %v1340
  %v1342 = vpop.f32.mrb[0].mxu0
  %v1343 = vpop.f32.mrb[0].mxu0
  %v1344 = vadd.f32 0.0, %v1343
  %v1345 = vpop.f32.mrb[0].mxu0
  %1346 = vdwg.mxu0
  %1347 = vrot.lane.b32.xlu0 %v257, 120
  %v1348 = vpop.permute.xlu0 %1347
  %1349 = vrot.lane.b32.xlu0 %v257, 104
  %v1350 = vpop.permute.xlu0 %1349
  %v1352 = vsel %vm43, %v1348, 0
  %v1355 = vsel %vm43, %v1350, 0
  %1357 = vmatprep.subr.bf16.mxu0 0
  %1358 = vmatpush1.bf16.xpose.msra.mxu0 %v1355
  %1359 = vmatprep.subr.bf16.mxu0 0
  %1360 = vmatpush1.bf16.xpose.msra.mxu0 0
  %1361 = vmatprep.subr.bf16.mxu0 0
  %1362 = vmatpush1.bf16.xpose.msra.mxu0 0
  %1363 = vmatprep.subr.bf16.mxu0 0
  %1364 = vmatpush1.bf16.xpose.msra.mxu0 0
  %1365 = vmatprep.subr.bf16.mxu0 0
  %1366 = vmatpush1.bf16.xpose.msra.mxu0 0
  %1367 = vmatprep.subr.bf16.mxu0 0
  %1368 = vmatpush1.bf16.xpose.msra.mxu0 0
  %1369 = vmatprep.subr.bf16.mxu0 0
  %1370 = vmatpush1.bf16.xpose.msra.mxu0 0
  %1371 = vmatprep.subr.bf16.mxu0 0
  %1372 = vmatpush1.bf16.xpose.msra.mxu0 0
  %1373 = vmatprep.subr.bf16.mxu0 0
  %1374 = vmatpush1.bf16.xpose.msra.mxu0 0
  %1375 = vmatprep.subr.bf16.mxu0 0
  %1376 = vmatpush1.bf16.xpose.msra.mxu0 0
  %1377 = vmatprep.subr.bf16.mxu0 0
  %1378 = vmatpush1.bf16.xpose.msra.mxu0 0
  %1379 = vmatprep.subr.bf16.mxu0 0
  %1380 = vmatpush1.bf16.xpose.msra.mxu0 0
  %1381 = vmatprep.subr.bf16.mxu0 0
  %1382 = vmatpush1.bf16.xpose.msra.mxu0 0
  %1383 = vmatprep.subr.bf16.mxu0 0
  %1384 = vmatpush1.bf16.xpose.msra.mxu0 0
  %1385 = vmatprep.subr.bf16.mxu0 0
  %1386 = vmatpush1.bf16.xpose.msra.mxu0 0
  %1387 = vmatprep.subr.bf16.mxu0 0
  %1388 = vmatpush1.bf16.xpose.msra.mxu0 0
  %1389 = vmatprep.mubr.bf16.mxu0 0
  %1390 = vmatmul.mubr.bf16.gmra.mrb[0].mxu0 %v1352
  %v1391 = vpop.f32.mrb[0].mxu0
  %v1392 = vadd.f32 0.0, %v1391
  %v1393 = vpop.f32.mrb[0].mxu0
  %v1394 = vpop.f32.mrb[0].mxu0
  %v1395 = vadd.f32 0.0, %v1394
  %v1396 = vpop.f32.mrb[0].mxu0
  %1397 = vdwg.mxu0
  %1398 = vrot.lane.b32.xlu0 %v311, 120
  %v1399 = vpop.permute.xlu0 %1398
  %1400 = vrot.lane.b32.xlu0 %v311, 104
  %v1401 = vpop.permute.xlu0 %1400
  %v1403 = vsel %vm43, %v1399, 0
  %v1406 = vsel %vm43, %v1401, 0
  %1408 = vmatprep.subr.bf16.mxu0 0
  %1409 = vmatpush1.bf16.xpose.msra.mxu0 %v1406
  %1410 = vmatprep.subr.bf16.mxu0 0
  %1411 = vmatpush1.bf16.xpose.msra.mxu0 0
  %1412 = vmatprep.subr.bf16.mxu0 0
  %1413 = vmatpush1.bf16.xpose.msra.mxu0 0
  %1414 = vmatprep.subr.bf16.mxu0 0
  %1415 = vmatpush1.bf16.xpose.msra.mxu0 0
  %1416 = vmatprep.subr.bf16.mxu0 0
  %1417 = vmatpush1.bf16.xpose.msra.mxu0 0
  %1418 = vmatprep.subr.bf16.mxu0 0
  %1419 = vmatpush1.bf16.xpose.msra.mxu0 0
  %1420 = vmatprep.subr.bf16.mxu0 0
  %1421 = vmatpush1.bf16.xpose.msra.mxu0 0
  %1422 = vmatprep.subr.bf16.mxu0 0
  %1423 = vmatpush1.bf16.xpose.msra.mxu0 0
  %1424 = vmatprep.subr.bf16.mxu0 0
  %1425 = vmatpush1.bf16.xpose.msra.mxu0 0
  %1426 = vmatprep.subr.bf16.mxu0 0
  %1427 = vmatpush1.bf16.xpose.msra.mxu0 0
  %1428 = vmatprep.subr.bf16.mxu0 0
  %1429 = vmatpush1.bf16.xpose.msra.mxu0 0
  %1430 = vmatprep.subr.bf16.mxu0 0
  %1431 = vmatpush1.bf16.xpose.msra.mxu0 0
  %1432 = vmatprep.subr.bf16.mxu0 0
  %1433 = vmatpush1.bf16.xpose.msra.mxu0 0
  %1434 = vmatprep.subr.bf16.mxu0 0
  %1435 = vmatpush1.bf16.xpose.msra.mxu0 0
  %1436 = vmatprep.subr.bf16.mxu0 0
  %1437 = vmatpush1.bf16.xpose.msra.mxu0 0
  %1438 = vmatprep.subr.bf16.mxu0 0
  %1439 = vmatpush1.bf16.xpose.msra.mxu0 0
  %1440 = vmatprep.mubr.bf16.mxu0 0
  %1441 = vmatmul.mubr.bf16.gmra.mrb[0].mxu0 %v1403
  %v1442 = vpop.f32.mrb[0].mxu0
  %v1443 = vadd.f32 0.0, %v1442
  %v1444 = vpop.f32.mrb[0].mxu0
  %v1445 = vpop.f32.mrb[0].mxu0
  %v1446 = vadd.f32 0.0, %v1445
  %v1447 = vpop.f32.mrb[0].mxu0
  %1448 = vdwg.mxu0
  %1449 = vrot.lane.b32.xlu0 %v365, 120
  %v1450 = vpop.permute.xlu0 %1449
  %1451 = vrot.lane.b32.xlu0 %v365, 104
  %v1452 = vpop.permute.xlu0 %1451
  %v1454 = vsel %vm43, %v1450, 0
  %v1457 = vsel %vm43, %v1452, 0
  %1459 = vmatprep.subr.bf16.mxu0 0
  %1460 = vmatpush1.bf16.xpose.msra.mxu0 %v1457
  %1461 = vmatprep.subr.bf16.mxu0 0
  %1462 = vmatpush1.bf16.xpose.msra.mxu0 0
  %1463 = vmatprep.subr.bf16.mxu0 0
  %1464 = vmatpush1.bf16.xpose.msra.mxu0 0
  %1465 = vmatprep.subr.bf16.mxu0 0
  %1466 = vmatpush1.bf16.xpose.msra.mxu0 0
  %1467 = vmatprep.subr.bf16.mxu0 0
  %1468 = vmatpush1.bf16.xpose.msra.mxu0 0
  %1469 = vmatprep.subr.bf16.mxu0 0
  %1470 = vmatpush1.bf16.xpose.msra.mxu0 0
  %1471 = vmatprep.subr.bf16.mxu0 0
  %1472 = vmatpush1.bf16.xpose.msra.mxu0 0
  %1473 = vmatprep.subr.bf16.mxu0 0
  %1474 = vmatpush1.bf16.xpose.msra.mxu0 0
  %1475 = vmatprep.subr.bf16.mxu0 0
  %1476 = vmatpush1.bf16.xpose.msra.mxu0 0
  %1477 = vmatprep.subr.bf16.mxu0 0
  %1478 = vmatpush1.bf16.xpose.msra.mxu0 0
  %1479 = vmatprep.subr.bf16.mxu0 0
  %1480 = vmatpush1.bf16.xpose.msra.mxu0 0
  %1481 = vmatprep.subr.bf16.mxu0 0
  %1482 = vmatpush1.bf16.xpose.msra.mxu0 0
  %1483 = vmatprep.subr.bf16.mxu0 0
  %1484 = vmatpush1.bf16.xpose.msra.mxu0 0
  %1485 = vmatprep.subr.bf16.mxu0 0
  %1486 = vmatpush1.bf16.xpose.msra.mxu0 0
  %1487 = vmatprep.subr.bf16.mxu0 0
  %1488 = vmatpush1.bf16.xpose.msra.mxu0 0
  %1489 = vmatprep.subr.bf16.mxu0 0
  %1490 = vmatpush1.bf16.xpose.msra.mxu0 0
  %1491 = vmatprep.mubr.bf16.mxu0 0
  %1492 = vmatmul.mubr.bf16.gmra.mrb[0].mxu0 %v1454
  %v1493 = vpop.f32.mrb[0].mxu0
  %v1494 = vadd.f32 0.0, %v1493
  %v1495 = vpop.f32.mrb[0].mxu0
  %v1496 = vpop.f32.mrb[0].mxu0
  %v1497 = vadd.f32 0.0, %v1496
  %v1498 = vpop.f32.mrb[0].mxu0
  %1499 = vdwg.mxu0
  %1500 = vrot.lane.b32.xlu0 %v419, 120
  %v1501 = vpop.permute.xlu0 %1500
  %1502 = vrot.lane.b32.xlu0 %v419, 104
  %v1503 = vpop.permute.xlu0 %1502
  %v1505 = vsel %vm43, %v1501, 0
  %v1508 = vsel %vm43, %v1503, 0
  %1510 = vmatprep.subr.bf16.mxu0 0
  %1511 = vmatpush1.bf16.xpose.msra.mxu0 %v1508
  %1512 = vmatprep.subr.bf16.mxu0 0
  %1513 = vmatpush1.bf16.xpose.msra.mxu0 0
  %1514 = vmatprep.subr.bf16.mxu0 0
  %1515 = vmatpush1.bf16.xpose.msra.mxu0 0
  %1516 = vmatprep.subr.bf16.mxu0 0
  %1517 = vmatpush1.bf16.xpose.msra.mxu0 0
  %1518 = vmatprep.subr.bf16.mxu0 0
  %1519 = vmatpush1.bf16.xpose.msra.mxu0 0
  %1520 = vmatprep.subr.bf16.mxu0 0
  %1521 = vmatpush1.bf16.xpose.msra.mxu0 0
  %1522 = vmatprep.subr.bf16.mxu0 0
  %1523 = vmatpush1.bf16.xpose.msra.mxu0 0
  %1524 = vmatprep.subr.bf16.mxu0 0
  %1525 = vmatpush1.bf16.xpose.msra.mxu0 0
  %1526 = vmatprep.subr.bf16.mxu0 0
  %1527 = vmatpush1.bf16.xpose.msra.mxu0 0
  %1528 = vmatprep.subr.bf16.mxu0 0
  %1529 = vmatpush1.bf16.xpose.msra.mxu0 0
  %1530 = vmatprep.subr.bf16.mxu0 0
  %1531 = vmatpush1.bf16.xpose.msra.mxu0 0
  %1532 = vmatprep.subr.bf16.mxu0 0
  %1533 = vmatpush1.bf16.xpose.msra.mxu0 0
  %1534 = vmatprep.subr.bf16.mxu0 0
  %1535 = vmatpush1.bf16.xpose.msra.mxu0 0
  %1536 = vmatprep.subr.bf16.mxu0 0
  %1537 = vmatpush1.bf16.xpose.msra.mxu0 0
  %1538 = vmatprep.subr.bf16.mxu0 0
  %1539 = vmatpush1.bf16.xpose.msra.mxu0 0
  %1540 = vmatprep.subr.bf16.mxu0 0
  %1541 = vmatpush1.bf16.xpose.msra.mxu0 0
  %1542 = vmatprep.mubr.bf16.mxu0 0
  %1543 = vmatmul.mubr.bf16.gmra.mrb[0].mxu0 %v1505
  %v1544 = vpop.f32.mrb[0].mxu0
  %v1545 = vadd.f32 0.0, %v1544
  %v1546 = vpop.f32.mrb[0].mxu0
  %v1547 = vpop.f32.mrb[0].mxu0
  %v1548 = vadd.f32 0.0, %v1547
  %v1549 = vpop.f32.mrb[0].mxu0
  %1550 = vdwg.mxu0
  %v1551 = vmul.f32 %v1188, 0.35355338
  %v1552 = vmul.f32 %v1191, 0.35355338
  %v1553 = vmul.f32 %v1239, 0.35355338
  %v1554 = vmul.f32 %v1242, 0.35355338
  %v1555 = vmul.f32 %v1290, 0.35355338
  %v1556 = vmul.f32 %v1293, 0.35355338
  %v1557 = vmul.f32 %v1341, 0.35355338
  %v1558 = vmul.f32 %v1344, 0.35355338
  %v1559 = vmul.f32 %v1392, 0.35355338
  %v1560 = vmul.f32 %v1395, 0.35355338
  %v1561 = vmul.f32 %v1443, 0.35355338
  %v1562 = vmul.f32 %v1446, 0.35355338
  %v1563 = vmul.f32 %v1494, 0.35355338
  %v1564 = vmul.f32 %v1497, 0.35355338
  %v1565 = vmul.f32 %v1545, 0.35355338
  %v1566 = vmul.f32 %v1548, 0.35355338
  %v1567 = vadd.f32 %v1551, %v34
  %v1568 = vadd.f32 %v1552, %v35
  %v1569 = vadd.f32 %v1553, %v34
  %v1570 = vadd.f32 %v1554, %v35
  %v1571 = vadd.f32 %v1555, %v34
  %v1572 = vadd.f32 %v1556, %v35
  %v1573 = vadd.f32 %v1557, %v34
  %v1574 = vadd.f32 %v1558, %v35
  %v1575 = vadd.f32 %v1559, %v34
  %v1576 = vadd.f32 %v1560, %v35
  %v1577 = vadd.f32 %v1561, %v34
  %v1578 = vadd.f32 %v1562, %v35
  %v1579 = vadd.f32 %v1563, %v34
  %v1580 = vadd.f32 %v1564, %v35
  %v1581 = vadd.f32 %v1565, %v34
  %v1582 = vadd.f32 %v1566, %v35
  %v1583 = vsel %vm501, %v1567, -inf
  %1584 = vmax.xlane.f32.xlu0 %v1583
  %v1585 = vpop.xlane.xlu0 %1584
  %v1586 = vsel %vm501, %v1568, -inf
  %1587 = vmax.xlane.f32.xlu0 %v1586
  %v1588 = vpop.xlane.xlu0 %1587
  %v1589 = vsel %vm501, %v1569, -inf
  %1590 = vmax.xlane.f32.xlu0 %v1589
  %v1591 = vpop.xlane.xlu0 %1590
  %v1592 = vsel %vm501, %v1570, -inf
  %1593 = vmax.xlane.f32.xlu0 %v1592
  %v1594 = vpop.xlane.xlu0 %1593
  %v1595 = vsel %vm501, %v1571, -inf
  %1596 = vmax.xlane.f32.xlu0 %v1595
  %v1597 = vpop.xlane.xlu0 %1596
  %v1598 = vsel %vm501, %v1572, -inf
  %1599 = vmax.xlane.f32.xlu0 %v1598
  %v1600 = vpop.xlane.xlu0 %1599
  %v1601 = vsel %vm501, %v1573, -inf
  %1602 = vmax.xlane.f32.xlu0 %v1601
  %v1603 = vpop.xlane.xlu0 %1602
  %v1604 = vsel %vm501, %v1574, -inf
  %1605 = vmax.xlane.f32.xlu0 %v1604
  %v1606 = vpop.xlane.xlu0 %1605
  %v1607 = vsel %vm501, %v1575, -inf
  %1608 = vmax.xlane.f32.xlu0 %v1607
  %v1609 = vpop.xlane.xlu0 %1608
  %v1610 = vsel %vm501, %v1576, -inf
  %1611 = vmax.xlane.f32.xlu0 %v1610
  %v1612 = vpop.xlane.xlu0 %1611
  %v1613 = vsel %vm501, %v1577, -inf
  %1614 = vmax.xlane.f32.xlu0 %v1613
  %v1615 = vpop.xlane.xlu0 %1614
  %v1616 = vsel %vm501, %v1578, -inf
  %1617 = vmax.xlane.f32.xlu0 %v1616
  %v1618 = vpop.xlane.xlu0 %1617
  %v1619 = vsel %vm501, %v1579, -inf
  %1620 = vmax.xlane.f32.xlu0 %v1619
  %v1621 = vpop.xlane.xlu0 %1620
  %v1622 = vsel %vm501, %v1580, -inf
  %1623 = vmax.xlane.f32.xlu0 %v1622
  %v1624 = vpop.xlane.xlu0 %1623
  %v1625 = vsel %vm501, %v1581, -inf
  %1626 = vmax.xlane.f32.xlu0 %v1625
  %v1627 = vpop.xlane.xlu0 %1626
  %v1628 = vsel %vm501, %v1582, -inf
  %1629 = vmax.xlane.f32.xlu0 %v1628
  %v1630 = vpop.xlane.xlu0 %1629
  %v1631 = vsub.f32 %v1567, %v1585
  %v1632 = vsub.f32 %v1568, %v1588
  %v1633 = vsub.f32 %v1569, %v1591
  %v1634 = vsub.f32 %v1570, %v1594
  %v1635 = vsub.f32 %v1571, %v1597
  %v1636 = vsub.f32 %v1572, %v1600
  %v1637 = vsub.f32 %v1573, %v1603
  %v1638 = vsub.f32 %v1574, %v1606
  %v1639 = vsub.f32 %v1575, %v1609
  %v1640 = vsub.f32 %v1576, %v1612
  %v1641 = vsub.f32 %v1577, %v1615
  %v1642 = vsub.f32 %v1578, %v1618
  %v1643 = vsub.f32 %v1579, %v1621
  %v1644 = vsub.f32 %v1580, %v1624
  %v1645 = vsub.f32 %v1581, %v1627
  %v1646 = vsub.f32 %v1582, %v1630
  %v1647 = vmul.f32 %v1631, 1.442695
  %v1648 = vpow.pop %v1647
  %v1649 = vmul.f32 %v1632, 1.442695
  %v1650 = vpow.pop %v1649
  %v1651 = vmul.f32 %v1633, 1.442695
  %v1652 = vpow.pop %v1651
  %v1653 = vmul.f32 %v1634, 1.442695
  %v1654 = vpow.pop %v1653
  %v1655 = vmul.f32 %v1635, 1.442695
  %v1656 = vpow.pop %v1655
  %v1657 = vmul.f32 %v1636, 1.442695
  %v1658 = vpow.pop %v1657
  %v1659 = vmul.f32 %v1637, 1.442695
  %v1660 = vpow.pop %v1659
  %v1661 = vmul.f32 %v1638, 1.442695
  %v1662 = vpow.pop %v1661
  %v1663 = vmul.f32 %v1639, 1.442695
  %v1664 = vpow.pop %v1663
  %v1665 = vmul.f32 %v1640, 1.442695
  %v1666 = vpow.pop %v1665
  %v1667 = vmul.f32 %v1641, 1.442695
  %v1668 = vpow.pop %v1667
  %v1669 = vmul.f32 %v1642, 1.442695
  %v1670 = vpow.pop %v1669
  %v1671 = vmul.f32 %v1643, 1.442695
  %v1672 = vpow.pop %v1671
  %v1673 = vmul.f32 %v1644, 1.442695
  %v1674 = vpow.pop %v1673
  %v1675 = vmul.f32 %v1645, 1.442695
  %v1676 = vpow.pop %v1675
  %v1677 = vmul.f32 %v1646, 1.442695
  %v1678 = vpow.pop %v1677
  %v1679 = vsel %vm501, %v1648, 0.0
  %1680 = vadd.xlane.f32.xlu0 %v1679
  %v1681 = vpop.xlane.xlu0 %1680
  %v1682 = vsel %vm501, %v1650, 0.0
  %1683 = vadd.xlane.f32.xlu0 %v1682
  %v1684 = vpop.xlane.xlu0 %1683
  %v1685 = vsel %vm501, %v1652, 0.0
  %1686 = vadd.xlane.f32.xlu0 %v1685
  %v1687 = vpop.xlane.xlu0 %1686
  %v1688 = vsel %vm501, %v1654, 0.0
  %1689 = vadd.xlane.f32.xlu0 %v1688
  %v1690 = vpop.xlane.xlu0 %1689
  %v1691 = vsel %vm501, %v1656, 0.0
  %1692 = vadd.xlane.f32.xlu0 %v1691
  %v1693 = vpop.xlane.xlu0 %1692
  %v1694 = vsel %vm501, %v1658, 0.0
  %1695 = vadd.xlane.f32.xlu0 %v1694
  %v1696 = vpop.xlane.xlu0 %1695
  %v1697 = vsel %vm501, %v1660, 0.0
  %1698 = vadd.xlane.f32.xlu0 %v1697
  %v1699 = vpop.xlane.xlu0 %1698
  %v1700 = vsel %vm501, %v1662, 0.0
  %1701 = vadd.xlane.f32.xlu0 %v1700
  %v1702 = vpop.xlane.xlu0 %1701
  %v1703 = vsel %vm501, %v1664, 0.0
  %1704 = vadd.xlane.f32.xlu0 %v1703
  %v1705 = vpop.xlane.xlu0 %1704
  %v1706 = vsel %vm501, %v1666, 0.0
  %1707 = vadd.xlane.f32.xlu0 %v1706
  %v1708 = vpop.xlane.xlu0 %1707
  %v1709 = vsel %vm501, %v1668, 0.0
  %1710 = vadd.xlane.f32.xlu0 %v1709
  %v1711 = vpop.xlane.xlu0 %1710
  %v1712 = vsel %vm501, %v1670, 0.0
  %1713 = vadd.xlane.f32.xlu0 %v1712
  %v1714 = vpop.xlane.xlu0 %1713
  %v1715 = vsel %vm501, %v1672, 0.0
  %1716 = vadd.xlane.f32.xlu0 %v1715
  %v1717 = vpop.xlane.xlu0 %1716
  %v1718 = vsel %vm501, %v1674, 0.0
  %1719 = vadd.xlane.f32.xlu0 %v1718
  %v1720 = vpop.xlane.xlu0 %1719
  %v1721 = vsel %vm501, %v1676, 0.0
  %1722 = vadd.xlane.f32.xlu0 %v1721
  %v1723 = vpop.xlane.xlu0 %1722
  %v1724 = vsel %vm501, %v1678, 0.0
  %1725 = vadd.xlane.f32.xlu0 %v1724
  %v1726 = vpop.xlane.xlu0 %1725
  %v1727 = vrcp.pop %v1681
  %v1728 = vrcp.pop %v1684
  %v1729 = vrcp.pop %v1687
  %v1730 = vrcp.pop %v1690
  %v1731 = vrcp.pop %v1693
  %v1732 = vrcp.pop %v1696
  %v1733 = vrcp.pop %v1699
  %v1734 = vrcp.pop %v1702
  %v1735 = vrcp.pop %v1705
  %v1736 = vrcp.pop %v1708
  %v1737 = vrcp.pop %v1711
  %v1738 = vrcp.pop %v1714
  %v1739 = vrcp.pop %v1717
  %v1740 = vrcp.pop %v1720
  %v1741 = vrcp.pop %v1723
  %v1742 = vrcp.pop %v1726
  %v1743 = vpack.c.bf16 %v1650, %v1648
  %v1744 = vpack.c.bf16 %v1654, %v1652
  %v1745 = vpack.c.bf16 %v1658, %v1656
  %v1746 = vpack.c.bf16 %v1662, %v1660
  %v1747 = vpack.c.bf16 %v1666, %v1664
  %v1748 = vpack.c.bf16 %v1670, %v1668
  %v1749 = vpack.c.bf16 %v1674, %v1672
  %v1750 = vpack.c.bf16 %v1678, %v1676
  %1751 = vrot.lane.b32.xlu0 %v40, 88
  %v1752 = vpop.permute.xlu0 %1751
  %v1755 = vsel %vm501, %v1743, 0
  %1757 = vmatprep.subr.bf16.mxu0 0
  %1758 = vmatpush1.bf16.msra.mxu0 %v1752
  %1759 = vmatprep.subr.bf16.mxu0 0
  %1760 = vmatpush1.bf16.msra.mxu0 0
  %1761 = vmatprep.subr.bf16.mxu0 0
  %1762 = vmatpush1.bf16.msra.mxu0 0
  %1763 = vmatprep.subr.bf16.mxu0 0
  %1764 = vmatpush1.bf16.msra.mxu0 0
  %1765 = vmatprep.subr.bf16.mxu0 0
  %1766 = vmatpush1.bf16.msra.mxu0 0
  %1767 = vmatprep.subr.bf16.mxu0 0
  %1768 = vmatpush1.bf16.msra.mxu0 0
  %1769 = vmatprep.subr.bf16.mxu0 0
  %1770 = vmatpush1.bf16.msra.mxu0 0
  %1771 = vmatprep.subr.bf16.mxu0 0
  %1772 = vmatpush1.bf16.msra.mxu0 0
  %1773 = vmatprep.subr.bf16.mxu0 0
  %1774 = vmatpush1.bf16.msra.mxu0 0
  %1775 = vmatprep.subr.bf16.mxu0 0
  %1776 = vmatpush1.bf16.msra.mxu0 0
  %1777 = vmatprep.subr.bf16.mxu0 0
  %1778 = vmatpush1.bf16.msra.mxu0 0
  %1779 = vmatprep.subr.bf16.mxu0 0
  %1780 = vmatpush1.bf16.msra.mxu0 0
  %1781 = vmatprep.subr.bf16.mxu0 0
  %1782 = vmatpush1.bf16.msra.mxu0 0
  %1783 = vmatprep.subr.bf16.mxu0 0
  %1784 = vmatpush1.bf16.msra.mxu0 0
  %1785 = vmatprep.subr.bf16.mxu0 0
  %1786 = vmatpush1.bf16.msra.mxu0 0
  %1787 = vmatprep.subr.bf16.mxu0 0
  %1788 = vmatpush1.bf16.msra.mxu0 0
  %1789 = vmatprep.mubr.bf16.mxu0 0
  %1790 = vmatmul.mubr.bf16.gmra.mrb[0].mxu0 %v1755
  %v1791 = vpop.f32.mrb[0].mxu0
  %v1792 = vadd.f32 0.0, %v1791
  %v1793 = vpop.f32.mrb[0].mxu0
  %v1794 = vpop.f32.mrb[0].mxu0
  %v1795 = vadd.f32 0.0, %v1794
  %v1796 = vpop.f32.mrb[0].mxu0
  %1797 = vdwg.mxu0
  %1798 = vrot.lane.b32.xlu0 %v95, 88
  %v1799 = vpop.permute.xlu0 %1798
  %v1802 = vsel %vm501, %v1744, 0
  %1804 = vmatprep.subr.bf16.mxu0 0
  %1805 = vmatpush1.bf16.msra.mxu0 %v1799
  %1806 = vmatprep.subr.bf16.mxu0 0
  %1807 = vmatpush1.bf16.msra.mxu0 0
  %1808 = vmatprep.subr.bf16.mxu0 0
  %1809 = vmatpush1.bf16.msra.mxu0 0
  %1810 = vmatprep.subr.bf16.mxu0 0
  %1811 = vmatpush1.bf16.msra.mxu0 0
  %1812 = vmatprep.subr.bf16.mxu0 0
  %1813 = vmatpush1.bf16.msra.mxu0 0
  %1814 = vmatprep.subr.bf16.mxu0 0
  %1815 = vmatpush1.bf16.msra.mxu0 0
  %1816 = vmatprep.subr.bf16.mxu0 0
  %1817 = vmatpush1.bf16.msra.mxu0 0
  %1818 = vmatprep.subr.bf16.mxu0 0
  %1819 = vmatpush1.bf16.msra.mxu0 0
  %1820 = vmatprep.subr.bf16.mxu0 0
  %1821 = vmatpush1.bf16.msra.mxu0 0
  %1822 = vmatprep.subr.bf16.mxu0 0
  %1823 = vmatpush1.bf16.msra.mxu0 0
  %1824 = vmatprep.subr.bf16.mxu0 0
  %1825 = vmatpush1.bf16.msra.mxu0 0
  %1826 = vmatprep.subr.bf16.mxu0 0
  %1827 = vmatpush1.bf16.msra.mxu0 0
  %1828 = vmatprep.subr.bf16.mxu0 0
  %1829 = vmatpush1.bf16.msra.mxu0 0
  %1830 = vmatprep.subr.bf16.mxu0 0
  %1831 = vmatpush1.bf16.msra.mxu0 0
  %1832 = vmatprep.subr.bf16.mxu0 0
  %1833 = vmatpush1.bf16.msra.mxu0 0
  %1834 = vmatprep.subr.bf16.mxu0 0
  %1835 = vmatpush1.bf16.msra.mxu0 0
  %1836 = vmatprep.mubr.bf16.mxu0 0
  %1837 = vmatmul.mubr.bf16.gmra.mrb[0].mxu0 %v1802
  %v1838 = vpop.f32.mrb[0].mxu0
  %v1839 = vadd.f32 0.0, %v1838
  %v1840 = vpop.f32.mrb[0].mxu0
  %v1841 = vpop.f32.mrb[0].mxu0
  %v1842 = vadd.f32 0.0, %v1841
  %v1843 = vpop.f32.mrb[0].mxu0
  %1844 = vdwg.mxu0
  %1845 = vrot.lane.b32.xlu0 %v149, 88
  %v1846 = vpop.permute.xlu0 %1845
  %v1849 = vsel %vm501, %v1745, 0
  %1851 = vmatprep.subr.bf16.mxu0 0
  %1852 = vmatpush1.bf16.msra.mxu0 %v1846
  %1853 = vmatprep.subr.bf16.mxu0 0
  %1854 = vmatpush1.bf16.msra.mxu0 0
  %1855 = vmatprep.subr.bf16.mxu0 0
  %1856 = vmatpush1.bf16.msra.mxu0 0
  %1857 = vmatprep.subr.bf16.mxu0 0
  %1858 = vmatpush1.bf16.msra.mxu0 0
  %1859 = vmatprep.subr.bf16.mxu0 0
  %1860 = vmatpush1.bf16.msra.mxu0 0
  %1861 = vmatprep.subr.bf16.mxu0 0
  %1862 = vmatpush1.bf16.msra.mxu0 0
  %1863 = vmatprep.subr.bf16.mxu0 0
  %1864 = vmatpush1.bf16.msra.mxu0 0
  %1865 = vmatprep.subr.bf16.mxu0 0
  %1866 = vmatpush1.bf16.msra.mxu0 0
  %1867 = vmatprep.subr.bf16.mxu0 0
  %1868 = vmatpush1.bf16.msra.mxu0 0
  %1869 = vmatprep.subr.bf16.mxu0 0
  %1870 = vmatpush1.bf16.msra.mxu0 0
  %1871 = vmatprep.subr.bf16.mxu0 0
  %1872 = vmatpush1.bf16.msra.mxu0 0
  %1873 = vmatprep.subr.bf16.mxu0 0
  %1874 = vmatpush1.bf16.msra.mxu0 0
  %1875 = vmatprep.subr.bf16.mxu0 0
  %1876 = vmatpush1.bf16.msra.mxu0 0
  %1877 = vmatprep.subr.bf16.mxu0 0
  %1878 = vmatpush1.bf16.msra.mxu0 0
  %1879 = vmatprep.subr.bf16.mxu0 0
  %1880 = vmatpush1.bf16.msra.mxu0 0
  %1881 = vmatprep.subr.bf16.mxu0 0
  %1882 = vmatpush1.bf16.msra.mxu0 0
  %1883 = vmatprep.mubr.bf16.mxu0 0
  %1884 = vmatmul.mubr.bf16.gmra.mrb[0].mxu0 %v1849
  %v1885 = vpop.f32.mrb[0].mxu0
  %v1886 = vadd.f32 0.0, %v1885
  %v1887 = vpop.f32.mrb[0].mxu0
  %v1888 = vpop.f32.mrb[0].mxu0
  %v1889 = vadd.f32 0.0, %v1888
  %v1890 = vpop.f32.mrb[0].mxu0
  %1891 = vdwg.mxu0
  %1892 = vrot.lane.b32.xlu0 %v203, 88
  %v1893 = vpop.permute.xlu0 %1892
  %v1896 = vsel %vm501, %v1746, 0
  %1898 = vmatprep.subr.bf16.mxu0 0
  %1899 = vmatpush1.bf16.msra.mxu0 %v1893
  %1900 = vmatprep.subr.bf16.mxu0 0
  %1901 = vmatpush1.bf16.msra.mxu0 0
  %1902 = vmatprep.subr.bf16.mxu0 0
  %1903 = vmatpush1.bf16.msra.mxu0 0
  %1904 = vmatprep.subr.bf16.mxu0 0
  %1905 = vmatpush1.bf16.msra.mxu0 0
  %1906 = vmatprep.subr.bf16.mxu0 0
  %1907 = vmatpush1.bf16.msra.mxu0 0
  %1908 = vmatprep.subr.bf16.mxu0 0
  %1909 = vmatpush1.bf16.msra.mxu0 0
  %1910 = vmatprep.subr.bf16.mxu0 0
  %1911 = vmatpush1.bf16.msra.mxu0 0
  %1912 = vmatprep.subr.bf16.mxu0 0
  %1913 = vmatpush1.bf16.msra.mxu0 0
  %1914 = vmatprep.subr.bf16.mxu0 0
  %1915 = vmatpush1.bf16.msra.mxu0 0
  %1916 = vmatprep.subr.bf16.mxu0 0
  %1917 = vmatpush1.bf16.msra.mxu0 0
  %1918 = vmatprep.subr.bf16.mxu0 0
  %1919 = vmatpush1.bf16.msra.mxu0 0
  %1920 = vmatprep.subr.bf16.mxu0 0
  %1921 = vmatpush1.bf16.msra.mxu0 0
  %1922 = vmatprep.subr.bf16.mxu0 0
  %1923 = vmatpush1.bf16.msra.mxu0 0
  %1924 = vmatprep.subr.bf16.mxu0 0
  %1925 = vmatpush1.bf16.msra.mxu0 0
  %1926 = vmatprep.subr.bf16.mxu0 0
  %1927 = vmatpush1.bf16.msra.mxu0 0
  %1928 = vmatprep.subr.bf16.mxu0 0
  %1929 = vmatpush1.bf16.msra.mxu0 0
  %1930 = vmatprep.mubr.bf16.mxu0 0
  %1931 = vmatmul.mubr.bf16.gmra.mrb[0].mxu0 %v1896
  %v1932 = vpop.f32.mrb[0].mxu0
  %v1933 = vadd.f32 0.0, %v1932
  %v1934 = vpop.f32.mrb[0].mxu0
  %v1935 = vpop.f32.mrb[0].mxu0
  %v1936 = vadd.f32 0.0, %v1935
  %v1937 = vpop.f32.mrb[0].mxu0
  %1938 = vdwg.mxu0
  %1939 = vrot.lane.b32.xlu0 %v257, 88
  %v1940 = vpop.permute.xlu0 %1939
  %v1943 = vsel %vm501, %v1747, 0
  %1945 = vmatprep.subr.bf16.mxu0 0
  %1946 = vmatpush1.bf16.msra.mxu0 %v1940
  %1947 = vmatprep.subr.bf16.mxu0 0
  %1948 = vmatpush1.bf16.msra.mxu0 0
  %1949 = vmatprep.subr.bf16.mxu0 0
  %1950 = vmatpush1.bf16.msra.mxu0 0
  %1951 = vmatprep.subr.bf16.mxu0 0
  %1952 = vmatpush1.bf16.msra.mxu0 0
  %1953 = vmatprep.subr.bf16.mxu0 0
  %1954 = vmatpush1.bf16.msra.mxu0 0
  %1955 = vmatprep.subr.bf16.mxu0 0
  %1956 = vmatpush1.bf16.msra.mxu0 0
  %1957 = vmatprep.subr.bf16.mxu0 0
  %1958 = vmatpush1.bf16.msra.mxu0 0
  %1959 = vmatprep.subr.bf16.mxu0 0
  %1960 = vmatpush1.bf16.msra.mxu0 0
  %1961 = vmatprep.subr.bf16.mxu0 0
  %1962 = vmatpush1.bf16.msra.mxu0 0
  %1963 = vmatprep.subr.bf16.mxu0 0
  %1964 = vmatpush1.bf16.msra.mxu0 0
  %1965 = vmatprep.subr.bf16.mxu0 0
  %1966 = vmatpush1.bf16.msra.mxu0 0
  %1967 = vmatprep.subr.bf16.mxu0 0
  %1968 = vmatpush1.bf16.msra.mxu0 0
  %1969 = vmatprep.subr.bf16.mxu0 0
  %1970 = vmatpush1.bf16.msra.mxu0 0
  %1971 = vmatprep.subr.bf16.mxu0 0
  %1972 = vmatpush1.bf16.msra.mxu0 0
  %1973 = vmatprep.subr.bf16.mxu0 0
  %1974 = vmatpush1.bf16.msra.mxu0 0
  %1975 = vmatprep.subr.bf16.mxu0 0
  %1976 = vmatpush1.bf16.msra.mxu0 0
  %1977 = vmatprep.mubr.bf16.mxu0 0
  %1978 = vmatmul.mubr.bf16.gmra.mrb[0].mxu0 %v1943
  %v1979 = vpop.f32.mrb[0].mxu0
  %v1980 = vadd.f32 0.0, %v1979
  %v1981 = vpop.f32.mrb[0].mxu0
  %v1982 = vpop.f32.mrb[0].mxu0
  %v1983 = vadd.f32 0.0, %v1982
  %v1984 = vpop.f32.mrb[0].mxu0
  %1985 = vdwg.mxu0
  %1986 = vrot.lane.b32.xlu0 %v311, 88
  %v1987 = vpop.permute.xlu0 %1986
  %v1990 = vsel %vm501, %v1748, 0
  %1992 = vmatprep.subr.bf16.mxu0 0
  %1993 = vmatpush1.bf16.msra.mxu0 %v1987
  %1994 = vmatprep.subr.bf16.mxu0 0
  %1995 = vmatpush1.bf16.msra.mxu0 0
  %1996 = vmatprep.subr.bf16.mxu0 0
  %1997 = vmatpush1.bf16.msra.mxu0 0
  %1998 = vmatprep.subr.bf16.mxu0 0
  %1999 = vmatpush1.bf16.msra.mxu0 0
  %2000 = vmatprep.subr.bf16.mxu0 0
  %2001 = vmatpush1.bf16.msra.mxu0 0
  %2002 = vmatprep.subr.bf16.mxu0 0
  %2003 = vmatpush1.bf16.msra.mxu0 0
  %2004 = vmatprep.subr.bf16.mxu0 0
  %2005 = vmatpush1.bf16.msra.mxu0 0
  %2006 = vmatprep.subr.bf16.mxu0 0
  %2007 = vmatpush1.bf16.msra.mxu0 0
  %2008 = vmatprep.subr.bf16.mxu0 0
  %2009 = vmatpush1.bf16.msra.mxu0 0
  %2010 = vmatprep.subr.bf16.mxu0 0
  %2011 = vmatpush1.bf16.msra.mxu0 0
  %2012 = vmatprep.subr.bf16.mxu0 0
  %2013 = vmatpush1.bf16.msra.mxu0 0
  %2014 = vmatprep.subr.bf16.mxu0 0
  %2015 = vmatpush1.bf16.msra.mxu0 0
  %2016 = vmatprep.subr.bf16.mxu0 0
  %2017 = vmatpush1.bf16.msra.mxu0 0
  %2018 = vmatprep.subr.bf16.mxu0 0
  %2019 = vmatpush1.bf16.msra.mxu0 0
  %2020 = vmatprep.subr.bf16.mxu0 0
  %2021 = vmatpush1.bf16.msra.mxu0 0
  %2022 = vmatprep.subr.bf16.mxu0 0
  %2023 = vmatpush1.bf16.msra.mxu0 0
  %2024 = vmatprep.mubr.bf16.mxu0 0
  %2025 = vmatmul.mubr.bf16.gmra.mrb[0].mxu0 %v1990
  %v2026 = vpop.f32.mrb[0].mxu0
  %v2027 = vadd.f32 0.0, %v2026
  %v2028 = vpop.f32.mrb[0].mxu0
  %v2029 = vpop.f32.mrb[0].mxu0
  %v2030 = vadd.f32 0.0, %v2029
  %v2031 = vpop.f32.mrb[0].mxu0
  %2032 = vdwg.mxu0
  %2033 = vrot.lane.b32.xlu0 %v365, 88
  %v2034 = vpop.permute.xlu0 %2033
  %v2037 = vsel %vm501, %v1749, 0
  %2039 = vmatprep.subr.bf16.mxu0 0
  %2040 = vmatpush1.bf16.msra.mxu0 %v2034
  %2041 = vmatprep.subr.bf16.mxu0 0
  %2042 = vmatpush1.bf16.msra.mxu0 0
  %2043 = vmatprep.subr.bf16.mxu0 0
  %2044 = vmatpush1.bf16.msra.mxu0 0
  %2045 = vmatprep.subr.bf16.mxu0 0
  %2046 = vmatpush1.bf16.msra.mxu0 0
  %2047 = vmatprep.subr.bf16.mxu0 0
  %2048 = vmatpush1.bf16.msra.mxu0 0
  %2049 = vmatprep.subr.bf16.mxu0 0
  %2050 = vmatpush1.bf16.msra.mxu0 0
  %2051 = vmatprep.subr.bf16.mxu0 0
  %2052 = vmatpush1.bf16.msra.mxu0 0
  %2053 = vmatprep.subr.bf16.mxu0 0
  %2054 = vmatpush1.bf16.msra.mxu0 0
  %2055 = vmatprep.subr.bf16.mxu0 0
  %2056 = vmatpush1.bf16.msra.mxu0 0
  %2057 = vmatprep.subr.bf16.mxu0 0
  %2058 = vmatpush1.bf16.msra.mxu0 0
  %2059 = vmatprep.subr.bf16.mxu0 0
  %2060 = vmatpush1.bf16.msra.mxu0 0
  %2061 = vmatprep.subr.bf16.mxu0 0
  %2062 = vmatpush1.bf16.msra.mxu0 0
  %2063 = vmatprep.subr.bf16.mxu0 0
  %2064 = vmatpush1.bf16.msra.mxu0 0
  %2065 = vmatprep.subr.bf16.mxu0 0
  %2066 = vmatpush1.bf16.msra.mxu0 0
  %2067 = vmatprep.subr.bf16.mxu0 0
  %2068 = vmatpush1.bf16.msra.mxu0 0
  %2069 = vmatprep.subr.bf16.mxu0 0
  %2070 = vmatpush1.bf16.msra.mxu0 0
  %2071 = vmatprep.mubr.bf16.mxu0 0
  %2072 = vmatmul.mubr.bf16.gmra.mrb[0].mxu0 %v2037
  %v2073 = vpop.f32.mrb[0].mxu0
  %v2074 = vadd.f32 0.0, %v2073
  %v2075 = vpop.f32.mrb[0].mxu0
  %v2076 = vpop.f32.mrb[0].mxu0
  %v2077 = vadd.f32 0.0, %v2076
  %v2078 = vpop.f32.mrb[0].mxu0
  %2079 = vdwg.mxu0
  %2080 = vrot.lane.b32.xlu0 %v419, 88
  %v2081 = vpop.permute.xlu0 %2080
  %v2084 = vsel %vm501, %v1750, 0
  %2086 = vmatprep.subr.bf16.mxu0 0
  %2087 = vmatpush1.bf16.msra.mxu0 %v2081
  %2088 = vmatprep.subr.bf16.mxu0 0
  %2089 = vmatpush1.bf16.msra.mxu0 0
  %2090 = vmatprep.subr.bf16.mxu0 0
  %2091 = vmatpush1.bf16.msra.mxu0 0
  %2092 = vmatprep.subr.bf16.mxu0 0
  %2093 = vmatpush1.bf16.msra.mxu0 0
  %2094 = vmatprep.subr.bf16.mxu0 0
  %2095 = vmatpush1.bf16.msra.mxu0 0
  %2096 = vmatprep.subr.bf16.mxu0 0
  %2097 = vmatpush1.bf16.msra.mxu0 0
  %2098 = vmatprep.subr.bf16.mxu0 0
  %2099 = vmatpush1.bf16.msra.mxu0 0
  %2100 = vmatprep.subr.bf16.mxu0 0
  %2101 = vmatpush1.bf16.msra.mxu0 0
  %2102 = vmatprep.subr.bf16.mxu0 0
  %2103 = vmatpush1.bf16.msra.mxu0 0
  %2104 = vmatprep.subr.bf16.mxu0 0
  %2105 = vmatpush1.bf16.msra.mxu0 0
  %2106 = vmatprep.subr.bf16.mxu0 0
  %2107 = vmatpush1.bf16.msra.mxu0 0
  %2108 = vmatprep.subr.bf16.mxu0 0
  %2109 = vmatpush1.bf16.msra.mxu0 0
  %2110 = vmatprep.subr.bf16.mxu0 0
  %2111 = vmatpush1.bf16.msra.mxu0 0
  %2112 = vmatprep.subr.bf16.mxu0 0
  %2113 = vmatpush1.bf16.msra.mxu0 0
  %2114 = vmatprep.subr.bf16.mxu0 0
  %2115 = vmatpush1.bf16.msra.mxu0 0
  %2116 = vmatprep.subr.bf16.mxu0 0
  %2117 = vmatpush1.bf16.msra.mxu0 0
  %2118 = vmatprep.mubr.bf16.mxu0 0
  %2119 = vmatmul.mubr.bf16.gmra.mrb[0].mxu0 %v2084
  %v2120 = vpop.f32.mrb[0].mxu0
  %v2121 = vadd.f32 0.0, %v2120
  %v2122 = vpop.f32.mrb[0].mxu0
  %v2123 = vpop.f32.mrb[0].mxu0
  %v2124 = vadd.f32 0.0, %v2123
  %v2125 = vpop.f32.mrb[0].mxu0
  %2126 = vdwg.mxu0
  %v2127 = vmul.f32 %v1792, %v1727
  %v2128 = vmul.f32 %v1795, %v1728
  %v2129 = vmul.f32 %v1839, %v1729
  %v2130 = vmul.f32 %v1842, %v1730
  %v2131 = vmul.f32 %v1886, %v1731
  %v2132 = vmul.f32 %v1889, %v1732
  %v2133 = vmul.f32 %v1933, %v1733
  %v2134 = vmul.f32 %v1936, %v1734
  %v2135 = vmul.f32 %v1980, %v1735
  %v2136 = vmul.f32 %v1983, %v1736
  %v2137 = vmul.f32 %v2027, %v1737
  %v2138 = vmul.f32 %v2030, %v1738
  %v2139 = vmul.f32 %v2074, %v1739
  %v2140 = vmul.f32 %v2077, %v1740
  %v2141 = vmul.f32 %v2121, %v1741
  %v2142 = vmul.f32 %v2124, %v1742
  %v2143 = vpack.c.bf16 %v2128, %v2127
  %v2144 = vpack.c.bf16 %v2130, %v2129
  %v2145 = vpack.c.bf16 %v2132, %v2131
  %v2146 = vpack.c.bf16 %v2134, %v2133
  %v2147 = vpack.c.bf16 %v2136, %v2135
  %v2148 = vpack.c.bf16 %v2138, %v2137
  %v2149 = vpack.c.bf16 %v2140, %v2139
  %v2150 = vpack.c.bf16 %v2142, %v2141
  %v2159 = vunpack.c.l.b16 %v2143
  %v2160 = vunpack.c.h.b16 %v2143
  %v2161 = vunpack.c.l.b16 %v2144
  %v2162 = vunpack.c.h.b16 %v2144
  %v2163 = vunpack.c.l.b16 %v2145
  %v2164 = vunpack.c.h.b16 %v2145
  %v2165 = vunpack.c.l.b16 %v2146
  %v2166 = vunpack.c.h.b16 %v2146
  %v2167 = vunpack.c.l.b16 %v2147
  %v2168 = vunpack.c.h.b16 %v2147
  %v2169 = vunpack.c.l.b16 %v2148
  %v2170 = vunpack.c.h.b16 %v2148
  %v2171 = vunpack.c.l.b16 %v2149
  %v2172 = vunpack.c.h.b16 %v2149
  %v2173 = vunpack.c.l.b16 %v2150
  %v2174 = vunpack.c.h.b16 %v2150
  %v2175 = vpack.c.b16 %v2159, %v2159
  %v2176 = vpack.c.b16 %v2160, %v2160
  %v2177 = vpack.c.b16 %v2161, %v2161
  %v2178 = vpack.c.b16 %v2162, %v2162
  %v2179 = vpack.c.b16 %v2163, %v2163
  %v2180 = vpack.c.b16 %v2164, %v2164
  %v2181 = vpack.c.b16 %v2165, %v2165
  %v2182 = vpack.c.b16 %v2166, %v2166
  %v2183 = vpack.c.b16 %v2167, %v2167
  %v2184 = vpack.c.b16 %v2168, %v2168
  %v2185 = vpack.c.b16 %v2169, %v2169
  %v2186 = vpack.c.b16 %v2170, %v2170
  %v2187 = vpack.c.b16 %v2171, %v2171
  %v2188 = vpack.c.b16 %v2172, %v2172
  %v2189 = vpack.c.b16 %v2173, %v2173
  %v2190 = vpack.c.b16 %v2174, %v2174
  %2191 = vrot.lane.b32.xlu0 %v2175, 8
  %v2192 = vpop.permute.xlu0 %2191
  %2193 = vrot.lane.b32.xlu0 %v2176, 8
  %v2194 = vpop.permute.xlu0 %2193
  %2195 = vrot.lane.b32.xlu0 %v2177, 8
  %v2196 = vpop.permute.xlu0 %2195
  %2197 = vrot.lane.b32.xlu0 %v2178, 8
  %v2198 = vpop.permute.xlu0 %2197
  %2199 = vrot.lane.b32.xlu0 %v2179, 8
  %v2200 = vpop.permute.xlu0 %2199
  %2201 = vrot.lane.b32.xlu0 %v2180, 8
  %v2202 = vpop.permute.xlu0 %2201
  %2203 = vrot.lane.b32.xlu0 %v2181, 8
  %v2204 = vpop.permute.xlu0 %2203
  %2205 = vrot.lane.b32.xlu0 %v2182, 8
  %v2206 = vpop.permute.xlu0 %2205
  %2207 = vrot.lane.b32.xlu0 %v2183, 8
  %v2208 = vpop.permute.xlu0 %2207
  %2209 = vrot.lane.b32.xlu0 %v2184, 8
  %v2210 = vpop.permute.xlu0 %2209
  %2211 = vrot.lane.b32.xlu0 %v2185, 8
  %v2212 = vpop.permute.xlu0 %2211
  %2213 = vrot.lane.b32.xlu0 %v2186, 8
  %v2214 = vpop.permute.xlu0 %2213
  %2215 = vrot.lane.b32.xlu0 %v2187, 8
  %v2216 = vpop.permute.xlu0 %2215
  %2217 = vrot.lane.b32.xlu0 %v2188, 8
  %v2218 = vpop.permute.xlu0 %2217
  %2219 = vrot.lane.b32.xlu0 %v2189, 8
  %v2220 = vpop.permute.xlu0 %2219
  %2221 = vrot.lane.b32.xlu0 %v2190, 8
  %v2222 = vpop.permute.xlu0 %2221
  %vm2239 = vcmask 126016
  %2240 = vst.msk [vmem:[%s2] sm:$0xf] %vm2239, %v2192
  %2241 = vst.msk [vmem:[%s2 + $0x4] sm:$0xf] %vm2239, %v2194
  %2242 = vst.msk [vmem:[%s2 + $0x8] sm:$0xf] %vm2239, %v2196
  %2243 = vst.msk [vmem:[%s2 + $0xc] sm:$0xf] %vm2239, %v2198
  %2244 = vst.msk [vmem:[%s2 + $0x10] sm:$0xf] %vm2239, %v2200
  %2245 = vst.msk [vmem:[%s2 + $0x14] sm:$0xf] %vm2239, %v2202
  %2246 = vst.msk [vmem:[%s2 + $0x18] sm:$0xf] %vm2239, %v2204
  %2247 = vst.msk [vmem:[%s2 + $0x1c] sm:$0xf] %vm2239, %v2206
  %2248 = vst.msk [vmem:[%s2 + $0x20] sm:$0xf] %vm2239, %v2208
  %2249 = vst.msk [vmem:[%s2 + $0x24] sm:$0xf] %vm2239, %v2210
  %2250 = vst.msk [vmem:[%s2 + $0x28] sm:$0xf] %vm2239, %v2212
  %2251 = vst.msk [vmem:[%s2 + $0x2c] sm:$0xf] %vm2239, %v2214
  %2252 = vst.msk [vmem:[%s2 + $0x30] sm:$0xf] %vm2239, %v2216
  %2253 = vst.msk [vmem:[%s2 + $0x34] sm:$0xf] %vm2239, %v2218
  %2254 = vst.msk [vmem:[%s2 + $0x38] sm:$0xf] %vm2239, %v2220
  %2255 = vst.msk [vmem:[%s2 + $0x3c] sm:$0xf] %vm2239, %v2222
  // Predicated region
  $region10: #{forward.28} parent=0 // pred_check
    _
  $region11: #{forward.28} parent=0 // pred_check_branch
    %2257 = sbr.rel (0) target = $region13
  $region12: #{forward.28} parent=0 // pred_region
    _
  $region13: #{forward.28} parent=0 // pred_fallthru
    _
  // Predicated region
  $region14: #{forward.28} parent=0 // pred_check
    _
  $region15: #{forward.28} parent=0 // pred_check_branch
    %2259 = sbr.rel (0) target = $region17
  $region16: #{forward.28} parent=0 // pred_region
    _
  $region17: #{forward.28} parent=0 // pred_fallthru
    _

// kernel: forward.33
$region0: #{forward.33}
  #allocation0 [shape = 'u32[]', space=smem, size = 0x4, offset = 0x4, fixed_abs, tag = 'smem constant byte address 0x4 - core index']
  #allocation1 [shape = 'u32[144,128]{1,0:T(1,128)}', space=vmem, size = 0x12000, scoped, tag = 'internal scratch']
  %s0 = inlined_call_operand.vmem [shape: bf16[8,16,128], index: 0, kind: input, shape index: {}]
  %s1 = inlined_call_operand.vmem [shape: bf16[2,16,16], index: 1, kind: input, shape index: {}]
  %s2 = inlined_call_operand.vmem [shape: bf16[4,16,16], index: 2, kind: input, shape index: {}]
  %s3 = inlined_call_operand.vmem [shape: bf16[8,16,16], index: 3, kind: output, shape index: {}]
  %s4 = sld [smem:[#allocation0]]
  $region45: #{forward.33} parent=0
    _
  %s6 = ssub.s32 1, %s4
  %s7 = scalar_select 0, %s6, %s4
  loop: start=0, step=1, limit=4
  $region2: #{forward.33} parent=0 // loop_pre_header
    _
  $region3: #{forward.33} parent=0 // loop_header
    %s9 = sphi 0, %s13
    %p10 = scmp.ge.s32.totalorder %s9, 4
    %s19 = sphi 0, %s21
    %s22 = sphi 0, %s19
    %s23 = sphi 0, %s22
    %s39 = sphi 0, %s23
    %s43 = sphi 0, %s43
    %s45 = sphi 0, %s43
    %s46 = sphi 0, %s45
    %s60 = sphi 0, %s46
    %s64 = sphi 0, %s64
    %s66 = sphi 0, %s64
    %s67 = sphi 0, %s66
    %s81 = sphi 0, %s67
    %s87 = sphi 0, %s89
    %s90 = sphi 0, %s87
    %s91 = sphi 0, %s90
    %s107 = sphi 0, %s91
  $region4: #{forward.33} parent=0 // loop_header_branch
    %12 = sbr.rel (%p10) target = $region8
  $region5: #{forward.33} parent=0 // loop_body
    %s14 = ssub.s32 %s9, 1
    %s15 = ssub.s32 %s9, 2
    %s16 = sadd.s32 %s9, 1
    %s17 = ssub.s32 %s9, %s16
    %p18 = scmp.eq.s32.totalorder %s17, 0
    %s20 = sadd.s32 %s19, 1
    %s21 = scalar_select %p18, %s19, %s20
    %p24 = pneg %p18
    %p25 = scmp.eq.s32.totalorder %s9, 1
    %p26 = por %p24, %p25
    %p27 = scmp.ne.s32.totalorder %s19, %s22
    %p28 = scmp.eq.s32.totalorder %s9, 0
    %p29 = por %p27, %p28
    %p30 = scmp.ne.s32.totalorder %s19, %s22
    %p31 = scmp.eq.s32.totalorder %s14, 1
    %p32 = por %p30, %p31
    %p33 = scmp.ne.s32.totalorder %s22, %s23
    %p34 = scmp.eq.s32.totalorder %s14, 0
    %p35 = por %p33, %p34
    %p36 = scmp.ne.s32.totalorder %s22, %s23
    %p37 = scmp.eq.s32.totalorder %s15, 1
    %p38 = por %p36, %p37
    %p40 = scmp.ne.s32.totalorder %s23, %s39
    %p41 = scmp.eq.s32.totalorder %s15, 0
    %p42 = por %p40, %p41
    %s44 = sadd.s32 %s43, 1
    %p47 = scmp.eq.s32.totalorder %s9, 1
    %p48 = scmp.ne.s32.totalorder %s43, %s45
    %p49 = scmp.eq.s32.totalorder %s9, 0
    %p50 = por %p48, %p49
    %p51 = scmp.ne.s32.totalorder %s43, %s45
    %p52 = scmp.eq.s32.totalorder %s14, 1
    %p53 = por %p51, %p52
    %p54 = scmp.ne.s32.totalorder %s45, %s46
    %p55 = scmp.eq.s32.totalorder %s14, 0
    %p56 = por %p54, %p55
    %p57 = scmp.ne.s32.totalorder %s45, %s46
    %p58 = scmp.eq.s32.totalorder %s15, 1
    %p59 = por %p57, %p58
    %p61 = scmp.ne.s32.totalorder %s46, %s60
    %p62 = scmp.eq.s32.totalorder %s15, 0
    %p63 = por %p61, %p62
    %s65 = sadd.s32 %s64, 1
    %p68 = scmp.eq.s32.totalorder %s9, 1
    %p69 = scmp.ne.s32.totalorder %s64, %s66
    %p70 = scmp.eq.s32.totalorder %s9, 0
    %p71 = por %p69, %p70
    %p72 = scmp.ne.s32.totalorder %s64, %s66
    %p73 = scmp.eq.s32.totalorder %s14, 1
    %p74 = por %p72, %p73
    %p75 = scmp.ne.s32.totalorder %s66, %s67
    %p76 = scmp.eq.s32.totalorder %s14, 0
    %p77 = por %p75, %p76
    %p78 = scmp.ne.s32.totalorder %s66, %s67
    %p79 = scmp.eq.s32.totalorder %s15, 1
    %p80 = por %p78, %p79
    %p82 = scmp.ne.s32.totalorder %s67, %s81
    %p83 = scmp.eq.s32.totalorder %s15, 0
    %p84 = por %p82, %p83
    %s85 = ssub.s32 %s9, %s16
    %p86 = scmp.eq.s32.totalorder %s85, 0
    %s88 = sadd.s32 %s87, 1
    %s89 = scalar_select %p86, %s87, %s88
    %p92 = pneg %p86
    %p93 = scmp.eq.s32.totalorder %s9, 1
    %p94 = por %p92, %p93
    %p95 = scmp.ne.s32.totalorder %s87, %s90
    %p96 = scmp.eq.s32.totalorder %s9, 0
    %p97 = por %p95, %p96
    %p98 = scmp.ne.s32.totalorder %s87, %s90
    %p99 = scmp.eq.s32.totalorder %s14, 1
    %p100 = por %p98, %p99
    %p101 = scmp.ne.s32.totalorder %s90, %s91
    %p102 = scmp.eq.s32.totalorder %s14, 0
    %p103 = por %p101, %p102
    %p104 = scmp.ne.s32.totalorder %s90, %s91
    %p105 = scmp.eq.s32.totalorder %s15, 1
    %p106 = por %p104, %p105
    %p108 = scmp.ne.s32.totalorder %s91, %s107
    %p109 = scmp.eq.s32.totalorder %s15, 0
    %p110 = por %p108, %p109
    %p111 = scmp.le.s32.totalorder 1, %s9
    %p112 = scmp.lt.s32.totalorder %s9, 3
    %p113 = pnand %p111, %p112
    %p114 = pneg %p113
    // Predicated region
    $region9: #{forward.33} parent=5 // pred_check
      _
    $region10: #{forward.33} parent=5 // pred_check_branch
      %116 = sbr.rel (%p113) target = $region12
    $region11: #{forward.33} parent=5 // pred_region
      %s117 = ssub.s32 %s9, 1
      // Predicated region
      $region13: #{forward.33} parent=11 // pred_check
        %p118 = pneg %p56
      $region14: #{forward.33} parent=11 // pred_check_branch
        %120 = sbr.rel (%p118) target = $region16
      $region15: #{forward.33} parent=11 // pred_region
        _
      $region16: #{forward.33} parent=11 // pred_fallthru
        _
      // Predicated region
      $region17: #{forward.33} parent=11 // pred_check
        %p121 = pneg %p77
      $region18: #{forward.33} parent=11 // pred_check_branch
        %123 = sbr.rel (%p121) target = $region20
      $region19: #{forward.33} parent=11 // pred_region
        _
      $region20: #{forward.33} parent=11 // pred_fallthru
        _
    $region12: #{forward.33} parent=5 // pred_fallthru
      _
    %p124 = scmp.lt.s32.totalorder %s9, 2
    // Predicated region
    $region21: #{forward.33} parent=5 // pred_check
      %p125 = pneg %p124
    $region22: #{forward.33} parent=5 // pred_check_branch
      %127 = sbr.rel (%p125) target = $region24
    $region23: #{forward.33} parent=5 // pred_region
      // Predicated region
      $region25: #{forward.33} parent=23 // pred_check
        %p128 = pneg %p29
      $region26: #{forward.33} parent=23 // pred_check_branch
        %130 = sbr.rel (%p128) target = $region28
      $region27: #{forward.33} parent=23 // pred_region
        %s131 = smul.u32 4, %s9
        %p132 = scmp.lt.s32.totalorder %s131, 7
        %s133 = scalar_select %p132, %s131, 7
        %s134 = smul.addr %s133, 2
        %s135 = smul.addr %s134, 4
        %s136 = scalar_lea.vmem %s0, %s135
        %s137 = smul.u32 4, %s9
      $region28: #{forward.33} parent=23 // pred_fallthru
        _
    $region24: #{forward.33} parent=5 // pred_fallthru
      _
    %p138 = scmp.le.s32.totalorder 1, %s9
    %p139 = scmp.lt.s32.totalorder %s9, 3
    %p140 = pnand %p138, %p139
    %p141 = pneg %p140
    // Predicated region
    $region29: #{forward.33} parent=5 // pred_check
      _
    $region30: #{forward.33} parent=5 // pred_check_branch
      %143 = sbr.rel (%p140) target = $region32
    $region31: #{forward.33} parent=5 // pred_region
      %s144 = ssub.s32 %s9, 1
      %s145 = smul.u32 4, %s14
      %p146 = scmp.lt.s32.totalorder %s145, 7
      %s147 = scalar_select %p146, %s145, 7
      %s148 = smul.addr %s147, 2
      %s149 = smul.addr %s148, 4
      %s150 = scalar_lea.vmem %s0, %s149
      %p151 = pneg %p35
      %p152 = pneg %p32
      %p153 = pneg %p56
      %p154 = pneg %p53
      %p155 = pneg %p77
      %p156 = pneg %p74
      %p157 = pneg %p103
      %p158 = pneg %p100
      %s159 = smul.u32 4, %s14
      %p160 = scmp.lt.s32.totalorder %s159, 7
      %s161 = scalar_select %p160, %s159, 7
      %s162 = smul.addr %s161, 2
      %s163 = smul.addr %s162, 4
      %s164 = scalar_lea.vmem %s3, %s163
      %s165 = smul.u32 4, %s14
      %p166 = scmp.lt.s32.totalorder %s165, 7
      %s167 = scalar_select %p166, %s165, 7
      %s168 = smul.addr %s167, 2
      %s169 = smul.addr %s168, 4
      %s170 = scalar_lea.vmem %s0, %s169
      %s171 = smul.u32 4, %s14
      %s172 = smul.u32 4, %s14
      %p173 = scmp.lt.s32.totalorder %s172, 7
      %s174 = scalar_select %p173, %s172, 7
      %s175 = smul.addr %s174, 2
      %s176 = smul.addr %s175, 4
      %s177 = scalar_lea.vmem %s3, %s176
      %s178 = smul.u32 4, %s14
      %v180 = vld [vmem:[%s170] sm:$0xf]
      %v181 = vld [vmem:[%s170 + $0x4] sm:$0xf]
      %v182 = vld [vmem:[%s170 + $0x8] sm:$0xf]
      %v183 = vld [vmem:[%s170 + $0xc] sm:$0xf]
      %v184 = vld [vmem:[%s170 + $0x10] sm:$0xf]
      %v185 = vld [vmem:[%s170 + $0x14] sm:$0xf]
      %v186 = vld [vmem:[%s170 + $0x18] sm:$0xf]
      %v187 = vld [vmem:[%s170 + $0x1c] sm:$0xf]
      %v188 = vld [vmem:[%s1] sm:$0xf]
      %v189 = vld [vmem:[%s1 + $0x4] sm:$0xf]
      %v190 = vld [vmem:[%s1 + $0x8] sm:$0xf]
      %v191 = vld [vmem:[%s1 + $0xc] sm:$0xf]
      %v192 = vunpack.c.l.bf16 %v188
      %v193 = vunpack.c.l.bf16 %v189
      %v194 = vunpack.c.l.bf16 %v190
      %v195 = vunpack.c.l.bf16 %v191
      %v196 = vld [vmem:[%s2] sm:$0xf]
      %v197 = vld [vmem:[%s2 + $0x4] sm:$0xf]
      %v198 = vld [vmem:[%s2 + $0x8] sm:$0xf]
      %v199 = vld [vmem:[%s2 + $0xc] sm:$0xf]
      %v200 = vld [vmem:[%s2 + $0x10] sm:$0xf]
      %v201 = vld [vmem:[%s2 + $0x14] sm:$0xf]
      %v202 = vld [vmem:[%s2 + $0x18] sm:$0xf]
      %v203 = vld [vmem:[%s2 + $0x1c] sm:$0xf]
      %v204 = vunpack.c.l.bf16 %v196
      %v205 = vunpack.c.l.bf16 %v197
      %v206 = vunpack.c.l.bf16 %v198
      %v207 = vunpack.c.l.bf16 %v199
      %v208 = vunpack.c.l.bf16 %v200
      %v209 = vunpack.c.l.bf16 %v201
      %v210 = vunpack.c.l.bf16 %v202
      %v211 = vunpack.c.l.bf16 %v203
      %v214 = vunpack.c.l.b16 %v180
      %v215 = vunpack.c.l.b16 %v181
      %v216 = vpack.c.b16 %v215, %v214
      %217 = vrot.lane.b32.xlu0 %v216, 112
      %v218 = vpop.permute.xlu0 %217
      %vm219 = vcmask 64512
      %v221 = vsel %vm219, %v216, 0
      %v224 = vsel %vm219, %v218, 0
      %226 = vmatprep.subr.bf16.mxu0 0
      %227 = vmatpush1.bf16.xpose.msra.mxu0 %v224
      %228 = vmatprep.subr.bf16.mxu0 0
      %229 = vmatpush1.bf16.xpose.msra.mxu0 0
      %230 = vmatprep.subr.bf16.mxu0 0
      %231 = vmatpush1.bf16.xpose.msra.mxu0 0
      %232 = vmatprep.subr.bf16.mxu0 0
      %233 = vmatpush1.bf16.xpose.msra.mxu0 0
      %234 = vmatprep.subr.bf16.mxu0 0
      %235 = vmatpush1.bf16.xpose.msra.mxu0 0
      %236 = vmatprep.subr.bf16.mxu0 0
      %237 = vmatpush1.bf16.xpose.msra.mxu0 0
      %238 = vmatprep.subr.bf16.mxu0 0
      %239 = vmatpush1.bf16.xpose.msra.mxu0 0
      %240 = vmatprep.subr.bf16.mxu0 0
      %241 = vmatpush1.bf16.xpose.msra.mxu0 0
      %242 = vmatprep.subr.bf16.mxu0 0
      %243 = vmatpush1.bf16.xpose.msra.mxu0 0
      %244 = vmatprep.subr.bf16.mxu0 0
      %245 = vmatpush1.bf16.xpose.msra.mxu0 0
      %246 = vmatprep.subr.bf16.mxu0 0
      %247 = vmatpush1.bf16.xpose.msra.mxu0 0
      %248 = vmatprep.subr.bf16.mxu0 0
      %249 = vmatpush1.bf16.xpose.msra.mxu0 0
      %250 = vmatprep.subr.bf16.mxu0 0
      %251 = vmatpush1.bf16.xpose.msra.mxu0 0
      %252 = vmatprep.subr.bf16.mxu0 0
      %253 = vmatpush1.bf16.xpose.msra.mxu0 0
      %254 = vmatprep.subr.bf16.mxu0 0
      %255 = vmatpush1.bf16.xpose.msra.mxu0 0
      %256 = vmatprep.subr.bf16.mxu0 0
      %257 = vmatpush1.bf16.xpose.msra.mxu0 0
      %258 = vmatprep.mubr.bf16.mxu0 0
      %259 = vmatmul.mubr.bf16.gmra.mrb[0].mxu0 %v221
      %v260 = vpop.f32.mrb[0].mxu0
      %v261 = vadd.f32 0.0, %v260
      %v262 = vpop.f32.mrb[0].mxu0
      %v263 = vpop.f32.mrb[0].mxu0
      %v264 = vadd.f32 0.0, %v263
      %v265 = vpop.f32.mrb[0].mxu0
      %266 = vdwg.mxu0
      %v269 = vunpack.c.l.b16 %v182
      %v270 = vunpack.c.l.b16 %v183
      %v271 = vpack.c.b16 %v270, %v269
      %272 = vrot.lane.b32.xlu0 %v271, 112
      %v273 = vpop.permute.xlu0 %272
      %v275 = vsel %vm219, %v271, 0
      %v278 = vsel %vm219, %v273, 0
      %280 = vmatprep.subr.bf16.mxu0 0
      %281 = vmatpush1.bf16.xpose.msra.mxu0 %v278
      %282 = vmatprep.subr.bf16.mxu0 0
      %283 = vmatpush1.bf16.xpose.msra.mxu0 0
      %284 = vmatprep.subr.bf16.mxu0 0
      %285 = vmatpush1.bf16.xpose.msra.mxu0 0
      %286 = vmatprep.subr.bf16.mxu0 0
      %287 = vmatpush1.bf16.xpose.msra.mxu0 0
      %288 = vmatprep.subr.bf16.mxu0 0
      %289 = vmatpush1.bf16.xpose.msra.mxu0 0
      %290 = vmatprep.subr.bf16.mxu0 0
      %291 = vmatpush1.bf16.xpose.msra.mxu0 0
      %292 = vmatprep.subr.bf16.mxu0 0
      %293 = vmatpush1.bf16.xpose.msra.mxu0 0
      %294 = vmatprep.subr.bf16.mxu0 0
      %295 = vmatpush1.bf16.xpose.msra.mxu0 0
      %296 = vmatprep.subr.bf16.mxu0 0
      %297 = vmatpush1.bf16.xpose.msra.mxu0 0
      %298 = vmatprep.subr.bf16.mxu0 0
      %299 = vmatpush1.bf16.xpose.msra.mxu0 0
      %300 = vmatprep.subr.bf16.mxu0 0
      %301 = vmatpush1.bf16.xpose.msra.mxu0 0
      %302 = vmatprep.subr.bf16.mxu0 0
      %303 = vmatpush1.bf16.xpose.msra.mxu0 0
      %304 = vmatprep.subr.bf16.mxu0 0
      %305 = vmatpush1.bf16.xpose.msra.mxu0 0
      %306 = vmatprep.subr.bf16.mxu0 0
      %307 = vmatpush1.bf16.xpose.msra.mxu0 0
      %308 = vmatprep.subr.bf16.mxu0 0
      %309 = vmatpush1.bf16.xpose.msra.mxu0 0
      %310 = vmatprep.subr.bf16.mxu0 0
      %311 = vmatpush1.bf16.xpose.msra.mxu0 0
      %312 = vmatprep.mubr.bf16.mxu0 0
      %313 = vmatmul.mubr.bf16.gmra.mrb[0].mxu0 %v275
      %v314 = vpop.f32.mrb[0].mxu0
      %v315 = vadd.f32 0.0, %v314
      %v316 = vpop.f32.mrb[0].mxu0
      %v317 = vpop.f32.mrb[0].mxu0
      %v318 = vadd.f32 0.0, %v317
      %v319 = vpop.f32.mrb[0].mxu0
      %320 = vdwg.mxu0
      %v323 = vunpack.c.l.b16 %v184
      %v324 = vunpack.c.l.b16 %v185
      %v325 = vpack.c.b16 %v324, %v323
      %326 = vrot.lane.b32.xlu0 %v325, 112
      %v327 = vpop.permute.xlu0 %326
      %v329 = vsel %vm219, %v325, 0
      %v332 = vsel %vm219, %v327, 0
      %334 = vmatprep.subr.bf16.mxu0 0
      %335 = vmatpush1.bf16.xpose.msra.mxu0 %v332
      %336 = vmatprep.subr.bf16.mxu0 0
      %337 = vmatpush1.bf16.xpose.msra.mxu0 0
      %338 = vmatprep.subr.bf16.mxu0 0
      %339 = vmatpush1.bf16.xpose.msra.mxu0 0
      %340 = vmatprep.subr.bf16.mxu0 0
      %341 = vmatpush1.bf16.xpose.msra.mxu0 0
      %342 = vmatprep.subr.bf16.mxu0 0
      %343 = vmatpush1.bf16.xpose.msra.mxu0 0
      %344 = vmatprep.subr.bf16.mxu0 0
      %345 = vmatpush1.bf16.xpose.msra.mxu0 0
      %346 = vmatprep.subr.bf16.mxu0 0
      %347 = vmatpush1.bf16.xpose.msra.mxu0 0
      %348 = vmatprep.subr.bf16.mxu0 0
      %349 = vmatpush1.bf16.xpose.msra.mxu0 0
      %350 = vmatprep.subr.bf16.mxu0 0
      %351 = vmatpush1.bf16.xpose.msra.mxu0 0
      %352 = vmatprep.subr.bf16.mxu0 0
      %353 = vmatpush1.bf16.xpose.msra.mxu0 0
      %354 = vmatprep.subr.bf16.mxu0 0
      %355 = vmatpush1.bf16.xpose.msra.mxu0 0
      %356 = vmatprep.subr.bf16.mxu0 0
      %357 = vmatpush1.bf16.xpose.msra.mxu0 0
      %358 = vmatprep.subr.bf16.mxu0 0
      %359 = vmatpush1.bf16.xpose.msra.mxu0 0
      %360 = vmatprep.subr.bf16.mxu0 0
      %361 = vmatpush1.bf16.xpose.msra.mxu0 0
      %362 = vmatprep.subr.bf16.mxu0 0
      %363 = vmatpush1.bf16.xpose.msra.mxu0 0
      %364 = vmatprep.subr.bf16.mxu0 0
      %365 = vmatpush1.bf16.xpose.msra.mxu0 0
      %366 = vmatprep.mubr.bf16.mxu0 0
      %367 = vmatmul.mubr.bf16.gmra.mrb[0].mxu0 %v329
      %v368 = vpop.f32.mrb[0].mxu0
      %v369 = vadd.f32 0.0, %v368
      %v370 = vpop.f32.mrb[0].mxu0
      %v371 = vpop.f32.mrb[0].mxu0
      %v372 = vadd.f32 0.0, %v371
      %v373 = vpop.f32.mrb[0].mxu0
      %374 = vdwg.mxu0
      %v377 = vunpack.c.l.b16 %v186
      %v378 = vunpack.c.l.b16 %v187
      %v379 = vpack.c.b16 %v378, %v377
      %380 = vrot.lane.b32.xlu0 %v379, 112
      %v381 = vpop.permute.xlu0 %380
      %v383 = vsel %vm219, %v379, 0
      %v386 = vsel %vm219, %v381, 0
      %388 = vmatprep.subr.bf16.mxu0 0
      %389 = vmatpush1.bf16.xpose.msra.mxu0 %v386
      %390 = vmatprep.subr.bf16.mxu0 0
      %391 = vmatpush1.bf16.xpose.msra.mxu0 0
      %392 = vmatprep.subr.bf16.mxu0 0
      %393 = vmatpush1.bf16.xpose.msra.mxu0 0
      %394 = vmatprep.subr.bf16.mxu0 0
      %395 = vmatpush1.bf16.xpose.msra.mxu0 0
      %396 = vmatprep.subr.bf16.mxu0 0
      %397 = vmatpush1.bf16.xpose.msra.mxu0 0
      %398 = vmatprep.subr.bf16.mxu0 0
      %399 = vmatpush1.bf16.xpose.msra.mxu0 0
      %400 = vmatprep.subr.bf16.mxu0 0
      %401 = vmatpush1.bf16.xpose.msra.mxu0 0
      %402 = vmatprep.subr.bf16.mxu0 0
      %403 = vmatpush1.bf16.xpose.msra.mxu0 0
      %404 = vmatprep.subr.bf16.mxu0 0
      %405 = vmatpush1.bf16.xpose.msra.mxu0 0
      %406 = vmatprep.subr.bf16.mxu0 0
      %407 = vmatpush1.bf16.xpose.msra.mxu0 0
      %408 = vmatprep.subr.bf16.mxu0 0
      %409 = vmatpush1.bf16.xpose.msra.mxu0 0
      %410 = vmatprep.subr.bf16.mxu0 0
      %411 = vmatpush1.bf16.xpose.msra.mxu0 0
      %412 = vmatprep.subr.bf16.mxu0 0
      %413 = vmatpush1.bf16.xpose.msra.mxu0 0
      %414 = vmatprep.subr.bf16.mxu0 0
      %415 = vmatpush1.bf16.xpose.msra.mxu0 0
      %416 = vmatprep.subr.bf16.mxu0 0
      %417 = vmatpush1.bf16.xpose.msra.mxu0 0
      %418 = vmatprep.subr.bf16.mxu0 0
      %419 = vmatpush1.bf16.xpose.msra.mxu0 0
      %420 = vmatprep.mubr.bf16.mxu0 0
      %421 = vmatmul.mubr.bf16.gmra.mrb[0].mxu0 %v383
      %v422 = vpop.f32.mrb[0].mxu0
      %v423 = vadd.f32 0.0, %v422
      %v424 = vpop.f32.mrb[0].mxu0
      %v425 = vpop.f32.mrb[0].mxu0
      %v426 = vadd.f32 0.0, %v425
      %v427 = vpop.f32.mrb[0].mxu0
      %428 = vdwg.mxu0
      %v429 = vmul.f32 %v261, 0.35355338
      %v430 = vmul.f32 %v264, 0.35355338
      %v431 = vmul.f32 %v315, 0.35355338
      %v432 = vmul.f32 %v318, 0.35355338
      %v433 = vmul.f32 %v369, 0.35355338
      %v434 = vmul.f32 %v372, 0.35355338
      %v435 = vmul.f32 %v423, 0.35355338
      %v436 = vmul.f32 %v426, 0.35355338
      %v437 = vadd.f32 %v429, %v192
      %v438 = vadd.f32 %v430, %v193
      %v439 = vadd.f32 %v431, %v192
      %v440 = vadd.f32 %v432, %v193
      %v441 = vadd.f32 %v433, %v192
      %v442 = vadd.f32 %v434, %v193
      %v443 = vadd.f32 %v435, %v192
      %v444 = vadd.f32 %v436, %v193
      %v445 = vadd.f32 %v437, %v204
      %v446 = vadd.f32 %v438, %v205
      %v447 = vadd.f32 %v439, %v206
      %v448 = vadd.f32 %v440, %v207
      %v449 = vadd.f32 %v441, %v208
      %v450 = vadd.f32 %v442, %v209
      %v451 = vadd.f32 %v443, %v210
      %v452 = vadd.f32 %v444, %v211
      %vm453 = vcmask 130048
      %v454 = vsel %vm453, %v445, -inf
      %455 = vmax.xlane.f32.xlu0 %v454
      %v456 = vpop.xlane.xlu0 %455
      %v457 = vsel %vm453, %v446, -inf
      %458 = vmax.xlane.f32.xlu0 %v457
      %v459 = vpop.xlane.xlu0 %458
      %v460 = vsel %vm453, %v447, -inf
      %461 = vmax.xlane.f32.xlu0 %v460
      %v462 = vpop.xlane.xlu0 %461
      %v463 = vsel %vm453, %v448, -inf
      %464 = vmax.xlane.f32.xlu0 %v463
      %v465 = vpop.xlane.xlu0 %464
      %v466 = vsel %vm453, %v449, -inf
      %467 = vmax.xlane.f32.xlu0 %v466
      %v468 = vpop.xlane.xlu0 %467
      %v469 = vsel %vm453, %v450, -inf
      %470 = vmax.xlane.f32.xlu0 %v469
      %v471 = vpop.xlane.xlu0 %470
      %v472 = vsel %vm453, %v451, -inf
      %473 = vmax.xlane.f32.xlu0 %v472
      %v474 = vpop.xlane.xlu0 %473
      %v475 = vsel %vm453, %v452, -inf
      %476 = vmax.xlane.f32.xlu0 %v475
      %v477 = vpop.xlane.xlu0 %476
      %v478 = vsub.f32 %v445, %v456
      %v479 = vsub.f32 %v446, %v459
      %v480 = vsub.f32 %v447, %v462
      %v481 = vsub.f32 %v448, %v465
      %v482 = vsub.f32 %v449, %v468
      %v483 = vsub.f32 %v450, %v471
      %v484 = vsub.f32 %v451, %v474
      %v485 = vsub.f32 %v452, %v477
      %v486 = vmul.f32 %v478, 1.442695
      %v487 = vpow.pop %v486
      %v488 = vmul.f32 %v479, 1.442695
      %v489 = vpow.pop %v488
      %v490 = vmul.f32 %v480, 1.442695
      %v491 = vpow.pop %v490
      %v492 = vmul.f32 %v481, 1.442695
      %v493 = vpow.pop %v492
      %v494 = vmul.f32 %v482, 1.442695
      %v495 = vpow.pop %v494
      %v496 = vmul.f32 %v483, 1.442695
      %v497 = vpow.pop %v496
      %v498 = vmul.f32 %v484, 1.442695
      %v499 = vpow.pop %v498
      %v500 = vmul.f32 %v485, 1.442695
      %v501 = vpow.pop %v500
      %v502 = vsel %vm453, %v487, 0.0
      %503 = vadd.xlane.f32.xlu0 %v502
      %v504 = vpop.xlane.xlu0 %503
      %v505 = vsel %vm453, %v489, 0.0
      %506 = vadd.xlane.f32.xlu0 %v505
      %v507 = vpop.xlane.xlu0 %506
      %v508 = vsel %vm453, %v491, 0.0
      %509 = vadd.xlane.f32.xlu0 %v508
      %v510 = vpop.xlane.xlu0 %509
      %v511 = vsel %vm453, %v493, 0.0
      %512 = vadd.xlane.f32.xlu0 %v511
      %v513 = vpop.xlane.xlu0 %512
      %v514 = vsel %vm453, %v495, 0.0
      %515 = vadd.xlane.f32.xlu0 %v514
      %v516 = vpop.xlane.xlu0 %515
      %v517 = vsel %vm453, %v497, 0.0
      %518 = vadd.xlane.f32.xlu0 %v517
      %v519 = vpop.xlane.xlu0 %518
      %v520 = vsel %vm453, %v499, 0.0
      %521 = vadd.xlane.f32.xlu0 %v520
      %v522 = vpop.xlane.xlu0 %521
      %v523 = vsel %vm453, %v501, 0.0
      %524 = vadd.xlane.f32.xlu0 %v523
      %v525 = vpop.xlane.xlu0 %524
      %v526 = vrcp.pop %v504
      %v527 = vrcp.pop %v507
      %v528 = vrcp.pop %v510
      %v529 = vrcp.pop %v513
      %v530 = vrcp.pop %v516
      %v531 = vrcp.pop %v519
      %v532 = vrcp.pop %v522
      %v533 = vrcp.pop %v525
      %v534 = vpack.c.bf16 %v489, %v487
      %v535 = vpack.c.bf16 %v493, %v491
      %v536 = vpack.c.bf16 %v497, %v495
      %v537 = vpack.c.bf16 %v501, %v499
      %538 = vrot.lane.b32.xlu0 %v216, 96
      %v539 = vpop.permute.xlu0 %538
      %v542 = vsel %vm453, %v534, 0
      %544 = vmatprep.subr.bf16.mxu0 0
      %545 = vmatpush1.bf16.msra.mxu0 %v539
      %546 = vmatprep.subr.bf16.mxu0 0
      %547 = vmatpush1.bf16.msra.mxu0 0
      %548 = vmatprep.subr.bf16.mxu0 0
      %549 = vmatpush1.bf16.msra.mxu0 0
      %550 = vmatprep.subr.bf16.mxu0 0
      %551 = vmatpush1.bf16.msra.mxu0 0
      %552 = vmatprep.subr.bf16.mxu0 0
      %553 = vmatpush1.bf16.msra.mxu0 0
      %554 = vmatprep.subr.bf16.mxu0 0
      %555 = vmatpush1.bf16.msra.mxu0 0
      %556 = vmatprep.subr.bf16.mxu0 0
      %557 = vmatpush1.bf16.msra.mxu0 0
      %558 = vmatprep.subr.bf16.mxu0 0
      %559 = vmatpush1.bf16.msra.mxu0 0
      %560 = vmatprep.subr.bf16.mxu0 0
      %561 = vmatpush1.bf16.msra.mxu0 0
      %562 = vmatprep.subr.bf16.mxu0 0
      %563 = vmatpush1.bf16.msra.mxu0 0
      %564 = vmatprep.subr.bf16.mxu0 0
      %565 = vmatpush1.bf16.msra.mxu0 0
      %566 = vmatprep.subr.bf16.mxu0 0
      %567 = vmatpush1.bf16.msra.mxu0 0
      %568 = vmatprep.subr.bf16.mxu0 0
      %569 = vmatpush1.bf16.msra.mxu0 0
      %570 = vmatprep.subr.bf16.mxu0 0
      %571 = vmatpush1.bf16.msra.mxu0 0
      %572 = vmatprep.subr.bf16.mxu0 0
      %573 = vmatpush1.bf16.msra.mxu0 0
      %574 = vmatprep.subr.bf16.mxu0 0
      %575 = vmatpush1.bf16.msra.mxu0 0
      %576 = vmatprep.mubr.bf16.mxu0 0
      %577 = vmatmul.mubr.bf16.gmra.mrb[0].mxu0 %v542
      %v578 = vpop.f32.mrb[0].mxu0
      %v579 = vadd.f32 0.0, %v578
      %v580 = vpop.f32.mrb[0].mxu0
      %v581 = vpop.f32.mrb[0].mxu0
      %v582 = vadd.f32 0.0, %v581
      %v583 = vpop.f32.mrb[0].mxu0
      %584 = vdwg.mxu0
      %585 = vrot.lane.b32.xlu0 %v271, 96
      %v586 = vpop.permute.xlu0 %585
      %v589 = vsel %vm453, %v535, 0
      %591 = vmatprep.subr.bf16.mxu0 0
      %592 = vmatpush1.bf16.msra.mxu0 %v586
      %593 = vmatprep.subr.bf16.mxu0 0
      %594 = vmatpush1.bf16.msra.mxu0 0
      %595 = vmatprep.subr.bf16.mxu0 0
      %596 = vmatpush1.bf16.msra.mxu0 0
      %597 = vmatprep.subr.bf16.mxu0 0
      %598 = vmatpush1.bf16.msra.mxu0 0
      %599 = vmatprep.subr.bf16.mxu0 0
      %600 = vmatpush1.bf16.msra.mxu0 0
      %601 = vmatprep.subr.bf16.mxu0 0
      %602 = vmatpush1.bf16.msra.mxu0 0
      %603 = vmatprep.subr.bf16.mxu0 0
      %604 = vmatpush1.bf16.msra.mxu0 0
      %605 = vmatprep.subr.bf16.mxu0 0
      %606 = vmatpush1.bf16.msra.mxu0 0
      %607 = vmatprep.subr.bf16.mxu0 0
      %608 = vmatpush1.bf16.msra.mxu0 0
      %609 = vmatprep.subr.bf16.mxu0 0
      %610 = vmatpush1.bf16.msra.mxu0 0
      %611 = vmatprep.subr.bf16.mxu0 0
      %612 = vmatpush1.bf16.msra.mxu0 0
      %613 = vmatprep.subr.bf16.mxu0 0
      %614 = vmatpush1.bf16.msra.mxu0 0
      %615 = vmatprep.subr.bf16.mxu0 0
      %616 = vmatpush1.bf16.msra.mxu0 0
      %617 = vmatprep.subr.bf16.mxu0 0
      %618 = vmatpush1.bf16.msra.mxu0 0
      %619 = vmatprep.subr.bf16.mxu0 0
      %620 = vmatpush1.bf16.msra.mxu0 0
      %621 = vmatprep.subr.bf16.mxu0 0
      %622 = vmatpush1.bf16.msra.mxu0 0
      %623 = vmatprep.mubr.bf16.mxu0 0
      %624 = vmatmul.mubr.bf16.gmra.mrb[0].mxu0 %v589
      %v625 = vpop.f32.mrb[0].mxu0
      %v626 = vadd.f32 0.0, %v625
      %v627 = vpop.f32.mrb[0].mxu0
      %v628 = vpop.f32.mrb[0].mxu0
      %v629 = vadd.f32 0.0, %v628
      %v630 = vpop.f32.mrb[0].mxu0
      %631 = vdwg.mxu0
      %632 = vrot.lane.b32.xlu0 %v325, 96
      %v633 = vpop.permute.xlu0 %632
      %v636 = vsel %vm453, %v536, 0
      %638 = vmatprep.subr.bf16.mxu0 0
      %639 = vmatpush1.bf16.msra.mxu0 %v633
      %640 = vmatprep.subr.bf16.mxu0 0
      %641 = vmatpush1.bf16.msra.mxu0 0
      %642 = vmatprep.subr.bf16.mxu0 0
      %643 = vmatpush1.bf16.msra.mxu0 0
      %644 = vmatprep.subr.bf16.mxu0 0
      %645 = vmatpush1.bf16.msra.mxu0 0
      %646 = vmatprep.subr.bf16.mxu0 0
      %647 = vmatpush1.bf16.msra.mxu0 0
      %648 = vmatprep.subr.bf16.mxu0 0
      %649 = vmatpush1.bf16.msra.mxu0 0
      %650 = vmatprep.subr.bf16.mxu0 0
      %651 = vmatpush1.bf16.msra.mxu0 0
      %652 = vmatprep.subr.bf16.mxu0 0
      %653 = vmatpush1.bf16.msra.mxu0 0
      %654 = vmatprep.subr.bf16.mxu0 0
      %655 = vmatpush1.bf16.msra.mxu0 0
      %656 = vmatprep.subr.bf16.mxu0 0
      %657 = vmatpush1.bf16.msra.mxu0 0
      %658 = vmatprep.subr.bf16.mxu0 0
      %659 = vmatpush1.bf16.msra.mxu0 0
      %660 = vmatprep.subr.bf16.mxu0 0
      %661 = vmatpush1.bf16.msra.mxu0 0
      %662 = vmatprep.subr.bf16.mxu0 0
      %663 = vmatpush1.bf16.msra.mxu0 0
      %664 = vmatprep.subr.bf16.mxu0 0
      %665 = vmatpush1.bf16.msra.mxu0 0
      %666 = vmatprep.subr.bf16.mxu0 0
      %667 = vmatpush1.bf16.msra.mxu0 0
      %668 = vmatprep.subr.bf16.mxu0 0
      %669 = vmatpush1.bf16.msra.mxu0 0
      %670 = vmatprep.mubr.bf16.mxu0 0
      %671 = vmatmul.mubr.bf16.gmra.mrb[0].mxu0 %v636
      %v672 = vpop.f32.mrb[0].mxu0
      %v673 = vadd.f32 0.0, %v672
      %v674 = vpop.f32.mrb[0].mxu0
      %v675 = vpop.f32.mrb[0].mxu0
      %v676 = vadd.f32 0.0, %v675
      %v677 = vpop.f32.mrb[0].mxu0
      %678 = vdwg.mxu0
      %679 = vrot.lane.b32.xlu0 %v379, 96
      %v680 = vpop.permute.xlu0 %679
      %v683 = vsel %vm453, %v537, 0
      %685 = vmatprep.subr.bf16.mxu0 0
      %686 = vmatpush1.bf16.msra.mxu0 %v680
      %687 = vmatprep.subr.bf16.mxu0 0
      %688 = vmatpush1.bf16.msra.mxu0 0
      %689 = vmatprep.subr.bf16.mxu0 0
      %690 = vmatpush1.bf16.msra.mxu0 0
      %691 = vmatprep.subr.bf16.mxu0 0
      %692 = vmatpush1.bf16.msra.mxu0 0
      %693 = vmatprep.subr.bf16.mxu0 0
      %694 = vmatpush1.bf16.msra.mxu0 0
      %695 = vmatprep.subr.bf16.mxu0 0
      %696 = vmatpush1.bf16.msra.mxu0 0
      %697 = vmatprep.subr.bf16.mxu0 0
      %698 = vmatpush1.bf16.msra.mxu0 0
      %699 = vmatprep.subr.bf16.mxu0 0
      %700 = vmatpush1.bf16.msra.mxu0 0
      %701 = vmatprep.subr.bf16.mxu0 0
      %702 = vmatpush1.bf16.msra.mxu0 0
      %703 = vmatprep.subr.bf16.mxu0 0
      %704 = vmatpush1.bf16.msra.mxu0 0
      %705 = vmatprep.subr.bf16.mxu0 0
      %706 = vmatpush1.bf16.msra.mxu0 0
      %707 = vmatprep.subr.bf16.mxu0 0
      %708 = vmatpush1.bf16.msra.mxu0 0
      %709 = vmatprep.subr.bf16.mxu0 0
      %710 = vmatpush1.bf16.msra.mxu0 0
      %711 = vmatprep.subr.bf16.mxu0 0
      %712 = vmatpush1.bf16.msra.mxu0 0
      %713 = vmatprep.subr.bf16.mxu0 0
      %714 = vmatpush1.bf16.msra.mxu0 0
      %715 = vmatprep.subr.bf16.mxu0 0
      %716 = vmatpush1.bf16.msra.mxu0 0
      %717 = vmatprep.mubr.bf16.mxu0 0
      %718 = vmatmul.mubr.bf16.gmra.mrb[0].mxu0 %v683
      %v719 = vpop.f32.mrb[0].mxu0
      %v720 = vadd.f32 0.0, %v719
      %v721 = vpop.f32.mrb[0].mxu0
      %v722 = vpop.f32.mrb[0].mxu0
      %v723 = vadd.f32 0.0, %v722
      %v724 = vpop.f32.mrb[0].mxu0
      %725 = vdwg.mxu0
      %v726 = vmul.f32 %v579, %v526
      %v727 = vmul.f32 %v582, %v527
      %v728 = vmul.f32 %v626, %v528
      %v729 = vmul.f32 %v629, %v529
      %v730 = vmul.f32 %v673, %v530
      %v731 = vmul.f32 %v676, %v531
      %v732 = vmul.f32 %v720, %v532
      %v733 = vmul.f32 %v723, %v533
      %v734 = vpack.c.bf16 %v727, %v726
      %v735 = vpack.c.bf16 %v729, %v728
      %v736 = vpack.c.bf16 %v731, %v730
      %v737 = vpack.c.bf16 %v733, %v732
      %v742 = vunpack.c.l.b16 %v734
      %v743 = vunpack.c.h.b16 %v734
      %v744 = vunpack.c.l.b16 %v735
      %v745 = vunpack.c.h.b16 %v735
      %v746 = vunpack.c.l.b16 %v736
      %v747 = vunpack.c.h.b16 %v736
      %v748 = vunpack.c.l.b16 %v737
      %v749 = vunpack.c.h.b16 %v737
      %v750 = vpack.c.b16 %v742, %v742
      %v751 = vpack.c.b16 %v743, %v743
      %v752 = vpack.c.b16 %v744, %v744
      %v753 = vpack.c.b16 %v745, %v745
      %v754 = vpack.c.b16 %v746, %v746
      %v755 = vpack.c.b16 %v747, %v747
      %v756 = vpack.c.b16 %v748, %v748
      %v757 = vpack.c.b16 %v749, %v749
      %vm766 = vcmask 60416
      %767 = vst.msk [vmem:[%s177] sm:$0xf] %vm766, %v750
      %768 = vst.msk [vmem:[%s177 + $0x4] sm:$0xf] %vm766, %v751
      %769 = vst.msk [vmem:[%s177 + $0x8] sm:$0xf] %vm766, %v752
      %770 = vst.msk [vmem:[%s177 + $0xc] sm:$0xf] %vm766, %v753
      %771 = vst.msk [vmem:[%s177 + $0x10] sm:$0xf] %vm766, %v754
      %772 = vst.msk [vmem:[%s177 + $0x14] sm:$0xf] %vm766, %v755
      %773 = vst.msk [vmem:[%s177 + $0x18] sm:$0xf] %vm766, %v756
      %774 = vst.msk [vmem:[%s177 + $0x1c] sm:$0xf] %vm766, %v757
      %775 = vrot.lane.b32.xlu0 %v216, 120
      %v776 = vpop.permute.xlu0 %775
      %777 = vrot.lane.b32.xlu0 %v216, 104
      %v778 = vpop.permute.xlu0 %777
      %v780 = vsel %vm219, %v776, 0
      %v783 = vsel %vm219, %v778, 0
      %785 = vmatprep.subr.bf16.mxu0 0
      %786 = vmatpush1.bf16.xpose.msra.mxu0 %v783
      %787 = vmatprep.subr.bf16.mxu0 0
      %788 = vmatpush1.bf16.xpose.msra.mxu0 0
      %789 = vmatprep.subr.bf16.mxu0 0
      %790 = vmatpush1.bf16.xpose.msra.mxu0 0
      %791 = vmatprep.subr.bf16.mxu0 0
      %792 = vmatpush1.bf16.xpose.msra.mxu0 0
      %793 = vmatprep.subr.bf16.mxu0 0
      %794 = vmatpush1.bf16.xpose.msra.mxu0 0
      %795 = vmatprep.subr.bf16.mxu0 0
      %796 = vmatpush1.bf16.xpose.msra.mxu0 0
      %797 = vmatprep.subr.bf16.mxu0 0
      %798 = vmatpush1.bf16.xpose.msra.mxu0 0
      %799 = vmatprep.subr.bf16.mxu0 0
      %800 = vmatpush1.bf16.xpose.msra.mxu0 0
      %801 = vmatprep.subr.bf16.mxu0 0
      %802 = vmatpush1.bf16.xpose.msra.mxu0 0
      %803 = vmatprep.subr.bf16.mxu0 0
      %804 = vmatpush1.bf16.xpose.msra.mxu0 0
      %805 = vmatprep.subr.bf16.mxu0 0
      %806 = vmatpush1.bf16.xpose.msra.mxu0 0
      %807 = vmatprep.subr.bf16.mxu0 0
      %808 = vmatpush1.bf16.xpose.msra.mxu0 0
      %809 = vmatprep.subr.bf16.mxu0 0
      %810 = vmatpush1.bf16.xpose.msra.mxu0 0
      %811 = vmatprep.subr.bf16.mxu0 0
      %812 = vmatpush1.bf16.xpose.msra.mxu0 0
      %813 = vmatprep.subr.bf16.mxu0 0
      %814 = vmatpush1.bf16.xpose.msra.mxu0 0
      %815 = vmatprep.subr.bf16.mxu0 0
      %816 = vmatpush1.bf16.xpose.msra.mxu0 0
      %817 = vmatprep.mubr.bf16.mxu0 0
      %818 = vmatmul.mubr.bf16.gmra.mrb[0].mxu0 %v780
      %v819 = vpop.f32.mrb[0].mxu0
      %v820 = vadd.f32 0.0, %v819
      %v821 = vpop.f32.mrb[0].mxu0
      %v822 = vpop.f32.mrb[0].mxu0
      %v823 = vadd.f32 0.0, %v822
      %v824 = vpop.f32.mrb[0].mxu0
      %825 = vdwg.mxu0
      %826 = vrot.lane.b32.xlu0 %v271, 120
      %v827 = vpop.permute.xlu0 %826
      %828 = vrot.lane.b32.xlu0 %v271, 104
      %v829 = vpop.permute.xlu0 %828
      %v831 = vsel %vm219, %v827, 0
      %v834 = vsel %vm219, %v829, 0
      %836 = vmatprep.subr.bf16.mxu0 0
      %837 = vmatpush1.bf16.xpose.msra.mxu0 %v834
      %838 = vmatprep.subr.bf16.mxu0 0
      %839 = vmatpush1.bf16.xpose.msra.mxu0 0
      %840 = vmatprep.subr.bf16.mxu0 0
      %841 = vmatpush1.bf16.xpose.msra.mxu0 0
      %842 = vmatprep.subr.bf16.mxu0 0
      %843 = vmatpush1.bf16.xpose.msra.mxu0 0
      %844 = vmatprep.subr.bf16.mxu0 0
      %845 = vmatpush1.bf16.xpose.msra.mxu0 0
      %846 = vmatprep.subr.bf16.mxu0 0
      %847 = vmatpush1.bf16.xpose.msra.mxu0 0
      %848 = vmatprep.subr.bf16.mxu0 0
      %849 = vmatpush1.bf16.xpose.msra.mxu0 0
      %850 = vmatprep.subr.bf16.mxu0 0
      %851 = vmatpush1.bf16.xpose.msra.mxu0 0
      %852 = vmatprep.subr.bf16.mxu0 0
      %853 = vmatpush1.bf16.xpose.msra.mxu0 0
      %854 = vmatprep.subr.bf16.mxu0 0
      %855 = vmatpush1.bf16.xpose.msra.mxu0 0
      %856 = vmatprep.subr.bf16.mxu0 0
      %857 = vmatpush1.bf16.xpose.msra.mxu0 0
      %858 = vmatprep.subr.bf16.mxu0 0
      %859 = vmatpush1.bf16.xpose.msra.mxu0 0
      %860 = vmatprep.subr.bf16.mxu0 0
      %861 = vmatpush1.bf16.xpose.msra.mxu0 0
      %862 = vmatprep.subr.bf16.mxu0 0
      %863 = vmatpush1.bf16.xpose.msra.mxu0 0
      %864 = vmatprep.subr.bf16.mxu0 0
      %865 = vmatpush1.bf16.xpose.msra.mxu0 0
      %866 = vmatprep.subr.bf16.mxu0 0
      %867 = vmatpush1.bf16.xpose.msra.mxu0 0
      %868 = vmatprep.mubr.bf16.mxu0 0
      %869 = vmatmul.mubr.bf16.gmra.mrb[0].mxu0 %v831
      %v870 = vpop.f32.mrb[0].mxu0
      %v871 = vadd.f32 0.0, %v870
      %v872 = vpop.f32.mrb[0].mxu0
      %v873 = vpop.f32.mrb[0].mxu0
      %v874 = vadd.f32 0.0, %v873
      %v875 = vpop.f32.mrb[0].mxu0
      %876 = vdwg.mxu0
      %877 = vrot.lane.b32.xlu0 %v325, 120
      %v878 = vpop.permute.xlu0 %877
      %879 = vrot.lane.b32.xlu0 %v325, 104
      %v880 = vpop.permute.xlu0 %879
      %v882 = vsel %vm219, %v878, 0
      %v885 = vsel %vm219, %v880, 0
      %887 = vmatprep.subr.bf16.mxu0 0
      %888 = vmatpush1.bf16.xpose.msra.mxu0 %v885
      %889 = vmatprep.subr.bf16.mxu0 0
      %890 = vmatpush1.bf16.xpose.msra.mxu0 0
      %891 = vmatprep.subr.bf16.mxu0 0
      %892 = vmatpush1.bf16.xpose.msra.mxu0 0
      %893 = vmatprep.subr.bf16.mxu0 0
      %894 = vmatpush1.bf16.xpose.msra.mxu0 0
      %895 = vmatprep.subr.bf16.mxu0 0
      %896 = vmatpush1.bf16.xpose.msra.mxu0 0
      %897 = vmatprep.subr.bf16.mxu0 0
      %898 = vmatpush1.bf16.xpose.msra.mxu0 0
      %899 = vmatprep.subr.bf16.mxu0 0
      %900 = vmatpush1.bf16.xpose.msra.mxu0 0
      %901 = vmatprep.subr.bf16.mxu0 0
      %902 = vmatpush1.bf16.xpose.msra.mxu0 0
      %903 = vmatprep.subr.bf16.mxu0 0
      %904 = vmatpush1.bf16.xpose.msra.mxu0 0
      %905 = vmatprep.subr.bf16.mxu0 0
      %906 = vmatpush1.bf16.xpose.msra.mxu0 0
      %907 = vmatprep.subr.bf16.mxu0 0
      %908 = vmatpush1.bf16.xpose.msra.mxu0 0
      %909 = vmatprep.subr.bf16.mxu0 0
      %910 = vmatpush1.bf16.xpose.msra.mxu0 0
      %911 = vmatprep.subr.bf16.mxu0 0
      %912 = vmatpush1.bf16.xpose.msra.mxu0 0
      %913 = vmatprep.subr.bf16.mxu0 0
      %914 = vmatpush1.bf16.xpose.msra.mxu0 0
      %915 = vmatprep.subr.bf16.mxu0 0
      %916 = vmatpush1.bf16.xpose.msra.mxu0 0
      %917 = vmatprep.subr.bf16.mxu0 0
      %918 = vmatpush1.bf16.xpose.msra.mxu0 0
      %919 = vmatprep.mubr.bf16.mxu0 0
      %920 = vmatmul.mubr.bf16.gmra.mrb[0].mxu0 %v882
      %v921 = vpop.f32.mrb[0].mxu0
      %v922 = vadd.f32 0.0, %v921
      %v923 = vpop.f32.mrb[0].mxu0
      %v924 = vpop.f32.mrb[0].mxu0
      %v925 = vadd.f32 0.0, %v924
      %v926 = vpop.f32.mrb[0].mxu0
      %927 = vdwg.mxu0
      %928 = vrot.lane.b32.xlu0 %v379, 120
      %v929 = vpop.permute.xlu0 %928
      %930 = vrot.lane.b32.xlu0 %v379, 104
      %v931 = vpop.permute.xlu0 %930
      %v933 = vsel %vm219, %v929, 0
      %v936 = vsel %vm219, %v931, 0
      %938 = vmatprep.subr.bf16.mxu0 0
      %939 = vmatpush1.bf16.xpose.msra.mxu0 %v936
      %940 = vmatprep.subr.bf16.mxu0 0
      %941 = vmatpush1.bf16.xpose.msra.mxu0 0
      %942 = vmatprep.subr.bf16.mxu0 0
      %943 = vmatpush1.bf16.xpose.msra.mxu0 0
      %944 = vmatprep.subr.bf16.mxu0 0
      %945 = vmatpush1.bf16.xpose.msra.mxu0 0
      %946 = vmatprep.subr.bf16.mxu0 0
      %947 = vmatpush1.bf16.xpose.msra.mxu0 0
      %948 = vmatprep.subr.bf16.mxu0 0
      %949 = vmatpush1.bf16.xpose.msra.mxu0 0
      %950 = vmatprep.subr.bf16.mxu0 0
      %951 = vmatpush1.bf16.xpose.msra.mxu0 0
      %952 = vmatprep.subr.bf16.mxu0 0
      %953 = vmatpush1.bf16.xpose.msra.mxu0 0
      %954 = vmatprep.subr.bf16.mxu0 0
      %955 = vmatpush1.bf16.xpose.msra.mxu0 0
      %956 = vmatprep.subr.bf16.mxu0 0
      %957 = vmatpush1.bf16.xpose.msra.mxu0 0
      %958 = vmatprep.subr.bf16.mxu0 0
      %959 = vmatpush1.bf16.xpose.msra.mxu0 0
      %960 = vmatprep.subr.bf16.mxu0 0
      %961 = vmatpush1.bf16.xpose.msra.mxu0 0
      %962 = vmatprep.subr.bf16.mxu0 0
      %963 = vmatpush1.bf16.xpose.msra.mxu0 0
      %964 = vmatprep.subr.bf16.mxu0 0
      %965 = vmatpush1.bf16.xpose.msra.mxu0 0
      %966 = vmatprep.subr.bf16.mxu0 0
      %967 = vmatpush1.bf16.xpose.msra.mxu0 0
      %968 = vmatprep.subr.bf16.mxu0 0
      %969 = vmatpush1.bf16.xpose.msra.mxu0 0
      %970 = vmatprep.mubr.bf16.mxu0 0
      %971 = vmatmul.mubr.bf16.gmra.mrb[0].mxu0 %v933
      %v972 = vpop.f32.mrb[0].mxu0
      %v973 = vadd.f32 0.0, %v972
      %v974 = vpop.f32.mrb[0].mxu0
      %v975 = vpop.f32.mrb[0].mxu0
      %v976 = vadd.f32 0.0, %v975
      %v977 = vpop.f32.mrb[0].mxu0
      %978 = vdwg.mxu0
      %v979 = vmul.f32 %v820, 0.35355338
      %v980 = vmul.f32 %v823, 0.35355338
      %v981 = vmul.f32 %v871, 0.35355338
      %v982 = vmul.f32 %v874, 0.35355338
      %v983 = vmul.f32 %v922, 0.35355338
      %v984 = vmul.f32 %v925, 0.35355338
      %v985 = vmul.f32 %v973, 0.35355338
      %v986 = vmul.f32 %v976, 0.35355338
      %v987 = vadd.f32 %v979, %v194
      %v988 = vadd.f32 %v980, %v195
      %v989 = vadd.f32 %v981, %v194
      %v990 = vadd.f32 %v982, %v195
      %v991 = vadd.f32 %v983, %v194
      %v992 = vadd.f32 %v984, %v195
      %v993 = vadd.f32 %v985, %v194
      %v994 = vadd.f32 %v986, %v195
      %v995 = vadd.f32 %v987, %v204
      %v996 = vadd.f32 %v988, %v205
      %v997 = vadd.f32 %v989, %v206
      %v998 = vadd.f32 %v990, %v207
      %v999 = vadd.f32 %v991, %v208
      %v1000 = vadd.f32 %v992, %v209
      %v1001 = vadd.f32 %v993, %v210
      %v1002 = vadd.f32 %v994, %v211
      %v1003 = vsel %vm453, %v995, -inf
      %1004 = vmax.xlane.f32.xlu0 %v1003
      %v1005 = vpop.xlane.xlu0 %1004
      %v1006 = vsel %vm453, %v996, -inf
      %1007 = vmax.xlane.f32.xlu0 %v1006
      %v1008 = vpop.xlane.xlu0 %1007
      %v1009 = vsel %vm453, %v997, -inf
      %1010 = vmax.xlane.f32.xlu0 %v1009
      %v1011 = vpop.xlane.xlu0 %1010
      %v1012 = vsel %vm453, %v998, -inf
      %1013 = vmax.xlane.f32.xlu0 %v1012
      %v1014 = vpop.xlane.xlu0 %1013
      %v1015 = vsel %vm453, %v999, -inf
      %1016 = vmax.xlane.f32.xlu0 %v1015
      %v1017 = vpop.xlane.xlu0 %1016
      %v1018 = vsel %vm453, %v1000, -inf
      %1019 = vmax.xlane.f32.xlu0 %v1018
      %v1020 = vpop.xlane.xlu0 %1019
      %v1021 = vsel %vm453, %v1001, -inf
      %1022 = vmax.xlane.f32.xlu0 %v1021
      %v1023 = vpop.xlane.xlu0 %1022
      %v1024 = vsel %vm453, %v1002, -inf
      %1025 = vmax.xlane.f32.xlu0 %v1024
      %v1026 = vpop.xlane.xlu0 %1025
      %v1027 = vsub.f32 %v995, %v1005
      %v1028 = vsub.f32 %v996, %v1008
      %v1029 = vsub.f32 %v997, %v1011
      %v1030 = vsub.f32 %v998, %v1014
      %v1031 = vsub.f32 %v999, %v1017
      %v1032 = vsub.f32 %v1000, %v1020
      %v1033 = vsub.f32 %v1001, %v1023
      %v1034 = vsub.f32 %v1002, %v1026
      %v1035 = vmul.f32 %v1027, 1.442695
      %v1036 = vpow.pop %v1035
      %v1037 = vmul.f32 %v1028, 1.442695
      %v1038 = vpow.pop %v1037
      %v1039 = vmul.f32 %v1029, 1.442695
      %v1040 = vpow.pop %v1039
      %v1041 = vmul.f32 %v1030, 1.442695
      %v1042 = vpow.pop %v1041
      %v1043 = vmul.f32 %v1031, 1.442695
      %v1044 = vpow.pop %v1043
      %v1045 = vmul.f32 %v1032, 1.442695
      %v1046 = vpow.pop %v1045
      %v1047 = vmul.f32 %v1033, 1.442695
      %v1048 = vpow.pop %v1047
      %v1049 = vmul.f32 %v1034, 1.442695
      %v1050 = vpow.pop %v1049
      %v1051 = vsel %vm453, %v1036, 0.0
      %1052 = vadd.xlane.f32.xlu0 %v1051
      %v1053 = vpop.xlane.xlu0 %1052
      %v1054 = vsel %vm453, %v1038, 0.0
      %1055 = vadd.xlane.f32.xlu0 %v1054
      %v1056 = vpop.xlane.xlu0 %1055
      %v1057 = vsel %vm453, %v1040, 0.0
      %1058 = vadd.xlane.f32.xlu0 %v1057
      %v1059 = vpop.xlane.xlu0 %1058
      %v1060 = vsel %vm453, %v1042, 0.0
      %1061 = vadd.xlane.f32.xlu0 %v1060
      %v1062 = vpop.xlane.xlu0 %1061
      %v1063 = vsel %vm453, %v1044, 0.0
      %1064 = vadd.xlane.f32.xlu0 %v1063
      %v1065 = vpop.xlane.xlu0 %1064
      %v1066 = vsel %vm453, %v1046, 0.0
      %1067 = vadd.xlane.f32.xlu0 %v1066
      %v1068 = vpop.xlane.xlu0 %1067
      %v1069 = vsel %vm453, %v1048, 0.0
      %1070 = vadd.xlane.f32.xlu0 %v1069
      %v1071 = vpop.xlane.xlu0 %1070
      %v1072 = vsel %vm453, %v1050, 0.0
      %1073 = vadd.xlane.f32.xlu0 %v1072
      %v1074 = vpop.xlane.xlu0 %1073
      %v1075 = vrcp.pop %v1053
      %v1076 = vrcp.pop %v1056
      %v1077 = vrcp.pop %v1059
      %v1078 = vrcp.pop %v1062
      %v1079 = vrcp.pop %v1065
      %v1080 = vrcp.pop %v1068
      %v1081 = vrcp.pop %v1071
      %v1082 = vrcp.pop %v1074
      %v1083 = vpack.c.bf16 %v1038, %v1036
      %v1084 = vpack.c.bf16 %v1042, %v1040
      %v1085 = vpack.c.bf16 %v1046, %v1044
      %v1086 = vpack.c.bf16 %v1050, %v1048
      %1087 = vrot.lane.b32.xlu0 %v216, 88
      %v1088 = vpop.permute.xlu0 %1087
      %v1091 = vsel %vm453, %v1083, 0
      %1093 = vmatprep.subr.bf16.mxu0 0
      %1094 = vmatpush1.bf16.msra.mxu0 %v1088
      %1095 = vmatprep.subr.bf16.mxu0 0
      %1096 = vmatpush1.bf16.msra.mxu0 0
      %1097 = vmatprep.subr.bf16.mxu0 0
      %1098 = vmatpush1.bf16.msra.mxu0 0
      %1099 = vmatprep.subr.bf16.mxu0 0
      %1100 = vmatpush1.bf16.msra.mxu0 0
      %1101 = vmatprep.subr.bf16.mxu0 0
      %1102 = vmatpush1.bf16.msra.mxu0 0
      %1103 = vmatprep.subr.bf16.mxu0 0
      %1104 = vmatpush1.bf16.msra.mxu0 0
      %1105 = vmatprep.subr.bf16.mxu0 0
      %1106 = vmatpush1.bf16.msra.mxu0 0
      %1107 = vmatprep.subr.bf16.mxu0 0
      %1108 = vmatpush1.bf16.msra.mxu0 0
      %1109 = vmatprep.subr.bf16.mxu0 0
      %1110 = vmatpush1.bf16.msra.mxu0 0
      %1111 = vmatprep.subr.bf16.mxu0 0
      %1112 = vmatpush1.bf16.msra.mxu0 0
      %1113 = vmatprep.subr.bf16.mxu0 0
      %1114 = vmatpush1.bf16.msra.mxu0 0
      %1115 = vmatprep.subr.bf16.mxu0 0
      %1116 = vmatpush1.bf16.msra.mxu0 0
      %1117 = vmatprep.subr.bf16.mxu0 0
      %1118 = vmatpush1.bf16.msra.mxu0 0
      %1119 = vmatprep.subr.bf16.mxu0 0
      %1120 = vmatpush1.bf16.msra.mxu0 0
      %1121 = vmatprep.subr.bf16.mxu0 0
      %1122 = vmatpush1.bf16.msra.mxu0 0
      %1123 = vmatprep.subr.bf16.mxu0 0
      %1124 = vmatpush1.bf16.msra.mxu0 0
      %1125 = vmatprep.mubr.bf16.mxu0 0
      %1126 = vmatmul.mubr.bf16.gmra.mrb[0].mxu0 %v1091
      %v1127 = vpop.f32.mrb[0].mxu0
      %v1128 = vadd.f32 0.0, %v1127
      %v1129 = vpop.f32.mrb[0].mxu0
      %v1130 = vpop.f32.mrb[0].mxu0
      %v1131 = vadd.f32 0.0, %v1130
      %v1132 = vpop.f32.mrb[0].mxu0
      %1133 = vdwg.mxu0
      %1134 = vrot.lane.b32.xlu0 %v271, 88
      %v1135 = vpop.permute.xlu0 %1134
      %v1138 = vsel %vm453, %v1084, 0
      %1140 = vmatprep.subr.bf16.mxu0 0
      %1141 = vmatpush1.bf16.msra.mxu0 %v1135
      %1142 = vmatprep.subr.bf16.mxu0 0
      %1143 = vmatpush1.bf16.msra.mxu0 0
      %1144 = vmatprep.subr.bf16.mxu0 0
      %1145 = vmatpush1.bf16.msra.mxu0 0
      %1146 = vmatprep.subr.bf16.mxu0 0
      %1147 = vmatpush1.bf16.msra.mxu0 0
      %1148 = vmatprep.subr.bf16.mxu0 0
      %1149 = vmatpush1.bf16.msra.mxu0 0
      %1150 = vmatprep.subr.bf16.mxu0 0
      %1151 = vmatpush1.bf16.msra.mxu0 0
      %1152 = vmatprep.subr.bf16.mxu0 0
      %1153 = vmatpush1.bf16.msra.mxu0 0
      %1154 = vmatprep.subr.bf16.mxu0 0
      %1155 = vmatpush1.bf16.msra.mxu0 0
      %1156 = vmatprep.subr.bf16.mxu0 0
      %1157 = vmatpush1.bf16.msra.mxu0 0
      %1158 = vmatprep.subr.bf16.mxu0 0
      %1159 = vmatpush1.bf16.msra.mxu0 0
      %1160 = vmatprep.subr.bf16.mxu0 0
      %1161 = vmatpush1.bf16.msra.mxu0 0
      %1162 = vmatprep.subr.bf16.mxu0 0
      %1163 = vmatpush1.bf16.msra.mxu0 0
      %1164 = vmatprep.subr.bf16.mxu0 0
      %1165 = vmatpush1.bf16.msra.mxu0 0
      %1166 = vmatprep.subr.bf16.mxu0 0
      %1167 = vmatpush1.bf16.msra.mxu0 0
      %1168 = vmatprep.subr.bf16.mxu0 0
      %1169 = vmatpush1.bf16.msra.mxu0 0
      %1170 = vmatprep.subr.bf16.mxu0 0
      %1171 = vmatpush1.bf16.msra.mxu0 0
      %1172 = vmatprep.mubr.bf16.mxu0 0
      %1173 = vmatmul.mubr.bf16.gmra.mrb[0].mxu0 %v1138
      %v1174 = vpop.f32.mrb[0].mxu0
      %v1175 = vadd.f32 0.0, %v1174
      %v1176 = vpop.f32.mrb[0].mxu0
      %v1177 = vpop.f32.mrb[0].mxu0
      %v1178 = vadd.f32 0.0, %v1177
      %v1179 = vpop.f32.mrb[0].mxu0
      %1180 = vdwg.mxu0
      %1181 = vrot.lane.b32.xlu0 %v325, 88
      %v1182 = vpop.permute.xlu0 %1181
      %v1185 = vsel %vm453, %v1085, 0
      %1187 = vmatprep.subr.bf16.mxu0 0
      %1188 = vmatpush1.bf16.msra.mxu0 %v1182
      %1189 = vmatprep.subr.bf16.mxu0 0
      %1190 = vmatpush1.bf16.msra.mxu0 0
      %1191 = vmatprep.subr.bf16.mxu0 0
      %1192 = vmatpush1.bf16.msra.mxu0 0
      %1193 = vmatprep.subr.bf16.mxu0 0
      %1194 = vmatpush1.bf16.msra.mxu0 0
      %1195 = vmatprep.subr.bf16.mxu0 0
      %1196 = vmatpush1.bf16.msra.mxu0 0
      %1197 = vmatprep.subr.bf16.mxu0 0
      %1198 = vmatpush1.bf16.msra.mxu0 0
      %1199 = vmatprep.subr.bf16.mxu0 0
      %1200 = vmatpush1.bf16.msra.mxu0 0
      %1201 = vmatprep.subr.bf16.mxu0 0
      %1202 = vmatpush1.bf16.msra.mxu0 0
      %1203 = vmatprep.subr.bf16.mxu0 0
      %1204 = vmatpush1.bf16.msra.mxu0 0
      %1205 = vmatprep.subr.bf16.mxu0 0
      %1206 = vmatpush1.bf16.msra.mxu0 0
      %1207 = vmatprep.subr.bf16.mxu0 0
      %1208 = vmatpush1.bf16.msra.mxu0 0
      %1209 = vmatprep.subr.bf16.mxu0 0
      %1210 = vmatpush1.bf16.msra.mxu0 0
      %1211 = vmatprep.subr.bf16.mxu0 0
      %1212 = vmatpush1.bf16.msra.mxu0 0
      %1213 = vmatprep.subr.bf16.mxu0 0
      %1214 = vmatpush1.bf16.msra.mxu0 0
      %1215 = vmatprep.subr.bf16.mxu0 0
      %1216 = vmatpush1.bf16.msra.mxu0 0
      %1217 = vmatprep.subr.bf16.mxu0 0
      %1218 = vmatpush1.bf16.msra.mxu0 0
      %1219 = vmatprep.mubr.bf16.mxu0 0
      %1220 = vmatmul.mubr.bf16.gmra.mrb[0].mxu0 %v1185
      %v1221 = vpop.f32.mrb[0].mxu0
      %v1222 = vadd.f32 0.0, %v1221
      %v1223 = vpop.f32.mrb[0].mxu0
      %v1224 = vpop.f32.mrb[0].mxu0
      %v1225 = vadd.f32 0.0, %v1224
      %v1226 = vpop.f32.mrb[0].mxu0
      %1227 = vdwg.mxu0
      %1228 = vrot.lane.b32.xlu0 %v379, 88
      %v1229 = vpop.permute.xlu0 %1228
      %v1232 = vsel %vm453, %v1086, 0
      %1234 = vmatprep.subr.bf16.mxu0 0
      %1235 = vmatpush1.bf16.msra.mxu0 %v1229
      %1236 = vmatprep.subr.bf16.mxu0 0
      %1237 = vmatpush1.bf16.msra.mxu0 0
      %1238 = vmatprep.subr.bf16.mxu0 0
      %1239 = vmatpush1.bf16.msra.mxu0 0
      %1240 = vmatprep.subr.bf16.mxu0 0
      %1241 = vmatpush1.bf16.msra.mxu0 0
      %1242 = vmatprep.subr.bf16.mxu0 0
      %1243 = vmatpush1.bf16.msra.mxu0 0
      %1244 = vmatprep.subr.bf16.mxu0 0
      %1245 = vmatpush1.bf16.msra.mxu0 0
      %1246 = vmatprep.subr.bf16.mxu0 0
      %1247 = vmatpush1.bf16.msra.mxu0 0
      %1248 = vmatprep.subr.bf16.mxu0 0
      %1249 = vmatpush1.bf16.msra.mxu0 0
      %1250 = vmatprep.subr.bf16.mxu0 0
      %1251 = vmatpush1.bf16.msra.mxu0 0
      %1252 = vmatprep.subr.bf16.mxu0 0
      %1253 = vmatpush1.bf16.msra.mxu0 0
      %1254 = vmatprep.subr.bf16.mxu0 0
      %1255 = vmatpush1.bf16.msra.mxu0 0
      %1256 = vmatprep.subr.bf16.mxu0 0
      %1257 = vmatpush1.bf16.msra.mxu0 0
      %1258 = vmatprep.subr.bf16.mxu0 0
      %1259 = vmatpush1.bf16.msra.mxu0 0
      %1260 = vmatprep.subr.bf16.mxu0 0
      %1261 = vmatpush1.bf16.msra.mxu0 0
      %1262 = vmatprep.subr.bf16.mxu0 0
      %1263 = vmatpush1.bf16.msra.mxu0 0
      %1264 = vmatprep.subr.bf16.mxu0 0
      %1265 = vmatpush1.bf16.msra.mxu0 0
      %1266 = vmatprep.mubr.bf16.mxu0 0
      %1267 = vmatmul.mubr.bf16.gmra.mrb[0].mxu0 %v1232
      %v1268 = vpop.f32.mrb[0].mxu0
      %v1269 = vadd.f32 0.0, %v1268
      %v1270 = vpop.f32.mrb[0].mxu0
      %v1271 = vpop.f32.mrb[0].mxu0
      %v1272 = vadd.f32 0.0, %v1271
      %v1273 = vpop.f32.mrb[0].mxu0
      %1274 = vdwg.mxu0
      %v1275 = vmul.f32 %v1128, %v1075
      %v1276 = vmul.f32 %v1131, %v1076
      %v1277 = vmul.f32 %v1175, %v1077
      %v1278 = vmul.f32 %v1178, %v1078
      %v1279 = vmul.f32 %v1222, %v1079
      %v1280 = vmul.f32 %v1225, %v1080
      %v1281 = vmul.f32 %v1269, %v1081
      %v1282 = vmul.f32 %v1272, %v1082
      %v1283 = vpack.c.bf16 %v1276, %v1275
      %v1284 = vpack.c.bf16 %v1278, %v1277
      %v1285 = vpack.c.bf16 %v1280, %v1279
      %v1286 = vpack.c.bf16 %v1282, %v1281
      %v1291 = vunpack.c.l.b16 %v1283
      %v1292 = vunpack.c.h.b16 %v1283
      %v1293 = vunpack.c.l.b16 %v1284
      %v1294 = vunpack.c.h.b16 %v1284
      %v1295 = vunpack.c.l.b16 %v1285
      %v1296 = vunpack.c.h.b16 %v1285
      %v1297 = vunpack.c.l.b16 %v1286
      %v1298 = vunpack.c.h.b16 %v1286
      %v1299 = vpack.c.b16 %v1291, %v1291
      %v1300 = vpack.c.b16 %v1292, %v1292
      %v1301 = vpack.c.b16 %v1293, %v1293
      %v1302 = vpack.c.b16 %v1294, %v1294
      %v1303 = vpack.c.b16 %v1295, %v1295
      %v1304 = vpack.c.b16 %v1296, %v1296
      %v1305 = vpack.c.b16 %v1297, %v1297
      %v1306 = vpack.c.b16 %v1298, %v1298
      %1307 = vrot.lane.b32.xlu0 %v1299, 8
      %v1308 = vpop.permute.xlu0 %1307
      %1309 = vrot.lane.b32.xlu0 %v1300, 8
      %v1310 = vpop.permute.xlu0 %1309
      %1311 = vrot.lane.b32.xlu0 %v1301, 8
      %v1312 = vpop.permute.xlu0 %1311
      %1313 = vrot.lane.b32.xlu0 %v1302, 8
      %v1314 = vpop.permute.xlu0 %1313
      %1315 = vrot.lane.b32.xlu0 %v1303, 8
      %v1316 = vpop.permute.xlu0 %1315
      %1317 = vrot.lane.b32.xlu0 %v1304, 8
      %v1318 = vpop.permute.xlu0 %1317
      %1319 = vrot.lane.b32.xlu0 %v1305, 8
      %v1320 = vpop.permute.xlu0 %1319
      %1321 = vrot.lane.b32.xlu0 %v1306, 8
      %v1322 = vpop.permute.xlu0 %1321
      %vm1331 = vcmask 126016
      %1332 = vst.msk [vmem:[%s177] sm:$0xf] %vm1331, %v1308
      %1333 = vst.msk [vmem:[%s177 + $0x4] sm:$0xf] %vm1331, %v1310
      %1334 = vst.msk [vmem:[%s177 + $0x8] sm:$0xf] %vm1331, %v1312
      %1335 = vst.msk [vmem:[%s177 + $0xc] sm:$0xf] %vm1331, %v1314
      %1336 = vst.msk [vmem:[%s177 + $0x10] sm:$0xf] %vm1331, %v1316
      %1337 = vst.msk [vmem:[%s177 + $0x14] sm:$0xf] %vm1331, %v1318
      %1338 = vst.msk [vmem:[%s177 + $0x18] sm:$0xf] %vm1331, %v1320
      %1339 = vst.msk [vmem:[%s177 + $0x1c] sm:$0xf] %vm1331, %v1322
      %s1340 = smul.u32 4, %s14
      %p1341 = scmp.lt.s32.totalorder %s1340, 7
      %s1342 = scalar_select %p1341, %s1340, 7
      %s1343 = smul.addr %s1342, 2
      %s1344 = smul.addr %s1343, 4
      %s1345 = scalar_lea.vmem %s3, %s1344
      // Predicated region
      $region33: #{forward.33} parent=31 // pred_check
        %p1346 = pneg %p100
      $region34: #{forward.33} parent=31 // pred_check_branch
        %1348 = sbr.rel (%p1346) target = $region36
      $region35: #{forward.33} parent=31 // pred_region
        %s1349 = smul.u32 4, %s14
      $region36: #{forward.33} parent=31 // pred_fallthru
        _
    $region32: #{forward.33} parent=5 // pred_fallthru
      _
    %p1350 = scmp.le.s32.totalorder 2, %s9
    // Predicated region
    $region37: #{forward.33} parent=5 // pred_check
      %p1351 = pneg %p1350
    $region38: #{forward.33} parent=5 // pred_check_branch
      %1353 = sbr.rel (%p1351) target = $region40
    $region39: #{forward.33} parent=5 // pred_region
      %s1354 = ssub.s32 %s9, 2
      // Predicated region
      $region41: #{forward.33} parent=39 // pred_check
        %p1355 = pneg %p106
      $region42: #{forward.33} parent=39 // pred_check_branch
        %1357 = sbr.rel (%p1355) target = $region44
      $region43: #{forward.33} parent=39 // pred_region
        %s1358 = smul.u32 4, %s15
        %p1359 = scmp.lt.s32.totalorder %s1358, 7
        %s1360 = scalar_select %p1359, %s1358, 7
        %s1361 = smul.addr %s1360, 2
        %s1362 = smul.addr %s1361, 4
        %s1363 = scalar_lea.vmem %s3, %s1362
      $region44: #{forward.33} parent=39 // pred_fallthru
        _
    $region40: #{forward.33} parent=5 // pred_fallthru
      _
  $region6: #{forward.33} parent=0 // loop_footer
    %s13 = sadd.s32 1, %s9
  $region7: #{forward.33} parent=0 // loop_footer_branch
    %8 = sbr.rel target = $region3
  $region8: #{forward.33} parent=0 // loop_exit
    _

// kernel: forward.38
$region0: #{forward.38}
  #allocation0 [shape = 'u32[]', space=smem, size = 0x4, offset = 0x4, fixed_abs, tag = 'smem constant byte address 0x4 - core index']
  #allocation1 [shape = 'u32[144,128]{1,0:T(1,128)}', space=vmem, size = 0x12000, scoped, tag = 'internal scratch']
  #allocation2 [shape = 'bf16[32,32]{1,0:T(16,128)(2,1)}', space=vmem, size = 0x2000, scoped, tag = 'scratch operand']
  %s0 = inlined_call_operand.vmem [shape: f32[32,32], index: 0, kind: input, shape index: {}]
  %s1 = inlined_call_operand.vmem [shape: bf16[32,128], index: 1, kind: input, shape index: {}]
  %s2 = inlined_call_operand.vmem [shape: f32[1,128], index: 2, kind: input, shape index: {}]
  %s3 = inlined_call_operand.vmem [shape: f32[1,32], index: 3, kind: input, shape index: {}]
  %s4 = inlined_call_operand.vmem [shape: f32[1,32], index: 4, kind: input, shape index: {}]
  %s5 = inlined_call_operand.vmem [shape: bf16[32,128], index: 5, kind: output, shape index: {}]
  %s6 = sld [smem:[#allocation0]]
  $region34: #{forward.38} parent=0
    _
  %s8 = ssub.s32 1, %s6
  %s9 = scalar_select 0, %s8, %s6
  // Predicated region
  $region2: #{forward.38} parent=0 // pred_check
    _
  $region3: #{forward.38} parent=0 // pred_check_branch
    %11 = sbr.rel (0) target = $region5
  $region4: #{forward.38} parent=0 // pred_region
    _
  $region5: #{forward.38} parent=0 // pred_fallthru
    _
  // Predicated region
  $region6: #{forward.38} parent=0 // pred_check
    _
  $region7: #{forward.38} parent=0 // pred_check_branch
    %13 = sbr.rel (0) target = $region9
  $region8: #{forward.38} parent=0 // pred_region
    _
  $region9: #{forward.38} parent=0 // pred_fallthru
    _
  // Predicated region
  $region10: #{forward.38} parent=0 // pred_check
    _
  $region11: #{forward.38} parent=0 // pred_check_branch
    %15 = sbr.rel (0) target = $region13
  $region12: #{forward.38} parent=0 // pred_region
    _
  $region13: #{forward.38} parent=0 // pred_fallthru
    _
  // Predicated region
  $region14: #{forward.38} parent=0 // pred_check
    _
  $region15: #{forward.38} parent=0 // pred_check_branch
    %17 = sbr.rel (0) target = $region17
  $region16: #{forward.38} parent=0 // pred_region
    _
  $region17: #{forward.38} parent=0 // pred_fallthru
    _
  // Predicated region
  $region18: #{forward.38} parent=0 // pred_check
    _
  $region19: #{forward.38} parent=0 // pred_check_branch
    %19 = sbr.rel (0) target = $region21
  $region20: #{forward.38} parent=0 // pred_region
    _
  $region21: #{forward.38} parent=0 // pred_fallthru
    _
  %p21 = scmp.eq.s32.totalorder 0, 0
  // Predicated region
  $region22: #{forward.38} parent=0 // pred_check
    %p22 = pneg %p21
  $region23: #{forward.38} parent=0 // pred_check_branch
    %24 = sbr.rel (%p22) target = $region25
  $region24: #{forward.38} parent=0 // pred_region
    %v25 = vld [vmem:[%s0] sm:$0xff]
    %v26 = vld [vmem:[%s0 + $0x8] sm:$0xff]
    %v27 = vld [vmem:[%s0 + $0x10] sm:$0xff]
    %v28 = vld [vmem:[%s0 + $0x18] sm:$0xff]
    %vm29 = vcmask 261120
    %v30 = vsel %vm29, %v25, 0.0
    %31 = vadd.xlane.f32.xlu0 %v30
    %v32 = vpop.xlane.xlu0 %31
    %v33 = vsel %vm29, %v26, 0.0
    %34 = vadd.xlane.f32.xlu0 %v33
    %v35 = vpop.xlane.xlu0 %34
    %v36 = vsel %vm29, %v27, 0.0
    %37 = vadd.xlane.f32.xlu0 %v36
    %v38 = vpop.xlane.xlu0 %37
    %v39 = vsel %vm29, %v28, 0.0
    %40 = vadd.xlane.f32.xlu0 %v39
    %v41 = vpop.xlane.xlu0 %40
    %v42 = vrcp.pop 32.0
    %v43 = vmul.f32 %v32, %v42
    %v44 = vmul.f32 %v35, %v42
    %v45 = vmul.f32 %v38, %v42
    %v46 = vmul.f32 %v41, %v42
    %v47 = vsub.f32 %v25, %v43
    %v48 = vsub.f32 %v26, %v44
    %v49 = vsub.f32 %v27, %v45
    %v50 = vsub.f32 %v28, %v46
    %v51 = vmul.f32 %v47, %v47
    %v52 = vmul.f32 %v48, %v48
    %v53 = vmul.f32 %v49, %v49
    %v54 = vmul.f32 %v50, %v50
    %v55 = vsel %vm29, %v51, 0.0
    %56 = vadd.xlane.f32.xlu0 %v55
    %v57 = vpop.xlane.xlu0 %56
    %v58 = vsel %vm29, %v52, 0.0
    %59 = vadd.xlane.f32.xlu0 %v58
    %v60 = vpop.xlane.xlu0 %59
    %v61 = vsel %vm29, %v53, 0.0
    %62 = vadd.xlane.f32.xlu0 %v61
    %v63 = vpop.xlane.xlu0 %62
    %v64 = vsel %vm29, %v54, 0.0
    %65 = vadd.xlane.f32.xlu0 %v64
    %v66 = vpop.xlane.xlu0 %65
    %v67 = vmul.f32 %v57, %v42
    %v68 = vmul.f32 %v60, %v42
    %v69 = vmul.f32 %v63, %v42
    %v70 = vmul.f32 %v66, %v42
    %v71 = vadd.f32 %v67, 1e-05
    %v72 = vadd.f32 %v68, 1e-05
    %v73 = vadd.f32 %v69, 1e-05
    %v74 = vadd.f32 %v70, 1e-05
    %v75 = vrsqrt.pop %v71
    %v76 = vrsqrt.pop %v72
    %v77 = vrsqrt.pop %v73
    %v78 = vrsqrt.pop %v74
    %v79 = vmul.f32 %v47, %v75
    %v80 = vmul.f32 %v48, %v76
    %v81 = vmul.f32 %v49, %v77
    %v82 = vmul.f32 %v50, %v78
    %v83 = vld [vmem:[%s3] sm:$0x1]
    %v85 = vlaneseq
    %v86 = vshrl.u32 %v85, 7
    %v87 = vsub.s32 0, %v86
    %v88 = vrot.slane %v83, %v87
    %v90 = vmul.f32 %v79, %v88
    %v91 = vmul.f32 %v80, %v88
    %v92 = vmul.f32 %v81, %v88
    %v93 = vmul.f32 %v82, %v88
    %v94 = vld [vmem:[%s4] sm:$0x1]
    %v96 = vlaneseq
    %v97 = vshrl.u32 %v96, 7
    %v98 = vsub.s32 0, %v97
    %v99 = vrot.slane %v94, %v98
    %v101 = vadd.f32 %v90, %v99
    %v102 = vadd.f32 %v91, %v99
    %v103 = vadd.f32 %v92, %v99
    %v104 = vadd.f32 %v93, %v99
    %v105 = vpack.c.bf16 %v102, %v101
    %v106 = vpack.c.bf16 %v104, %v103
    %107 = vst.msk [vmem:[#allocation2] sm:$0xff] %vm29, %v105
    %108 = vst.msk [vmem:[#allocation2 + $0x8] sm:$0xff] %vm29, %v106
  $region25: #{forward.38} parent=0 // pred_fallthru
    _
  %v109 = vld [vmem:[#allocation2] sm:$0xff]
  %v110 = vld [vmem:[#allocation2 + $0x8] sm:$0xff]
  %v111 = vld [vmem:[%s1] sm:$0xf]
  %v112 = vld [vmem:[%s1 + $0x4] sm:$0xf]
  %v113 = vld [vmem:[%s1 + $0x8] sm:$0xf]
  %v114 = vld [vmem:[%s1 + $0xc] sm:$0xf]
  %v115 = vld [vmem:[%s2] sm:$0x1]
  %v117 = vlaneseq
  %v118 = vshrl.u32 %v117, 7
  %v119 = vsub.s32 0, %v118
  %v120 = vrot.slane %v115, %v119
  %v126 = vunpack.c.l.b16 %v111
  %v127 = vunpack.c.l.b16 %v112
  %v128 = vunpack.c.l.b16 %v113
  %v129 = vunpack.c.l.b16 %v114
  %v130 = vpack.c.b16 %v127, %v126
  %v131 = vpack.c.b16 %v129, %v128
  %vm134 = vcmask 261120
  %v136 = vsel %vm134, %v109, 0
  %v139 = vsel %vm134, %v110, 0
  %141 = vmatprep.subr.bf16.mxu0 0
  %142 = vmatpush1.bf16.msra.mxu0 %v130
  %143 = vmatprep.subr.bf16.mxu0 0
  %144 = vmatpush1.bf16.msra.mxu0 %v131
  %145 = vmatprep.subr.bf16.mxu0 0
  %146 = vmatpush1.bf16.msra.mxu0 0
  %147 = vmatprep.subr.bf16.mxu0 0
  %148 = vmatpush1.bf16.msra.mxu0 0
  %149 = vmatprep.subr.bf16.mxu0 0
  %150 = vmatpush1.bf16.msra.mxu0 0
  %151 = vmatprep.subr.bf16.mxu0 0
  %152 = vmatpush1.bf16.msra.mxu0 0
  %153 = vmatprep.subr.bf16.mxu0 0
  %154 = vmatpush1.bf16.msra.mxu0 0
  %155 = vmatprep.subr.bf16.mxu0 0
  %156 = vmatpush1.bf16.msra.mxu0 0
  %157 = vmatprep.subr.bf16.mxu0 0
  %158 = vmatpush1.bf16.msra.mxu0 0
  %159 = vmatprep.subr.bf16.mxu0 0
  %160 = vmatpush1.bf16.msra.mxu0 0
  %161 = vmatprep.subr.bf16.mxu0 0
  %162 = vmatpush1.bf16.msra.mxu0 0
  %163 = vmatprep.subr.bf16.mxu0 0
  %164 = vmatpush1.bf16.msra.mxu0 0
  %165 = vmatprep.subr.bf16.mxu0 0
  %166 = vmatpush1.bf16.msra.mxu0 0
  %167 = vmatprep.subr.bf16.mxu0 0
  %168 = vmatpush1.bf16.msra.mxu0 0
  %169 = vmatprep.subr.bf16.mxu0 0
  %170 = vmatpush1.bf16.msra.mxu0 0
  %171 = vmatprep.subr.bf16.mxu0 0
  %172 = vmatpush1.bf16.msra.mxu0 0
  %173 = vmatprep.mubr.bf16.mxu0 0
  %174 = vmatmul.mubr.bf16.gmra.mrb[0].mxu0 %v136
  %v175 = vpop.f32.mrb[0].mxu0
  %v176 = vadd.f32 %v120, %v175
  %v177 = vpop.f32.mrb[0].mxu0
  %v178 = vpop.f32.mrb[0].mxu0
  %v179 = vadd.f32 %v120, %v178
  %v180 = vpop.f32.mrb[0].mxu0
  %181 = vmatprep.mubr.bf16.mxu0 0
  %182 = vmatmul.mubr.bf16.gmra.mrb[0].mxu0 %v139
  %v183 = vpop.f32.mrb[0].mxu0
  %v184 = vadd.f32 %v120, %v183
  %v185 = vpop.f32.mrb[0].mxu0
  %v186 = vpop.f32.mrb[0].mxu0
  %v187 = vadd.f32 %v120, %v186
  %v188 = vpop.f32.mrb[0].mxu0
  %189 = vdwg.mxu0
  %v190 = vpack.c.bf16 %v179, %v176
  %v191 = vpack.c.bf16 %v187, %v184
  %v194 = vunpack.c.l.b16 %v190
  %v195 = vunpack.c.h.b16 %v190
  %v196 = vunpack.c.l.b16 %v191
  %v197 = vunpack.c.h.b16 %v191
  %v198 = vpack.c.b16 %v194, %v194
  %v199 = vpack.c.b16 %v195, %v195
  %v200 = vpack.c.b16 %v196, %v196
  %v201 = vpack.c.b16 %v197, %v197
  %206 = vst [vmem:[%s5] sm:$0xf] %v198
  %207 = vst [vmem:[%s5 + $0x4] sm:$0xf] %v199
  %208 = vst [vmem:[%s5 + $0x8] sm:$0xf] %v200
  %209 = vst [vmem:[%s5 + $0xc] sm:$0xf] %v201
  // Predicated region
  $region26: #{forward.38} parent=0 // pred_check
    _
  $region27: #{forward.38} parent=0 // pred_check_branch
    %211 = sbr.rel (0) target = $region29
  $region28: #{forward.38} parent=0 // pred_region
    _
  $region29: #{forward.38} parent=0 // pred_fallthru
    _
  // Predicated region
  $region30: #{forward.38} parent=0 // pred_check
    _
  $region31: #{forward.38} parent=0 // pred_check_branch
    %213 = sbr.rel (0) target = $region33
  $region32: #{forward.38} parent=0 // pred_region
    _
  $region33: #{forward.38} parent=0 // pred_fallthru
    _

// kernel: forward.37
$region0: #{forward.37}
  #allocation0 [shape = 'u32[]', space=smem, size = 0x4, offset = 0x4, fixed_abs, tag = 'smem constant byte address 0x4 - core index']
  #allocation1 [shape = 'u32[144,128]{1,0:T(1,128)}', space=vmem, size = 0x12000, scoped, tag = 'internal scratch']
  #allocation2 [shape = 'bf16[32,64]{1,0:T(16,128)(2,1)}', space=vmem, size = 0x2000, scoped, tag = 'scratch operand']
  %s0 = inlined_call_operand.vmem [shape: f32[32,64], index: 0, kind: input, shape index: {}]
  %s1 = inlined_call_operand.vmem [shape: bf16[64,32], index: 1, kind: input, shape index: {}]
  %s2 = inlined_call_operand.vmem [shape: f32[1,32], index: 2, kind: input, shape index: {}]
  %s3 = inlined_call_operand.vmem [shape: f32[1,64], index: 3, kind: input, shape index: {}]
  %s4 = inlined_call_operand.vmem [shape: f32[1,64], index: 4, kind: input, shape index: {}]
  %s5 = inlined_call_operand.vmem [shape: f32[32,32], index: 5, kind: output, shape index: {}]
  %s6 = sld [smem:[#allocation0]]
  $region34: #{forward.37} parent=0
    _
  %s8 = ssub.s32 1, %s6
  %s9 = scalar_select 0, %s8, %s6
  // Predicated region
  $region2: #{forward.37} parent=0 // pred_check
    _
  $region3: #{forward.37} parent=0 // pred_check_branch
    %11 = sbr.rel (0) target = $region5
  $region4: #{forward.37} parent=0 // pred_region
    _
  $region5: #{forward.37} parent=0 // pred_fallthru
    _
  // Predicated region
  $region6: #{forward.37} parent=0 // pred_check
    _
  $region7: #{forward.37} parent=0 // pred_check_branch
    %13 = sbr.rel (0) target = $region9
  $region8: #{forward.37} parent=0 // pred_region
    _
  $region9: #{forward.37} parent=0 // pred_fallthru
    _
  // Predicated region
  $region10: #{forward.37} parent=0 // pred_check
    _
  $region11: #{forward.37} parent=0 // pred_check_branch
    %15 = sbr.rel (0) target = $region13
  $region12: #{forward.37} parent=0 // pred_region
    _
  $region13: #{forward.37} parent=0 // pred_fallthru
    _
  // Predicated region
  $region14: #{forward.37} parent=0 // pred_check
    _
  $region15: #{forward.37} parent=0 // pred_check_branch
    %17 = sbr.rel (0) target = $region17
  $region16: #{forward.37} parent=0 // pred_region
    _
  $region17: #{forward.37} parent=0 // pred_fallthru
    _
  // Predicated region
  $region18: #{forward.37} parent=0 // pred_check
    _
  $region19: #{forward.37} parent=0 // pred_check_branch
    %19 = sbr.rel (0) target = $region21
  $region20: #{forward.37} parent=0 // pred_region
    _
  $region21: #{forward.37} parent=0 // pred_fallthru
    _
  %p21 = scmp.eq.s32.totalorder 0, 0
  // Predicated region
  $region22: #{forward.37} parent=0 // pred_check
    %p22 = pneg %p21
  $region23: #{forward.37} parent=0 // pred_check_branch
    %24 = sbr.rel (%p22) target = $region25
  $region24: #{forward.37} parent=0 // pred_region
    %v25 = vld [vmem:[%s0] sm:$0xff]
    %v26 = vld [vmem:[%s0 + $0x8] sm:$0xff]
    %v27 = vld [vmem:[%s0 + $0x10] sm:$0xff]
    %v28 = vld [vmem:[%s0 + $0x18] sm:$0xff]
    %vm29 = vcmask 523264
    %v30 = vsel %vm29, %v25, 0.0
    %31 = vadd.xlane.f32.xlu0 %v30
    %v32 = vpop.xlane.xlu0 %31
    %v33 = vsel %vm29, %v26, 0.0
    %34 = vadd.xlane.f32.xlu0 %v33
    %v35 = vpop.xlane.xlu0 %34
    %v36 = vsel %vm29, %v27, 0.0
    %37 = vadd.xlane.f32.xlu0 %v36
    %v38 = vpop.xlane.xlu0 %37
    %v39 = vsel %vm29, %v28, 0.0
    %40 = vadd.xlane.f32.xlu0 %v39
    %v41 = vpop.xlane.xlu0 %40
    %v42 = vrcp.pop 64.0
    %v43 = vmul.f32 %v32, %v42
    %v44 = vmul.f32 %v35, %v42
    %v45 = vmul.f32 %v38, %v42
    %v46 = vmul.f32 %v41, %v42
    %v47 = vsub.f32 %v25, %v43
    %v48 = vsub.f32 %v26, %v44
    %v49 = vsub.f32 %v27, %v45
    %v50 = vsub.f32 %v28, %v46
    %v51 = vmul.f32 %v47, %v47
    %v52 = vmul.f32 %v48, %v48
    %v53 = vmul.f32 %v49, %v49
    %v54 = vmul.f32 %v50, %v50
    %v55 = vsel %vm29, %v51, 0.0
    %56 = vadd.xlane.f32.xlu0 %v55
    %v57 = vpop.xlane.xlu0 %56
    %v58 = vsel %vm29, %v52, 0.0
    %59 = vadd.xlane.f32.xlu0 %v58
    %v60 = vpop.xlane.xlu0 %59
    %v61 = vsel %vm29, %v53, 0.0
    %62 = vadd.xlane.f32.xlu0 %v61
    %v63 = vpop.xlane.xlu0 %62
    %v64 = vsel %vm29, %v54, 0.0
    %65 = vadd.xlane.f32.xlu0 %v64
    %v66 = vpop.xlane.xlu0 %65
    %v67 = vmul.f32 %v57, %v42
    %v68 = vmul.f32 %v60, %v42
    %v69 = vmul.f32 %v63, %v42
    %v70 = vmul.f32 %v66, %v42
    %v71 = vadd.f32 %v67, 1e-05
    %v72 = vadd.f32 %v68, 1e-05
    %v73 = vadd.f32 %v69, 1e-05
    %v74 = vadd.f32 %v70, 1e-05
    %v75 = vrsqrt.pop %v71
    %v76 = vrsqrt.pop %v72
    %v77 = vrsqrt.pop %v73
    %v78 = vrsqrt.pop %v74
    %v79 = vmul.f32 %v47, %v75
    %v80 = vmul.f32 %v48, %v76
    %v81 = vmul.f32 %v49, %v77
    %v82 = vmul.f32 %v50, %v78
    %v83 = vld [vmem:[%s3] sm:$0x1]
    %v85 = vlaneseq
    %v86 = vshrl.u32 %v85, 7
    %v87 = vsub.s32 0, %v86
    %v88 = vrot.slane %v83, %v87
    %v90 = vmul.f32 %v79, %v88
    %v91 = vmul.f32 %v80, %v88
    %v92 = vmul.f32 %v81, %v88
    %v93 = vmul.f32 %v82, %v88
    %v94 = vld [vmem:[%s4] sm:$0x1]
    %v96 = vlaneseq
    %v97 = vshrl.u32 %v96, 7
    %v98 = vsub.s32 0, %v97
    %v99 = vrot.slane %v94, %v98
    %v101 = vadd.f32 %v90, %v99
    %v102 = vadd.f32 %v91, %v99
    %v103 = vadd.f32 %v92, %v99
    %v104 = vadd.f32 %v93, %v99
    %v105 = vpack.c.bf16 %v102, %v101
    %v106 = vpack.c.bf16 %v104, %v103
    %107 = vst.msk [vmem:[#allocation2] sm:$0xff] %vm29, %v105
    %108 = vst.msk [vmem:[#allocation2 + $0x8] sm:$0xff] %vm29, %v106
  $region25: #{forward.37} parent=0 // pred_fallthru
    _
  %v109 = vld [vmem:[#allocation2] sm:$0xff]
  %v110 = vld [vmem:[#allocation2 + $0x8] sm:$0xff]
  %v111 = vld [vmem:[%s1] sm:$0xf]
  %v112 = vld [vmem:[%s1 + $0x4] sm:$0xf]
  %v113 = vld [vmem:[%s1 + $0x8] sm:$0xf]
  %v114 = vld [vmem:[%s1 + $0xc] sm:$0xf]
  %v115 = vld [vmem:[%s1 + $0x10] sm:$0xf]
  %v116 = vld [vmem:[%s1 + $0x14] sm:$0xf]
  %v117 = vld [vmem:[%s1 + $0x18] sm:$0xf]
  %v118 = vld [vmem:[%s1 + $0x1c] sm:$0xf]
  %v119 = vld [vmem:[%s2] sm:$0x1]
  %v121 = vlaneseq
  %v122 = vshrl.u32 %v121, 7
  %v123 = vsub.s32 0, %v122
  %v124 = vrot.slane %v119, %v123
  %v134 = vunpack.c.l.b16 %v111
  %v135 = vunpack.c.l.b16 %v112
  %v136 = vunpack.c.l.b16 %v113
  %v137 = vunpack.c.l.b16 %v114
  %v138 = vunpack.c.l.b16 %v115
  %v139 = vunpack.c.l.b16 %v116
  %v140 = vunpack.c.l.b16 %v117
  %v141 = vunpack.c.l.b16 %v118
  %v142 = vpack.c.b16 %v135, %v134
  %v143 = vpack.c.b16 %v137, %v136
  %v144 = vpack.c.b16 %v139, %v138
  %v145 = vpack.c.b16 %v141, %v140
  %vm150 = vcmask 523264
  %v152 = vsel %vm150, %v109, 0
  %v155 = vsel %vm150, %v110, 0
  %157 = vmatprep.subr.bf16.mxu0 0
  %158 = vmatpush1.bf16.msra.mxu0 %v142
  %159 = vmatprep.subr.bf16.mxu0 0
  %160 = vmatpush1.bf16.msra.mxu0 %v143
  %161 = vmatprep.subr.bf16.mxu0 0
  %162 = vmatpush1.bf16.msra.mxu0 %v144
  %163 = vmatprep.subr.bf16.mxu0 0
  %164 = vmatpush1.bf16.msra.mxu0 %v145
  %165 = vmatprep.subr.bf16.mxu0 0
  %166 = vmatpush1.bf16.msra.mxu0 0
  %167 = vmatprep.subr.bf16.mxu0 0
  %168 = vmatpush1.bf16.msra.mxu0 0
  %169 = vmatprep.subr.bf16.mxu0 0
  %170 = vmatpush1.bf16.msra.mxu0 0
  %171 = vmatprep.subr.bf16.mxu0 0
  %172 = vmatpush1.bf16.msra.mxu0 0
  %173 = vmatprep.subr.bf16.mxu0 0
  %174 = vmatpush1.bf16.msra.mxu0 0
  %175 = vmatprep.subr.bf16.mxu0 0
  %176 = vmatpush1.bf16.msra.mxu0 0
  %177 = vmatprep.subr.bf16.mxu0 0
  %178 = vmatpush1.bf16.msra.mxu0 0
  %179 = vmatprep.subr.bf16.mxu0 0
  %180 = vmatpush1.bf16.msra.mxu0 0
  %181 = vmatprep.subr.bf16.mxu0 0
  %182 = vmatpush1.bf16.msra.mxu0 0
  %183 = vmatprep.subr.bf16.mxu0 0
  %184 = vmatpush1.bf16.msra.mxu0 0
  %185 = vmatprep.subr.bf16.mxu0 0
  %186 = vmatpush1.bf16.msra.mxu0 0
  %187 = vmatprep.subr.bf16.mxu0 0
  %188 = vmatpush1.bf16.msra.mxu0 0
  %189 = vmatprep.mubr.bf16.mxu0 0
  %190 = vmatmul.mubr.bf16.gmra.mrb[0].mxu0 %v152
  %v191 = vpop.f32.mrb[0].mxu0
  %v192 = vadd.f32 %v124, %v191
  %v193 = vpop.f32.mrb[0].mxu0
  %v194 = vpop.f32.mrb[0].mxu0
  %v195 = vadd.f32 %v124, %v194
  %v196 = vpop.f32.mrb[0].mxu0
  %197 = vmatprep.mubr.bf16.mxu0 0
  %198 = vmatmul.mubr.bf16.gmra.mrb[0].mxu0 %v155
  %v199 = vpop.f32.mrb[0].mxu0
  %v200 = vadd.f32 %v124, %v199
  %v201 = vpop.f32.mrb[0].mxu0
  %v202 = vpop.f32.mrb[0].mxu0
  %v203 = vadd.f32 %v124, %v202
  %v204 = vpop.f32.mrb[0].mxu0
  %205 = vdwg.mxu0
  %vm206 = vcmask 261120
  %207 = vst.msk [vmem:[%s5] sm:$0xff] %vm206, %v192
  %208 = vst.msk [vmem:[%s5 + $0x8] sm:$0xff] %vm206, %v195
  %209 = vst.msk [vmem:[%s5 + $0x10] sm:$0xff] %vm206, %v200
  %210 = vst.msk [vmem:[%s5 + $0x18] sm:$0xff] %vm206, %v203
  // Predicated region
  $region26: #{forward.37} parent=0 // pred_check
    _
  $region27: #{forward.37} parent=0 // pred_check_branch
    %212 = sbr.rel (0) target = $region29
  $region28: #{forward.37} parent=0 // pred_region
    _
  $region29: #{forward.37} parent=0 // pred_fallthru
    _
  // Predicated region
  $region30: #{forward.37} parent=0 // pred_check
    _
  $region31: #{forward.37} parent=0 // pred_check_branch
    %214 = sbr.rel (0) target = $region33
  $region32: #{forward.37} parent=0 // pred_region
    _
  $region33: #{forward.37} parent=0 // pred_fallthru
    _

// kernel: forward.40
$region0: #{forward.40}
  #allocation0 [shape = 'u32[]', space=smem, size = 0x4, offset = 0x4, fixed_abs, tag = 'smem constant byte address 0x4 - core index']
  #allocation1 [shape = 'u32[144,128]{1,0:T(1,128)}', space=vmem, size = 0x12000, scoped, tag = 'internal scratch']
  %s0 = inlined_call_operand.vmem [shape: bf16[32,32], index: 0, kind: input, shape index: {}]
  %s1 = inlined_call_operand.vmem [shape: bf16[32,32], index: 1, kind: input, shape index: {}]
  %s2 = inlined_call_operand.vmem [shape: f32[1,32], index: 2, kind: input, shape index: {}]
  %s3 = inlined_call_operand.vmem [shape: bf16[32,32], index: 3, kind: output, shape index: {}]
  %s4 = sld [smem:[#allocation0]]
  $region22: #{forward.40} parent=0
    _
  %s6 = ssub.s32 1, %s4
  %s7 = scalar_select 0, %s6, %s4
  // Predicated region
  $region2: #{forward.40} parent=0 // pred_check
    _
  $region3: #{forward.40} parent=0 // pred_check_branch
    %9 = sbr.rel (0) target = $region5
  $region4: #{forward.40} parent=0 // pred_region
    _
  $region5: #{forward.40} parent=0 // pred_fallthru
    _
  // Predicated region
  $region6: #{forward.40} parent=0 // pred_check
    _
  $region7: #{forward.40} parent=0 // pred_check_branch
    %11 = sbr.rel (0) target = $region9
  $region8: #{forward.40} parent=0 // pred_region
    _
  $region9: #{forward.40} parent=0 // pred_fallthru
    _
  // Predicated region
  $region10: #{forward.40} parent=0 // pred_check
    _
  $region11: #{forward.40} parent=0 // pred_check_branch
    %13 = sbr.rel (0) target = $region13
  $region12: #{forward.40} parent=0 // pred_region
    _
  $region13: #{forward.40} parent=0 // pred_fallthru
    _
  %v15 = vld [vmem:[%s0] sm:$0xf]
  %v16 = vld [vmem:[%s0 + $0x4] sm:$0xf]
  %v17 = vld [vmem:[%s0 + $0x8] sm:$0xf]
  %v18 = vld [vmem:[%s0 + $0xc] sm:$0xf]
  %v19 = vld [vmem:[%s1] sm:$0xf]
  %v20 = vld [vmem:[%s1 + $0x4] sm:$0xf]
  %v21 = vld [vmem:[%s1 + $0x8] sm:$0xf]
  %v22 = vld [vmem:[%s1 + $0xc] sm:$0xf]
  %v23 = vld [vmem:[%s2] sm:$0x1]
  %v25 = vlaneseq
  %v26 = vshrl.u32 %v25, 7
  %v27 = vsub.s32 0, %v26
  %v28 = vrot.slane %v23, %v27
  %v34 = vunpack.c.l.b16 %v15
  %v35 = vunpack.c.l.b16 %v16
  %v36 = vunpack.c.l.b16 %v17
  %v37 = vunpack.c.l.b16 %v18
  %v38 = vpack.c.b16 %v35, %v34
  %v39 = vpack.c.b16 %v37, %v36
  %v44 = vunpack.c.l.b16 %v19
  %v45 = vunpack.c.l.b16 %v20
  %v46 = vunpack.c.l.b16 %v21
  %v47 = vunpack.c.l.b16 %v22
  %v48 = vpack.c.b16 %v45, %v44
  %v49 = vpack.c.b16 %v47, %v46
  %vm52 = vcmask 261120
  %v54 = vsel %vm52, %v38, 0
  %v57 = vsel %vm52, %v39, 0
  %59 = vmatprep.subr.bf16.mxu0 0
  %60 = vmatpush1.bf16.msra.mxu0 %v48
  %61 = vmatprep.subr.bf16.mxu0 0
  %62 = vmatpush1.bf16.msra.mxu0 %v49
  %63 = vmatprep.subr.bf16.mxu0 0
  %64 = vmatpush1.bf16.msra.mxu0 0
  %65 = vmatprep.subr.bf16.mxu0 0
  %66 = vmatpush1.bf16.msra.mxu0 0
  %67 = vmatprep.subr.bf16.mxu0 0
  %68 = vmatpush1.bf16.msra.mxu0 0
  %69 = vmatprep.subr.bf16.mxu0 0
  %70 = vmatpush1.bf16.msra.mxu0 0
  %71 = vmatprep.subr.bf16.mxu0 0
  %72 = vmatpush1.bf16.msra.mxu0 0
  %73 = vmatprep.subr.bf16.mxu0 0
  %74 = vmatpush1.bf16.msra.mxu0 0
  %75 = vmatprep.subr.bf16.mxu0 0
  %76 = vmatpush1.bf16.msra.mxu0 0
  %77 = vmatprep.subr.bf16.mxu0 0
  %78 = vmatpush1.bf16.msra.mxu0 0
  %79 = vmatprep.subr.bf16.mxu0 0
  %80 = vmatpush1.bf16.msra.mxu0 0
  %81 = vmatprep.subr.bf16.mxu0 0
  %82 = vmatpush1.bf16.msra.mxu0 0
  %83 = vmatprep.subr.bf16.mxu0 0
  %84 = vmatpush1.bf16.msra.mxu0 0
  %85 = vmatprep.subr.bf16.mxu0 0
  %86 = vmatpush1.bf16.msra.mxu0 0
  %87 = vmatprep.subr.bf16.mxu0 0
  %88 = vmatpush1.bf16.msra.mxu0 0
  %89 = vmatprep.subr.bf16.mxu0 0
  %90 = vmatpush1.bf16.msra.mxu0 0
  %91 = vmatprep.mubr.bf16.mxu0 0
  %92 = vmatmul.mubr.bf16.gmra.mrb[0].mxu0 %v54
  %v93 = vpop.f32.mrb[0].mxu0
  %v94 = vadd.f32 %v28, %v93
  %v95 = vpop.f32.mrb[0].mxu0
  %v96 = vpop.f32.mrb[0].mxu0
  %v97 = vadd.f32 %v28, %v96
  %v98 = vpop.f32.mrb[0].mxu0
  %99 = vmatprep.mubr.bf16.mxu0 0
  %100 = vmatmul.mubr.bf16.gmra.mrb[0].mxu0 %v57
  %v101 = vpop.f32.mrb[0].mxu0
  %v102 = vadd.f32 %v28, %v101
  %v103 = vpop.f32.mrb[0].mxu0
  %v104 = vpop.f32.mrb[0].mxu0
  %v105 = vadd.f32 %v28, %v104
  %v106 = vpop.f32.mrb[0].mxu0
  %107 = vdwg.mxu0
  %v108 = vpack.c.bf16 %v97, %v94
  %v109 = vpack.c.bf16 %v105, %v102
  %v112 = vunpack.c.l.b16 %v108
  %v113 = vunpack.c.h.b16 %v108
  %v114 = vunpack.c.l.b16 %v109
  %v115 = vunpack.c.h.b16 %v109
  %v116 = vpack.c.b16 %v112, %v112
  %v117 = vpack.c.b16 %v113, %v113
  %v118 = vpack.c.b16 %v114, %v114
  %v119 = vpack.c.b16 %v115, %v115
  %vm124 = vcmask 257024
  %125 = vst.msk [vmem:[%s3] sm:$0xf] %vm124, %v116
  %126 = vst.msk [vmem:[%s3 + $0x4] sm:$0xf] %vm124, %v117
  %127 = vst.msk [vmem:[%s3 + $0x8] sm:$0xf] %vm124, %v118
  %128 = vst.msk [vmem:[%s3 + $0xc] sm:$0xf] %vm124, %v119
  // Predicated region
  $region14: #{forward.40} parent=0 // pred_check
    _
  $region15: #{forward.40} parent=0 // pred_check_branch
    %130 = sbr.rel (0) target = $region17
  $region16: #{forward.40} parent=0 // pred_region
    _
  $region17: #{forward.40} parent=0 // pred_fallthru
    _
  // Predicated region
  $region18: #{forward.40} parent=0 // pred_check
    _
  $region19: #{forward.40} parent=0 // pred_check_branch
    %132 = sbr.rel (0) target = $region21
  $region20: #{forward.40} parent=0 // pred_region
    _
  $region21: #{forward.40} parent=0 // pred_fallthru
    _

// kernel: forward.39
$region0: #{forward.39}
  #allocation0 [shape = 'u32[]', space=smem, size = 0x4, offset = 0x4, fixed_abs, tag = 'smem constant byte address 0x4 - core index']
  #allocation1 [shape = 'u32[144,128]{1,0:T(1,128)}', space=vmem, size = 0x12000, scoped, tag = 'internal scratch']
  %s0 = inlined_call_operand.vmem [shape: bf16[2,16,128], index: 0, kind: input, shape index: {}]
  %s1 = inlined_call_operand.vmem [shape: bf16[4,16,16], index: 1, kind: input, shape index: {}]
  %s2 = inlined_call_operand.vmem [shape: bf16[2,16,32], index: 2, kind: output, shape index: {}]
  %s3 = sld [smem:[#allocation0]]
  $region18: #{forward.39} parent=0
    _
  %s5 = ssub.s32 1, %s3
  %s6 = scalar_select 0, %s5, %s3
  // Predicated region
  $region2: #{forward.39} parent=0 // pred_check
    _
  $region3: #{forward.39} parent=0 // pred_check_branch
    %8 = sbr.rel (0) target = $region5
  $region4: #{forward.39} parent=0 // pred_region
    _
  $region5: #{forward.39} parent=0 // pred_fallthru
    _
  // Predicated region
  $region6: #{forward.39} parent=0 // pred_check
    _
  $region7: #{forward.39} parent=0 // pred_check_branch
    %10 = sbr.rel (0) target = $region9
  $region8: #{forward.39} parent=0 // pred_region
    _
  $region9: #{forward.39} parent=0 // pred_fallthru
    _
  %v12 = vld [vmem:[%s0] sm:$0xf]
  %v13 = vld [vmem:[%s0 + $0x4] sm:$0xf]
  %v14 = vld [vmem:[%s0 + $0x8] sm:$0xf]
  %v15 = vld [vmem:[%s0 + $0xc] sm:$0xf]
  %v16 = vld [vmem:[%s1] sm:$0xf]
  %v17 = vld [vmem:[%s1 + $0x4] sm:$0xf]
  %v18 = vld [vmem:[%s1 + $0x8] sm:$0xf]
  %v19 = vld [vmem:[%s1 + $0xc] sm:$0xf]
  %v20 = vld [vmem:[%s1 + $0x10] sm:$0xf]
  %v21 = vld [vmem:[%s1 + $0x14] sm:$0xf]
  %v22 = vld [vmem:[%s1 + $0x18] sm:$0xf]
  %v23 = vld [vmem:[%s1 + $0x1c] sm:$0xf]
  %v24 = vunpack.c.l.bf16 %v16
  %v25 = vunpack.c.l.bf16 %v17
  %v26 = vunpack.c.l.bf16 %v18
  %v27 = vunpack.c.l.bf16 %v19
  %v28 = vunpack.c.l.bf16 %v20
  %v29 = vunpack.c.l.bf16 %v21
  %v30 = vunpack.c.l.bf16 %v22
  %v31 = vunpack.c.l.bf16 %v23
  %v34 = vunpack.c.l.b16 %v12
  %v35 = vunpack.c.l.b16 %v13
  %v36 = vpack.c.b16 %v35, %v34
  %37 = vrot.lane.b32.xlu0 %v36, 96
  %v38 = vpop.permute.xlu0 %37
  %vm39 = vcmask 64512
  %v41 = vsel %vm39, %v36, 0
  %v44 = vsel %vm39, %v38, 0
  %46 = vmatprep.subr.bf16.mxu0 0
  %47 = vmatpush1.bf16.xpose.msra.mxu0 %v44
  %48 = vmatprep.subr.bf16.mxu0 0
  %49 = vmatpush1.bf16.xpose.msra.mxu0 0
  %50 = vmatprep.subr.bf16.mxu0 0
  %51 = vmatpush1.bf16.xpose.msra.mxu0 0
  %52 = vmatprep.subr.bf16.mxu0 0
  %53 = vmatpush1.bf16.xpose.msra.mxu0 0
  %54 = vmatprep.subr.bf16.mxu0 0
  %55 = vmatpush1.bf16.xpose.msra.mxu0 0
  %56 = vmatprep.subr.bf16.mxu0 0
  %57 = vmatpush1.bf16.xpose.msra.mxu0 0
  %58 = vmatprep.subr.bf16.mxu0 0
  %59 = vmatpush1.bf16.xpose.msra.mxu0 0
  %60 = vmatprep.subr.bf16.mxu0 0
  %61 = vmatpush1.bf16.xpose.msra.mxu0 0
  %62 = vmatprep.subr.bf16.mxu0 0
  %63 = vmatpush1.bf16.xpose.msra.mxu0 0
  %64 = vmatprep.subr.bf16.mxu0 0
  %65 = vmatpush1.bf16.xpose.msra.mxu0 0
  %66 = vmatprep.subr.bf16.mxu0 0
  %67 = vmatpush1.bf16.xpose.msra.mxu0 0
  %68 = vmatprep.subr.bf16.mxu0 0
  %69 = vmatpush1.bf16.xpose.msra.mxu0 0
  %70 = vmatprep.subr.bf16.mxu0 0
  %71 = vmatpush1.bf16.xpose.msra.mxu0 0
  %72 = vmatprep.subr.bf16.mxu0 0
  %73 = vmatpush1.bf16.xpose.msra.mxu0 0
  %74 = vmatprep.subr.bf16.mxu0 0
  %75 = vmatpush1.bf16.xpose.msra.mxu0 0
  %76 = vmatprep.subr.bf16.mxu0 0
  %77 = vmatpush1.bf16.xpose.msra.mxu0 0
  %78 = vmatprep.mubr.bf16.mxu0 0
  %79 = vmatmul.mubr.bf16.gmra.mrb[0].mxu0 %v41
  %v80 = vpop.f32.mrb[0].mxu0
  %v81 = vadd.f32 0.0, %v80
  %v82 = vpop.f32.mrb[0].mxu0
  %v83 = vpop.f32.mrb[0].mxu0
  %v84 = vadd.f32 0.0, %v83
  %v85 = vpop.f32.mrb[0].mxu0
  %86 = vdwg.mxu0
  %v89 = vunpack.c.l.b16 %v14
  %v90 = vunpack.c.l.b16 %v15
  %v91 = vpack.c.b16 %v90, %v89
  %92 = vrot.lane.b32.xlu0 %v91, 96
  %v93 = vpop.permute.xlu0 %92
  %v95 = vsel %vm39, %v91, 0
  %v98 = vsel %vm39, %v93, 0
  %100 = vmatprep.subr.bf16.mxu0 0
  %101 = vmatpush1.bf16.xpose.msra.mxu0 %v98
  %102 = vmatprep.subr.bf16.mxu0 0
  %103 = vmatpush1.bf16.xpose.msra.mxu0 0
  %104 = vmatprep.subr.bf16.mxu0 0
  %105 = vmatpush1.bf16.xpose.msra.mxu0 0
  %106 = vmatprep.subr.bf16.mxu0 0
  %107 = vmatpush1.bf16.xpose.msra.mxu0 0
  %108 = vmatprep.subr.bf16.mxu0 0
  %109 = vmatpush1.bf16.xpose.msra.mxu0 0
  %110 = vmatprep.subr.bf16.mxu0 0
  %111 = vmatpush1.bf16.xpose.msra.mxu0 0
  %112 = vmatprep.subr.bf16.mxu0 0
  %113 = vmatpush1.bf16.xpose.msra.mxu0 0
  %114 = vmatprep.subr.bf16.mxu0 0
  %115 = vmatpush1.bf16.xpose.msra.mxu0 0
  %116 = vmatprep.subr.bf16.mxu0 0
  %117 = vmatpush1.bf16.xpose.msra.mxu0 0
  %118 = vmatprep.subr.bf16.mxu0 0
  %119 = vmatpush1.bf16.xpose.msra.mxu0 0
  %120 = vmatprep.subr.bf16.mxu0 0
  %121 = vmatpush1.bf16.xpose.msra.mxu0 0
  %122 = vmatprep.subr.bf16.mxu0 0
  %123 = vmatpush1.bf16.xpose.msra.mxu0 0
  %124 = vmatprep.subr.bf16.mxu0 0
  %125 = vmatpush1.bf16.xpose.msra.mxu0 0
  %126 = vmatprep.subr.bf16.mxu0 0
  %127 = vmatpush1.bf16.xpose.msra.mxu0 0
  %128 = vmatprep.subr.bf16.mxu0 0
  %129 = vmatpush1.bf16.xpose.msra.mxu0 0
  %130 = vmatprep.subr.bf16.mxu0 0
  %131 = vmatpush1.bf16.xpose.msra.mxu0 0
  %132 = vmatprep.mubr.bf16.mxu0 0
  %133 = vmatmul.mubr.bf16.gmra.mrb[0].mxu0 %v95
  %v134 = vpop.f32.mrb[0].mxu0
  %v135 = vadd.f32 0.0, %v134
  %v136 = vpop.f32.mrb[0].mxu0
  %v137 = vpop.f32.mrb[0].mxu0
  %v138 = vadd.f32 0.0, %v137
  %v139 = vpop.f32.mrb[0].mxu0
  %140 = vdwg.mxu0
  %v141 = vmul.f32 %v81, 0.35355338
  %v142 = vmul.f32 %v84, 0.35355338
  %v143 = vmul.f32 %v135, 0.35355338
  %v144 = vmul.f32 %v138, 0.35355338
  %v145 = vadd.f32 %v141, %v24
  %v146 = vadd.f32 %v142, %v25
  %v147 = vadd.f32 %v143, %v24
  %v148 = vadd.f32 %v144, %v25
  %vm149 = vcmask 130048
  %v150 = vsel %vm149, %v145, -inf
  %151 = vmax.xlane.f32.xlu0 %v150
  %v152 = vpop.xlane.xlu0 %151
  %v153 = vsel %vm149, %v146, -inf
  %154 = vmax.xlane.f32.xlu0 %v153
  %v155 = vpop.xlane.xlu0 %154
  %v156 = vsel %vm149, %v147, -inf
  %157 = vmax.xlane.f32.xlu0 %v156
  %v158 = vpop.xlane.xlu0 %157
  %v159 = vsel %vm149, %v148, -inf
  %160 = vmax.xlane.f32.xlu0 %v159
  %v161 = vpop.xlane.xlu0 %160
  %v162 = vsub.f32 %v145, %v152
  %v163 = vsub.f32 %v146, %v155
  %v164 = vsub.f32 %v147, %v158
  %v165 = vsub.f32 %v148, %v161
  %v166 = vmul.f32 %v162, 1.442695
  %v167 = vpow.pop %v166
  %v168 = vmul.f32 %v163, 1.442695
  %v169 = vpow.pop %v168
  %v170 = vmul.f32 %v164, 1.442695
  %v171 = vpow.pop %v170
  %v172 = vmul.f32 %v165, 1.442695
  %v173 = vpow.pop %v172
  %v174 = vsel %vm149, %v167, 0.0
  %175 = vadd.xlane.f32.xlu0 %v174
  %v176 = vpop.xlane.xlu0 %175
  %v177 = vsel %vm149, %v169, 0.0
  %178 = vadd.xlane.f32.xlu0 %v177
  %v179 = vpop.xlane.xlu0 %178
  %v180 = vsel %vm149, %v171, 0.0
  %181 = vadd.xlane.f32.xlu0 %v180
  %v182 = vpop.xlane.xlu0 %181
  %v183 = vsel %vm149, %v173, 0.0
  %184 = vadd.xlane.f32.xlu0 %v183
  %v185 = vpop.xlane.xlu0 %184
  %v186 = vrcp.pop %v176
  %v187 = vrcp.pop %v179
  %v188 = vrcp.pop %v182
  %v189 = vrcp.pop %v185
  %v190 = vpack.c.bf16 %v169, %v167
  %v191 = vpack.c.bf16 %v173, %v171
  %192 = vrot.lane.b32.xlu0 %v36, 64
  %v193 = vpop.permute.xlu0 %192
  %v196 = vsel %vm149, %v190, 0
  %198 = vmatprep.subr.bf16.mxu0 0
  %199 = vmatpush1.bf16.msra.mxu0 %v193
  %200 = vmatprep.subr.bf16.mxu0 0
  %201 = vmatpush1.bf16.msra.mxu0 0
  %202 = vmatprep.subr.bf16.mxu0 0
  %203 = vmatpush1.bf16.msra.mxu0 0
  %204 = vmatprep.subr.bf16.mxu0 0
  %205 = vmatpush1.bf16.msra.mxu0 0
  %206 = vmatprep.subr.bf16.mxu0 0
  %207 = vmatpush1.bf16.msra.mxu0 0
  %208 = vmatprep.subr.bf16.mxu0 0
  %209 = vmatpush1.bf16.msra.mxu0 0
  %210 = vmatprep.subr.bf16.mxu0 0
  %211 = vmatpush1.bf16.msra.mxu0 0
  %212 = vmatprep.subr.bf16.mxu0 0
  %213 = vmatpush1.bf16.msra.mxu0 0
  %214 = vmatprep.subr.bf16.mxu0 0
  %215 = vmatpush1.bf16.msra.mxu0 0
  %216 = vmatprep.subr.bf16.mxu0 0
  %217 = vmatpush1.bf16.msra.mxu0 0
  %218 = vmatprep.subr.bf16.mxu0 0
  %219 = vmatpush1.bf16.msra.mxu0 0
  %220 = vmatprep.subr.bf16.mxu0 0
  %221 = vmatpush1.bf16.msra.mxu0 0
  %222 = vmatprep.subr.bf16.mxu0 0
  %223 = vmatpush1.bf16.msra.mxu0 0
  %224 = vmatprep.subr.bf16.mxu0 0
  %225 = vmatpush1.bf16.msra.mxu0 0
  %226 = vmatprep.subr.bf16.mxu0 0
  %227 = vmatpush1.bf16.msra.mxu0 0
  %228 = vmatprep.subr.bf16.mxu0 0
  %229 = vmatpush1.bf16.msra.mxu0 0
  %230 = vmatprep.mubr.bf16.mxu0 0
  %231 = vmatmul.mubr.bf16.gmra.mrb[0].mxu0 %v196
  %v232 = vpop.f32.mrb[0].mxu0
  %v233 = vadd.f32 0.0, %v232
  %v234 = vpop.f32.mrb[0].mxu0
  %v235 = vpop.f32.mrb[0].mxu0
  %v236 = vadd.f32 0.0, %v235
  %v237 = vpop.f32.mrb[0].mxu0
  %238 = vdwg.mxu0
  %239 = vrot.lane.b32.xlu0 %v91, 64
  %v240 = vpop.permute.xlu0 %239
  %v243 = vsel %vm149, %v191, 0
  %245 = vmatprep.subr.bf16.mxu0 0
  %246 = vmatpush1.bf16.msra.mxu0 %v240
  %247 = vmatprep.subr.bf16.mxu0 0
  %248 = vmatpush1.bf16.msra.mxu0 0
  %249 = vmatprep.subr.bf16.mxu0 0
  %250 = vmatpush1.bf16.msra.mxu0 0
  %251 = vmatprep.subr.bf16.mxu0 0
  %252 = vmatpush1.bf16.msra.mxu0 0
  %253 = vmatprep.subr.bf16.mxu0 0
  %254 = vmatpush1.bf16.msra.mxu0 0
  %255 = vmatprep.subr.bf16.mxu0 0
  %256 = vmatpush1.bf16.msra.mxu0 0
  %257 = vmatprep.subr.bf16.mxu0 0
  %258 = vmatpush1.bf16.msra.mxu0 0
  %259 = vmatprep.subr.bf16.mxu0 0
  %260 = vmatpush1.bf16.msra.mxu0 0
  %261 = vmatprep.subr.bf16.mxu0 0
  %262 = vmatpush1.bf16.msra.mxu0 0
  %263 = vmatprep.subr.bf16.mxu0 0
  %264 = vmatpush1.bf16.msra.mxu0 0
  %265 = vmatprep.subr.bf16.mxu0 0
  %266 = vmatpush1.bf16.msra.mxu0 0
  %267 = vmatprep.subr.bf16.mxu0 0
  %268 = vmatpush1.bf16.msra.mxu0 0
  %269 = vmatprep.subr.bf16.mxu0 0
  %270 = vmatpush1.bf16.msra.mxu0 0
  %271 = vmatprep.subr.bf16.mxu0 0
  %272 = vmatpush1.bf16.msra.mxu0 0
  %273 = vmatprep.subr.bf16.mxu0 0
  %274 = vmatpush1.bf16.msra.mxu0 0
  %275 = vmatprep.subr.bf16.mxu0 0
  %276 = vmatpush1.bf16.msra.mxu0 0
  %277 = vmatprep.mubr.bf16.mxu0 0
  %278 = vmatmul.mubr.bf16.gmra.mrb[0].mxu0 %v243
  %v279 = vpop.f32.mrb[0].mxu0
  %v280 = vadd.f32 0.0, %v279
  %v281 = vpop.f32.mrb[0].mxu0
  %v282 = vpop.f32.mrb[0].mxu0
  %v283 = vadd.f32 0.0, %v282
  %v284 = vpop.f32.mrb[0].mxu0
  %285 = vdwg.mxu0
  %v286 = vmul.f32 %v233, %v186
  %v287 = vmul.f32 %v236, %v187
  %v288 = vmul.f32 %v280, %v188
  %v289 = vmul.f32 %v283, %v189
  %v290 = vpack.c.bf16 %v287, %v286
  %v291 = vpack.c.bf16 %v289, %v288
  %v294 = vunpack.c.l.b16 %v290
  %v295 = vunpack.c.h.b16 %v290
  %v296 = vunpack.c.l.b16 %v291
  %v297 = vunpack.c.h.b16 %v291
  %v298 = vpack.c.b16 %v294, %v294
  %v299 = vpack.c.b16 %v295, %v295
  %v300 = vpack.c.b16 %v296, %v296
  %v301 = vpack.c.b16 %v297, %v297
  %vm306 = vcmask 60416
  %307 = vst.msk [vmem:[%s2] sm:$0xf] %vm306, %v298
  %308 = vst.msk [vmem:[%s2 + $0x4] sm:$0xf] %vm306, %v299
  %309 = vst.msk [vmem:[%s2 + $0x8] sm:$0xf] %vm306, %v300
  %310 = vst.msk [vmem:[%s2 + $0xc] sm:$0xf] %vm306, %v301
  %311 = vrot.lane.b32.xlu0 %v36, 120
  %v312 = vpop.permute.xlu0 %311
  %313 = vrot.lane.b32.xlu0 %v36, 88
  %v314 = vpop.permute.xlu0 %313
  %v316 = vsel %vm39, %v312, 0
  %v319 = vsel %vm39, %v314, 0
  %321 = vmatprep.subr.bf16.mxu0 0
  %322 = vmatpush1.bf16.xpose.msra.mxu0 %v319
  %323 = vmatprep.subr.bf16.mxu0 0
  %324 = vmatpush1.bf16.xpose.msra.mxu0 0
  %325 = vmatprep.subr.bf16.mxu0 0
  %326 = vmatpush1.bf16.xpose.msra.mxu0 0
  %327 = vmatprep.subr.bf16.mxu0 0
  %328 = vmatpush1.bf16.xpose.msra.mxu0 0
  %329 = vmatprep.subr.bf16.mxu0 0
  %330 = vmatpush1.bf16.xpose.msra.mxu0 0
  %331 = vmatprep.subr.bf16.mxu0 0
  %332 = vmatpush1.bf16.xpose.msra.mxu0 0
  %333 = vmatprep.subr.bf16.mxu0 0
  %334 = vmatpush1.bf16.xpose.msra.mxu0 0
  %335 = vmatprep.subr.bf16.mxu0 0
  %336 = vmatpush1.bf16.xpose.msra.mxu0 0
  %337 = vmatprep.subr.bf16.mxu0 0
  %338 = vmatpush1.bf16.xpose.msra.mxu0 0
  %339 = vmatprep.subr.bf16.mxu0 0
  %340 = vmatpush1.bf16.xpose.msra.mxu0 0
  %341 = vmatprep.subr.bf16.mxu0 0
  %342 = vmatpush1.bf16.xpose.msra.mxu0 0
  %343 = vmatprep.subr.bf16.mxu0 0
  %344 = vmatpush1.bf16.xpose.msra.mxu0 0
  %345 = vmatprep.subr.bf16.mxu0 0
  %346 = vmatpush1.bf16.xpose.msra.mxu0 0
  %347 = vmatprep.subr.bf16.mxu0 0
  %348 = vmatpush1.bf16.xpose.msra.mxu0 0
  %349 = vmatprep.subr.bf16.mxu0 0
  %350 = vmatpush1.bf16.xpose.msra.mxu0 0
  %351 = vmatprep.subr.bf16.mxu0 0
  %352 = vmatpush1.bf16.xpose.msra.mxu0 0
  %353 = vmatprep.mubr.bf16.mxu0 0
  %354 = vmatmul.mubr.bf16.gmra.mrb[0].mxu0 %v316
  %v355 = vpop.f32.mrb[0].mxu0
  %v356 = vadd.f32 0.0, %v355
  %v357 = vpop.f32.mrb[0].mxu0
  %v358 = vpop.f32.mrb[0].mxu0
  %v359 = vadd.f32 0.0, %v358
  %v360 = vpop.f32.mrb[0].mxu0
  %361 = vdwg.mxu0
  %362 = vrot.lane.b32.xlu0 %v91, 120
  %v363 = vpop.permute.xlu0 %362
  %364 = vrot.lane.b32.xlu0 %v91, 88
  %v365 = vpop.permute.xlu0 %364
  %v367 = vsel %vm39, %v363, 0
  %v370 = vsel %vm39, %v365, 0
  %372 = vmatprep.subr.bf16.mxu0 0
  %373 = vmatpush1.bf16.xpose.msra.mxu0 %v370
  %374 = vmatprep.subr.bf16.mxu0 0
  %375 = vmatpush1.bf16.xpose.msra.mxu0 0
  %376 = vmatprep.subr.bf16.mxu0 0
  %377 = vmatpush1.bf16.xpose.msra.mxu0 0
  %378 = vmatprep.subr.bf16.mxu0 0
  %379 = vmatpush1.bf16.xpose.msra.mxu0 0
  %380 = vmatprep.subr.bf16.mxu0 0
  %381 = vmatpush1.bf16.xpose.msra.mxu0 0
  %382 = vmatprep.subr.bf16.mxu0 0
  %383 = vmatpush1.bf16.xpose.msra.mxu0 0
  %384 = vmatprep.subr.bf16.mxu0 0
  %385 = vmatpush1.bf16.xpose.msra.mxu0 0
  %386 = vmatprep.subr.bf16.mxu0 0
  %387 = vmatpush1.bf16.xpose.msra.mxu0 0
  %388 = vmatprep.subr.bf16.mxu0 0
  %389 = vmatpush1.bf16.xpose.msra.mxu0 0
  %390 = vmatprep.subr.bf16.mxu0 0
  %391 = vmatpush1.bf16.xpose.msra.mxu0 0
  %392 = vmatprep.subr.bf16.mxu0 0
  %393 = vmatpush1.bf16.xpose.msra.mxu0 0
  %394 = vmatprep.subr.bf16.mxu0 0
  %395 = vmatpush1.bf16.xpose.msra.mxu0 0
  %396 = vmatprep.subr.bf16.mxu0 0
  %397 = vmatpush1.bf16.xpose.msra.mxu0 0
  %398 = vmatprep.subr.bf16.mxu0 0
  %399 = vmatpush1.bf16.xpose.msra.mxu0 0
  %400 = vmatprep.subr.bf16.mxu0 0
  %401 = vmatpush1.bf16.xpose.msra.mxu0 0
  %402 = vmatprep.subr.bf16.mxu0 0
  %403 = vmatpush1.bf16.xpose.msra.mxu0 0
  %404 = vmatprep.mubr.bf16.mxu0 0
  %405 = vmatmul.mubr.bf16.gmra.mrb[0].mxu0 %v367
  %v406 = vpop.f32.mrb[0].mxu0
  %v407 = vadd.f32 0.0, %v406
  %v408 = vpop.f32.mrb[0].mxu0
  %v409 = vpop.f32.mrb[0].mxu0
  %v410 = vadd.f32 0.0, %v409
  %v411 = vpop.f32.mrb[0].mxu0
  %412 = vdwg.mxu0
  %v413 = vmul.f32 %v356, 0.35355338
  %v414 = vmul.f32 %v359, 0.35355338
  %v415 = vmul.f32 %v407, 0.35355338
  %v416 = vmul.f32 %v410, 0.35355338
  %v417 = vadd.f32 %v413, %v26
  %v418 = vadd.f32 %v414, %v27
  %v419 = vadd.f32 %v415, %v26
  %v420 = vadd.f32 %v416, %v27
  %v421 = vsel %vm149, %v417, -inf
  %422 = vmax.xlane.f32.xlu0 %v421
  %v423 = vpop.xlane.xlu0 %422
  %v424 = vsel %vm149, %v418, -inf
  %425 = vmax.xlane.f32.xlu0 %v424
  %v426 = vpop.xlane.xlu0 %425
  %v427 = vsel %vm149, %v419, -inf
  %428 = vmax.xlane.f32.xlu0 %v427
  %v429 = vpop.xlane.xlu0 %428
  %v430 = vsel %vm149, %v420, -inf
  %431 = vmax.xlane.f32.xlu0 %v430
  %v432 = vpop.xlane.xlu0 %431
  %v433 = vsub.f32 %v417, %v423
  %v434 = vsub.f32 %v418, %v426
  %v435 = vsub.f32 %v419, %v429
  %v436 = vsub.f32 %v420, %v432
  %v437 = vmul.f32 %v433, 1.442695
  %v438 = vpow.pop %v437
  %v439 = vmul.f32 %v434, 1.442695
  %v440 = vpow.pop %v439
  %v441 = vmul.f32 %v435, 1.442695
  %v442 = vpow.pop %v441
  %v443 = vmul.f32 %v436, 1.442695
  %v444 = vpow.pop %v443
  %v445 = vsel %vm149, %v438, 0.0
  %446 = vadd.xlane.f32.xlu0 %v445
  %v447 = vpop.xlane.xlu0 %446
  %v448 = vsel %vm149, %v440, 0.0
  %449 = vadd.xlane.f32.xlu0 %v448
  %v450 = vpop.xlane.xlu0 %449
  %v451 = vsel %vm149, %v442, 0.0
  %452 = vadd.xlane.f32.xlu0 %v451
  %v453 = vpop.xlane.xlu0 %452
  %v454 = vsel %vm149, %v444, 0.0
  %455 = vadd.xlane.f32.xlu0 %v454
  %v456 = vpop.xlane.xlu0 %455
  %v457 = vrcp.pop %v447
  %v458 = vrcp.pop %v450
  %v459 = vrcp.pop %v453
  %v460 = vrcp.pop %v456
  %v461 = vpack.c.bf16 %v440, %v438
  %v462 = vpack.c.bf16 %v444, %v442
  %463 = vrot.lane.b32.xlu0 %v36, 56
  %v464 = vpop.permute.xlu0 %463
  %v467 = vsel %vm149, %v461, 0
  %469 = vmatprep.subr.bf16.mxu0 0
  %470 = vmatpush1.bf16.msra.mxu0 %v464
  %471 = vmatprep.subr.bf16.mxu0 0
  %472 = vmatpush1.bf16.msra.mxu0 0
  %473 = vmatprep.subr.bf16.mxu0 0
  %474 = vmatpush1.bf16.msra.mxu0 0
  %475 = vmatprep.subr.bf16.mxu0 0
  %476 = vmatpush1.bf16.msra.mxu0 0
  %477 = vmatprep.subr.bf16.mxu0 0
  %478 = vmatpush1.bf16.msra.mxu0 0
  %479 = vmatprep.subr.bf16.mxu0 0
  %480 = vmatpush1.bf16.msra.mxu0 0
  %481 = vmatprep.subr.bf16.mxu0 0
  %482 = vmatpush1.bf16.msra.mxu0 0
  %483 = vmatprep.subr.bf16.mxu0 0
  %484 = vmatpush1.bf16.msra.mxu0 0
  %485 = vmatprep.subr.bf16.mxu0 0
  %486 = vmatpush1.bf16.msra.mxu0 0
  %487 = vmatprep.subr.bf16.mxu0 0
  %488 = vmatpush1.bf16.msra.mxu0 0
  %489 = vmatprep.subr.bf16.mxu0 0
  %490 = vmatpush1.bf16.msra.mxu0 0
  %491 = vmatprep.subr.bf16.mxu0 0
  %492 = vmatpush1.bf16.msra.mxu0 0
  %493 = vmatprep.subr.bf16.mxu0 0
  %494 = vmatpush1.bf16.msra.mxu0 0
  %495 = vmatprep.subr.bf16.mxu0 0
  %496 = vmatpush1.bf16.msra.mxu0 0
  %497 = vmatprep.subr.bf16.mxu0 0
  %498 = vmatpush1.bf16.msra.mxu0 0
  %499 = vmatprep.subr.bf16.mxu0 0
  %500 = vmatpush1.bf16.msra.mxu0 0
  %501 = vmatprep.mubr.bf16.mxu0 0
  %502 = vmatmul.mubr.bf16.gmra.mrb[0].mxu0 %v467
  %v503 = vpop.f32.mrb[0].mxu0
  %v504 = vadd.f32 0.0, %v503
  %v505 = vpop.f32.mrb[0].mxu0
  %v506 = vpop.f32.mrb[0].mxu0
  %v507 = vadd.f32 0.0, %v506
  %v508 = vpop.f32.mrb[0].mxu0
  %509 = vdwg.mxu0
  %510 = vrot.lane.b32.xlu0 %v91, 56
  %v511 = vpop.permute.xlu0 %510
  %v514 = vsel %vm149, %v462, 0
  %516 = vmatprep.subr.bf16.mxu0 0
  %517 = vmatpush1.bf16.msra.mxu0 %v511
  %518 = vmatprep.subr.bf16.mxu0 0
  %519 = vmatpush1.bf16.msra.mxu0 0
  %520 = vmatprep.subr.bf16.mxu0 0
  %521 = vmatpush1.bf16.msra.mxu0 0
  %522 = vmatprep.subr.bf16.mxu0 0
  %523 = vmatpush1.bf16.msra.mxu0 0
  %524 = vmatprep.subr.bf16.mxu0 0
  %525 = vmatpush1.bf16.msra.mxu0 0
  %526 = vmatprep.subr.bf16.mxu0 0
  %527 = vmatpush1.bf16.msra.mxu0 0
  %528 = vmatprep.subr.bf16.mxu0 0
  %529 = vmatpush1.bf16.msra.mxu0 0
  %530 = vmatprep.subr.bf16.mxu0 0
  %531 = vmatpush1.bf16.msra.mxu0 0
  %532 = vmatprep.subr.bf16.mxu0 0
  %533 = vmatpush1.bf16.msra.mxu0 0
  %534 = vmatprep.subr.bf16.mxu0 0
  %535 = vmatpush1.bf16.msra.mxu0 0
  %536 = vmatprep.subr.bf16.mxu0 0
  %537 = vmatpush1.bf16.msra.mxu0 0
  %538 = vmatprep.subr.bf16.mxu0 0
  %539 = vmatpush1.bf16.msra.mxu0 0
  %540 = vmatprep.subr.bf16.mxu0 0
  %541 = vmatpush1.bf16.msra.mxu0 0
  %542 = vmatprep.subr.bf16.mxu0 0
  %543 = vmatpush1.bf16.msra.mxu0 0
  %544 = vmatprep.subr.bf16.mxu0 0
  %545 = vmatpush1.bf16.msra.mxu0 0
  %546 = vmatprep.subr.bf16.mxu0 0
  %547 = vmatpush1.bf16.msra.mxu0 0
  %548 = vmatprep.mubr.bf16.mxu0 0
  %549 = vmatmul.mubr.bf16.gmra.mrb[0].mxu0 %v514
  %v550 = vpop.f32.mrb[0].mxu0
  %v551 = vadd.f32 0.0, %v550
  %v552 = vpop.f32.mrb[0].mxu0
  %v553 = vpop.f32.mrb[0].mxu0
  %v554 = vadd.f32 0.0, %v553
  %v555 = vpop.f32.mrb[0].mxu0
  %556 = vdwg.mxu0
  %v557 = vmul.f32 %v504, %v457
  %v558 = vmul.f32 %v507, %v458
  %v559 = vmul.f32 %v551, %v459
  %v560 = vmul.f32 %v554, %v460
  %v561 = vpack.c.bf16 %v558, %v557
  %v562 = vpack.c.bf16 %v560, %v559
  %v565 = vunpack.c.l.b16 %v561
  %v566 = vunpack.c.h.b16 %v561
  %v567 = vunpack.c.l.b16 %v562
  %v568 = vunpack.c.h.b16 %v562
  %v569 = vpack.c.b16 %v565, %v565
  %v570 = vpack.c.b16 %v566, %v566
  %v571 = vpack.c.b16 %v567, %v567
  %v572 = vpack.c.b16 %v568, %v568
  %573 = vrot.lane.b32.xlu0 %v569, 8
  %v574 = vpop.permute.xlu0 %573
  %575 = vrot.lane.b32.xlu0 %v570, 8
  %v576 = vpop.permute.xlu0 %575
  %577 = vrot.lane.b32.xlu0 %v571, 8
  %v578 = vpop.permute.xlu0 %577
  %579 = vrot.lane.b32.xlu0 %v572, 8
  %v580 = vpop.permute.xlu0 %579
  %vm585 = vcmask 126016
  %586 = vst.msk [vmem:[%s2] sm:$0xf] %vm585, %v574
  %587 = vst.msk [vmem:[%s2 + $0x4] sm:$0xf] %vm585, %v576
  %588 = vst.msk [vmem:[%s2 + $0x8] sm:$0xf] %vm585, %v578
  %589 = vst.msk [vmem:[%s2 + $0xc] sm:$0xf] %vm585, %v580
  %590 = vrot.lane.b32.xlu0 %v36, 112
  %v591 = vpop.permute.xlu0 %590
  %592 = vrot.lane.b32.xlu0 %v36, 80
  %v593 = vpop.permute.xlu0 %592
  %v595 = vsel %vm39, %v591, 0
  %v598 = vsel %vm39, %v593, 0
  %600 = vmatprep.subr.bf16.mxu0 0
  %601 = vmatpush1.bf16.xpose.msra.mxu0 %v598
  %602 = vmatprep.subr.bf16.mxu0 0
  %603 = vmatpush1.bf16.xpose.msra.mxu0 0
  %604 = vmatprep.subr.bf16.mxu0 0
  %605 = vmatpush1.bf16.xpose.msra.mxu0 0
  %606 = vmatprep.subr.bf16.mxu0 0
  %607 = vmatpush1.bf16.xpose.msra.mxu0 0
  %608 = vmatprep.subr.bf16.mxu0 0
  %609 = vmatpush1.bf16.xpose.msra.mxu0 0
  %610 = vmatprep.subr.bf16.mxu0 0
  %611 = vmatpush1.bf16.xpose.msra.mxu0 0
  %612 = vmatprep.subr.bf16.mxu0 0
  %613 = vmatpush1.bf16.xpose.msra.mxu0 0
  %614 = vmatprep.subr.bf16.mxu0 0
  %615 = vmatpush1.bf16.xpose.msra.mxu0 0
  %616 = vmatprep.subr.bf16.mxu0 0
  %617 = vmatpush1.bf16.xpose.msra.mxu0 0
  %618 = vmatprep.subr.bf16.mxu0 0
  %619 = vmatpush1.bf16.xpose.msra.mxu0 0
  %620 = vmatprep.subr.bf16.mxu0 0
  %621 = vmatpush1.bf16.xpose.msra.mxu0 0
  %622 = vmatprep.subr.bf16.mxu0 0
  %623 = vmatpush1.bf16.xpose.msra.mxu0 0
  %624 = vmatprep.subr.bf16.mxu0 0
  %625 = vmatpush1.bf16.xpose.msra.mxu0 0
  %626 = vmatprep.subr.bf16.mxu0 0
  %627 = vmatpush1.bf16.xpose.msra.mxu0 0
  %628 = vmatprep.subr.bf16.mxu0 0
  %629 = vmatpush1.bf16.xpose.msra.mxu0 0
  %630 = vmatprep.subr.bf16.mxu0 0
  %631 = vmatpush1.bf16.xpose.msra.mxu0 0
  %632 = vmatprep.mubr.bf16.mxu0 0
  %633 = vmatmul.mubr.bf16.gmra.mrb[0].mxu0 %v595
  %v634 = vpop.f32.mrb[0].mxu0
  %v635 = vadd.f32 0.0, %v634
  %v636 = vpop.f32.mrb[0].mxu0
  %v637 = vpop.f32.mrb[0].mxu0
  %v638 = vadd.f32 0.0, %v637
  %v639 = vpop.f32.mrb[0].mxu0
  %640 = vdwg.mxu0
  %641 = vrot.lane.b32.xlu0 %v91, 112
  %v642 = vpop.permute.xlu0 %641
  %643 = vrot.lane.b32.xlu0 %v91, 80
  %v644 = vpop.permute.xlu0 %643
  %v646 = vsel %vm39, %v642, 0
  %v649 = vsel %vm39, %v644, 0
  %651 = vmatprep.subr.bf16.mxu0 0
  %652 = vmatpush1.bf16.xpose.msra.mxu0 %v649
  %653 = vmatprep.subr.bf16.mxu0 0
  %654 = vmatpush1.bf16.xpose.msra.mxu0 0
  %655 = vmatprep.subr.bf16.mxu0 0
  %656 = vmatpush1.bf16.xpose.msra.mxu0 0
  %657 = vmatprep.subr.bf16.mxu0 0
  %658 = vmatpush1.bf16.xpose.msra.mxu0 0
  %659 = vmatprep.subr.bf16.mxu0 0
  %660 = vmatpush1.bf16.xpose.msra.mxu0 0
  %661 = vmatprep.subr.bf16.mxu0 0
  %662 = vmatpush1.bf16.xpose.msra.mxu0 0
  %663 = vmatprep.subr.bf16.mxu0 0
  %664 = vmatpush1.bf16.xpose.msra.mxu0 0
  %665 = vmatprep.subr.bf16.mxu0 0
  %666 = vmatpush1.bf16.xpose.msra.mxu0 0
  %667 = vmatprep.subr.bf16.mxu0 0
  %668 = vmatpush1.bf16.xpose.msra.mxu0 0
  %669 = vmatprep.subr.bf16.mxu0 0
  %670 = vmatpush1.bf16.xpose.msra.mxu0 0
  %671 = vmatprep.subr.bf16.mxu0 0
  %672 = vmatpush1.bf16.xpose.msra.mxu0 0
  %673 = vmatprep.subr.bf16.mxu0 0
  %674 = vmatpush1.bf16.xpose.msra.mxu0 0
  %675 = vmatprep.subr.bf16.mxu0 0
  %676 = vmatpush1.bf16.xpose.msra.mxu0 0
  %677 = vmatprep.subr.bf16.mxu0 0
  %678 = vmatpush1.bf16.xpose.msra.mxu0 0
  %679 = vmatprep.subr.bf16.mxu0 0
  %680 = vmatpush1.bf16.xpose.msra.mxu0 0
  %681 = vmatprep.subr.bf16.mxu0 0
  %682 = vmatpush1.bf16.xpose.msra.mxu0 0
  %683 = vmatprep.mubr.bf16.mxu0 0
  %684 = vmatmul.mubr.bf16.gmra.mrb[0].mxu0 %v646
  %v685 = vpop.f32.mrb[0].mxu0
  %v686 = vadd.f32 0.0, %v685
  %v687 = vpop.f32.mrb[0].mxu0
  %v688 = vpop.f32.mrb[0].mxu0
  %v689 = vadd.f32 0.0, %v688
  %v690 = vpop.f32.mrb[0].mxu0
  %691 = vdwg.mxu0
  %v692 = vmul.f32 %v635, 0.35355338
  %v693 = vmul.f32 %v638, 0.35355338
  %v694 = vmul.f32 %v686, 0.35355338
  %v695 = vmul.f32 %v689, 0.35355338
  %v696 = vadd.f32 %v692, %v28
  %v697 = vadd.f32 %v693, %v29
  %v698 = vadd.f32 %v694, %v28
  %v699 = vadd.f32 %v695, %v29
  %v700 = vsel %vm149, %v696, -inf
  %701 = vmax.xlane.f32.xlu0 %v700
  %v702 = vpop.xlane.xlu0 %701
  %v703 = vsel %vm149, %v697, -inf
  %704 = vmax.xlane.f32.xlu0 %v703
  %v705 = vpop.xlane.xlu0 %704
  %v706 = vsel %vm149, %v698, -inf
  %707 = vmax.xlane.f32.xlu0 %v706
  %v708 = vpop.xlane.xlu0 %707
  %v709 = vsel %vm149, %v699, -inf
  %710 = vmax.xlane.f32.xlu0 %v709
  %v711 = vpop.xlane.xlu0 %710
  %v712 = vsub.f32 %v696, %v702
  %v713 = vsub.f32 %v697, %v705
  %v714 = vsub.f32 %v698, %v708
  %v715 = vsub.f32 %v699, %v711
  %v716 = vmul.f32 %v712, 1.442695
  %v717 = vpow.pop %v716
  %v718 = vmul.f32 %v713, 1.442695
  %v719 = vpow.pop %v718
  %v720 = vmul.f32 %v714, 1.442695
  %v721 = vpow.pop %v720
  %v722 = vmul.f32 %v715, 1.442695
  %v723 = vpow.pop %v722
  %v724 = vsel %vm149, %v717, 0.0
  %725 = vadd.xlane.f32.xlu0 %v724
  %v726 = vpop.xlane.xlu0 %725
  %v727 = vsel %vm149, %v719, 0.0
  %728 = vadd.xlane.f32.xlu0 %v727
  %v729 = vpop.xlane.xlu0 %728
  %v730 = vsel %vm149, %v721, 0.0
  %731 = vadd.xlane.f32.xlu0 %v730
  %v732 = vpop.xlane.xlu0 %731
  %v733 = vsel %vm149, %v723, 0.0
  %734 = vadd.xlane.f32.xlu0 %v733
  %v735 = vpop.xlane.xlu0 %734
  %v736 = vrcp.pop %v726
  %v737 = vrcp.pop %v729
  %v738 = vrcp.pop %v732
  %v739 = vrcp.pop %v735
  %v740 = vpack.c.bf16 %v719, %v717
  %v741 = vpack.c.bf16 %v723, %v721
  %742 = vrot.lane.b32.xlu0 %v36, 48
  %v743 = vpop.permute.xlu0 %742
  %v746 = vsel %vm149, %v740, 0
  %748 = vmatprep.subr.bf16.mxu0 0
  %749 = vmatpush1.bf16.msra.mxu0 %v743
  %750 = vmatprep.subr.bf16.mxu0 0
  %751 = vmatpush1.bf16.msra.mxu0 0
  %752 = vmatprep.subr.bf16.mxu0 0
  %753 = vmatpush1.bf16.msra.mxu0 0
  %754 = vmatprep.subr.bf16.mxu0 0
  %755 = vmatpush1.bf16.msra.mxu0 0
  %756 = vmatprep.subr.bf16.mxu0 0
  %757 = vmatpush1.bf16.msra.mxu0 0
  %758 = vmatprep.subr.bf16.mxu0 0
  %759 = vmatpush1.bf16.msra.mxu0 0
  %760 = vmatprep.subr.bf16.mxu0 0
  %761 = vmatpush1.bf16.msra.mxu0 0
  %762 = vmatprep.subr.bf16.mxu0 0
  %763 = vmatpush1.bf16.msra.mxu0 0
  %764 = vmatprep.subr.bf16.mxu0 0
  %765 = vmatpush1.bf16.msra.mxu0 0
  %766 = vmatprep.subr.bf16.mxu0 0
  %767 = vmatpush1.bf16.msra.mxu0 0
  %768 = vmatprep.subr.bf16.mxu0 0
  %769 = vmatpush1.bf16.msra.mxu0 0
  %770 = vmatprep.subr.bf16.mxu0 0
  %771 = vmatpush1.bf16.msra.mxu0 0
  %772 = vmatprep.subr.bf16.mxu0 0
  %773 = vmatpush1.bf16.msra.mxu0 0
  %774 = vmatprep.subr.bf16.mxu0 0
  %775 = vmatpush1.bf16.msra.mxu0 0
  %776 = vmatprep.subr.bf16.mxu0 0
  %777 = vmatpush1.bf16.msra.mxu0 0
  %778 = vmatprep.subr.bf16.mxu0 0
  %779 = vmatpush1.bf16.msra.mxu0 0
  %780 = vmatprep.mubr.bf16.mxu0 0
  %781 = vmatmul.mubr.bf16.gmra.mrb[0].mxu0 %v746
  %v782 = vpop.f32.mrb[0].mxu0
  %v783 = vadd.f32 0.0, %v782
  %v784 = vpop.f32.mrb[0].mxu0
  %v785 = vpop.f32.mrb[0].mxu0
  %v786 = vadd.f32 0.0, %v785
  %v787 = vpop.f32.mrb[0].mxu0
  %788 = vdwg.mxu0
  %789 = vrot.lane.b32.xlu0 %v91, 48
  %v790 = vpop.permute.xlu0 %789
  %v793 = vsel %vm149, %v741, 0
  %795 = vmatprep.subr.bf16.mxu0 0
  %796 = vmatpush1.bf16.msra.mxu0 %v790
  %797 = vmatprep.subr.bf16.mxu0 0
  %798 = vmatpush1.bf16.msra.mxu0 0
  %799 = vmatprep.subr.bf16.mxu0 0
  %800 = vmatpush1.bf16.msra.mxu0 0
  %801 = vmatprep.subr.bf16.mxu0 0
  %802 = vmatpush1.bf16.msra.mxu0 0
  %803 = vmatprep.subr.bf16.mxu0 0
  %804 = vmatpush1.bf16.msra.mxu0 0
  %805 = vmatprep.subr.bf16.mxu0 0
  %806 = vmatpush1.bf16.msra.mxu0 0
  %807 = vmatprep.subr.bf16.mxu0 0
  %808 = vmatpush1.bf16.msra.mxu0 0
  %809 = vmatprep.subr.bf16.mxu0 0
  %810 = vmatpush1.bf16.msra.mxu0 0
  %811 = vmatprep.subr.bf16.mxu0 0
  %812 = vmatpush1.bf16.msra.mxu0 0
  %813 = vmatprep.subr.bf16.mxu0 0
  %814 = vmatpush1.bf16.msra.mxu0 0
  %815 = vmatprep.subr.bf16.mxu0 0
  %816 = vmatpush1.bf16.msra.mxu0 0
  %817 = vmatprep.subr.bf16.mxu0 0
  %818 = vmatpush1.bf16.msra.mxu0 0
  %819 = vmatprep.subr.bf16.mxu0 0
  %820 = vmatpush1.bf16.msra.mxu0 0
  %821 = vmatprep.subr.bf16.mxu0 0
  %822 = vmatpush1.bf16.msra.mxu0 0
  %823 = vmatprep.subr.bf16.mxu0 0
  %824 = vmatpush1.bf16.msra.mxu0 0
  %825 = vmatprep.subr.bf16.mxu0 0
  %826 = vmatpush1.bf16.msra.mxu0 0
  %827 = vmatprep.mubr.bf16.mxu0 0
  %828 = vmatmul.mubr.bf16.gmra.mrb[0].mxu0 %v793
  %v829 = vpop.f32.mrb[0].mxu0
  %v830 = vadd.f32 0.0, %v829
  %v831 = vpop.f32.mrb[0].mxu0
  %v832 = vpop.f32.mrb[0].mxu0
  %v833 = vadd.f32 0.0, %v832
  %v834 = vpop.f32.mrb[0].mxu0
  %835 = vdwg.mxu0
  %v836 = vmul.f32 %v783, %v736
  %v837 = vmul.f32 %v786, %v737
  %v838 = vmul.f32 %v830, %v738
  %v839 = vmul.f32 %v833, %v739
  %v840 = vpack.c.bf16 %v837, %v836
  %v841 = vpack.c.bf16 %v839, %v838
  %v844 = vunpack.c.l.b16 %v840
  %v845 = vunpack.c.h.b16 %v840
  %v846 = vunpack.c.l.b16 %v841
  %v847 = vunpack.c.h.b16 %v841
  %v848 = vpack.c.b16 %v844, %v844
  %v849 = vpack.c.b16 %v845, %v845
  %v850 = vpack.c.b16 %v846, %v846
  %v851 = vpack.c.b16 %v847, %v847
  %852 = vrot.lane.b32.xlu0 %v848, 16
  %v853 = vpop.permute.xlu0 %852
  %854 = vrot.lane.b32.xlu0 %v849, 16
  %v855 = vpop.permute.xlu0 %854
  %856 = vrot.lane.b32.xlu0 %v850, 16
  %v857 = vpop.permute.xlu0 %856
  %858 = vrot.lane.b32.xlu0 %v851, 16
  %v859 = vpop.permute.xlu0 %858
  %vm864 = vcmask 191616
  %865 = vst.msk [vmem:[%s2] sm:$0xf] %vm864, %v853
  %866 = vst.msk [vmem:[%s2 + $0x4] sm:$0xf] %vm864, %v855
  %867 = vst.msk [vmem:[%s2 + $0x8] sm:$0xf] %vm864, %v857
  %868 = vst.msk [vmem:[%s2 + $0xc] sm:$0xf] %vm864, %v859
  %869 = vrot.lane.b32.xlu0 %v36, 104
  %v870 = vpop.permute.xlu0 %869
  %871 = vrot.lane.b32.xlu0 %v36, 72
  %v872 = vpop.permute.xlu0 %871
  %v874 = vsel %vm39, %v870, 0
  %v877 = vsel %vm39, %v872, 0
  %879 = vmatprep.subr.bf16.mxu0 0
  %880 = vmatpush1.bf16.xpose.msra.mxu0 %v877
  %881 = vmatprep.subr.bf16.mxu0 0
  %882 = vmatpush1.bf16.xpose.msra.mxu0 0
  %883 = vmatprep.subr.bf16.mxu0 0
  %884 = vmatpush1.bf16.xpose.msra.mxu0 0
  %885 = vmatprep.subr.bf16.mxu0 0
  %886 = vmatpush1.bf16.xpose.msra.mxu0 0
  %887 = vmatprep.subr.bf16.mxu0 0
  %888 = vmatpush1.bf16.xpose.msra.mxu0 0
  %889 = vmatprep.subr.bf16.mxu0 0
  %890 = vmatpush1.bf16.xpose.msra.mxu0 0
  %891 = vmatprep.subr.bf16.mxu0 0
  %892 = vmatpush1.bf16.xpose.msra.mxu0 0
  %893 = vmatprep.subr.bf16.mxu0 0
  %894 = vmatpush1.bf16.xpose.msra.mxu0 0
  %895 = vmatprep.subr.bf16.mxu0 0
  %896 = vmatpush1.bf16.xpose.msra.mxu0 0
  %897 = vmatprep.subr.bf16.mxu0 0
  %898 = vmatpush1.bf16.xpose.msra.mxu0 0
  %899 = vmatprep.subr.bf16.mxu0 0
  %900 = vmatpush1.bf16.xpose.msra.mxu0 0
  %901 = vmatprep.subr.bf16.mxu0 0
  %902 = vmatpush1.bf16.xpose.msra.mxu0 0
  %903 = vmatprep.subr.bf16.mxu0 0
  %904 = vmatpush1.bf16.xpose.msra.mxu0 0
  %905 = vmatprep.subr.bf16.mxu0 0
  %906 = vmatpush1.bf16.xpose.msra.mxu0 0
  %907 = vmatprep.subr.bf16.mxu0 0
  %908 = vmatpush1.bf16.xpose.msra.mxu0 0
  %909 = vmatprep.subr.bf16.mxu0 0
  %910 = vmatpush1.bf16.xpose.msra.mxu0 0
  %911 = vmatprep.mubr.bf16.mxu0 0
  %912 = vmatmul.mubr.bf16.gmra.mrb[0].mxu0 %v874
  %v913 = vpop.f32.mrb[0].mxu0
  %v914 = vadd.f32 0.0, %v913
  %v915 = vpop.f32.mrb[0].mxu0
  %v916 = vpop.f32.mrb[0].mxu0
  %v917 = vadd.f32 0.0, %v916
  %v918 = vpop.f32.mrb[0].mxu0
  %919 = vdwg.mxu0
  %920 = vrot.lane.b32.xlu0 %v91, 104
  %v921 = vpop.permute.xlu0 %920
  %922 = vrot.lane.b32.xlu0 %v91, 72
  %v923 = vpop.permute.xlu0 %922
  %v925 = vsel %vm39, %v921, 0
  %v928 = vsel %vm39, %v923, 0
  %930 = vmatprep.subr.bf16.mxu0 0
  %931 = vmatpush1.bf16.xpose.msra.mxu0 %v928
  %932 = vmatprep.subr.bf16.mxu0 0
  %933 = vmatpush1.bf16.xpose.msra.mxu0 0
  %934 = vmatprep.subr.bf16.mxu0 0
  %935 = vmatpush1.bf16.xpose.msra.mxu0 0
  %936 = vmatprep.subr.bf16.mxu0 0
  %937 = vmatpush1.bf16.xpose.msra.mxu0 0
  %938 = vmatprep.subr.bf16.mxu0 0
  %939 = vmatpush1.bf16.xpose.msra.mxu0 0
  %940 = vmatprep.subr.bf16.mxu0 0
  %941 = vmatpush1.bf16.xpose.msra.mxu0 0
  %942 = vmatprep.subr.bf16.mxu0 0
  %943 = vmatpush1.bf16.xpose.msra.mxu0 0
  %944 = vmatprep.subr.bf16.mxu0 0
  %945 = vmatpush1.bf16.xpose.msra.mxu0 0
  %946 = vmatprep.subr.bf16.mxu0 0
  %947 = vmatpush1.bf16.xpose.msra.mxu0 0
  %948 = vmatprep.subr.bf16.mxu0 0
  %949 = vmatpush1.bf16.xpose.msra.mxu0 0
  %950 = vmatprep.subr.bf16.mxu0 0
  %951 = vmatpush1.bf16.xpose.msra.mxu0 0
  %952 = vmatprep.subr.bf16.mxu0 0
  %953 = vmatpush1.bf16.xpose.msra.mxu0 0
  %954 = vmatprep.subr.bf16.mxu0 0
  %955 = vmatpush1.bf16.xpose.msra.mxu0 0
  %956 = vmatprep.subr.bf16.mxu0 0
  %957 = vmatpush1.bf16.xpose.msra.mxu0 0
  %958 = vmatprep.subr.bf16.mxu0 0
  %959 = vmatpush1.bf16.xpose.msra.mxu0 0
  %960 = vmatprep.subr.bf16.mxu0 0
  %961 = vmatpush1.bf16.xpose.msra.mxu0 0
  %962 = vmatprep.mubr.bf16.mxu0 0
  %963 = vmatmul.mubr.bf16.gmra.mrb[0].mxu0 %v925
  %v964 = vpop.f32.mrb[0].mxu0
  %v965 = vadd.f32 0.0, %v964
  %v966 = vpop.f32.mrb[0].mxu0
  %v967 = vpop.f32.mrb[0].mxu0
  %v968 = vadd.f32 0.0, %v967
  %v969 = vpop.f32.mrb[0].mxu0
  %970 = vdwg.mxu0
  %v971 = vmul.f32 %v914, 0.35355338
  %v972 = vmul.f32 %v917, 0.35355338
  %v973 = vmul.f32 %v965, 0.35355338
  %v974 = vmul.f32 %v968, 0.35355338
  %v975 = vadd.f32 %v971, %v30
  %v976 = vadd.f32 %v972, %v31
  %v977 = vadd.f32 %v973, %v30
  %v978 = vadd.f32 %v974, %v31
  %v979 = vsel %vm149, %v975, -inf
  %980 = vmax.xlane.f32.xlu0 %v979
  %v981 = vpop.xlane.xlu0 %980
  %v982 = vsel %vm149, %v976, -inf
  %983 = vmax.xlane.f32.xlu0 %v982
  %v984 = vpop.xlane.xlu0 %983
  %v985 = vsel %vm149, %v977, -inf
  %986 = vmax.xlane.f32.xlu0 %v985
  %v987 = vpop.xlane.xlu0 %986
  %v988 = vsel %vm149, %v978, -inf
  %989 = vmax.xlane.f32.xlu0 %v988
  %v990 = vpop.xlane.xlu0 %989
  %v991 = vsub.f32 %v975, %v981
  %v992 = vsub.f32 %v976, %v984
  %v993 = vsub.f32 %v977, %v987
  %v994 = vsub.f32 %v978, %v990
  %v995 = vmul.f32 %v991, 1.442695
  %v996 = vpow.pop %v995
  %v997 = vmul.f32 %v992, 1.442695
  %v998 = vpow.pop %v997
  %v999 = vmul.f32 %v993, 1.442695
  %v1000 = vpow.pop %v999
  %v1001 = vmul.f32 %v994, 1.442695
  %v1002 = vpow.pop %v1001
  %v1003 = vsel %vm149, %v996, 0.0
  %1004 = vadd.xlane.f32.xlu0 %v1003
  %v1005 = vpop.xlane.xlu0 %1004
  %v1006 = vsel %vm149, %v998, 0.0
  %1007 = vadd.xlane.f32.xlu0 %v1006
  %v1008 = vpop.xlane.xlu0 %1007
  %v1009 = vsel %vm149, %v1000, 0.0
  %1010 = vadd.xlane.f32.xlu0 %v1009
  %v1011 = vpop.xlane.xlu0 %1010
  %v1012 = vsel %vm149, %v1002, 0.0
  %1013 = vadd.xlane.f32.xlu0 %v1012
  %v1014 = vpop.xlane.xlu0 %1013
  %v1015 = vrcp.pop %v1005
  %v1016 = vrcp.pop %v1008
  %v1017 = vrcp.pop %v1011
  %v1018 = vrcp.pop %v1014
  %v1019 = vpack.c.bf16 %v998, %v996
  %v1020 = vpack.c.bf16 %v1002, %v1000
  %1021 = vrot.lane.b32.xlu0 %v36, 40
  %v1022 = vpop.permute.xlu0 %1021
  %v1025 = vsel %vm149, %v1019, 0
  %1027 = vmatprep.subr.bf16.mxu0 0
  %1028 = vmatpush1.bf16.msra.mxu0 %v1022
  %1029 = vmatprep.subr.bf16.mxu0 0
  %1030 = vmatpush1.bf16.msra.mxu0 0
  %1031 = vmatprep.subr.bf16.mxu0 0
  %1032 = vmatpush1.bf16.msra.mxu0 0
  %1033 = vmatprep.subr.bf16.mxu0 0
  %1034 = vmatpush1.bf16.msra.mxu0 0
  %1035 = vmatprep.subr.bf16.mxu0 0
  %1036 = vmatpush1.bf16.msra.mxu0 0
  %1037 = vmatprep.subr.bf16.mxu0 0
  %1038 = vmatpush1.bf16.msra.mxu0 0
  %1039 = vmatprep.subr.bf16.mxu0 0
  %1040 = vmatpush1.bf16.msra.mxu0 0
  %1041 = vmatprep.subr.bf16.mxu0 0
  %1042 = vmatpush1.bf16.msra.mxu0 0
  %1043 = vmatprep.subr.bf16.mxu0 0
  %1044 = vmatpush1.bf16.msra.mxu0 0
  %1045 = vmatprep.subr.bf16.mxu0 0
  %1046 = vmatpush1.bf16.msra.mxu0 0
  %1047 = vmatprep.subr.bf16.mxu0 0
  %1048 = vmatpush1.bf16.msra.mxu0 0
  %1049 = vmatprep.subr.bf16.mxu0 0
  %1050 = vmatpush1.bf16.msra.mxu0 0
  %1051 = vmatprep.subr.bf16.mxu0 0
  %1052 = vmatpush1.bf16.msra.mxu0 0
  %1053 = vmatprep.subr.bf16.mxu0 0
  %1054 = vmatpush1.bf16.msra.mxu0 0
  %1055 = vmatprep.subr.bf16.mxu0 0
  %1056 = vmatpush1.bf16.msra.mxu0 0
  %1057 = vmatprep.subr.bf16.mxu0 0
  %1058 = vmatpush1.bf16.msra.mxu0 0
  %1059 = vmatprep.mubr.bf16.mxu0 0
  %1060 = vmatmul.mubr.bf16.gmra.mrb[0].mxu0 %v1025
  %v1061 = vpop.f32.mrb[0].mxu0
  %v1062 = vadd.f32 0.0, %v1061
  %v1063 = vpop.f32.mrb[0].mxu0
  %v1064 = vpop.f32.mrb[0].mxu0
  %v1065 = vadd.f32 0.0, %v1064
  %v1066 = vpop.f32.mrb[0].mxu0
  %1067 = vdwg.mxu0
  %1068 = vrot.lane.b32.xlu0 %v91, 40
  %v1069 = vpop.permute.xlu0 %1068
  %v1072 = vsel %vm149, %v1020, 0
  %1074 = vmatprep.subr.bf16.mxu0 0
  %1075 = vmatpush1.bf16.msra.mxu0 %v1069
  %1076 = vmatprep.subr.bf16.mxu0 0
  %1077 = vmatpush1.bf16.msra.mxu0 0
  %1078 = vmatprep.subr.bf16.mxu0 0
  %1079 = vmatpush1.bf16.msra.mxu0 0
  %1080 = vmatprep.subr.bf16.mxu0 0
  %1081 = vmatpush1.bf16.msra.mxu0 0
  %1082 = vmatprep.subr.bf16.mxu0 0
  %1083 = vmatpush1.bf16.msra.mxu0 0
  %1084 = vmatprep.subr.bf16.mxu0 0
  %1085 = vmatpush1.bf16.msra.mxu0 0
  %1086 = vmatprep.subr.bf16.mxu0 0
  %1087 = vmatpush1.bf16.msra.mxu0 0
  %1088 = vmatprep.subr.bf16.mxu0 0
  %1089 = vmatpush1.bf16.msra.mxu0 0
  %1090 = vmatprep.subr.bf16.mxu0 0
  %1091 = vmatpush1.bf16.msra.mxu0 0
  %1092 = vmatprep.subr.bf16.mxu0 0
  %1093 = vmatpush1.bf16.msra.mxu0 0
  %1094 = vmatprep.subr.bf16.mxu0 0
  %1095 = vmatpush1.bf16.msra.mxu0 0
  %1096 = vmatprep.subr.bf16.mxu0 0
  %1097 = vmatpush1.bf16.msra.mxu0 0
  %1098 = vmatprep.subr.bf16.mxu0 0
  %1099 = vmatpush1.bf16.msra.mxu0 0
  %1100 = vmatprep.subr.bf16.mxu0 0
  %1101 = vmatpush1.bf16.msra.mxu0 0
  %1102 = vmatprep.subr.bf16.mxu0 0
  %1103 = vmatpush1.bf16.msra.mxu0 0
  %1104 = vmatprep.subr.bf16.mxu0 0
  %1105 = vmatpush1.bf16.msra.mxu0 0
  %1106 = vmatprep.mubr.bf16.mxu0 0
  %1107 = vmatmul.mubr.bf16.gmra.mrb[0].mxu0 %v1072
  %v1108 = vpop.f32.mrb[0].mxu0
  %v1109 = vadd.f32 0.0, %v1108
  %v1110 = vpop.f32.mrb[0].mxu0
  %v1111 = vpop.f32.mrb[0].mxu0
  %v1112 = vadd.f32 0.0, %v1111
  %v1113 = vpop.f32.mrb[0].mxu0
  %1114 = vdwg.mxu0
  %v1115 = vmul.f32 %v1062, %v1015
  %v1116 = vmul.f32 %v1065, %v1016
  %v1117 = vmul.f32 %v1109, %v1017
  %v1118 = vmul.f32 %v1112, %v1018
  %v1119 = vpack.c.bf16 %v1116, %v1115
  %v1120 = vpack.c.bf16 %v1118, %v1117
  %v1123 = vunpack.c.l.b16 %v1119
  %v1124 = vunpack.c.h.b16 %v1119
  %v1125 = vunpack.c.l.b16 %v1120
  %v1126 = vunpack.c.h.b16 %v1120
  %v1127 = vpack.c.b16 %v1123, %v1123
  %v1128 = vpack.c.b16 %v1124, %v1124
  %v1129 = vpack.c.b16 %v1125, %v1125
  %v1130 = vpack.c.b16 %v1126, %v1126
  %1131 = vrot.lane.b32.xlu0 %v1127, 24
  %v1132 = vpop.permute.xlu0 %1131
  %1133 = vrot.lane.b32.xlu0 %v1128, 24
  %v1134 = vpop.permute.xlu0 %1133
  %1135 = vrot.lane.b32.xlu0 %v1129, 24
  %v1136 = vpop.permute.xlu0 %1135
  %1137 = vrot.lane.b32.xlu0 %v1130, 24
  %v1138 = vpop.permute.xlu0 %1137
  %vm1143 = vcmask 257216
  %1144 = vst.msk [vmem:[%s2] sm:$0xf] %vm1143, %v1132
  %1145 = vst.msk [vmem:[%s2 + $0x4] sm:$0xf] %vm1143, %v1134
  %1146 = vst.msk [vmem:[%s2 + $0x8] sm:$0xf] %vm1143, %v1136
  %1147 = vst.msk [vmem:[%s2 + $0xc] sm:$0xf] %vm1143, %v1138
  // Predicated region
  $region10: #{forward.39} parent=0 // pred_check
    _
  $region11: #{forward.39} parent=0 // pred_check_branch
    %1149 = sbr.rel (0) target = $region13
  $region12: #{forward.39} parent=0 // pred_region
    _
  $region13: #{forward.39} parent=0 // pred_fallthru
    _
  // Predicated region
  $region14: #{forward.39} parent=0 // pred_check
    _
  $region15: #{forward.39} parent=0 // pred_check_branch
    %1151 = sbr.rel (0) target = $region17
  $region16: #{forward.39} parent=0 // pred_region
    _
  $region17: #{forward.39} parent=0 // pred_fallthru
    _

// kernel: forward.41
$region0: #{forward.41}
  #allocation0 [shape = 'u32[]', space=smem, size = 0x4, offset = 0x4, fixed_abs, tag = 'smem constant byte address 0x4 - core index']
  #allocation1 [shape = 'u32[144,128]{1,0:T(1,128)}', space=vmem, size = 0x12000, scoped, tag = 'internal scratch']
  #allocation2 [shape = 'bf16[32,32]{1,0:T(16,128)(2,1)}', space=vmem, size = 0x2000, scoped, tag = 'scratch operand']
  %s0 = inlined_call_operand.vmem [shape: f32[32,32], index: 0, kind: input, shape index: {}]
  %s1 = inlined_call_operand.vmem [shape: bf16[32,128], index: 1, kind: input, shape index: {}]
  %s2 = inlined_call_operand.vmem [shape: f32[1,128], index: 2, kind: input, shape index: {}]
  %s3 = inlined_call_operand.vmem [shape: f32[1,32], index: 3, kind: input, shape index: {}]
  %s4 = inlined_call_operand.vmem [shape: f32[1,32], index: 4, kind: input, shape index: {}]
  %s5 = inlined_call_operand.vmem [shape: bf16[32,128], index: 5, kind: output, shape index: {}]
  %s6 = sld [smem:[#allocation0]]
  $region34: #{forward.41} parent=0
    _
  %s8 = ssub.s32 1, %s6
  %s9 = scalar_select 0, %s8, %s6
  // Predicated region
  $region2: #{forward.41} parent=0 // pred_check
    _
  $region3: #{forward.41} parent=0 // pred_check_branch
    %11 = sbr.rel (0) target = $region5
  $region4: #{forward.41} parent=0 // pred_region
    _
  $region5: #{forward.41} parent=0 // pred_fallthru
    _
  // Predicated region
  $region6: #{forward.41} parent=0 // pred_check
    _
  $region7: #{forward.41} parent=0 // pred_check_branch
    %13 = sbr.rel (0) target = $region9
  $region8: #{forward.41} parent=0 // pred_region
    _
  $region9: #{forward.41} parent=0 // pred_fallthru
    _
  // Predicated region
  $region10: #{forward.41} parent=0 // pred_check
    _
  $region11: #{forward.41} parent=0 // pred_check_branch
    %15 = sbr.rel (0) target = $region13
  $region12: #{forward.41} parent=0 // pred_region
    _
  $region13: #{forward.41} parent=0 // pred_fallthru
    _
  // Predicated region
  $region14: #{forward.41} parent=0 // pred_check
    _
  $region15: #{forward.41} parent=0 // pred_check_branch
    %17 = sbr.rel (0) target = $region17
  $region16: #{forward.41} parent=0 // pred_region
    _
  $region17: #{forward.41} parent=0 // pred_fallthru
    _
  // Predicated region
  $region18: #{forward.41} parent=0 // pred_check
    _
  $region19: #{forward.41} parent=0 // pred_check_branch
    %19 = sbr.rel (0) target = $region21
  $region20: #{forward.41} parent=0 // pred_region
    _
  $region21: #{forward.41} parent=0 // pred_fallthru
    _
  %p21 = scmp.eq.s32.totalorder 0, 0
  // Predicated region
  $region22: #{forward.41} parent=0 // pred_check
    %p22 = pneg %p21
  $region23: #{forward.41} parent=0 // pred_check_branch
    %24 = sbr.rel (%p22) target = $region25
  $region24: #{forward.41} parent=0 // pred_region
    %v25 = vld [vmem:[%s0] sm:$0xff]
    %v26 = vld [vmem:[%s0 + $0x8] sm:$0xff]
    %v27 = vld [vmem:[%s0 + $0x10] sm:$0xff]
    %v28 = vld [vmem:[%s0 + $0x18] sm:$0xff]
    %vm29 = vcmask 261120
    %v30 = vsel %vm29, %v25, 0.0
    %31 = vadd.xlane.f32.xlu0 %v30
    %v32 = vpop.xlane.xlu0 %31
    %v33 = vsel %vm29, %v26, 0.0
    %34 = vadd.xlane.f32.xlu0 %v33
    %v35 = vpop.xlane.xlu0 %34
    %v36 = vsel %vm29, %v27, 0.0
    %37 = vadd.xlane.f32.xlu0 %v36
    %v38 = vpop.xlane.xlu0 %37
    %v39 = vsel %vm29, %v28, 0.0
    %40 = vadd.xlane.f32.xlu0 %v39
    %v41 = vpop.xlane.xlu0 %40
    %v42 = vrcp.pop 32.0
    %v43 = vmul.f32 %v32, %v42
    %v44 = vmul.f32 %v35, %v42
    %v45 = vmul.f32 %v38, %v42
    %v46 = vmul.f32 %v41, %v42
    %v47 = vsub.f32 %v25, %v43
    %v48 = vsub.f32 %v26, %v44
    %v49 = vsub.f32 %v27, %v45
    %v50 = vsub.f32 %v28, %v46
    %v51 = vmul.f32 %v47, %v47
    %v52 = vmul.f32 %v48, %v48
    %v53 = vmul.f32 %v49, %v49
    %v54 = vmul.f32 %v50, %v50
    %v55 = vsel %vm29, %v51, 0.0
    %56 = vadd.xlane.f32.xlu0 %v55
    %v57 = vpop.xlane.xlu0 %56
    %v58 = vsel %vm29, %v52, 0.0
    %59 = vadd.xlane.f32.xlu0 %v58
    %v60 = vpop.xlane.xlu0 %59
    %v61 = vsel %vm29, %v53, 0.0
    %62 = vadd.xlane.f32.xlu0 %v61
    %v63 = vpop.xlane.xlu0 %62
    %v64 = vsel %vm29, %v54, 0.0
    %65 = vadd.xlane.f32.xlu0 %v64
    %v66 = vpop.xlane.xlu0 %65
    %v67 = vmul.f32 %v57, %v42
    %v68 = vmul.f32 %v60, %v42
    %v69 = vmul.f32 %v63, %v42
    %v70 = vmul.f32 %v66, %v42
    %v71 = vadd.f32 %v67, 1e-05
    %v72 = vadd.f32 %v68, 1e-05
    %v73 = vadd.f32 %v69, 1e-05
    %v74 = vadd.f32 %v70, 1e-05
    %v75 = vrsqrt.pop %v71
    %v76 = vrsqrt.pop %v72
    %v77 = vrsqrt.pop %v73
    %v78 = vrsqrt.pop %v74
    %v79 = vmul.f32 %v47, %v75
    %v80 = vmul.f32 %v48, %v76
    %v81 = vmul.f32 %v49, %v77
    %v82 = vmul.f32 %v50, %v78
    %v83 = vld [vmem:[%s3] sm:$0x1]
    %v85 = vlaneseq
    %v86 = vshrl.u32 %v85, 7
    %v87 = vsub.s32 0, %v86
    %v88 = vrot.slane %v83, %v87
    %v90 = vmul.f32 %v79, %v88
    %v91 = vmul.f32 %v80, %v88
    %v92 = vmul.f32 %v81, %v88
    %v93 = vmul.f32 %v82, %v88
    %v94 = vld [vmem:[%s4] sm:$0x1]
    %v96 = vlaneseq
    %v97 = vshrl.u32 %v96, 7
    %v98 = vsub.s32 0, %v97
    %v99 = vrot.slane %v94, %v98
    %v101 = vadd.f32 %v90, %v99
    %v102 = vadd.f32 %v91, %v99
    %v103 = vadd.f32 %v92, %v99
    %v104 = vadd.f32 %v93, %v99
    %v105 = vpack.c.bf16 %v102, %v101
    %v106 = vpack.c.bf16 %v104, %v103
    %107 = vst.msk [vmem:[#allocation2] sm:$0xff] %vm29, %v105
    %108 = vst.msk [vmem:[#allocation2 + $0x8] sm:$0xff] %vm29, %v106
  $region25: #{forward.41} parent=0 // pred_fallthru
    _
  %v109 = vld [vmem:[#allocation2] sm:$0xff]
  %v110 = vld [vmem:[#allocation2 + $0x8] sm:$0xff]
  %v111 = vld [vmem:[%s1] sm:$0xf]
  %v112 = vld [vmem:[%s1 + $0x4] sm:$0xf]
  %v113 = vld [vmem:[%s1 + $0x8] sm:$0xf]
  %v114 = vld [vmem:[%s1 + $0xc] sm:$0xf]
  %v115 = vld [vmem:[%s2] sm:$0x1]
  %v117 = vlaneseq
  %v118 = vshrl.u32 %v117, 7
  %v119 = vsub.s32 0, %v118
  %v120 = vrot.slane %v115, %v119
  %v126 = vunpack.c.l.b16 %v111
  %v127 = vunpack.c.l.b16 %v112
  %v128 = vunpack.c.l.b16 %v113
  %v129 = vunpack.c.l.b16 %v114
  %v130 = vpack.c.b16 %v127, %v126
  %v131 = vpack.c.b16 %v129, %v128
  %vm134 = vcmask 261120
  %v136 = vsel %vm134, %v109, 0
  %v139 = vsel %vm134, %v110, 0
  %141 = vmatprep.subr.bf16.mxu0 0
  %142 = vmatpush1.bf16.msra.mxu0 %v130
  %143 = vmatprep.subr.bf16.mxu0 0
  %144 = vmatpush1.bf16.msra.mxu0 %v131
  %145 = vmatprep.subr.bf16.mxu0 0
  %146 = vmatpush1.bf16.msra.mxu0 0
  %147 = vmatprep.subr.bf16.mxu0 0
  %148 = vmatpush1.bf16.msra.mxu0 0
  %149 = vmatprep.subr.bf16.mxu0 0
  %150 = vmatpush1.bf16.msra.mxu0 0
  %151 = vmatprep.subr.bf16.mxu0 0
  %152 = vmatpush1.bf16.msra.mxu0 0
  %153 = vmatprep.subr.bf16.mxu0 0
  %154 = vmatpush1.bf16.msra.mxu0 0
  %155 = vmatprep.subr.bf16.mxu0 0
  %156 = vmatpush1.bf16.msra.mxu0 0
  %157 = vmatprep.subr.bf16.mxu0 0
  %158 = vmatpush1.bf16.msra.mxu0 0
  %159 = vmatprep.subr.bf16.mxu0 0
  %160 = vmatpush1.bf16.msra.mxu0 0
  %161 = vmatprep.subr.bf16.mxu0 0
  %162 = vmatpush1.bf16.msra.mxu0 0
  %163 = vmatprep.subr.bf16.mxu0 0
  %164 = vmatpush1.bf16.msra.mxu0 0
  %165 = vmatprep.subr.bf16.mxu0 0
  %166 = vmatpush1.bf16.msra.mxu0 0
  %167 = vmatprep.subr.bf16.mxu0 0
  %168 = vmatpush1.bf16.msra.mxu0 0
  %169 = vmatprep.subr.bf16.mxu0 0
  %170 = vmatpush1.bf16.msra.mxu0 0
  %171 = vmatprep.subr.bf16.mxu0 0
  %172 = vmatpush1.bf16.msra.mxu0 0
  %173 = vmatprep.mubr.bf16.mxu0 0
  %174 = vmatmul.mubr.bf16.gmra.mrb[0].mxu0 %v136
  %v175 = vpop.f32.mrb[0].mxu0
  %v176 = vadd.f32 %v120, %v175
  %v177 = vpop.f32.mrb[0].mxu0
  %v178 = vpop.f32.mrb[0].mxu0
  %v179 = vadd.f32 %v120, %v178
  %v180 = vpop.f32.mrb[0].mxu0
  %181 = vmatprep.mubr.bf16.mxu0 0
  %182 = vmatmul.mubr.bf16.gmra.mrb[0].mxu0 %v139
  %v183 = vpop.f32.mrb[0].mxu0
  %v184 = vadd.f32 %v120, %v183
  %v185 = vpop.f32.mrb[0].mxu0
  %v186 = vpop.f32.mrb[0].mxu0
  %v187 = vadd.f32 %v120, %v186
  %v188 = vpop.f32.mrb[0].mxu0
  %189 = vdwg.mxu0
  %v190 = vmul.f32 %v176, %v176
  %v191 = vmul.f32 %v179, %v179
  %v192 = vmul.f32 %v184, %v184
  %v193 = vmul.f32 %v187, %v187
  %v194 = vmul.f32 %v176, %v190
  %v195 = vmul.f32 %v179, %v191
  %v196 = vmul.f32 %v184, %v192
  %v197 = vmul.f32 %v187, %v193
  %v198 = vmul.f32 %v194, 0.044715
  %v199 = vmul.f32 %v195, 0.044715
  %v200 = vmul.f32 %v196, 0.044715
  %v201 = vmul.f32 %v197, 0.044715
  %v202 = vadd.f32 %v176, %v198
  %v203 = vadd.f32 %v179, %v199
  %v204 = vadd.f32 %v184, %v200
  %v205 = vadd.f32 %v187, %v201
  %v206 = vmul.f32 %v202, 0.7978846
  %v207 = vmul.f32 %v203, 0.7978846
  %v208 = vmul.f32 %v204, 0.7978846
  %v209 = vmul.f32 %v205, 0.7978846
  %v210 = vtanh.pop %v206
  %v211 = vtanh.pop %v207
  %v212 = vtanh.pop %v208
  %v213 = vtanh.pop %v209
  %v214 = vadd.f32 %v210, 1.0
  %v215 = vadd.f32 %v211, 1.0
  %v216 = vadd.f32 %v212, 1.0
  %v217 = vadd.f32 %v213, 1.0
  %v218 = vmul.f32 %v214, 0.5
  %v219 = vmul.f32 %v215, 0.5
  %v220 = vmul.f32 %v216, 0.5
  %v221 = vmul.f32 %v217, 0.5
  %v222 = vmul.f32 %v176, %v218
  %v223 = vmul.f32 %v179, %v219
  %v224 = vmul.f32 %v184, %v220
  %v225 = vmul.f32 %v187, %v221
  %v226 = vpack.c.bf16 %v223, %v222
  %v227 = vpack.c.bf16 %v225, %v224
  %v230 = vunpack.c.l.b16 %v226
  %v231 = vunpack.c.h.b16 %v226
  %v232 = vunpack.c.l.b16 %v227
  %v233 = vunpack.c.h.b16 %v227
  %v234 = vpack.c.b16 %v230, %v230
  %v235 = vpack.c.b16 %v231, %v231
  %v236 = vpack.c.b16 %v232, %v232
  %v237 = vpack.c.b16 %v233, %v233
  %242 = vst [vmem:[%s5] sm:$0xf] %v234
  %243 = vst [vmem:[%s5 + $0x4] sm:$0xf] %v235
  %244 = vst [vmem:[%s5 + $0x8] sm:$0xf] %v236
  %245 = vst [vmem:[%s5 + $0xc] sm:$0xf] %v237
  // Predicated region
  $region26: #{forward.41} parent=0 // pred_check
    _
  $region27: #{forward.41} parent=0 // pred_check_branch
    %247 = sbr.rel (0) target = $region29
  $region28: #{forward.41} parent=0 // pred_region
    _
  $region29: #{forward.41} parent=0 // pred_fallthru
    _
  // Predicated region
  $region30: #{forward.41} parent=0 // pred_check
    _
  $region31: #{forward.41} parent=0 // pred_check_branch
    %249 = sbr.rel (0) target = $region33
  $region32: #{forward.41} parent=0 // pred_region
    _
  $region33: #{forward.41} parent=0 // pred_fallthru
    _

// kernel: forward.42
$region0: #{forward.42}
  #allocation0 [shape = 'u32[]', space=smem, size = 0x4, offset = 0x4, fixed_abs, tag = 'smem constant byte address 0x4 - core index']
  #allocation1 [shape = 'u32[144,128]{1,0:T(1,128)}', space=vmem, size = 0x12000, scoped, tag = 'internal scratch']
  %s0 = inlined_call_operand.vmem [shape: bf16[32,128], index: 0, kind: input, shape index: {}]
  %s1 = inlined_call_operand.vmem [shape: bf16[128,32], index: 1, kind: input, shape index: {}]
  %s2 = inlined_call_operand.vmem [shape: f32[1,32], index: 2, kind: input, shape index: {}]
  %s3 = inlined_call_operand.vmem [shape: f32[32,32], index: 3, kind: input, shape index: {}]
  %s4 = inlined_call_operand.vmem [shape: f32[32,32], index: 4, kind: output, shape index: {}]
  %s5 = sld [smem:[#allocation0]]
  $region26: #{forward.42} parent=0
    _
  %s7 = ssub.s32 1, %s5
  %s8 = scalar_select 0, %s7, %s5
  // Predicated region
  $region2: #{forward.42} parent=0 // pred_check
    _
  $region3: #{forward.42} parent=0 // pred_check_branch
    %10 = sbr.rel (0) target = $region5
  $region4: #{forward.42} parent=0 // pred_region
    _
  $region5: #{forward.42} parent=0 // pred_fallthru
    _
  // Predicated region
  $region6: #{forward.42} parent=0 // pred_check
    _
  $region7: #{forward.42} parent=0 // pred_check_branch
    %12 = sbr.rel (0) target = $region9
  $region8: #{forward.42} parent=0 // pred_region
    _
  $region9: #{forward.42} parent=0 // pred_fallthru
    _
  // Predicated region
  $region10: #{forward.42} parent=0 // pred_check
    _
  $region11: #{forward.42} parent=0 // pred_check_branch
    %14 = sbr.rel (0) target = $region13
  $region12: #{forward.42} parent=0 // pred_region
    _
  $region13: #{forward.42} parent=0 // pred_fallthru
    _
  // Predicated region
  $region14: #{forward.42} parent=0 // pred_check
    _
  $region15: #{forward.42} parent=0 // pred_check_branch
    %16 = sbr.rel (0) target = $region17
  $region16: #{forward.42} parent=0 // pred_region
    _
  $region17: #{forward.42} parent=0 // pred_fallthru
    _
  %v18 = vld [vmem:[%s0] sm:$0xf]
  %v19 = vld [vmem:[%s0 + $0x4] sm:$0xf]
  %v20 = vld [vmem:[%s0 + $0x8] sm:$0xf]
  %v21 = vld [vmem:[%s0 + $0xc] sm:$0xf]
  %v22 = vld [vmem:[%s1] sm:$0xf]
  %v23 = vld [vmem:[%s1 + $0x4] sm:$0xf]
  %v24 = vld [vmem:[%s1 + $0x8] sm:$0xf]
  %v25 = vld [vmem:[%s1 + $0xc] sm:$0xf]
  %v26 = vld [vmem:[%s1 + $0x10] sm:$0xf]
  %v27 = vld [vmem:[%s1 + $0x14] sm:$0xf]
  %v28 = vld [vmem:[%s1 + $0x18] sm:$0xf]
  %v29 = vld [vmem:[%s1 + $0x1c] sm:$0xf]
  %v30 = vld [vmem:[%s1 + $0x20] sm:$0xf]
  %v31 = vld [vmem:[%s1 + $0x24] sm:$0xf]
  %v32 = vld [vmem:[%s1 + $0x28] sm:$0xf]
  %v33 = vld [vmem:[%s1 + $0x2c] sm:$0xf]
  %v34 = vld [vmem:[%s1 + $0x30] sm:$0xf]
  %v35 = vld [vmem:[%s1 + $0x34] sm:$0xf]
  %v36 = vld [vmem:[%s1 + $0x38] sm:$0xf]
  %v37 = vld [vmem:[%s1 + $0x3c] sm:$0xf]
  %v38 = vld [vmem:[%s2] sm:$0x1]
  %v40 = vlaneseq
  %v41 = vshrl.u32 %v40, 7
  %v42 = vsub.s32 0, %v41
  %v43 = vrot.slane %v38, %v42
  %v49 = vunpack.c.l.b16 %v18
  %v50 = vunpack.c.l.b16 %v19
  %v51 = vunpack.c.l.b16 %v20
  %v52 = vunpack.c.l.b16 %v21
  %v53 = vpack.c.b16 %v50, %v49
  %v54 = vpack.c.b16 %v52, %v51
  %v73 = vunpack.c.l.b16 %v22
  %v74 = vunpack.c.l.b16 %v23
  %v75 = vunpack.c.l.b16 %v24
  %v76 = vunpack.c.l.b16 %v25
  %v77 = vunpack.c.l.b16 %v26
  %v78 = vunpack.c.l.b16 %v27
  %v79 = vunpack.c.l.b16 %v28
  %v80 = vunpack.c.l.b16 %v29
  %v81 = vunpack.c.l.b16 %v30
  %v82 = vunpack.c.l.b16 %v31
  %v83 = vunpack.c.l.b16 %v32
  %v84 = vunpack.c.l.b16 %v33
  %v85 = vunpack.c.l.b16 %v34
  %v86 = vunpack.c.l.b16 %v35
  %v87 = vunpack.c.l.b16 %v36
  %v88 = vunpack.c.l.b16 %v37
  %v89 = vpack.c.b16 %v74, %v73
  %v90 = vpack.c.b16 %v76, %v75
  %v91 = vpack.c.b16 %v78, %v77
  %v92 = vpack.c.b16 %v80, %v79
  %v93 = vpack.c.b16 %v82, %v81
  %v94 = vpack.c.b16 %v84, %v83
  %v95 = vpack.c.b16 %v86, %v85
  %v96 = vpack.c.b16 %v88, %v87
  %105 = vmatprep.subr.bf16.mxu0 0
  %106 = vmatpush1.bf16.msra.mxu0 %v89
  %107 = vmatprep.subr.bf16.mxu0 0
  %108 = vmatpush1.bf16.msra.mxu0 %v90
  %109 = vmatprep.subr.bf16.mxu0 0
  %110 = vmatpush1.bf16.msra.mxu0 %v91
  %111 = vmatprep.subr.bf16.mxu0 0
  %112 = vmatpush1.bf16.msra.mxu0 %v92
  %113 = vmatprep.subr.bf16.mxu0 0
  %114 = vmatpush1.bf16.msra.mxu0 %v93
  %115 = vmatprep.subr.bf16.mxu0 0
  %116 = vmatpush1.bf16.msra.mxu0 %v94
  %117 = vmatprep.subr.bf16.mxu0 0
  %118 = vmatpush1.bf16.msra.mxu0 %v95
  %119 = vmatprep.subr.bf16.mxu0 0
  %120 = vmatpush1.bf16.msra.mxu0 %v96
  %121 = vmatprep.subr.bf16.mxu0 0
  %122 = vmatpush1.bf16.msra.mxu0 0
  %123 = vmatprep.subr.bf16.mxu0 0
  %124 = vmatpush1.bf16.msra.mxu0 0
  %125 = vmatprep.subr.bf16.mxu0 0
  %126 = vmatpush1.bf16.msra.mxu0 0
  %127 = vmatprep.subr.bf16.mxu0 0
  %128 = vmatpush1.bf16.msra.mxu0 0
  %129 = vmatprep.subr.bf16.mxu0 0
  %130 = vmatpush1.bf16.msra.mxu0 0
  %131 = vmatprep.subr.bf16.mxu0 0
  %132 = vmatpush1.bf16.msra.mxu0 0
  %133 = vmatprep.subr.bf16.mxu0 0
  %134 = vmatpush1.bf16.msra.mxu0 0
  %135 = vmatprep.subr.bf16.mxu0 0
  %136 = vmatpush1.bf16.msra.mxu0 0
  %137 = vmatprep.mubr.bf16.mxu0 0
  %138 = vmatmul.mubr.bf16.gmra.mrb[0].mxu0 %v53
  %v139 = vpop.f32.mrb[0].mxu0
  %v140 = vadd.f32 %v43, %v139
  %v141 = vpop.f32.mrb[0].mxu0
  %v142 = vpop.f32.mrb[0].mxu0
  %v143 = vadd.f32 %v43, %v142
  %v144 = vpop.f32.mrb[0].mxu0
  %145 = vmatprep.mubr.bf16.mxu0 0
  %146 = vmatmul.mubr.bf16.gmra.mrb[0].mxu0 %v54
  %v147 = vpop.f32.mrb[0].mxu0
  %v148 = vadd.f32 %v43, %v147
  %v149 = vpop.f32.mrb[0].mxu0
  %v150 = vpop.f32.mrb[0].mxu0
  %v151 = vadd.f32 %v43, %v150
  %v152 = vpop.f32.mrb[0].mxu0
  %153 = vdwg.mxu0
  %v154 = vld [vmem:[%s3] sm:$0xff]
  %v155 = vld [vmem:[%s3 + $0x8] sm:$0xff]
  %v156 = vld [vmem:[%s3 + $0x10] sm:$0xff]
  %v157 = vld [vmem:[%s3 + $0x18] sm:$0xff]
  %v158 = vadd.f32 %v140, %v154
  %v159 = vadd.f32 %v143, %v155
  %v160 = vadd.f32 %v148, %v156
  %v161 = vadd.f32 %v151, %v157
  %vm162 = vcmask 261120
  %163 = vst.msk [vmem:[%s4] sm:$0xff] %vm162, %v158
  %164 = vst.msk [vmem:[%s4 + $0x8] sm:$0xff] %vm162, %v159
  %165 = vst.msk [vmem:[%s4 + $0x10] sm:$0xff] %vm162, %v160
  %166 = vst.msk [vmem:[%s4 + $0x18] sm:$0xff] %vm162, %v161
  // Predicated region
  $region18: #{forward.42} parent=0 // pred_check
    _
  $region19: #{forward.42} parent=0 // pred_check_branch
    %168 = sbr.rel (0) target = $region21
  $region20: #{forward.42} parent=0 // pred_region
    _
  $region21: #{forward.42} parent=0 // pred_fallthru
    _
  // Predicated region
  $region22: #{forward.42} parent=0 // pred_check
    _
  $region23: #{forward.42} parent=0 // pred_check_branch
    %170 = sbr.rel (0) target = $region25
  $region24: #{forward.42} parent=0 // pred_region
    _
  $region25: #{forward.42} parent=0 // pred_fallthru
    _

// kernel: forward.48
$region0: #{forward.48}
  #allocation0 [shape = 'u32[]', space=smem, size = 0x4, offset = 0x4, fixed_abs, tag = 'smem constant byte address 0x4 - core index']
  #allocation1 [shape = 'u32[144,128]{1,0:T(1,128)}', space=vmem, size = 0x12000, scoped, tag = 'internal scratch']
  %s0 = inlined_call_operand.vmem [shape: f32[32,32], index: 0, kind: input, shape index: {}]
  %s1 = inlined_call_operand.vmem [shape: f32[1,32], index: 1, kind: input, shape index: {}]
  %s2 = inlined_call_operand.vmem [shape: f32[1,32], index: 2, kind: input, shape index: {}]
  %s3 = inlined_call_operand.vmem [shape: f32[32,32], index: 3, kind: output, shape index: {}]
  %s4 = sld [smem:[#allocation0]]
  $region22: #{forward.48} parent=0
    _
  %s6 = ssub.s32 1, %s4
  %s7 = scalar_select 0, %s6, %s4
  // Predicated region
  $region2: #{forward.48} parent=0 // pred_check
    _
  $region3: #{forward.48} parent=0 // pred_check_branch
    %9 = sbr.rel (0) target = $region5
  $region4: #{forward.48} parent=0 // pred_region
    _
  $region5: #{forward.48} parent=0 // pred_fallthru
    _
  // Predicated region
  $region6: #{forward.48} parent=0 // pred_check
    _
  $region7: #{forward.48} parent=0 // pred_check_branch
    %11 = sbr.rel (0) target = $region9
  $region8: #{forward.48} parent=0 // pred_region
    _
  $region9: #{forward.48} parent=0 // pred_fallthru
    _
  // Predicated region
  $region10: #{forward.48} parent=0 // pred_check
    _
  $region11: #{forward.48} parent=0 // pred_check_branch
    %13 = sbr.rel (0) target = $region13
  $region12: #{forward.48} parent=0 // pred_region
    _
  $region13: #{forward.48} parent=0 // pred_fallthru
    _
  %v14 = vld [vmem:[%s0] sm:$0xff]
  %v15 = vld [vmem:[%s0 + $0x8] sm:$0xff]
  %v16 = vld [vmem:[%s0 + $0x10] sm:$0xff]
  %v17 = vld [vmem:[%s0 + $0x18] sm:$0xff]
  %vm18 = vcmask 261120
  %v19 = vsel %vm18, %v14, 0.0
  %20 = vadd.xlane.f32.xlu0 %v19
  %v21 = vpop.xlane.xlu0 %20
  %v22 = vsel %vm18, %v15, 0.0
  %23 = vadd.xlane.f32.xlu0 %v22
  %v24 = vpop.xlane.xlu0 %23
  %v25 = vsel %vm18, %v16, 0.0
  %26 = vadd.xlane.f32.xlu0 %v25
  %v27 = vpop.xlane.xlu0 %26
  %v28 = vsel %vm18, %v17, 0.0
  %29 = vadd.xlane.f32.xlu0 %v28
  %v30 = vpop.xlane.xlu0 %29
  %v31 = vrcp.pop 32.0
  %v32 = vmul.f32 %v21, %v31
  %v33 = vmul.f32 %v24, %v31
  %v34 = vmul.f32 %v27, %v31
  %v35 = vmul.f32 %v30, %v31
  %v36 = vsub.f32 %v14, %v32
  %v37 = vsub.f32 %v15, %v33
  %v38 = vsub.f32 %v16, %v34
  %v39 = vsub.f32 %v17, %v35
  %v40 = vmul.f32 %v36, %v36
  %v41 = vmul.f32 %v37, %v37
  %v42 = vmul.f32 %v38, %v38
  %v43 = vmul.f32 %v39, %v39
  %v44 = vsel %vm18, %v40, 0.0
  %45 = vadd.xlane.f32.xlu0 %v44
  %v46 = vpop.xlane.xlu0 %45
  %v47 = vsel %vm18, %v41, 0.0
  %48 = vadd.xlane.f32.xlu0 %v47
  %v49 = vpop.xlane.xlu0 %48
  %v50 = vsel %vm18, %v42, 0.0
  %51 = vadd.xlane.f32.xlu0 %v50
  %v52 = vpop.xlane.xlu0 %51
  %v53 = vsel %vm18, %v43, 0.0
  %54 = vadd.xlane.f32.xlu0 %v53
  %v55 = vpop.xlane.xlu0 %54
  %v56 = vmul.f32 %v46, %v31
  %v57 = vmul.f32 %v49, %v31
  %v58 = vmul.f32 %v52, %v31
  %v59 = vmul.f32 %v55, %v31
  %v60 = vadd.f32 %v56, 1e-05
  %v61 = vadd.f32 %v57, 1e-05
  %v62 = vadd.f32 %v58, 1e-05
  %v63 = vadd.f32 %v59, 1e-05
  %v64 = vrsqrt.pop %v60
  %v65 = vrsqrt.pop %v61
  %v66 = vrsqrt.pop %v62
  %v67 = vrsqrt.pop %v63
  %v68 = vmul.f32 %v36, %v64
  %v69 = vmul.f32 %v37, %v65
  %v70 = vmul.f32 %v38, %v66
  %v71 = vmul.f32 %v39, %v67
  %v72 = vld [vmem:[%s1] sm:$0x1]
  %v74 = vlaneseq
  %v75 = vshrl.u32 %v74, 7
  %v76 = vsub.s32 0, %v75
  %v77 = vrot.slane %v72, %v76
  %v79 = vmul.f32 %v68, %v77
  %v80 = vmul.f32 %v69, %v77
  %v81 = vmul.f32 %v70, %v77
  %v82 = vmul.f32 %v71, %v77
  %v83 = vld [vmem:[%s2] sm:$0x1]
  %v85 = vlaneseq
  %v86 = vshrl.u32 %v85, 7
  %v87 = vsub.s32 0, %v86
  %v88 = vrot.slane %v83, %v87
  %v90 = vadd.f32 %v79, %v88
  %v91 = vadd.f32 %v80, %v88
  %v92 = vadd.f32 %v81, %v88
  %v93 = vadd.f32 %v82, %v88
  %94 = vst.msk [vmem:[%s3] sm:$0xff] %vm18, %v90
  %95 = vst.msk [vmem:[%s3 + $0x8] sm:$0xff] %vm18, %v91
  %96 = vst.msk [vmem:[%s3 + $0x10] sm:$0xff] %vm18, %v92
  %97 = vst.msk [vmem:[%s3 + $0x18] sm:$0xff] %vm18, %v93
  // Predicated region
  $region14: #{forward.48} parent=0 // pred_check
    _
  $region15: #{forward.48} parent=0 // pred_check_branch
    %99 = sbr.rel (0) target = $region17
  $region16: #{forward.48} parent=0 // pred_region
    _
  $region17: #{forward.48} parent=0 // pred_fallthru
    _
  // Predicated region
  $region18: #{forward.48} parent=0 // pred_check
    _
  $region19: #{forward.48} parent=0 // pred_check_branch
    %101 = sbr.rel (0) target = $region21
  $region20: #{forward.48} parent=0 // pred_region
    _
  $region21: #{forward.48} parent=0 // pred_fallthru
    _

// kernel: forward.49
$region0: #{forward.49}
  #allocation0 [shape = 'u32[]', space=smem, size = 0x4, offset = 0x4, fixed_abs, tag = 'smem constant byte address 0x4 - core index']
  #allocation1 [shape = 'u32[144,128]{1,0:T(1,128)}', space=vmem, size = 0x12000, scoped, tag = 'internal scratch']
  %s0 = inlined_call_operand.vmem [shape: f32[2,32], index: 0, kind: input, shape index: {}]
  %s1 = inlined_call_operand.vmem [shape: bf16[32,128], index: 1, kind: input, shape index: {}]
  %s2 = inlined_call_operand.vmem [shape: f32[1,128], index: 2, kind: input, shape index: {}]
  %s3 = inlined_call_operand.hbm [shape: f32[2,128], index: 3, kind: output, shape index: {}]
  %s4 = sld [smem:[#allocation0]]
  $region22: #{forward.49} parent=0
    _
  %s6 = ssub.s32 1, %s4
  %s7 = scalar_select 0, %s6, %s4
  $region1: #{forward.49} parent=0
    #allocation2 [shape = 'u8[1024]{0}', space=vmem, size = 0x400, scoped, tag = 'output window, operand 0, single buffered']
    #allocation3 [shape = 's32[1]{0}', space=sflag, size = 0x4, scoped, tag = 'scoped memory for forward.49']
    %8 = vsyncpa [#allocation3], 0
    // Predicated region
    $region2: #{forward.49} parent=1 // pred_check
      _
    $region3: #{forward.49} parent=1 // pred_check_branch
      %10 = sbr.rel (0) target = $region5
    $region4: #{forward.49} parent=1 // pred_region
      _
    $region5: #{forward.49} parent=1 // pred_fallthru
      _
    // Predicated region
    $region6: #{forward.49} parent=1 // pred_check
      _
    $region7: #{forward.49} parent=1 // pred_check_branch
      %12 = sbr.rel (0) target = $region9
    $region8: #{forward.49} parent=1 // pred_region
      _
    $region9: #{forward.49} parent=1 // pred_fallthru
      _
    // Predicated region
    $region10: #{forward.49} parent=1 // pred_check
      _
    $region11: #{forward.49} parent=1 // pred_check_branch
      %14 = sbr.rel (0) target = $region13
    $region12: #{forward.49} parent=1 // pred_region
      _
    $region13: #{forward.49} parent=1 // pred_fallthru
      _
    %v16 = vld [vmem:[%s0] sm:$0x3]
    %v17 = vpack.c.bf16 %v16, %v16
    %v18 = vld [vmem:[%s1] sm:$0xf]
    %v19 = vld [vmem:[%s1 + $0x4] sm:$0xf]
    %v20 = vld [vmem:[%s1 + $0x8] sm:$0xf]
    %v21 = vld [vmem:[%s1 + $0xc] sm:$0xf]
    %v22 = vld [vmem:[%s2] sm:$0x1]
    %v24 = vlaneseq
    %v25 = vshrl.u32 %v24, 7
    %v26 = vsub.s32 0, %v25
    %v27 = vrot.slane %v22, %v26
    %v33 = vunpack.c.l.b16 %v18
    %v34 = vunpack.c.l.b16 %v19
    %v35 = vunpack.c.l.b16 %v20
    %v36 = vunpack.c.l.b16 %v21
    %v37 = vpack.c.b16 %v34, %v33
    %v38 = vpack.c.b16 %v36, %v35
    %vm41 = vcmask 261120
    %v43 = vsel %vm41, %v17, 0
    %45 = vmatprep.subr.bf16.mxu0 0
    %46 = vmatpush1.bf16.msra.mxu0 %v37
    %47 = vmatprep.subr.bf16.mxu0 0
    %48 = vmatpush1.bf16.msra.mxu0 %v38
    %49 = vmatprep.subr.bf16.mxu0 0
    %50 = vmatpush1.bf16.msra.mxu0 0
    %51 = vmatprep.subr.bf16.mxu0 0
    %52 = vmatpush1.bf16.msra.mxu0 0
    %53 = vmatprep.subr.bf16.mxu0 0
    %54 = vmatpush1.bf16.msra.mxu0 0
    %55 = vmatprep.subr.bf16.mxu0 0
    %56 = vmatpush1.bf16.msra.mxu0 0
    %57 = vmatprep.subr.bf16.mxu0 0
    %58 = vmatpush1.bf16.msra.mxu0 0
    %59 = vmatprep.subr.bf16.mxu0 0
    %60 = vmatpush1.bf16.msra.mxu0 0
    %61 = vmatprep.subr.bf16.mxu0 0
    %62 = vmatpush1.bf16.msra.mxu0 0
    %63 = vmatprep.subr.bf16.mxu0 0
    %64 = vmatpush1.bf16.msra.mxu0 0
    %65 = vmatprep.subr.bf16.mxu0 0
    %66 = vmatpush1.bf16.msra.mxu0 0
    %67 = vmatprep.subr.bf16.mxu0 0
    %68 = vmatpush1.bf16.msra.mxu0 0
    %69 = vmatprep.subr.bf16.mxu0 0
    %70 = vmatpush1.bf16.msra.mxu0 0
    %71 = vmatprep.subr.bf16.mxu0 0
    %72 = vmatpush1.bf16.msra.mxu0 0
    %73 = vmatprep.subr.bf16.mxu0 0
    %74 = vmatpush1.bf16.msra.mxu0 0
    %75 = vmatprep.subr.bf16.mxu0 0
    %76 = vmatpush1.bf16.msra.mxu0 0
    %77 = vmatprep.mubr.bf16.mxu0 0
    %78 = vmatmul.mubr.bf16.gmra.mrb[0].mxu0 %v43
    %v79 = vpop.f32.mrb[0].mxu0
    %v80 = vadd.f32 %v27, %v79
    %v81 = vpop.f32.mrb[0].mxu0
    %v82 = vpop.f32.mrb[0].mxu0
    %v83 = vpop.f32.mrb[0].mxu0
    %84 = vdwg.mxu0
    %85 = vst [vmem:[#allocation2] sm:$0x3] %v80
    // Predicated region
    $region14: #{forward.49} parent=1 // pred_check
      _
    $region15: #{forward.49} parent=1 // pred_check_branch
      %87 = sbr.rel (0) target = $region17
    $region16: #{forward.49} parent=1 // pred_region
      %s89 = ssub.s32 32, 32
      %90 = vsyncadd [#allocation3], %s89
      %s92 = sshll.u32 [#allocation2], 4
      %s93 = int_to_ptr.vmem [resolvable:$true] %s92
      %95 = dma.vmem_to_hbm [thread:$0]  %s93, 32, %s3, [#allocation3]
    $region17: #{forward.49} parent=1 // pred_fallthru
      _
    // Predicated region
    $region18: #{forward.49} parent=1 // pred_check
      _
    $region19: #{forward.49} parent=1 // pred_check_branch
      %97 = sbr.rel (0) target = $region21
    $region20: #{forward.49} parent=1 // pred_region
      %98 = dma.done [#allocation3], 32
    $region21: #{forward.49} parent=1 // pred_fallthru
      _
    %99 = vsyncpa [#allocation3], 1

</llo_original>
